<compile_context>
chip_gen: v5e
topology: v5e:2x2
jax: 0.10.0
libtpu: 0.0.40
codegen_flags: <defaults>
</compile_context>

<pallas_src>
import functools

import jax
import jax.numpy as jnp
from jax import lax
from jax.experimental import pallas as pl
from jax.experimental.pallas import tpu as pltpu


# ----------------------------------------------------------------------------
# helpers
# ----------------------------------------------------------------------------
def _pick_time_block(T, cap):
    """Largest divisor of T that is <= cap (time steps per grid block)."""
    for d in range(min(T, cap), 0, -1):
        if T % d == 0:
            return d
    return T
    # TODO(synk): for awkward (e.g. prime) T, pad T to a multiple of the target block
    #             and mask the tail instead of shrinking the block to 1.


# ----------------------------------------------------------------------------
# fused bidirectional GRU block kernel
# ----------------------------------------------------------------------------
def _bigru_block_kernel(*refs, tb, bp, hidden, n_parts, with_residual):
    """One time block of a bidirectional GRU layer (both directions interleaved).

    refs (inputs) : xf_0..xf_{P-1}  (tb*bp, Din)  bf16  fwd-order input parts
                    xb_0..xb_{P-1}  (tb*bp, Din)  bf16  bwd-order input parts
                    wih  (2, P, Din, 3H) bf16
                    bih  (2, 1, 3H)      f32   (b_ih with b_hh folded in for r,z gates)
                    whh  (2, H, 3H)      bf16
                    bhn  (2, 1, H)       f32   (n-gate hidden bias, kept separate)
    refs (outputs): out_f, out_b  (tb*bp, H) bf16
    refs (scratch): gi  (2, tb*bp, 3H) f32   block input gates
                    h   (2, bp, H)     f32   carried hidden states (fwd, bwd)
    """
    xf = refs[:n_parts]
    xb = refs[n_parts:2 * n_parts]
    wih_ref, bih_ref, whh_ref, bhn_ref = refs[2 * n_parts:2 * n_parts + 4]
    out_f_ref, out_b_ref = refs[2 * n_parts + 4:2 * n_parts + 6]
    gi_ref, h_ref = refs[2 * n_parts + 6:]

    # The hidden state carried across grid steps relies on the single "arbitrary" grid
    # axis iterating time blocks sequentially with reset at block 0.
    @pl.when(pl.program_id(0) == 0)
    def _init():
        h_ref[...] = jnp.zeros_like(h_ref)

    H = hidden

    # ---- hoisted input projection for this block (one big MXU matmul per direction) ----
    for d, xparts in ((0, xf), (1, xb)):
        acc = jnp.dot(xparts[0][...], wih_ref[d, 0],
                      preferred_element_type=jnp.float32)
        for p in range(1, n_parts):
            acc = acc + jnp.dot(xparts[p][...], wih_ref[d, p],
                                preferred_element_type=jnp.float32)
        gi_ref[d] = acc + bih_ref[d]          # (tb*bp, 3H) f32

    whh_f = whh_ref[0]                        # (H, 3H) bf16, resident across the loop
    whh_b = whh_ref[1]
    bhn_f = bhn_ref[0]                        # (1, H) f32
    bhn_b = bhn_ref[1]

    def cell(gi, gh, bhn, h):
        r = jax.nn.sigmoid(gi[:, :H] + gh[:, :H])
        z = jax.nn.sigmoid(gi[:, H:2 * H] + gh[:, H:2 * H])
        n = jnp.tanh(gi[:, 2 * H:] + r * (gh[:, 2 * H:] + bhn))
        return n + z * (h - n)                # == (1-z)*n + z*h

    def step(i, carry):
        hf, hb = carry
        j = tb - 1 - i                        # backward direction walks its block reversed
        fo = pl.multiple_of(i * bp, bp)       # sublane-aligned (bp is a multiple of 8)
        bo = pl.multiple_of(j * bp, bp)

        gif = gi_ref[0, pl.ds(fo, bp), :]     # (bp, 3H)
        gib = gi_ref[1, pl.ds(bo, bp), :]
        ghf = jnp.dot(hf.astype(whh_f.dtype), whh_f,
                      preferred_element_type=jnp.float32)
        ghb = jnp.dot(hb.astype(whh_b.dtype), whh_b,
                      preferred_element_type=jnp.float32)

        hf_new = cell(gif, ghf, bhn_f, hf)
        hb_new = cell(gib, ghb, bhn_b, hb)

        of = hf_new
        ob = hb_new
        if with_residual:                     # residual = the layer's own input part
            of = of + xf[0][pl.ds(fo, bp), :].astype(jnp.float32)
            ob = ob + xb[n_parts - 1][pl.ds(bo, bp), :].astype(jnp.float32)

        out_f_ref[pl.ds(fo, bp), :] = of.astype(out_f_ref.dtype)
        out_b_ref[pl.ds(bo, bp), :] = ob.astype(out_b_ref.dtype)
        return hf_new, hb_new

    hf, hb = lax.fori_loop(0, tb, step, (h_ref[0], h_ref[1]), unroll=True)
    h_ref[0] = hf
    h_ref[1] = hb


# ----------------------------------------------------------------------------
# pallas_call wrapper for one bidirectional GRU layer
# ----------------------------------------------------------------------------
def bidirectional_gru_layer(x_parts, T, Bp, params, with_residual=False,
                            *, time_block_cap=32):
    """x_parts: list of (T*Bp, Din_part) bf16 time-major flattened input parts.

    Returns (out_fwd, out_bwd), each (T*Bp, H) bf16, time-major flattened.
    """
    wih, bih, whh, bhn = params["wih"], params["bih"], params["whh"], params["bhn"]
    n_parts = wih.shape[1]
    din = wih.shape[2]
    H = whh.shape[1]
    G = 3 * H
    assert len(x_parts) == n_parts

    tb = _pick_time_block(T, time_block_cap)
    nb = T // tb
    tbb = tb * Bp

    fwd_map = lambda k: (k, 0)
    bwd_map = lambda k: (nb - 1 - k, 0)       # time reversal purely in the index_map

    x_specs = ([pl.BlockSpec((tbb, din), fwd_map) for _ in range(n_parts)] +
               [pl.BlockSpec((tbb, din), bwd_map) for _ in range(n_parts)])
    w_specs = [
        pl.BlockSpec((2, n_parts, din, G), lambda k: (0, 0, 0, 0)),
        pl.BlockSpec((2, 1, G), lambda k: (0, 0, 0)),
        pl.BlockSpec((2, H, G), lambda k: (0, 0, 0)),
        pl.BlockSpec((2, 1, H), lambda k: (0, 0, 0)),
    ]

    out_dtype = jnp.bfloat16
    out_shape = (jax.ShapeDtypeStruct((T * Bp, H), out_dtype),
                 jax.ShapeDtypeStruct((T * Bp, H), out_dtype))
    out_specs = [pl.BlockSpec((tbb, H), fwd_map),
                 pl.BlockSpec((tbb, H), bwd_map)]

    kernel = functools.partial(_bigru_block_kernel, tb=tb, bp=Bp, hidden=H,
                               n_parts=n_parts, with_residual=with_residual)

    return pl.pallas_call(
        kernel,
        out_shape=out_shape,
        grid_spec=pltpu.PrefetchScalarGridSpec(
            num_scalar_prefetch=0,
            grid=(nb,),
            in_specs=x_specs + w_specs,
            out_specs=out_specs,
            scratch_shapes=[
                pltpu.VMEM((2, tbb, G), jnp.float32),   # block input gates
                pltpu.VMEM((2, Bp, H), jnp.float32),    # carried hidden states
            ],
        ),
        compiler_params=pltpu.CompilerParams(
            dimension_semantics=("arbitrary",)),        # sequential recurrence over time
    )(*x_parts, *x_parts, wih, bih, whh, bhn)


def _subsample_parts(parts, T, Bp, factor):
    """Mode-0 sub-sampling (trim then keep every factor-th frame) on flattened parts."""
    keep = T - T % factor
    T_out = keep // factor
    outs = []
    for p in parts:
        F = p.shape[-1]
        p3 = p.reshape(T, Bp, F)
        outs.append(p3[0:keep:factor].reshape(T_out * Bp, F))
    return outs, T_out


# ----------------------------------------------------------------------------
# Parameter initialization (PyTorch-like U(-1/sqrt(H), 1/sqrt(H)), gate order r,z,n)
# ----------------------------------------------------------------------------
def _init_gru_layer_params(key, in_dim, hid, n_parts):
    part = in_dim // n_parts
    bound = float(hid) ** -0.5
    keys = jax.random.split(key, 8)

    def u(kk, shape):
        return jax.random.uniform(kk, shape, jnp.float32, -bound, bound)

    wih, whh, bih, bhn = [], [], [], []
    for d in range(2):
        w_ih = u(keys[4 * d + 0], (3 * hid, in_dim))     # torch layout (3H, Din)
        w_hh = u(keys[4 * d + 1], (3 * hid, hid))        # torch layout (3H, H)
        b_ih = u(keys[4 * d + 2], (3 * hid,))
        b_hh = u(keys[4 * d + 3], (3 * hid,))
        gi_bias = b_ih.at[:2 * hid].add(b_hh[:2 * hid])  # fold b_hh for r,z gates only
        wih.append(w_ih.T.reshape(n_parts, part, 3 * hid))   # (P, Dpart, 3H)
        whh.append(w_hh.T)                                   # (H, 3H)
        bih.append(gi_bias.reshape(1, 3 * hid))
        bhn.append(b_hh[2 * hid:].reshape(1, hid))           # n-gate hidden bias
    return {
        "wih": jnp.stack(wih).astype(jnp.bfloat16),   # (2, P, Dpart, 3H)
        "whh": jnp.stack(whh).astype(jnp.bfloat16),   # (2, H, 3H)
        "bih": jnp.stack(bih).astype(jnp.float32),    # (2, 1, 3H)
        "bhn": jnp.stack(bhn).astype(jnp.float32),    # (2, 1, H)
    }


def init_encoder_params(key, input_dim, hidden_dim, output_dim):
    k1, k2, k3 = jax.random.split(key, 3)
    return {
        "gru_1": _init_gru_layer_params(k1, input_dim, hidden_dim, n_parts=1),
        "gru_2": _init_gru_layer_params(k2, 2 * hidden_dim, hidden_dim, n_parts=2),
        "gru_3": _init_gru_layer_params(k3, 2 * hidden_dim, output_dim, n_parts=2),
    }


# ----------------------------------------------------------------------------
# Encoder forward (sub_sampling_mode = 0; dropout is identity at inference)
# ----------------------------------------------------------------------------
@functools.partial(jax.jit, static_argnames=("sub_sampling_factor",))
def sub_sampling_encoder_forward(x, params, sub_sampling_factor):
    B, T, D = x.shape
    Bp = ((B + 7) // 8) * 8                                  # sublane-align the batch
    xt = jnp.transpose(x, (1, 0, 2))                         # (T, B, D) time-major
    if Bp != B:
        xt = jnp.pad(xt, ((0, 0), (0, Bp - B), (0, 0)))
    x_flat = xt.reshape(T * Bp, D).astype(jnp.bfloat16)

    h1f, h1b = bidirectional_gru_layer([x_flat], T, Bp, params["gru_1"])
    (h1fs, h1bs), T2 = _subsample_parts([h1f, h1b], T, Bp, sub_sampling_factor)

    # Residual h2 = h1_pp + h2_p fused into the GRU-2 output store (input is the residual).
    h2f, h2b = bidirectional_gru_layer([h1fs, h1bs], T2, Bp, params["gru_2"],
                                       with_residual=True)
    (h2fs, h2bs), T3 = _subsample_parts([h2f, h2b], T2, Bp, sub_sampling_factor)

    h3f, h3b = bidirectional_gru_layer([h2fs, h2bs], T3, Bp, params["gru_3"])

    O = h3f.shape[-1]
    h3 = jnp.concatenate([h3f.reshape(T3, Bp, O), h3b.reshape(T3, Bp, O)], axis=-1)
    return jnp.transpose(h3, (1, 0, 2))[:B].astype(jnp.float32)   # (B, T3, 2*O)


if __name__ == "__main__":
    B, T = 2, 16
    input_dim, hidden_dim, output_dim = 8, 16, 16
    dropout_p = 0.1                       # identity at inference
    sub_sampling_factor = 2

    key = jax.random.PRNGKey(0)
    kx, kp = jax.random.split(key)
    x = jax.random.normal(kx, (B, T, input_dim), dtype=jnp.float32)
    params = init_encoder_params(kp, input_dim, hidden_dim, output_dim)

    h3 = sub_sampling_encoder_forward(x, params, sub_sampling_factor)
    h3 = jax.block_until_ready(h3)

    expected_shape = (B, T // sub_sampling_factor // sub_sampling_factor,
                      2 * output_dim)
    assert h3.shape == expected_shape, (h3.shape, expected_shape)
    assert bool(jnp.all(jnp.isfinite(h3)))
    print("KERNEL_OK")
</pallas_src>

<mosaic_0001>
module attributes {stable_mosaic.version = 11 : i64} {
  func.func @_bigru_block_kernel(%arg0: i32, %arg1: memref<64x16xbf16, #tpu.memory_space<vmem>>, %arg2: memref<64x16xbf16, #tpu.memory_space<vmem>>, %arg3: memref<64x16xbf16, #tpu.memory_space<vmem>>, %arg4: memref<64x16xbf16, #tpu.memory_space<vmem>>, %arg5: memref<2x2x16x48xbf16, #tpu.memory_space<vmem>>, %arg6: memref<2x1x48xf32, #tpu.memory_space<vmem>>, %arg7: memref<2x16x48xbf16, #tpu.memory_space<vmem>>, %arg8: memref<2x1x16xf32, #tpu.memory_space<vmem>>, %arg9: memref<64x16xbf16, #tpu.memory_space<vmem>>, %arg10: memref<64x16xbf16, #tpu.memory_space<vmem>>, %arg11: memref<2x64x48xf32, #tpu.memory_space<vmem>>, %arg12: memref<2x8x16xf32, #tpu.memory_space<vmem>>) attributes {dimension_semantics = [#tpu.dimension_semantics<arbitrary>], iteration_bounds = array<i64: 1>, scalar_prefetch = 0 : i64, scratch_operands = 2 : i64, tpu.core_type = #tpu.core_type<tc>, window_params = [{transform_indices = @transform_0, window_bounds = array<i64: 64, 16>}, {transform_indices = @transform_1, window_bounds = array<i64: 64, 16>}, {transform_indices = @transform_2, window_bounds = array<i64: 64, 16>}, {transform_indices = @transform_3, window_bounds = array<i64: 64, 16>}, {pipeline_mode = #tpu.pipeline_mode<synchronous>, transform_indices = @transform_4, window_bounds = array<i64: 2, 2, 16, 48>}, {pipeline_mode = #tpu.pipeline_mode<synchronous>, transform_indices = @transform_5, window_bounds = array<i64: 2, 1, 48>}, {pipeline_mode = #tpu.pipeline_mode<synchronous>, transform_indices = @transform_6, window_bounds = array<i64: 2, 16, 48>}, {pipeline_mode = #tpu.pipeline_mode<synchronous>, transform_indices = @transform_7, window_bounds = array<i64: 2, 1, 16>}, {transform_indices = @transform_8, window_bounds = array<i64: 64, 16>}, {transform_indices = @transform_9, window_bounds = array<i64: 64, 16>}]} {
    %c0_i32 = arith.constant 0 : i32
    %0 = arith.cmpi eq, %arg0, %c0_i32 : i32
    %1 = arith.extui %0 : i1 to i32
    %c0_i32_0 = arith.constant 0 : i32
    %2 = arith.cmpi ne, %1, %c0_i32_0 : i32
    scf.if %2 {
      %cst_199 = arith.constant 0.000000e+00 : f32
      %701 = vector.broadcast %cst_199 : f32 to vector<2x8x16xf32>
      %c0_200 = arith.constant 0 : index
      %c0_201 = arith.constant 0 : index
      %c0_202 = arith.constant 0 : index
      %702 = vector.load %arg12[%c0_200, %c0_201, %c0_202] : memref<2x8x16xf32, #tpu.memory_space<vmem>>, vector<2x8x16xf32>
      tpu.vector_store %arg12[%c0_200, %c0_201, %c0_202], %701 {strides = array<i32>} : memref<2x8x16xf32, #tpu.memory_space<vmem>>, vector<2x8x16xf32>,
    } else {
    }
    %c0 = arith.constant 0 : index
    %c0_1 = arith.constant 0 : index
    %3 = vector.load %arg1[%c0, %c0_1] : memref<64x16xbf16, #tpu.memory_space<vmem>>, vector<64x16xbf16>
    %c0_2 = arith.constant 0 : index
    %c0_3 = arith.constant 0 : index
    %c0_4 = arith.constant 0 : index
    %c0_5 = arith.constant 0 : index
    %4 = vector.load %arg5[%c0_2, %c0_3, %c0_4, %c0_5] : memref<2x2x16x48xbf16, #tpu.memory_space<vmem>>, vector<1x1x16x48xbf16>
    %5 = vector.shape_cast %4 : vector<1x1x16x48xbf16> to vector<16x48xbf16>
    %cst = arith.constant dense<0.000000e+00> : vector<64x48xf32>
    %6 = tpu.matmul %3, %5, %cst {dimension_numbers = #tpu.dot_dimension_numbers<[1], [0], [0], [1], [0, 0, 1, 1], [], []>} : vector<64x16xbf16>, vector<16x48xbf16>, vector<64x48xf32> -> vector<64x48xf32>
    %c0_6 = arith.constant 0 : index
    %c0_7 = arith.constant 0 : index
    %7 = vector.load %arg2[%c0_6, %c0_7] : memref<64x16xbf16, #tpu.memory_space<vmem>>, vector<64x16xbf16>
    %c0_8 = arith.constant 0 : index
    %c1 = arith.constant 1 : index
    %c0_9 = arith.constant 0 : index
    %c0_10 = arith.constant 0 : index
    %8 = vector.load %arg5[%c0_8, %c1, %c0_9, %c0_10] : memref<2x2x16x48xbf16, #tpu.memory_space<vmem>>, vector<1x1x16x48xbf16>
    %9 = vector.shape_cast %8 : vector<1x1x16x48xbf16> to vector<16x48xbf16>
    %cst_11 = arith.constant dense<0.000000e+00> : vector<64x48xf32>
    %10 = tpu.matmul %7, %9, %cst_11 {dimension_numbers = #tpu.dot_dimension_numbers<[1], [0], [0], [1], [0, 0, 1, 1], [], []>} : vector<64x16xbf16>, vector<16x48xbf16>, vector<64x48xf32> -> vector<64x48xf32>
    %11 = arith.addf %6, %10 : vector<64x48xf32>
    %c0_12 = arith.constant 0 : index
    %c0_13 = arith.constant 0 : index
    %c0_14 = arith.constant 0 : index
    %12 = vector.load %arg6[%c0_12, %c0_13, %c0_14] : memref<2x1x48xf32, #tpu.memory_space<vmem>>, vector<1x1x48xf32>
    %13 = vector.shape_cast %12 : vector<1x1x48xf32> to vector<1x48xf32>
    %14 = vector.broadcast %13 : vector<1x48xf32> to vector<64x48xf32>
    %15 = arith.addf %11, %14 : vector<64x48xf32>
    %c0_15 = arith.constant 0 : index
    %c0_16 = arith.constant 0 : index
    %c0_17 = arith.constant 0 : index
    %16 = vector.load %arg11[%c0_15, %c0_16, %c0_17] : memref<2x64x48xf32, #tpu.memory_space<vmem>>, vector<1x64x48xf32>
    %17 = vector.shape_cast %16 : vector<1x64x48xf32> to vector<64x48xf32>
    %18 = vector.shape_cast %15 : vector<64x48xf32> to vector<1x64x48xf32>
    tpu.vector_store %arg11[%c0_15, %c0_16, %c0_17], %18 {strides = array<i32>} : memref<2x64x48xf32, #tpu.memory_space<vmem>>, vector<1x64x48xf32>,
    %c0_18 = arith.constant 0 : index
    %c0_19 = arith.constant 0 : index
    %19 = vector.load %arg3[%c0_18, %c0_19] : memref<64x16xbf16, #tpu.memory_space<vmem>>, vector<64x16xbf16>
    %c1_20 = arith.constant 1 : index
    %c0_21 = arith.constant 0 : index
    %c0_22 = arith.constant 0 : index
    %c0_23 = arith.constant 0 : index
    %20 = vector.load %arg5[%c1_20, %c0_21, %c0_22, %c0_23] : memref<2x2x16x48xbf16, #tpu.memory_space<vmem>>, vector<1x1x16x48xbf16>
    %21 = vector.shape_cast %20 : vector<1x1x16x48xbf16> to vector<16x48xbf16>
    %cst_24 = arith.constant dense<0.000000e+00> : vector<64x48xf32>
    %22 = tpu.matmul %19, %21, %cst_24 {dimension_numbers = #tpu.dot_dimension_numbers<[1], [0], [0], [1], [0, 0, 1, 1], [], []>} : vector<64x16xbf16>, vector<16x48xbf16>, vector<64x48xf32> -> vector<64x48xf32>
    %c0_25 = arith.constant 0 : index
    %c0_26 = arith.constant 0 : index
    %23 = vector.load %arg4[%c0_25, %c0_26] : memref<64x16xbf16, #tpu.memory_space<vmem>>, vector<64x16xbf16>
    %c1_27 = arith.constant 1 : index
    %c1_28 = arith.constant 1 : index
    %c0_29 = arith.constant 0 : index
    %c0_30 = arith.constant 0 : index
    %24 = vector.load %arg5[%c1_27, %c1_28, %c0_29, %c0_30] : memref<2x2x16x48xbf16, #tpu.memory_space<vmem>>, vector<1x1x16x48xbf16>
    %25 = vector.shape_cast %24 : vector<1x1x16x48xbf16> to vector<16x48xbf16>
    %cst_31 = arith.constant dense<0.000000e+00> : vector<64x48xf32>
    %26 = tpu.matmul %23, %25, %cst_31 {dimension_numbers = #tpu.dot_dimension_numbers<[1], [0], [0], [1], [0, 0, 1, 1], [], []>} : vector<64x16xbf16>, vector<16x48xbf16>, vector<64x48xf32> -> vector<64x48xf32>
    %27 = arith.addf %22, %26 : vector<64x48xf32>
    %c1_32 = arith.constant 1 : index
    %c0_33 = arith.constant 0 : index
    %c0_34 = arith.constant 0 : index
    %28 = vector.load %arg6[%c1_32, %c0_33, %c0_34] : memref<2x1x48xf32, #tpu.memory_space<vmem>>, vector<1x1x48xf32>
    %29 = vector.shape_cast %28 : vector<1x1x48xf32> to vector<1x48xf32>
    %30 = vector.broadcast %29 : vector<1x48xf32> to vector<64x48xf32>
    %31 = arith.addf %27, %30 : vector<64x48xf32>
    %c1_35 = arith.constant 1 : index
    %c0_36 = arith.constant 0 : index
    %c0_37 = arith.constant 0 : index
    %32 = vector.load %arg11[%c1_35, %c0_36, %c0_37] : memref<2x64x48xf32, #tpu.memory_space<vmem>>, vector<1x64x48xf32>
    %33 = vector.shape_cast %32 : vector<1x64x48xf32> to vector<64x48xf32>
    %34 = vector.shape_cast %31 : vector<64x48xf32> to vector<1x64x48xf32>
    tpu.vector_store %arg11[%c1_35, %c0_36, %c0_37], %34 {strides = array<i32>} : memref<2x64x48xf32, #tpu.memory_space<vmem>>, vector<1x64x48xf32>,
    %c0_38 = arith.constant 0 : index
    %c0_39 = arith.constant 0 : index
    %c0_40 = arith.constant 0 : index
    %35 = vector.load %arg7[%c0_38, %c0_39, %c0_40] : memref<2x16x48xbf16, #tpu.memory_space<vmem>>, vector<1x16x48xbf16>
    %36 = vector.shape_cast %35 : vector<1x16x48xbf16> to vector<16x48xbf16>
    %c1_41 = arith.constant 1 : index
    %c0_42 = arith.constant 0 : index
    %c0_43 = arith.constant 0 : index
    %37 = vector.load %arg7[%c1_41, %c0_42, %c0_43] : memref<2x16x48xbf16, #tpu.memory_space<vmem>>, vector<1x16x48xbf16>
    %38 = vector.shape_cast %37 : vector<1x16x48xbf16> to vector<16x48xbf16>
    %c0_44 = arith.constant 0 : index
    %c0_45 = arith.constant 0 : index
    %c0_46 = arith.constant 0 : index
    %39 = vector.load %arg8[%c0_44, %c0_45, %c0_46] : memref<2x1x16xf32, #tpu.memory_space<vmem>>, vector<1x1x16xf32>
    %40 = vector.shape_cast %39 : vector<1x1x16xf32> to vector<1x16xf32>
    %c1_47 = arith.constant 1 : index
    %c0_48 = arith.constant 0 : index
    %c0_49 = arith.constant 0 : index
    %41 = vector.load %arg8[%c1_47, %c0_48, %c0_49] : memref<2x1x16xf32, #tpu.memory_space<vmem>>, vector<1x1x16xf32>
    %42 = vector.shape_cast %41 : vector<1x1x16xf32> to vector<1x16xf32>
    %c0_50 = arith.constant 0 : index
    %c0_51 = arith.constant 0 : index
    %c0_52 = arith.constant 0 : index
    %43 = vector.load %arg12[%c0_50, %c0_51, %c0_52] : memref<2x8x16xf32, #tpu.memory_space<vmem>>, vector<1x8x16xf32>
    %44 = vector.shape_cast %43 : vector<1x8x16xf32> to vector<8x16xf32>
    %c1_53 = arith.constant 1 : index
    %c0_54 = arith.constant 0 : index
    %c0_55 = arith.constant 0 : index
    %45 = vector.load %arg12[%c1_53, %c0_54, %c0_55] : memref<2x8x16xf32, #tpu.memory_space<vmem>>, vector<1x8x16xf32>
    %46 = vector.shape_cast %45 : vector<1x8x16xf32> to vector<8x16xf32>
    %c0_i32_56 = arith.constant 0 : i32
    %c7_i32 = arith.constant 7 : i32
    %47 = arith.subi %c7_i32, %c0_i32_56 : i32
    %c8_i32 = arith.constant 8 : i32
    %48 = arith.muli %c0_i32_56, %c8_i32 : i32
    %49 = tpu.assume_multiple %48, 8 : i32
    %c8_i32_57 = arith.constant 8 : i32
    %50 = arith.muli %47, %c8_i32_57 : i32
    %51 = tpu.assume_multiple %50, 8 : i32
    %c0_58 = arith.constant 0 : index
    %52 = arith.index_cast %49 : i32 to index
    %c0_59 = arith.constant 0 : index
    %53 = vector.load %arg11[%c0_58, %52, %c0_59] : memref<2x64x48xf32, #tpu.memory_space<vmem>>, vector<1x8x48xf32>
    %54 = vector.shape_cast %53 : vector<1x8x48xf32> to vector<8x48xf32>
    %c1_60 = arith.constant 1 : index
    %55 = arith.index_cast %51 : i32 to index
    %c0_61 = arith.constant 0 : index
    %56 = vector.load %arg11[%c1_60, %55, %c0_61] : memref<2x64x48xf32, #tpu.memory_space<vmem>>, vector<1x8x48xf32>
    %57 = vector.shape_cast %56 : vector<1x8x48xf32> to vector<8x48xf32>
    %58 = arith.truncf %44 : vector<8x16xf32> to vector<8x16xbf16>
    %cst_62 = arith.constant dense<0.000000e+00> : vector<8x48xf32>
    %59 = tpu.matmul %58, %36, %cst_62 {dimension_numbers = #tpu.dot_dimension_numbers<[1], [0], [0], [1], [0, 0, 1, 1], [], []>} : vector<8x16xbf16>, vector<16x48xbf16>, vector<8x48xf32> -> vector<8x48xf32>
    %60 = arith.truncf %46 : vector<8x16xf32> to vector<8x16xbf16>
    %cst_63 = arith.constant dense<0.000000e+00> : vector<8x48xf32>
    %61 = tpu.matmul %60, %38, %cst_63 {dimension_numbers = #tpu.dot_dimension_numbers<[1], [0], [0], [1], [0, 0, 1, 1], [], []>} : vector<8x16xbf16>, vector<16x48xbf16>, vector<8x48xf32> -> vector<8x48xf32>
    %62 = vector.extract_strided_slice %54 {offsets = [0, 0], sizes = [8, 16], strides = [1, 1]} : vector<8x48xf32> to vector<8x16xf32>
    %63 = vector.extract_strided_slice %59 {offsets = [0, 0], sizes = [8, 16], strides = [1, 1]} : vector<8x48xf32> to vector<8x16xf32>
    %64 = arith.addf %62, %63 : vector<8x16xf32>
    %65 = arith.negf %64 : vector<8x16xf32>
    %66 = math.exp %65 : vector<8x16xf32>
    %cst_64 = arith.constant 1.000000e+00 : f32
    %67 = vector.broadcast %cst_64 : f32 to vector<8x16xf32>
    %68 = arith.addf %67, %66 : vector<8x16xf32>
    %69 = arith.divf %67, %68 : vector<8x16xf32>
    %70 = vector.extract_strided_slice %54 {offsets = [0, 16], sizes = [8, 16], strides = [1, 1]} : vector<8x48xf32> to vector<8x16xf32>
    %71 = vector.extract_strided_slice %59 {offsets = [0, 16], sizes = [8, 16], strides = [1, 1]} : vector<8x48xf32> to vector<8x16xf32>
    %72 = arith.addf %70, %71 : vector<8x16xf32>
    %73 = arith.negf %72 : vector<8x16xf32>
    %74 = math.exp %73 : vector<8x16xf32>
    %cst_65 = arith.constant 1.000000e+00 : f32
    %75 = vector.broadcast %cst_65 : f32 to vector<8x16xf32>
    %76 = arith.addf %75, %74 : vector<8x16xf32>
    %77 = arith.divf %75, %76 : vector<8x16xf32>
    %78 = vector.extract_strided_slice %54 {offsets = [0, 32], sizes = [8, 16], strides = [1, 1]} : vector<8x48xf32> to vector<8x16xf32>
    %79 = vector.extract_strided_slice %59 {offsets = [0, 32], sizes = [8, 16], strides = [1, 1]} : vector<8x48xf32> to vector<8x16xf32>
    %80 = vector.broadcast %40 : vector<1x16xf32> to vector<8x16xf32>
    %81 = arith.addf %79, %80 : vector<8x16xf32>
    %82 = arith.mulf %69, %81 : vector<8x16xf32>
    %83 = arith.addf %78, %82 : vector<8x16xf32>
    %84 = math.tanh %83 : vector<8x16xf32>
    %85 = arith.subf %44, %84 : vector<8x16xf32>
    %86 = arith.mulf %77, %85 : vector<8x16xf32>
    %87 = arith.addf %84, %86 : vector<8x16xf32>
    %88 = vector.extract_strided_slice %57 {offsets = [0, 0], sizes = [8, 16], strides = [1, 1]} : vector<8x48xf32> to vector<8x16xf32>
    %89 = vector.extract_strided_slice %61 {offsets = [0, 0], sizes = [8, 16], strides = [1, 1]} : vector<8x48xf32> to vector<8x16xf32>
    %90 = arith.addf %88, %89 : vector<8x16xf32>
    %91 = arith.negf %90 : vector<8x16xf32>
    %92 = math.exp %91 : vector<8x16xf32>
    %cst_66 = arith.constant 1.000000e+00 : f32
    %93 = vector.broadcast %cst_66 : f32 to vector<8x16xf32>
    %94 = arith.addf %93, %92 : vector<8x16xf32>
    %95 = arith.divf %93, %94 : vector<8x16xf32>
    %96 = vector.extract_strided_slice %57 {offsets = [0, 16], sizes = [8, 16], strides = [1, 1]} : vector<8x48xf32> to vector<8x16xf32>
    %97 = vector.extract_strided_slice %61 {offsets = [0, 16], sizes = [8, 16], strides = [1, 1]} : vector<8x48xf32> to vector<8x16xf32>
    %98 = arith.addf %96, %97 : vector<8x16xf32>
    %99 = arith.negf %98 : vector<8x16xf32>
    %100 = math.exp %99 : vector<8x16xf32>
    %cst_67 = arith.constant 1.000000e+00 : f32
    %101 = vector.broadcast %cst_67 : f32 to vector<8x16xf32>
    %102 = arith.addf %101, %100 : vector<8x16xf32>
    %103 = arith.divf %101, %102 : vector<8x16xf32>
    %104 = vector.extract_strided_slice %57 {offsets = [0, 32], sizes = [8, 16], strides = [1, 1]} : vector<8x48xf32> to vector<8x16xf32>
    %105 = vector.extract_strided_slice %61 {offsets = [0, 32], sizes = [8, 16], strides = [1, 1]} : vector<8x48xf32> to vector<8x16xf32>
    %106 = vector.broadcast %42 : vector<1x16xf32> to vector<8x16xf32>
    %107 = arith.addf %105, %106 : vector<8x16xf32>
    %108 = arith.mulf %95, %107 : vector<8x16xf32>
    %109 = arith.addf %104, %108 : vector<8x16xf32>
    %110 = math.tanh %109 : vector<8x16xf32>
    %111 = arith.subf %46, %110 : vector<8x16xf32>
    %112 = arith.mulf %103, %111 : vector<8x16xf32>
    %113 = arith.addf %110, %112 : vector<8x16xf32>
    %114 = arith.index_cast %49 : i32 to index
    %c0_68 = arith.constant 0 : index
    %115 = vector.load %arg1[%114, %c0_68] : memref<64x16xbf16, #tpu.memory_space<vmem>>, vector<8x16xbf16>
    %116 = arith.extf %115 : vector<8x16xbf16> to vector<8x16xf32>
    %117 = arith.addf %87, %116 : vector<8x16xf32>
    %118 = arith.index_cast %51 : i32 to index
    %c0_69 = arith.constant 0 : index
    %119 = vector.load %arg4[%118, %c0_69] : memref<64x16xbf16, #tpu.memory_space<vmem>>, vector<8x16xbf16>
    %120 = arith.extf %119 : vector<8x16xbf16> to vector<8x16xf32>
    %121 = arith.addf %113, %120 : vector<8x16xf32>
    %122 = arith.truncf %117 : vector<8x16xf32> to vector<8x16xbf16>
    %123 = arith.index_cast %49 : i32 to index
    %c0_70 = arith.constant 0 : index
    %124 = vector.load %arg9[%123, %c0_70] : memref<64x16xbf16, #tpu.memory_space<vmem>>, vector<8x16xbf16>
    tpu.vector_store %arg9[%123, %c0_70], %122 {strides = array<i32>} : memref<64x16xbf16, #tpu.memory_space<vmem>>, vector<8x16xbf16>,
    %125 = arith.truncf %121 : vector<8x16xf32> to vector<8x16xbf16>
    %126 = arith.index_cast %51 : i32 to index
    %c0_71 = arith.constant 0 : index
    %127 = vector.load %arg10[%126, %c0_71] : memref<64x16xbf16, #tpu.memory_space<vmem>>, vector<8x16xbf16>
    tpu.vector_store %arg10[%126, %c0_71], %125 {strides = array<i32>} : memref<64x16xbf16, #tpu.memory_space<vmem>>, vector<8x16xbf16>,
    %c1_i32 = arith.constant 1 : i32
    %c7_i32_72 = arith.constant 7 : i32
    %128 = arith.subi %c7_i32_72, %c1_i32 : i32
    %c8_i32_73 = arith.constant 8 : i32
    %129 = arith.muli %c1_i32, %c8_i32_73 : i32
    %130 = tpu.assume_multiple %129, 8 : i32
    %c8_i32_74 = arith.constant 8 : i32
    %131 = arith.muli %128, %c8_i32_74 : i32
    %132 = tpu.assume_multiple %131, 8 : i32
    %c0_75 = arith.constant 0 : index
    %133 = arith.index_cast %130 : i32 to index
    %c0_76 = arith.constant 0 : index
    %134 = vector.load %arg11[%c0_75, %133, %c0_76] : memref<2x64x48xf32, #tpu.memory_space<vmem>>, vector<1x8x48xf32>
    %135 = vector.shape_cast %134 : vector<1x8x48xf32> to vector<8x48xf32>
    %c1_77 = arith.constant 1 : index
    %136 = arith.index_cast %132 : i32 to index
    %c0_78 = arith.constant 0 : index
    %137 = vector.load %arg11[%c1_77, %136, %c0_78] : memref<2x64x48xf32, #tpu.memory_space<vmem>>, vector<1x8x48xf32>
    %138 = vector.shape_cast %137 : vector<1x8x48xf32> to vector<8x48xf32>
    %139 = arith.truncf %87 : vector<8x16xf32> to vector<8x16xbf16>
    %cst_79 = arith.constant dense<0.000000e+00> : vector<8x48xf32>
    %140 = tpu.matmul %139, %36, %cst_79 {dimension_numbers = #tpu.dot_dimension_numbers<[1], [0], [0], [1], [0, 0, 1, 1], [], []>} : vector<8x16xbf16>, vector<16x48xbf16>, vector<8x48xf32> -> vector<8x48xf32>
    %141 = arith.truncf %113 : vector<8x16xf32> to vector<8x16xbf16>
    %cst_80 = arith.constant dense<0.000000e+00> : vector<8x48xf32>
    %142 = tpu.matmul %141, %38, %cst_80 {dimension_numbers = #tpu.dot_dimension_numbers<[1], [0], [0], [1], [0, 0, 1, 1], [], []>} : vector<8x16xbf16>, vector<16x48xbf16>, vector<8x48xf32> -> vector<8x48xf32>
    %143 = vector.extract_strided_slice %135 {offsets = [0, 0], sizes = [8, 16], strides = [1, 1]} : vector<8x48xf32> to vector<8x16xf32>
    %144 = vector.extract_strided_slice %140 {offsets = [0, 0], sizes = [8, 16], strides = [1, 1]} : vector<8x48xf32> to vector<8x16xf32>
    %145 = arith.addf %143, %144 : vector<8x16xf32>
    %146 = arith.negf %145 : vector<8x16xf32>
    %147 = math.exp %146 : vector<8x16xf32>
    %cst_81 = arith.constant 1.000000e+00 : f32
    %148 = vector.broadcast %cst_81 : f32 to vector<8x16xf32>
    %149 = arith.addf %148, %147 : vector<8x16xf32>
    %150 = arith.divf %148, %149 : vector<8x16xf32>
    %151 = vector.extract_strided_slice %135 {offsets = [0, 16], sizes = [8, 16], strides = [1, 1]} : vector<8x48xf32> to vector<8x16xf32>
    %152 = vector.extract_strided_slice %140 {offsets = [0, 16], sizes = [8, 16], strides = [1, 1]} : vector<8x48xf32> to vector<8x16xf32>
    %153 = arith.addf %151, %152 : vector<8x16xf32>
    %154 = arith.negf %153 : vector<8x16xf32>
    %155 = math.exp %154 : vector<8x16xf32>
    %cst_82 = arith.constant 1.000000e+00 : f32
    %156 = vector.broadcast %cst_82 : f32 to vector<8x16xf32>
    %157 = arith.addf %156, %155 : vector<8x16xf32>
    %158 = arith.divf %156, %157 : vector<8x16xf32>
    %159 = vector.extract_strided_slice %135 {offsets = [0, 32], sizes = [8, 16], strides = [1, 1]} : vector<8x48xf32> to vector<8x16xf32>
    %160 = vector.extract_strided_slice %140 {offsets = [0, 32], sizes = [8, 16], strides = [1, 1]} : vector<8x48xf32> to vector<8x16xf32>
    %161 = vector.broadcast %40 : vector<1x16xf32> to vector<8x16xf32>
    %162 = arith.addf %160, %161 : vector<8x16xf32>
    %163 = arith.mulf %150, %162 : vector<8x16xf32>
    %164 = arith.addf %159, %163 : vector<8x16xf32>
    %165 = math.tanh %164 : vector<8x16xf32>
    %166 = arith.subf %87, %165 : vector<8x16xf32>
    %167 = arith.mulf %158, %166 : vector<8x16xf32>
    %168 = arith.addf %165, %167 : vector<8x16xf32>
    %169 = vector.extract_strided_slice %138 {offsets = [0, 0], sizes = [8, 16], strides = [1, 1]} : vector<8x48xf32> to vector<8x16xf32>
    %170 = vector.extract_strided_slice %142 {offsets = [0, 0], sizes = [8, 16], strides = [1, 1]} : vector<8x48xf32> to vector<8x16xf32>
    %171 = arith.addf %169, %170 : vector<8x16xf32>
    %172 = arith.negf %171 : vector<8x16xf32>
    %173 = math.exp %172 : vector<8x16xf32>
    %cst_83 = arith.constant 1.000000e+00 : f32
    %174 = vector.broadcast %cst_83 : f32 to vector<8x16xf32>
    %175 = arith.addf %174, %173 : vector<8x16xf32>
    %176 = arith.divf %174, %175 : vector<8x16xf32>
    %177 = vector.extract_strided_slice %138 {offsets = [0, 16], sizes = [8, 16], strides = [1, 1]} : vector<8x48xf32> to vector<8x16xf32>
    %178 = vector.extract_strided_slice %142 {offsets = [0, 16], sizes = [8, 16], strides = [1, 1]} : vector<8x48xf32> to vector<8x16xf32>
    %179 = arith.addf %177, %178 : vector<8x16xf32>
    %180 = arith.negf %179 : vector<8x16xf32>
    %181 = math.exp %180 : vector<8x16xf32>
    %cst_84 = arith.constant 1.000000e+00 : f32
    %182 = vector.broadcast %cst_84 : f32 to vector<8x16xf32>
    %183 = arith.addf %182, %181 : vector<8x16xf32>
    %184 = arith.divf %182, %183 : vector<8x16xf32>
    %185 = vector.extract_strided_slice %138 {offsets = [0, 32], sizes = [8, 16], strides = [1, 1]} : vector<8x48xf32> to vector<8x16xf32>
    %186 = vector.extract_strided_slice %142 {offsets = [0, 32], sizes = [8, 16], strides = [1, 1]} : vector<8x48xf32> to vector<8x16xf32>
    %187 = vector.broadcast %42 : vector<1x16xf32> to vector<8x16xf32>
    %188 = arith.addf %186, %187 : vector<8x16xf32>
    %189 = arith.mulf %176, %188 : vector<8x16xf32>
    %190 = arith.addf %185, %189 : vector<8x16xf32>
    %191 = math.tanh %190 : vector<8x16xf32>
    %192 = arith.subf %113, %191 : vector<8x16xf32>
    %193 = arith.mulf %184, %192 : vector<8x16xf32>
    %194 = arith.addf %191, %193 : vector<8x16xf32>
    %195 = arith.index_cast %130 : i32 to index
    %c0_85 = arith.constant 0 : index
    %196 = vector.load %arg1[%195, %c0_85] : memref<64x16xbf16, #tpu.memory_space<vmem>>, vector<8x16xbf16>
    %197 = arith.extf %196 : vector<8x16xbf16> to vector<8x16xf32>
    %198 = arith.addf %168, %197 : vector<8x16xf32>
    %199 = arith.index_cast %132 : i32 to index
    %c0_86 = arith.constant 0 : index
    %200 = vector.load %arg4[%199, %c0_86] : memref<64x16xbf16, #tpu.memory_space<vmem>>, vector<8x16xbf16>
    %201 = arith.extf %200 : vector<8x16xbf16> to vector<8x16xf32>
    %202 = arith.addf %194, %201 : vector<8x16xf32>
    %203 = arith.truncf %198 : vector<8x16xf32> to vector<8x16xbf16>
    %204 = arith.index_cast %130 : i32 to index
    %c0_87 = arith.constant 0 : index
    %205 = vector.load %arg9[%204, %c0_87] : memref<64x16xbf16, #tpu.memory_space<vmem>>, vector<8x16xbf16>
    tpu.vector_store %arg9[%204, %c0_87], %203 {strides = array<i32>} : memref<64x16xbf16, #tpu.memory_space<vmem>>, vector<8x16xbf16>,
    %206 = arith.truncf %202 : vector<8x16xf32> to vector<8x16xbf16>
    %207 = arith.index_cast %132 : i32 to index
    %c0_88 = arith.constant 0 : index
    %208 = vector.load %arg10[%207, %c0_88] : memref<64x16xbf16, #tpu.memory_space<vmem>>, vector<8x16xbf16>
    tpu.vector_store %arg10[%207, %c0_88], %206 {strides = array<i32>} : memref<64x16xbf16, #tpu.memory_space<vmem>>, vector<8x16xbf16>,
    %c2_i32 = arith.constant 2 : i32
    %c7_i32_89 = arith.constant 7 : i32
    %209 = arith.subi %c7_i32_89, %c2_i32 : i32
    %c8_i32_90 = arith.constant 8 : i32
    %210 = arith.muli %c2_i32, %c8_i32_90 : i32
    %211 = tpu.assume_multiple %210, 8 : i32
    %c8_i32_91 = arith.constant 8 : i32
    %212 = arith.muli %209, %c8_i32_91 : i32
    %213 = tpu.assume_multiple %212, 8 : i32
    %c0_92 = arith.constant 0 : index
    %214 = arith.index_cast %211 : i32 to index
    %c0_93 = arith.constant 0 : index
    %215 = vector.load %arg11[%c0_92, %214, %c0_93] : memref<2x64x48xf32, #tpu.memory_space<vmem>>, vector<1x8x48xf32>
    %216 = vector.shape_cast %215 : vector<1x8x48xf32> to vector<8x48xf32>
    %c1_94 = arith.constant 1 : index
    %217 = arith.index_cast %213 : i32 to index
    %c0_95 = arith.constant 0 : index
    %218 = vector.load %arg11[%c1_94, %217, %c0_95] : memref<2x64x48xf32, #tpu.memory_space<vmem>>, vector<1x8x48xf32>
    %219 = vector.shape_cast %218 : vector<1x8x48xf32> to vector<8x48xf32>
    %220 = arith.truncf %168 : vector<8x16xf32> to vector<8x16xbf16>
    %cst_96 = arith.constant dense<0.000000e+00> : vector<8x48xf32>
    %221 = tpu.matmul %220, %36, %cst_96 {dimension_numbers = #tpu.dot_dimension_numbers<[1], [0], [0], [1], [0, 0, 1, 1], [], []>} : vector<8x16xbf16>, vector<16x48xbf16>, vector<8x48xf32> -> vector<8x48xf32>
    %222 = arith.truncf %194 : vector<8x16xf32> to vector<8x16xbf16>
    %cst_97 = arith.constant dense<0.000000e+00> : vector<8x48xf32>
    %223 = tpu.matmul %222, %38, %cst_97 {dimension_numbers = #tpu.dot_dimension_numbers<[1], [0], [0], [1], [0, 0, 1, 1], [], []>} : vector<8x16xbf16>, vector<16x48xbf16>, vector<8x48xf32> -> vector<8x48xf32>
    %224 = vector.extract_strided_slice %216 {offsets = [0, 0], sizes = [8, 16], strides = [1, 1]} : vector<8x48xf32> to vector<8x16xf32>
    %225 = vector.extract_strided_slice %221 {offsets = [0, 0], sizes = [8, 16], strides = [1, 1]} : vector<8x48xf32> to vector<8x16xf32>
    %226 = arith.addf %224, %225 : vector<8x16xf32>
    %227 = arith.negf %226 : vector<8x16xf32>
    %228 = math.exp %227 : vector<8x16xf32>
    %cst_98 = arith.constant 1.000000e+00 : f32
    %229 = vector.broadcast %cst_98 : f32 to vector<8x16xf32>
    %230 = arith.addf %229, %228 : vector<8x16xf32>
    %231 = arith.divf %229, %230 : vector<8x16xf32>
    %232 = vector.extract_strided_slice %216 {offsets = [0, 16], sizes = [8, 16], strides = [1, 1]} : vector<8x48xf32> to vector<8x16xf32>
    %233 = vector.extract_strided_slice %221 {offsets = [0, 16], sizes = [8, 16], strides = [1, 1]} : vector<8x48xf32> to vector<8x16xf32>
    %234 = arith.addf %232, %233 : vector<8x16xf32>
    %235 = arith.negf %234 : vector<8x16xf32>
    %236 = math.exp %235 : vector<8x16xf32>
    %cst_99 = arith.constant 1.000000e+00 : f32
    %237 = vector.broadcast %cst_99 : f32 to vector<8x16xf32>
    %238 = arith.addf %237, %236 : vector<8x16xf32>
    %239 = arith.divf %237, %238 : vector<8x16xf32>
    %240 = vector.extract_strided_slice %216 {offsets = [0, 32], sizes = [8, 16], strides = [1, 1]} : vector<8x48xf32> to vector<8x16xf32>
    %241 = vector.extract_strided_slice %221 {offsets = [0, 32], sizes = [8, 16], strides = [1, 1]} : vector<8x48xf32> to vector<8x16xf32>
    %242 = vector.broadcast %40 : vector<1x16xf32> to vector<8x16xf32>
    %243 = arith.addf %241, %242 : vector<8x16xf32>
    %244 = arith.mulf %231, %243 : vector<8x16xf32>
    %245 = arith.addf %240, %244 : vector<8x16xf32>
    %246 = math.tanh %245 : vector<8x16xf32>
    %247 = arith.subf %168, %246 : vector<8x16xf32>
    %248 = arith.mulf %239, %247 : vector<8x16xf32>
    %249 = arith.addf %246, %248 : vector<8x16xf32>
    %250 = vector.extract_strided_slice %219 {offsets = [0, 0], sizes = [8, 16], strides = [1, 1]} : vector<8x48xf32> to vector<8x16xf32>
    %251 = vector.extract_strided_slice %223 {offsets = [0, 0], sizes = [8, 16], strides = [1, 1]} : vector<8x48xf32> to vector<8x16xf32>
    %252 = arith.addf %250, %251 : vector<8x16xf32>
    %253 = arith.negf %252 : vector<8x16xf32>
    %254 = math.exp %253 : vector<8x16xf32>
    %cst_100 = arith.constant 1.000000e+00 : f32
    %255 = vector.broadcast %cst_100 : f32 to vector<8x16xf32>
    %256 = arith.addf %255, %254 : vector<8x16xf32>
    %257 = arith.divf %255, %256 : vector<8x16xf32>
    %258 = vector.extract_strided_slice %219 {offsets = [0, 16], sizes = [8, 16], strides = [1, 1]} : vector<8x48xf32> to vector<8x16xf32>
    %259 = vector.extract_strided_slice %223 {offsets = [0, 16], sizes = [8, 16], strides = [1, 1]} : vector<8x48xf32> to vector<8x16xf32>
    %260 = arith.addf %258, %259 : vector<8x16xf32>
    %261 = arith.negf %260 : vector<8x16xf32>
    %262 = math.exp %261 : vector<8x16xf32>
    %cst_101 = arith.constant 1.000000e+00 : f32
    %263 = vector.broadcast %cst_101 : f32 to vector<8x16xf32>
    %264 = arith.addf %263, %262 : vector<8x16xf32>
    %265 = arith.divf %263, %264 : vector<8x16xf32>
    %266 = vector.extract_strided_slice %219 {offsets = [0, 32], sizes = [8, 16], strides = [1, 1]} : vector<8x48xf32> to vector<8x16xf32>
    %267 = vector.extract_strided_slice %223 {offsets = [0, 32], sizes = [8, 16], strides = [1, 1]} : vector<8x48xf32> to vector<8x16xf32>
    %268 = vector.broadcast %42 : vector<1x16xf32> to vector<8x16xf32>
    %269 = arith.addf %267, %268 : vector<8x16xf32>
    %270 = arith.mulf %257, %269 : vector<8x16xf32>
    %271 = arith.addf %266, %270 : vector<8x16xf32>
    %272 = math.tanh %271 : vector<8x16xf32>
    %273 = arith.subf %194, %272 : vector<8x16xf32>
    %274 = arith.mulf %265, %273 : vector<8x16xf32>
    %275 = arith.addf %272, %274 : vector<8x16xf32>
    %276 = arith.index_cast %211 : i32 to index
    %c0_102 = arith.constant 0 : index
    %277 = vector.load %arg1[%276, %c0_102] : memref<64x16xbf16, #tpu.memory_space<vmem>>, vector<8x16xbf16>
    %278 = arith.extf %277 : vector<8x16xbf16> to vector<8x16xf32>
    %279 = arith.addf %249, %278 : vector<8x16xf32>
    %280 = arith.index_cast %213 : i32 to index
    %c0_103 = arith.constant 0 : index
    %281 = vector.load %arg4[%280, %c0_103] : memref<64x16xbf16, #tpu.memory_space<vmem>>, vector<8x16xbf16>
    %282 = arith.extf %281 : vector<8x16xbf16> to vector<8x16xf32>
    %283 = arith.addf %275, %282 : vector<8x16xf32>
    %284 = arith.truncf %279 : vector<8x16xf32> to vector<8x16xbf16>
    %285 = arith.index_cast %211 : i32 to index
    %c0_104 = arith.constant 0 : index
    %286 = vector.load %arg9[%285, %c0_104] : memref<64x16xbf16, #tpu.memory_space<vmem>>, vector<8x16xbf16>
    tpu.vector_store %arg9[%285, %c0_104], %284 {strides = array<i32>} : memref<64x16xbf16, #tpu.memory_space<vmem>>, vector<8x16xbf16>,
    %287 = arith.truncf %283 : vector<8x16xf32> to vector<8x16xbf16>
    %288 = arith.index_cast %213 : i32 to index
    %c0_105 = arith.constant 0 : index
    %289 = vector.load %arg10[%288, %c0_105] : memref<64x16xbf16, #tpu.memory_space<vmem>>, vector<8x16xbf16>
    tpu.vector_store %arg10[%288, %c0_105], %287 {strides = array<i32>} : memref<64x16xbf16, #tpu.memory_space<vmem>>, vector<8x16xbf16>,
    %c3_i32 = arith.constant 3 : i32
    %c7_i32_106 = arith.constant 7 : i32
    %290 = arith.subi %c7_i32_106, %c3_i32 : i32
    %c8_i32_107 = arith.constant 8 : i32
    %291 = arith.muli %c3_i32, %c8_i32_107 : i32
    %292 = tpu.assume_multiple %291, 8 : i32
    %c8_i32_108 = arith.constant 8 : i32
    %293 = arith.muli %290, %c8_i32_108 : i32
    %294 = tpu.assume_multiple %293, 8 : i32
    %c0_109 = arith.constant 0 : index
    %295 = arith.index_cast %292 : i32 to index
    %c0_110 = arith.constant 0 : index
    %296 = vector.load %arg11[%c0_109, %295, %c0_110] : memref<2x64x48xf32, #tpu.memory_space<vmem>>, vector<1x8x48xf32>
    %297 = vector.shape_cast %296 : vector<1x8x48xf32> to vector<8x48xf32>
    %c1_111 = arith.constant 1 : index
    %298 = arith.index_cast %294 : i32 to index
    %c0_112 = arith.constant 0 : index
    %299 = vector.load %arg11[%c1_111, %298, %c0_112] : memref<2x64x48xf32, #tpu.memory_space<vmem>>, vector<1x8x48xf32>
    %300 = vector.shape_cast %299 : vector<1x8x48xf32> to vector<8x48xf32>
    %301 = arith.truncf %249 : vector<8x16xf32> to vector<8x16xbf16>
    %cst_113 = arith.constant dense<0.000000e+00> : vector<8x48xf32>
    %302 = tpu.matmul %301, %36, %cst_113 {dimension_numbers = #tpu.dot_dimension_numbers<[1], [0], [0], [1], [0, 0, 1, 1], [], []>} : vector<8x16xbf16>, vector<16x48xbf16>, vector<8x48xf32> -> vector<8x48xf32>
    %303 = arith.truncf %275 : vector<8x16xf32> to vector<8x16xbf16>
    %cst_114 = arith.constant dense<0.000000e+00> : vector<8x48xf32>
    %304 = tpu.matmul %303, %38, %cst_114 {dimension_numbers = #tpu.dot_dimension_numbers<[1], [0], [0], [1], [0, 0, 1, 1], [], []>} : vector<8x16xbf16>, vector<16x48xbf16>, vector<8x48xf32> -> vector<8x48xf32>
    %305 = vector.extract_strided_slice %297 {offsets = [0, 0], sizes = [8, 16], strides = [1, 1]} : vector<8x48xf32> to vector<8x16xf32>
    %306 = vector.extract_strided_slice %302 {offsets = [0, 0], sizes = [8, 16], strides = [1, 1]} : vector<8x48xf32> to vector<8x16xf32>
    %307 = arith.addf %305, %306 : vector<8x16xf32>
    %308 = arith.negf %307 : vector<8x16xf32>
    %309 = math.exp %308 : vector<8x16xf32>
    %cst_115 = arith.constant 1.000000e+00 : f32
    %310 = vector.broadcast %cst_115 : f32 to vector<8x16xf32>
    %311 = arith.addf %310, %309 : vector<8x16xf32>
    %312 = arith.divf %310, %311 : vector<8x16xf32>
    %313 = vector.extract_strided_slice %297 {offsets = [0, 16], sizes = [8, 16], strides = [1, 1]} : vector<8x48xf32> to vector<8x16xf32>
    %314 = vector.extract_strided_slice %302 {offsets = [0, 16], sizes = [8, 16], strides = [1, 1]} : vector<8x48xf32> to vector<8x16xf32>
    %315 = arith.addf %313, %314 : vector<8x16xf32>
    %316 = arith.negf %315 : vector<8x16xf32>
    %317 = math.exp %316 : vector<8x16xf32>
    %cst_116 = arith.constant 1.000000e+00 : f32
    %318 = vector.broadcast %cst_116 : f32 to vector<8x16xf32>
    %319 = arith.addf %318, %317 : vector<8x16xf32>
    %320 = arith.divf %318, %319 : vector<8x16xf32>
    %321 = vector.extract_strided_slice %297 {offsets = [0, 32], sizes = [8, 16], strides = [1, 1]} : vector<8x48xf32> to vector<8x16xf32>
    %322 = vector.extract_strided_slice %302 {offsets = [0, 32], sizes = [8, 16], strides = [1, 1]} : vector<8x48xf32> to vector<8x16xf32>
    %323 = vector.broadcast %40 : vector<1x16xf32> to vector<8x16xf32>
    %324 = arith.addf %322, %323 : vector<8x16xf32>
    %325 = arith.mulf %312, %324 : vector<8x16xf32>
    %326 = arith.addf %321, %325 : vector<8x16xf32>
    %327 = math.tanh %326 : vector<8x16xf32>
    %328 = arith.subf %249, %327 : vector<8x16xf32>
    %329 = arith.mulf %320, %328 : vector<8x16xf32>
    %330 = arith.addf %327, %329 : vector<8x16xf32>
    %331 = vector.extract_strided_slice %300 {offsets = [0, 0], sizes = [8, 16], strides = [1, 1]} : vector<8x48xf32> to vector<8x16xf32>
    %332 = vector.extract_strided_slice %304 {offsets = [0, 0], sizes = [8, 16], strides = [1, 1]} : vector<8x48xf32> to vector<8x16xf32>
    %333 = arith.addf %331, %332 : vector<8x16xf32>
    %334 = arith.negf %333 : vector<8x16xf32>
    %335 = math.exp %334 : vector<8x16xf32>
    %cst_117 = arith.constant 1.000000e+00 : f32
    %336 = vector.broadcast %cst_117 : f32 to vector<8x16xf32>
    %337 = arith.addf %336, %335 : vector<8x16xf32>
    %338 = arith.divf %336, %337 : vector<8x16xf32>
    %339 = vector.extract_strided_slice %300 {offsets = [0, 16], sizes = [8, 16], strides = [1, 1]} : vector<8x48xf32> to vector<8x16xf32>
    %340 = vector.extract_strided_slice %304 {offsets = [0, 16], sizes = [8, 16], strides = [1, 1]} : vector<8x48xf32> to vector<8x16xf32>
    %341 = arith.addf %339, %340 : vector<8x16xf32>
    %342 = arith.negf %341 : vector<8x16xf32>
    %343 = math.exp %342 : vector<8x16xf32>
    %cst_118 = arith.constant 1.000000e+00 : f32
    %344 = vector.broadcast %cst_118 : f32 to vector<8x16xf32>
    %345 = arith.addf %344, %343 : vector<8x16xf32>
    %346 = arith.divf %344, %345 : vector<8x16xf32>
    %347 = vector.extract_strided_slice %300 {offsets = [0, 32], sizes = [8, 16], strides = [1, 1]} : vector<8x48xf32> to vector<8x16xf32>
    %348 = vector.extract_strided_slice %304 {offsets = [0, 32], sizes = [8, 16], strides = [1, 1]} : vector<8x48xf32> to vector<8x16xf32>
    %349 = vector.broadcast %42 : vector<1x16xf32> to vector<8x16xf32>
    %350 = arith.addf %348, %349 : vector<8x16xf32>
    %351 = arith.mulf %338, %350 : vector<8x16xf32>
    %352 = arith.addf %347, %351 : vector<8x16xf32>
    %353 = math.tanh %352 : vector<8x16xf32>
    %354 = arith.subf %275, %353 : vector<8x16xf32>
    %355 = arith.mulf %346, %354 : vector<8x16xf32>
    %356 = arith.addf %353, %355 : vector<8x16xf32>
    %357 = arith.index_cast %292 : i32 to index
    %c0_119 = arith.constant 0 : index
    %358 = vector.load %arg1[%357, %c0_119] : memref<64x16xbf16, #tpu.memory_space<vmem>>, vector<8x16xbf16>
    %359 = arith.extf %358 : vector<8x16xbf16> to vector<8x16xf32>
    %360 = arith.addf %330, %359 : vector<8x16xf32>
    %361 = arith.index_cast %294 : i32 to index
    %c0_120 = arith.constant 0 : index
    %362 = vector.load %arg4[%361, %c0_120] : memref<64x16xbf16, #tpu.memory_space<vmem>>, vector<8x16xbf16>
    %363 = arith.extf %362 : vector<8x16xbf16> to vector<8x16xf32>
    %364 = arith.addf %356, %363 : vector<8x16xf32>
    %365 = arith.truncf %360 : vector<8x16xf32> to vector<8x16xbf16>
    %366 = arith.index_cast %292 : i32 to index
    %c0_121 = arith.constant 0 : index
    %367 = vector.load %arg9[%366, %c0_121] : memref<64x16xbf16, #tpu.memory_space<vmem>>, vector<8x16xbf16>
    tpu.vector_store %arg9[%366, %c0_121], %365 {strides = array<i32>} : memref<64x16xbf16, #tpu.memory_space<vmem>>, vector<8x16xbf16>,
    %368 = arith.truncf %364 : vector<8x16xf32> to vector<8x16xbf16>
    %369 = arith.index_cast %294 : i32 to index
    %c0_122 = arith.constant 0 : index
    %370 = vector.load %arg10[%369, %c0_122] : memref<64x16xbf16, #tpu.memory_space<vmem>>, vector<8x16xbf16>
    tpu.vector_store %arg10[%369, %c0_122], %368 {strides = array<i32>} : memref<64x16xbf16, #tpu.memory_space<vmem>>, vector<8x16xbf16>,
    %c4_i32 = arith.constant 4 : i32
    %c7_i32_123 = arith.constant 7 : i32
    %371 = arith.subi %c7_i32_123, %c4_i32 : i32
    %c8_i32_124 = arith.constant 8 : i32
    %372 = arith.muli %c4_i32, %c8_i32_124 : i32
    %373 = tpu.assume_multiple %372, 8 : i32
    %c8_i32_125 = arith.constant 8 : i32
    %374 = arith.muli %371, %c8_i32_125 : i32
    %375 = tpu.assume_multiple %374, 8 : i32
    %c0_126 = arith.constant 0 : index
    %376 = arith.index_cast %373 : i32 to index
    %c0_127 = arith.constant 0 : index
    %377 = vector.load %arg11[%c0_126, %376, %c0_127] : memref<2x64x48xf32, #tpu.memory_space<vmem>>, vector<1x8x48xf32>
    %378 = vector.shape_cast %377 : vector<1x8x48xf32> to vector<8x48xf32>
    %c1_128 = arith.constant 1 : index
    %379 = arith.index_cast %375 : i32 to index
    %c0_129 = arith.constant 0 : index
    %380 = vector.load %arg11[%c1_128, %379, %c0_129] : memref<2x64x48xf32, #tpu.memory_space<vmem>>, vector<1x8x48xf32>
    %381 = vector.shape_cast %380 : vector<1x8x48xf32> to vector<8x48xf32>
    %382 = arith.truncf %330 : vector<8x16xf32> to vector<8x16xbf16>
    %cst_130 = arith.constant dense<0.000000e+00> : vector<8x48xf32>
    %383 = tpu.matmul %382, %36, %cst_130 {dimension_numbers = #tpu.dot_dimension_numbers<[1], [0], [0], [1], [0, 0, 1, 1], [], []>} : vector<8x16xbf16>, vector<16x48xbf16>, vector<8x48xf32> -> vector<8x48xf32>
    %384 = arith.truncf %356 : vector<8x16xf32> to vector<8x16xbf16>
    %cst_131 = arith.constant dense<0.000000e+00> : vector<8x48xf32>
    %385 = tpu.matmul %384, %38, %cst_131 {dimension_numbers = #tpu.dot_dimension_numbers<[1], [0], [0], [1], [0, 0, 1, 1], [], []>} : vector<8x16xbf16>, vector<16x48xbf16>, vector<8x48xf32> -> vector<8x48xf32>
    %386 = vector.extract_strided_slice %378 {offsets = [0, 0], sizes = [8, 16], strides = [1, 1]} : vector<8x48xf32> to vector<8x16xf32>
    %387 = vector.extract_strided_slice %383 {offsets = [0, 0], sizes = [8, 16], strides = [1, 1]} : vector<8x48xf32> to vector<8x16xf32>
    %388 = arith.addf %386, %387 : vector<8x16xf32>
    %389 = arith.negf %388 : vector<8x16xf32>
    %390 = math.exp %389 : vector<8x16xf32>
    %cst_132 = arith.constant 1.000000e+00 : f32
    %391 = vector.broadcast %cst_132 : f32 to vector<8x16xf32>
    %392 = arith.addf %391, %390 : vector<8x16xf32>
    %393 = arith.divf %391, %392 : vector<8x16xf32>
    %394 = vector.extract_strided_slice %378 {offsets = [0, 16], sizes = [8, 16], strides = [1, 1]} : vector<8x48xf32> to vector<8x16xf32>
    %395 = vector.extract_strided_slice %383 {offsets = [0, 16], sizes = [8, 16], strides = [1, 1]} : vector<8x48xf32> to vector<8x16xf32>
    %396 = arith.addf %394, %395 : vector<8x16xf32>
    %397 = arith.negf %396 : vector<8x16xf32>
    %398 = math.exp %397 : vector<8x16xf32>
    %cst_133 = arith.constant 1.000000e+00 : f32
    %399 = vector.broadcast %cst_133 : f32 to vector<8x16xf32>
    %400 = arith.addf %399, %398 : vector<8x16xf32>
    %401 = arith.divf %399, %400 : vector<8x16xf32>
    %402 = vector.extract_strided_slice %378 {offsets = [0, 32], sizes = [8, 16], strides = [1, 1]} : vector<8x48xf32> to vector<8x16xf32>
    %403 = vector.extract_strided_slice %383 {offsets = [0, 32], sizes = [8, 16], strides = [1, 1]} : vector<8x48xf32> to vector<8x16xf32>
    %404 = vector.broadcast %40 : vector<1x16xf32> to vector<8x16xf32>
    %405 = arith.addf %403, %404 : vector<8x16xf32>
    %406 = arith.mulf %393, %405 : vector<8x16xf32>
    %407 = arith.addf %402, %406 : vector<8x16xf32>
    %408 = math.tanh %407 : vector<8x16xf32>
    %409 = arith.subf %330, %408 : vector<8x16xf32>
    %410 = arith.mulf %401, %409 : vector<8x16xf32>
    %411 = arith.addf %408, %410 : vector<8x16xf32>
    %412 = vector.extract_strided_slice %381 {offsets = [0, 0], sizes = [8, 16], strides = [1, 1]} : vector<8x48xf32> to vector<8x16xf32>
    %413 = vector.extract_strided_slice %385 {offsets = [0, 0], sizes = [8, 16], strides = [1, 1]} : vector<8x48xf32> to vector<8x16xf32>
    %414 = arith.addf %412, %413 : vector<8x16xf32>
    %415 = arith.negf %414 : vector<8x16xf32>
    %416 = math.exp %415 : vector<8x16xf32>
    %cst_134 = arith.constant 1.000000e+00 : f32
    %417 = vector.broadcast %cst_134 : f32 to vector<8x16xf32>
    %418 = arith.addf %417, %416 : vector<8x16xf32>
    %419 = arith.divf %417, %418 : vector<8x16xf32>
    %420 = vector.extract_strided_slice %381 {offsets = [0, 16], sizes = [8, 16], strides = [1, 1]} : vector<8x48xf32> to vector<8x16xf32>
    %421 = vector.extract_strided_slice %385 {offsets = [0, 16], sizes = [8, 16], strides = [1, 1]} : vector<8x48xf32> to vector<8x16xf32>
    %422 = arith.addf %420, %421 : vector<8x16xf32>
    %423 = arith.negf %422 : vector<8x16xf32>
    %424 = math.exp %423 : vector<8x16xf32>
    %cst_135 = arith.constant 1.000000e+00 : f32
    %425 = vector.broadcast %cst_135 : f32 to vector<8x16xf32>
    %426 = arith.addf %425, %424 : vector<8x16xf32>
    %427 = arith.divf %425, %426 : vector<8x16xf32>
    %428 = vector.extract_strided_slice %381 {offsets = [0, 32], sizes = [8, 16], strides = [1, 1]} : vector<8x48xf32> to vector<8x16xf32>
    %429 = vector.extract_strided_slice %385 {offsets = [0, 32], sizes = [8, 16], strides = [1, 1]} : vector<8x48xf32> to vector<8x16xf32>
    %430 = vector.broadcast %42 : vector<1x16xf32> to vector<8x16xf32>
    %431 = arith.addf %429, %430 : vector<8x16xf32>
    %432 = arith.mulf %419, %431 : vector<8x16xf32>
    %433 = arith.addf %428, %432 : vector<8x16xf32>
    %434 = math.tanh %433 : vector<8x16xf32>
    %435 = arith.subf %356, %434 : vector<8x16xf32>
    %436 = arith.mulf %427, %435 : vector<8x16xf32>
    %437 = arith.addf %434, %436 : vector<8x16xf32>
    %438 = arith.index_cast %373 : i32 to index
    %c0_136 = arith.constant 0 : index
    %439 = vector.load %arg1[%438, %c0_136] : memref<64x16xbf16, #tpu.memory_space<vmem>>, vector<8x16xbf16>
    %440 = arith.extf %439 : vector<8x16xbf16> to vector<8x16xf32>
    %441 = arith.addf %411, %440 : vector<8x16xf32>
    %442 = arith.index_cast %375 : i32 to index
    %c0_137 = arith.constant 0 : index
    %443 = vector.load %arg4[%442, %c0_137] : memref<64x16xbf16, #tpu.memory_space<vmem>>, vector<8x16xbf16>
    %444 = arith.extf %443 : vector<8x16xbf16> to vector<8x16xf32>
    %445 = arith.addf %437, %444 : vector<8x16xf32>
    %446 = arith.truncf %441 : vector<8x16xf32> to vector<8x16xbf16>
    %447 = arith.index_cast %373 : i32 to index
    %c0_138 = arith.constant 0 : index
    %448 = vector.load %arg9[%447, %c0_138] : memref<64x16xbf16, #tpu.memory_space<vmem>>, vector<8x16xbf16>
    tpu.vector_store %arg9[%447, %c0_138], %446 {strides = array<i32>} : memref<64x16xbf16, #tpu.memory_space<vmem>>, vector<8x16xbf16>,
    %449 = arith.truncf %445 : vector<8x16xf32> to vector<8x16xbf16>
    %450 = arith.index_cast %375 : i32 to index
    %c0_139 = arith.constant 0 : index
    %451 = vector.load %arg10[%450, %c0_139] : memref<64x16xbf16, #tpu.memory_space<vmem>>, vector<8x16xbf16>
    tpu.vector_store %arg10[%450, %c0_139], %449 {strides = array<i32>} : memref<64x16xbf16, #tpu.memory_space<vmem>>, vector<8x16xbf16>,
    %c5_i32 = arith.constant 5 : i32
    %c7_i32_140 = arith.constant 7 : i32
    %452 = arith.subi %c7_i32_140, %c5_i32 : i32
    %c8_i32_141 = arith.constant 8 : i32
    %453 = arith.muli %c5_i32, %c8_i32_141 : i32
    %454 = tpu.assume_multiple %453, 8 : i32
    %c8_i32_142 = arith.constant 8 : i32
    %455 = arith.muli %452, %c8_i32_142 : i32
    %456 = tpu.assume_multiple %455, 8 : i32
    %c0_143 = arith.constant 0 : index
    %457 = arith.index_cast %454 : i32 to index
    %c0_144 = arith.constant 0 : index
    %458 = vector.load %arg11[%c0_143, %457, %c0_144] : memref<2x64x48xf32, #tpu.memory_space<vmem>>, vector<1x8x48xf32>
    %459 = vector.shape_cast %458 : vector<1x8x48xf32> to vector<8x48xf32>
    %c1_145 = arith.constant 1 : index
    %460 = arith.index_cast %456 : i32 to index
    %c0_146 = arith.constant 0 : index
    %461 = vector.load %arg11[%c1_145, %460, %c0_146] : memref<2x64x48xf32, #tpu.memory_space<vmem>>, vector<1x8x48xf32>
    %462 = vector.shape_cast %461 : vector<1x8x48xf32> to vector<8x48xf32>
    %463 = arith.truncf %411 : vector<8x16xf32> to vector<8x16xbf16>
    %cst_147 = arith.constant dense<0.000000e+00> : vector<8x48xf32>
    %464 = tpu.matmul %463, %36, %cst_147 {dimension_numbers = #tpu.dot_dimension_numbers<[1], [0], [0], [1], [0, 0, 1, 1], [], []>} : vector<8x16xbf16>, vector<16x48xbf16>, vector<8x48xf32> -> vector<8x48xf32>
    %465 = arith.truncf %437 : vector<8x16xf32> to vector<8x16xbf16>
    %cst_148 = arith.constant dense<0.000000e+00> : vector<8x48xf32>
    %466 = tpu.matmul %465, %38, %cst_148 {dimension_numbers = #tpu.dot_dimension_numbers<[1], [0], [0], [1], [0, 0, 1, 1], [], []>} : vector<8x16xbf16>, vector<16x48xbf16>, vector<8x48xf32> -> vector<8x48xf32>
    %467 = vector.extract_strided_slice %459 {offsets = [0, 0], sizes = [8, 16], strides = [1, 1]} : vector<8x48xf32> to vector<8x16xf32>
    %468 = vector.extract_strided_slice %464 {offsets = [0, 0], sizes = [8, 16], strides = [1, 1]} : vector<8x48xf32> to vector<8x16xf32>
    %469 = arith.addf %467, %468 : vector<8x16xf32>
    %470 = arith.negf %469 : vector<8x16xf32>
    %471 = math.exp %470 : vector<8x16xf32>
    %cst_149 = arith.constant 1.000000e+00 : f32
    %472 = vector.broadcast %cst_149 : f32 to vector<8x16xf32>
    %473 = arith.addf %472, %471 : vector<8x16xf32>
    %474 = arith.divf %472, %473 : vector<8x16xf32>
    %475 = vector.extract_strided_slice %459 {offsets = [0, 16], sizes = [8, 16], strides = [1, 1]} : vector<8x48xf32> to vector<8x16xf32>
    %476 = vector.extract_strided_slice %464 {offsets = [0, 16], sizes = [8, 16], strides = [1, 1]} : vector<8x48xf32> to vector<8x16xf32>
    %477 = arith.addf %475, %476 : vector<8x16xf32>
    %478 = arith.negf %477 : vector<8x16xf32>
    %479 = math.exp %478 : vector<8x16xf32>
    %cst_150 = arith.constant 1.000000e+00 : f32
    %480 = vector.broadcast %cst_150 : f32 to vector<8x16xf32>
    %481 = arith.addf %480, %479 : vector<8x16xf32>
    %482 = arith.divf %480, %481 : vector<8x16xf32>
    %483 = vector.extract_strided_slice %459 {offsets = [0, 32], sizes = [8, 16], strides = [1, 1]} : vector<8x48xf32> to vector<8x16xf32>
    %484 = vector.extract_strided_slice %464 {offsets = [0, 32], sizes = [8, 16], strides = [1, 1]} : vector<8x48xf32> to vector<8x16xf32>
    %485 = vector.broadcast %40 : vector<1x16xf32> to vector<8x16xf32>
    %486 = arith.addf %484, %485 : vector<8x16xf32>
    %487 = arith.mulf %474, %486 : vector<8x16xf32>
    %488 = arith.addf %483, %487 : vector<8x16xf32>
    %489 = math.tanh %488 : vector<8x16xf32>
    %490 = arith.subf %411, %489 : vector<8x16xf32>
    %491 = arith.mulf %482, %490 : vector<8x16xf32>
    %492 = arith.addf %489, %491 : vector<8x16xf32>
    %493 = vector.extract_strided_slice %462 {offsets = [0, 0], sizes = [8, 16], strides = [1, 1]} : vector<8x48xf32> to vector<8x16xf32>
    %494 = vector.extract_strided_slice %466 {offsets = [0, 0], sizes = [8, 16], strides = [1, 1]} : vector<8x48xf32> to vector<8x16xf32>
    %495 = arith.addf %493, %494 : vector<8x16xf32>
    %496 = arith.negf %495 : vector<8x16xf32>
    %497 = math.exp %496 : vector<8x16xf32>
    %cst_151 = arith.constant 1.000000e+00 : f32
    %498 = vector.broadcast %cst_151 : f32 to vector<8x16xf32>
    %499 = arith.addf %498, %497 : vector<8x16xf32>
    %500 = arith.divf %498, %499 : vector<8x16xf32>
    %501 = vector.extract_strided_slice %462 {offsets = [0, 16], sizes = [8, 16], strides = [1, 1]} : vector<8x48xf32> to vector<8x16xf32>
    %502 = vector.extract_strided_slice %466 {offsets = [0, 16], sizes = [8, 16], strides = [1, 1]} : vector<8x48xf32> to vector<8x16xf32>
    %503 = arith.addf %501, %502 : vector<8x16xf32>
    %504 = arith.negf %503 : vector<8x16xf32>
    %505 = math.exp %504 : vector<8x16xf32>
    %cst_152 = arith.constant 1.000000e+00 : f32
    %506 = vector.broadcast %cst_152 : f32 to vector<8x16xf32>
    %507 = arith.addf %506, %505 : vector<8x16xf32>
    %508 = arith.divf %506, %507 : vector<8x16xf32>
    %509 = vector.extract_strided_slice %462 {offsets = [0, 32], sizes = [8, 16], strides = [1, 1]} : vector<8x48xf32> to vector<8x16xf32>
    %510 = vector.extract_strided_slice %466 {offsets = [0, 32], sizes = [8, 16], strides = [1, 1]} : vector<8x48xf32> to vector<8x16xf32>
    %511 = vector.broadcast %42 : vector<1x16xf32> to vector<8x16xf32>
    %512 = arith.addf %510, %511 : vector<8x16xf32>
    %513 = arith.mulf %500, %512 : vector<8x16xf32>
    %514 = arith.addf %509, %513 : vector<8x16xf32>
    %515 = math.tanh %514 : vector<8x16xf32>
    %516 = arith.subf %437, %515 : vector<8x16xf32>
    %517 = arith.mulf %508, %516 : vector<8x16xf32>
    %518 = arith.addf %515, %517 : vector<8x16xf32>
    %519 = arith.index_cast %454 : i32 to index
    %c0_153 = arith.constant 0 : index
    %520 = vector.load %arg1[%519, %c0_153] : memref<64x16xbf16, #tpu.memory_space<vmem>>, vector<8x16xbf16>
    %521 = arith.extf %520 : vector<8x16xbf16> to vector<8x16xf32>
    %522 = arith.addf %492, %521 : vector<8x16xf32>
    %523 = arith.index_cast %456 : i32 to index
    %c0_154 = arith.constant 0 : index
    %524 = vector.load %arg4[%523, %c0_154] : memref<64x16xbf16, #tpu.memory_space<vmem>>, vector<8x16xbf16>
    %525 = arith.extf %524 : vector<8x16xbf16> to vector<8x16xf32>
    %526 = arith.addf %518, %525 : vector<8x16xf32>
    %527 = arith.truncf %522 : vector<8x16xf32> to vector<8x16xbf16>
    %528 = arith.index_cast %454 : i32 to index
    %c0_155 = arith.constant 0 : index
    %529 = vector.load %arg9[%528, %c0_155] : memref<64x16xbf16, #tpu.memory_space<vmem>>, vector<8x16xbf16>
    tpu.vector_store %arg9[%528, %c0_155], %527 {strides = array<i32>} : memref<64x16xbf16, #tpu.memory_space<vmem>>, vector<8x16xbf16>,
    %530 = arith.truncf %526 : vector<8x16xf32> to vector<8x16xbf16>
    %531 = arith.index_cast %456 : i32 to index
    %c0_156 = arith.constant 0 : index
    %532 = vector.load %arg10[%531, %c0_156] : memref<64x16xbf16, #tpu.memory_space<vmem>>, vector<8x16xbf16>
    tpu.vector_store %arg10[%531, %c0_156], %530 {strides = array<i32>} : memref<64x16xbf16, #tpu.memory_space<vmem>>, vector<8x16xbf16>,
    %c6_i32 = arith.constant 6 : i32
    %c7_i32_157 = arith.constant 7 : i32
    %533 = arith.subi %c7_i32_157, %c6_i32 : i32
    %c8_i32_158 = arith.constant 8 : i32
    %534 = arith.muli %c6_i32, %c8_i32_158 : i32
    %535 = tpu.assume_multiple %534, 8 : i32
    %c8_i32_159 = arith.constant 8 : i32
    %536 = arith.muli %533, %c8_i32_159 : i32
    %537 = tpu.assume_multiple %536, 8 : i32
    %c0_160 = arith.constant 0 : index
    %538 = arith.index_cast %535 : i32 to index
    %c0_161 = arith.constant 0 : index
    %539 = vector.load %arg11[%c0_160, %538, %c0_161] : memref<2x64x48xf32, #tpu.memory_space<vmem>>, vector<1x8x48xf32>
    %540 = vector.shape_cast %539 : vector<1x8x48xf32> to vector<8x48xf32>
    %c1_162 = arith.constant 1 : index
    %541 = arith.index_cast %537 : i32 to index
    %c0_163 = arith.constant 0 : index
    %542 = vector.load %arg11[%c1_162, %541, %c0_163] : memref<2x64x48xf32, #tpu.memory_space<vmem>>, vector<1x8x48xf32>
    %543 = vector.shape_cast %542 : vector<1x8x48xf32> to vector<8x48xf32>
    %544 = arith.truncf %492 : vector<8x16xf32> to vector<8x16xbf16>
    %cst_164 = arith.constant dense<0.000000e+00> : vector<8x48xf32>
    %545 = tpu.matmul %544, %36, %cst_164 {dimension_numbers = #tpu.dot_dimension_numbers<[1], [0], [0], [1], [0, 0, 1, 1], [], []>} : vector<8x16xbf16>, vector<16x48xbf16>, vector<8x48xf32> -> vector<8x48xf32>
    %546 = arith.truncf %518 : vector<8x16xf32> to vector<8x16xbf16>
    %cst_165 = arith.constant dense<0.000000e+00> : vector<8x48xf32>
    %547 = tpu.matmul %546, %38, %cst_165 {dimension_numbers = #tpu.dot_dimension_numbers<[1], [0], [0], [1], [0, 0, 1, 1], [], []>} : vector<8x16xbf16>, vector<16x48xbf16>, vector<8x48xf32> -> vector<8x48xf32>
    %548 = vector.extract_strided_slice %540 {offsets = [0, 0], sizes = [8, 16], strides = [1, 1]} : vector<8x48xf32> to vector<8x16xf32>
    %549 = vector.extract_strided_slice %545 {offsets = [0, 0], sizes = [8, 16], strides = [1, 1]} : vector<8x48xf32> to vector<8x16xf32>
    %550 = arith.addf %548, %549 : vector<8x16xf32>
    %551 = arith.negf %550 : vector<8x16xf32>
    %552 = math.exp %551 : vector<8x16xf32>
    %cst_166 = arith.constant 1.000000e+00 : f32
    %553 = vector.broadcast %cst_166 : f32 to vector<8x16xf32>
    %554 = arith.addf %553, %552 : vector<8x16xf32>
    %555 = arith.divf %553, %554 : vector<8x16xf32>
    %556 = vector.extract_strided_slice %540 {offsets = [0, 16], sizes = [8, 16], strides = [1, 1]} : vector<8x48xf32> to vector<8x16xf32>
    %557 = vector.extract_strided_slice %545 {offsets = [0, 16], sizes = [8, 16], strides = [1, 1]} : vector<8x48xf32> to vector<8x16xf32>
    %558 = arith.addf %556, %557 : vector<8x16xf32>
    %559 = arith.negf %558 : vector<8x16xf32>
    %560 = math.exp %559 : vector<8x16xf32>
    %cst_167 = arith.constant 1.000000e+00 : f32
    %561 = vector.broadcast %cst_167 : f32 to vector<8x16xf32>
    %562 = arith.addf %561, %560 : vector<8x16xf32>
    %563 = arith.divf %561, %562 : vector<8x16xf32>
    %564 = vector.extract_strided_slice %540 {offsets = [0, 32], sizes = [8, 16], strides = [1, 1]} : vector<8x48xf32> to vector<8x16xf32>
    %565 = vector.extract_strided_slice %545 {offsets = [0, 32], sizes = [8, 16], strides = [1, 1]} : vector<8x48xf32> to vector<8x16xf32>
    %566 = vector.broadcast %40 : vector<1x16xf32> to vector<8x16xf32>
    %567 = arith.addf %565, %566 : vector<8x16xf32>
    %568 = arith.mulf %555, %567 : vector<8x16xf32>
    %569 = arith.addf %564, %568 : vector<8x16xf32>
    %570 = math.tanh %569 : vector<8x16xf32>
    %571 = arith.subf %492, %570 : vector<8x16xf32>
    %572 = arith.mulf %563, %571 : vector<8x16xf32>
    %573 = arith.addf %570, %572 : vector<8x16xf32>
    %574 = vector.extract_strided_slice %543 {offsets = [0, 0], sizes = [8, 16], strides = [1, 1]} : vector<8x48xf32> to vector<8x16xf32>
    %575 = vector.extract_strided_slice %547 {offsets = [0, 0], sizes = [8, 16], strides = [1, 1]} : vector<8x48xf32> to vector<8x16xf32>
    %576 = arith.addf %574, %575 : vector<8x16xf32>
    %577 = arith.negf %576 : vector<8x16xf32>
    %578 = math.exp %577 : vector<8x16xf32>
    %cst_168 = arith.constant 1.000000e+00 : f32
    %579 = vector.broadcast %cst_168 : f32 to vector<8x16xf32>
    %580 = arith.addf %579, %578 : vector<8x16xf32>
    %581 = arith.divf %579, %580 : vector<8x16xf32>
    %582 = vector.extract_strided_slice %543 {offsets = [0, 16], sizes = [8, 16], strides = [1, 1]} : vector<8x48xf32> to vector<8x16xf32>
    %583 = vector.extract_strided_slice %547 {offsets = [0, 16], sizes = [8, 16], strides = [1, 1]} : vector<8x48xf32> to vector<8x16xf32>
    %584 = arith.addf %582, %583 : vector<8x16xf32>
    %585 = arith.negf %584 : vector<8x16xf32>
    %586 = math.exp %585 : vector<8x16xf32>
    %cst_169 = arith.constant 1.000000e+00 : f32
    %587 = vector.broadcast %cst_169 : f32 to vector<8x16xf32>
    %588 = arith.addf %587, %586 : vector<8x16xf32>
    %589 = arith.divf %587, %588 : vector<8x16xf32>
    %590 = vector.extract_strided_slice %543 {offsets = [0, 32], sizes = [8, 16], strides = [1, 1]} : vector<8x48xf32> to vector<8x16xf32>
    %591 = vector.extract_strided_slice %547 {offsets = [0, 32], sizes = [8, 16], strides = [1, 1]} : vector<8x48xf32> to vector<8x16xf32>
    %592 = vector.broadcast %42 : vector<1x16xf32> to vector<8x16xf32>
    %593 = arith.addf %591, %592 : vector<8x16xf32>
    %594 = arith.mulf %581, %593 : vector<8x16xf32>
    %595 = arith.addf %590, %594 : vector<8x16xf32>
    %596 = math.tanh %595 : vector<8x16xf32>
    %597 = arith.subf %518, %596 : vector<8x16xf32>
    %598 = arith.mulf %589, %597 : vector<8x16xf32>
    %599 = arith.addf %596, %598 : vector<8x16xf32>
    %600 = arith.index_cast %535 : i32 to index
    %c0_170 = arith.constant 0 : index
    %601 = vector.load %arg1[%600, %c0_170] : memref<64x16xbf16, #tpu.memory_space<vmem>>, vector<8x16xbf16>
    %602 = arith.extf %601 : vector<8x16xbf16> to vector<8x16xf32>
    %603 = arith.addf %573, %602 : vector<8x16xf32>
    %604 = arith.index_cast %537 : i32 to index
    %c0_171 = arith.constant 0 : index
    %605 = vector.load %arg4[%604, %c0_171] : memref<64x16xbf16, #tpu.memory_space<vmem>>, vector<8x16xbf16>
    %606 = arith.extf %605 : vector<8x16xbf16> to vector<8x16xf32>
    %607 = arith.addf %599, %606 : vector<8x16xf32>
    %608 = arith.truncf %603 : vector<8x16xf32> to vector<8x16xbf16>
    %609 = arith.index_cast %535 : i32 to index
    %c0_172 = arith.constant 0 : index
    %610 = vector.load %arg9[%609, %c0_172] : memref<64x16xbf16, #tpu.memory_space<vmem>>, vector<8x16xbf16>
    tpu.vector_store %arg9[%609, %c0_172], %608 {strides = array<i32>} : memref<64x16xbf16, #tpu.memory_space<vmem>>, vector<8x16xbf16>,
    %611 = arith.truncf %607 : vector<8x16xf32> to vector<8x16xbf16>
    %612 = arith.index_cast %537 : i32 to index
    %c0_173 = arith.constant 0 : index
    %613 = vector.load %arg10[%612, %c0_173] : memref<64x16xbf16, #tpu.memory_space<vmem>>, vector<8x16xbf16>
    tpu.vector_store %arg10[%612, %c0_173], %611 {strides = array<i32>} : memref<64x16xbf16, #tpu.memory_space<vmem>>, vector<8x16xbf16>,
    %c7_i32_174 = arith.constant 7 : i32
    %c7_i32_175 = arith.constant 7 : i32
    %614 = arith.subi %c7_i32_175, %c7_i32_174 : i32
    %c8_i32_176 = arith.constant 8 : i32
    %615 = arith.muli %c7_i32_174, %c8_i32_176 : i32
    %616 = tpu.assume_multiple %615, 8 : i32
    %c8_i32_177 = arith.constant 8 : i32
    %617 = arith.muli %614, %c8_i32_177 : i32
    %618 = tpu.assume_multiple %617, 8 : i32
    %c0_178 = arith.constant 0 : index
    %619 = arith.index_cast %616 : i32 to index
    %c0_179 = arith.constant 0 : index
    %620 = vector.load %arg11[%c0_178, %619, %c0_179] : memref<2x64x48xf32, #tpu.memory_space<vmem>>, vector<1x8x48xf32>
    %621 = vector.shape_cast %620 : vector<1x8x48xf32> to vector<8x48xf32>
    %c1_180 = arith.constant 1 : index
    %622 = arith.index_cast %618 : i32 to index
    %c0_181 = arith.constant 0 : index
    %623 = vector.load %arg11[%c1_180, %622, %c0_181] : memref<2x64x48xf32, #tpu.memory_space<vmem>>, vector<1x8x48xf32>
    %624 = vector.shape_cast %623 : vector<1x8x48xf32> to vector<8x48xf32>
    %625 = arith.truncf %573 : vector<8x16xf32> to vector<8x16xbf16>
    %cst_182 = arith.constant dense<0.000000e+00> : vector<8x48xf32>
    %626 = tpu.matmul %625, %36, %cst_182 {dimension_numbers = #tpu.dot_dimension_numbers<[1], [0], [0], [1], [0, 0, 1, 1], [], []>} : vector<8x16xbf16>, vector<16x48xbf16>, vector<8x48xf32> -> vector<8x48xf32>
    %627 = arith.truncf %599 : vector<8x16xf32> to vector<8x16xbf16>
    %cst_183 = arith.constant dense<0.000000e+00> : vector<8x48xf32>
    %628 = tpu.matmul %627, %38, %cst_183 {dimension_numbers = #tpu.dot_dimension_numbers<[1], [0], [0], [1], [0, 0, 1, 1], [], []>} : vector<8x16xbf16>, vector<16x48xbf16>, vector<8x48xf32> -> vector<8x48xf32>
    %629 = vector.extract_strided_slice %621 {offsets = [0, 0], sizes = [8, 16], strides = [1, 1]} : vector<8x48xf32> to vector<8x16xf32>
    %630 = vector.extract_strided_slice %626 {offsets = [0, 0], sizes = [8, 16], strides = [1, 1]} : vector<8x48xf32> to vector<8x16xf32>
    %631 = arith.addf %629, %630 : vector<8x16xf32>
    %632 = arith.negf %631 : vector<8x16xf32>
    %633 = math.exp %632 : vector<8x16xf32>
    %cst_184 = arith.constant 1.000000e+00 : f32
    %634 = vector.broadcast %cst_184 : f32 to vector<8x16xf32>
    %635 = arith.addf %634, %633 : vector<8x16xf32>
    %636 = arith.divf %634, %635 : vector<8x16xf32>
    %637 = vector.extract_strided_slice %621 {offsets = [0, 16], sizes = [8, 16], strides = [1, 1]} : vector<8x48xf32> to vector<8x16xf32>
    %638 = vector.extract_strided_slice %626 {offsets = [0, 16], sizes = [8, 16], strides = [1, 1]} : vector<8x48xf32> to vector<8x16xf32>
    %639 = arith.addf %637, %638 : vector<8x16xf32>
    %640 = arith.negf %639 : vector<8x16xf32>
    %641 = math.exp %640 : vector<8x16xf32>
    %cst_185 = arith.constant 1.000000e+00 : f32
    %642 = vector.broadcast %cst_185 : f32 to vector<8x16xf32>
    %643 = arith.addf %642, %641 : vector<8x16xf32>
    %644 = arith.divf %642, %643 : vector<8x16xf32>
    %645 = vector.extract_strided_slice %621 {offsets = [0, 32], sizes = [8, 16], strides = [1, 1]} : vector<8x48xf32> to vector<8x16xf32>
    %646 = vector.extract_strided_slice %626 {offsets = [0, 32], sizes = [8, 16], strides = [1, 1]} : vector<8x48xf32> to vector<8x16xf32>
    %647 = vector.broadcast %40 : vector<1x16xf32> to vector<8x16xf32>
    %648 = arith.addf %646, %647 : vector<8x16xf32>
    %649 = arith.mulf %636, %648 : vector<8x16xf32>
    %650 = arith.addf %645, %649 : vector<8x16xf32>
    %651 = math.tanh %650 : vector<8x16xf32>
    %652 = arith.subf %573, %651 : vector<8x16xf32>
    %653 = arith.mulf %644, %652 : vector<8x16xf32>
    %654 = arith.addf %651, %653 : vector<8x16xf32>
    %655 = vector.extract_strided_slice %624 {offsets = [0, 0], sizes = [8, 16], strides = [1, 1]} : vector<8x48xf32> to vector<8x16xf32>
    %656 = vector.extract_strided_slice %628 {offsets = [0, 0], sizes = [8, 16], strides = [1, 1]} : vector<8x48xf32> to vector<8x16xf32>
    %657 = arith.addf %655, %656 : vector<8x16xf32>
    %658 = arith.negf %657 : vector<8x16xf32>
    %659 = math.exp %658 : vector<8x16xf32>
    %cst_186 = arith.constant 1.000000e+00 : f32
    %660 = vector.broadcast %cst_186 : f32 to vector<8x16xf32>
    %661 = arith.addf %660, %659 : vector<8x16xf32>
    %662 = arith.divf %660, %661 : vector<8x16xf32>
    %663 = vector.extract_strided_slice %624 {offsets = [0, 16], sizes = [8, 16], strides = [1, 1]} : vector<8x48xf32> to vector<8x16xf32>
    %664 = vector.extract_strided_slice %628 {offsets = [0, 16], sizes = [8, 16], strides = [1, 1]} : vector<8x48xf32> to vector<8x16xf32>
    %665 = arith.addf %663, %664 : vector<8x16xf32>
    %666 = arith.negf %665 : vector<8x16xf32>
    %667 = math.exp %666 : vector<8x16xf32>
    %cst_187 = arith.constant 1.000000e+00 : f32
    %668 = vector.broadcast %cst_187 : f32 to vector<8x16xf32>
    %669 = arith.addf %668, %667 : vector<8x16xf32>
    %670 = arith.divf %668, %669 : vector<8x16xf32>
    %671 = vector.extract_strided_slice %624 {offsets = [0, 32], sizes = [8, 16], strides = [1, 1]} : vector<8x48xf32> to vector<8x16xf32>
    %672 = vector.extract_strided_slice %628 {offsets = [0, 32], sizes = [8, 16], strides = [1, 1]} : vector<8x48xf32> to vector<8x16xf32>
    %673 = vector.broadcast %42 : vector<1x16xf32> to vector<8x16xf32>
    %674 = arith.addf %672, %673 : vector<8x16xf32>
    %675 = arith.mulf %662, %674 : vector<8x16xf32>
    %676 = arith.addf %671, %675 : vector<8x16xf32>
    %677 = math.tanh %676 : vector<8x16xf32>
    %678 = arith.subf %599, %677 : vector<8x16xf32>
    %679 = arith.mulf %670, %678 : vector<8x16xf32>
    %680 = arith.addf %677, %679 : vector<8x16xf32>
    %681 = arith.index_cast %616 : i32 to index
    %c0_188 = arith.constant 0 : index
    %682 = vector.load %arg1[%681, %c0_188] : memref<64x16xbf16, #tpu.memory_space<vmem>>, vector<8x16xbf16>
    %683 = arith.extf %682 : vector<8x16xbf16> to vector<8x16xf32>
    %684 = arith.addf %654, %683 : vector<8x16xf32>
    %685 = arith.index_cast %618 : i32 to index
    %c0_189 = arith.constant 0 : index
    %686 = vector.load %arg4[%685, %c0_189] : memref<64x16xbf16, #tpu.memory_space<vmem>>, vector<8x16xbf16>
    %687 = arith.extf %686 : vector<8x16xbf16> to vector<8x16xf32>
    %688 = arith.addf %680, %687 : vector<8x16xf32>
    %689 = arith.truncf %684 : vector<8x16xf32> to vector<8x16xbf16>
    %690 = arith.index_cast %616 : i32 to index
    %c0_190 = arith.constant 0 : index
    %691 = vector.load %arg9[%690, %c0_190] : memref<64x16xbf16, #tpu.memory_space<vmem>>, vector<8x16xbf16>
    tpu.vector_store %arg9[%690, %c0_190], %689 {strides = array<i32>} : memref<64x16xbf16, #tpu.memory_space<vmem>>, vector<8x16xbf16>,
    %692 = arith.truncf %688 : vector<8x16xf32> to vector<8x16xbf16>
    %693 = arith.index_cast %618 : i32 to index
    %c0_191 = arith.constant 0 : index
    %694 = vector.load %arg10[%693, %c0_191] : memref<64x16xbf16, #tpu.memory_space<vmem>>, vector<8x16xbf16>
    tpu.vector_store %arg10[%693, %c0_191], %692 {strides = array<i32>} : memref<64x16xbf16, #tpu.memory_space<vmem>>, vector<8x16xbf16>,
    %c8_i32_192 = arith.constant 8 : i32
    %c0_193 = arith.constant 0 : index
    %c0_194 = arith.constant 0 : index
    %c0_195 = arith.constant 0 : index
    %695 = vector.load %arg12[%c0_193, %c0_194, %c0_195] : memref<2x8x16xf32, #tpu.memory_space<vmem>>, vector<1x8x16xf32>
    %696 = vector.shape_cast %695 : vector<1x8x16xf32> to vector<8x16xf32>
    %697 = vector.shape_cast %654 : vector<8x16xf32> to vector<1x8x16xf32>
    tpu.vector_store %arg12[%c0_193, %c0_194, %c0_195], %697 {strides = array<i32>} : memref<2x8x16xf32, #tpu.memory_space<vmem>>, vector<1x8x16xf32>,
    %c1_196 = arith.constant 1 : index
    %c0_197 = arith.constant 0 : index
    %c0_198 = arith.constant 0 : index
    %698 = vector.load %arg12[%c1_196, %c0_197, %c0_198] : memref<2x8x16xf32, #tpu.memory_space<vmem>>, vector<1x8x16xf32>
    %699 = vector.shape_cast %698 : vector<1x8x16xf32> to vector<8x16xf32>
    %700 = vector.shape_cast %680 : vector<8x16xf32> to vector<1x8x16xf32>
    tpu.vector_store %arg12[%c1_196, %c0_197, %c0_198], %700 {strides = array<i32>} : memref<2x8x16xf32, #tpu.memory_space<vmem>>, vector<1x8x16xf32>,
    return
  }
  func.func @transform_0(%arg0: i32) -> (i32, i32) {
    %c0_i32 = arith.constant 0 : i32
    %c0_i32_0 = arith.constant 0 : i32
    return %arg0, %c0_i32 : i32, i32
  }
  func.func @transform_1(%arg0: i32) -> (i32, i32) {
    %c0_i32 = arith.constant 0 : i32
    %c0_i32_0 = arith.constant 0 : i32
    return %arg0, %c0_i32 : i32, i32
  }
  func.func @transform_2(%arg0: i32) -> (i32, i32) {
    %c0_i32 = arith.constant 0 : i32
    %0 = arith.subi %c0_i32, %arg0 : i32
    %c0_i32_0 = arith.constant 0 : i32
    %c0_i32_1 = arith.constant 0 : i32
    return %0, %c0_i32_0 : i32, i32
  }
  func.func @transform_3(%arg0: i32) -> (i32, i32) {
    %c0_i32 = arith.constant 0 : i32
    %0 = arith.subi %c0_i32, %arg0 : i32
    %c0_i32_0 = arith.constant 0 : i32
    %c0_i32_1 = arith.constant 0 : i32
    return %0, %c0_i32_0 : i32, i32
  }
  func.func @transform_4(%arg0: i32) -> (i32, i32, i32, i32) {
    %c0_i32 = arith.constant 0 : i32
    %c0_i32_0 = arith.constant 0 : i32
    %c0_i32_1 = arith.constant 0 : i32
    %c0_i32_2 = arith.constant 0 : i32
    %c0_i32_3 = arith.constant 0 : i32
    return %c0_i32, %c0_i32_0, %c0_i32_1, %c0_i32_2 : i32, i32, i32, i32
  }
  func.func @transform_5(%arg0: i32) -> (i32, i32, i32) {
    %c0_i32 = arith.constant 0 : i32
    %c0_i32_0 = arith.constant 0 : i32
    %c0_i32_1 = arith.constant 0 : i32
    %c0_i32_2 = arith.constant 0 : i32
    return %c0_i32, %c0_i32_0, %c0_i32_1 : i32, i32, i32
  }
  func.func @transform_6(%arg0: i32) -> (i32, i32, i32) {
    %c0_i32 = arith.constant 0 : i32
    %c0_i32_0 = arith.constant 0 : i32
    %c0_i32_1 = arith.constant 0 : i32
    %c0_i32_2 = arith.constant 0 : i32
    return %c0_i32, %c0_i32_0, %c0_i32_1 : i32, i32, i32
  }
  func.func @transform_7(%arg0: i32) -> (i32, i32, i32) {
    %c0_i32 = arith.constant 0 : i32
    %c0_i32_0 = arith.constant 0 : i32
    %c0_i32_1 = arith.constant 0 : i32
    %c0_i32_2 = arith.constant 0 : i32
    return %c0_i32, %c0_i32_0, %c0_i32_1 : i32, i32, i32
  }
  func.func @transform_8(%arg0: i32) -> (i32, i32) {
    %c0_i32 = arith.constant 0 : i32
    %c0_i32_0 = arith.constant 0 : i32
    return %arg0, %c0_i32 : i32, i32
  }
  func.func @transform_9(%arg0: i32) -> (i32, i32) {
    %c0_i32 = arith.constant 0 : i32
    %0 = arith.subi %c0_i32, %arg0 : i32
    %c0_i32_0 = arith.constant 0 : i32
    %c0_i32_1 = arith.constant 0 : i32
    return %0, %c0_i32_0 : i32, i32
  }
}

module attributes {stable_mosaic.version = 11 : i64} {
  func.func @_bigru_block_kernel(%arg0: i32, %arg1: memref<128x8xbf16, #tpu.memory_space<vmem>>, %arg2: memref<128x8xbf16, #tpu.memory_space<vmem>>, %arg3: memref<2x1x8x48xbf16, #tpu.memory_space<vmem>>, %arg4: memref<2x1x48xf32, #tpu.memory_space<vmem>>, %arg5: memref<2x16x48xbf16, #tpu.memory_space<vmem>>, %arg6: memref<2x1x16xf32, #tpu.memory_space<vmem>>, %arg7: memref<128x16xbf16, #tpu.memory_space<vmem>>, %arg8: memref<128x16xbf16, #tpu.memory_space<vmem>>, %arg9: memref<2x128x48xf32, #tpu.memory_space<vmem>>, %arg10: memref<2x8x16xf32, #tpu.memory_space<vmem>>) attributes {dimension_semantics = [#tpu.dimension_semantics<arbitrary>], iteration_bounds = array<i64: 1>, scalar_prefetch = 0 : i64, scratch_operands = 2 : i64, tpu.core_type = #tpu.core_type<tc>, window_params = [{transform_indices = @transform_0, window_bounds = array<i64: 128, 8>}, {transform_indices = @transform_1, window_bounds = array<i64: 128, 8>}, {pipeline_mode = #tpu.pipeline_mode<synchronous>, transform_indices = @transform_2, window_bounds = array<i64: 2, 1, 8, 48>}, {pipeline_mode = #tpu.pipeline_mode<synchronous>, transform_indices = @transform_3, window_bounds = array<i64: 2, 1, 48>}, {pipeline_mode = #tpu.pipeline_mode<synchronous>, transform_indices = @transform_4, window_bounds = array<i64: 2, 16, 48>}, {pipeline_mode = #tpu.pipeline_mode<synchronous>, transform_indices = @transform_5, window_bounds = array<i64: 2, 1, 16>}, {transform_indices = @transform_6, window_bounds = array<i64: 128, 16>}, {transform_indices = @transform_7, window_bounds = array<i64: 128, 16>}]} {
    %c0_i32 = arith.constant 0 : i32
    %0 = arith.cmpi eq, %arg0, %c0_i32 : i32
    %1 = arith.extui %0 : i1 to i32
    %c0_i32_0 = arith.constant 0 : i32
    %2 = arith.cmpi ne, %1, %c0_i32_0 : i32
    scf.if %2 {
      %cst_289 = arith.constant 0.000000e+00 : f32
      %1211 = vector.broadcast %cst_289 : f32 to vector<2x8x16xf32>
      %c0_290 = arith.constant 0 : index
      %c0_291 = arith.constant 0 : index
      %c0_292 = arith.constant 0 : index
      %1212 = vector.load %arg10[%c0_290, %c0_291, %c0_292] : memref<2x8x16xf32, #tpu.memory_space<vmem>>, vector<2x8x16xf32>
      tpu.vector_store %arg10[%c0_290, %c0_291, %c0_292], %1211 {strides = array<i32>} : memref<2x8x16xf32, #tpu.memory_space<vmem>>, vector<2x8x16xf32>,
    } else {
    }
    %c0 = arith.constant 0 : index
    %c0_1 = arith.constant 0 : index
    %3 = vector.load %arg1[%c0, %c0_1] : memref<128x8xbf16, #tpu.memory_space<vmem>>, vector<128x8xbf16>
    %c0_2 = arith.constant 0 : index
    %c0_3 = arith.constant 0 : index
    %c0_4 = arith.constant 0 : index
    %c0_5 = arith.constant 0 : index
    %4 = vector.load %arg3[%c0_2, %c0_3, %c0_4, %c0_5] : memref<2x1x8x48xbf16, #tpu.memory_space<vmem>>, vector<1x1x8x48xbf16>
    %5 = vector.shape_cast %4 : vector<1x1x8x48xbf16> to vector<8x48xbf16>
    %cst = arith.constant dense<0.000000e+00> : vector<128x48xf32>
    %6 = tpu.matmul %3, %5, %cst {dimension_numbers = #tpu.dot_dimension_numbers<[1], [0], [0], [1], [0, 0, 1, 1], [], []>} : vector<128x8xbf16>, vector<8x48xbf16>, vector<128x48xf32> -> vector<128x48xf32>
    %c0_6 = arith.constant 0 : index
    %c0_7 = arith.constant 0 : index
    %c0_8 = arith.constant 0 : index
    %7 = vector.load %arg4[%c0_6, %c0_7, %c0_8] : memref<2x1x48xf32, #tpu.memory_space<vmem>>, vector<1x1x48xf32>
    %8 = vector.shape_cast %7 : vector<1x1x48xf32> to vector<1x48xf32>
    %9 = vector.broadcast %8 : vector<1x48xf32> to vector<128x48xf32>
    %10 = arith.addf %6, %9 : vector<128x48xf32>
    %c0_9 = arith.constant 0 : index
    %c0_10 = arith.constant 0 : index
    %c0_11 = arith.constant 0 : index
    %11 = vector.load %arg9[%c0_9, %c0_10, %c0_11] : memref<2x128x48xf32, #tpu.memory_space<vmem>>, vector<1x128x48xf32>
    %12 = vector.shape_cast %11 : vector<1x128x48xf32> to vector<128x48xf32>
    %13 = vector.shape_cast %10 : vector<128x48xf32> to vector<1x128x48xf32>
    tpu.vector_store %arg9[%c0_9, %c0_10, %c0_11], %13 {strides = array<i32>} : memref<2x128x48xf32, #tpu.memory_space<vmem>>, vector<1x128x48xf32>,
    %c0_12 = arith.constant 0 : index
    %c0_13 = arith.constant 0 : index
    %14 = vector.load %arg2[%c0_12, %c0_13] : memref<128x8xbf16, #tpu.memory_space<vmem>>, vector<128x8xbf16>
    %c1 = arith.constant 1 : index
    %c0_14 = arith.constant 0 : index
    %c0_15 = arith.constant 0 : index
    %c0_16 = arith.constant 0 : index
    %15 = vector.load %arg3[%c1, %c0_14, %c0_15, %c0_16] : memref<2x1x8x48xbf16, #tpu.memory_space<vmem>>, vector<1x1x8x48xbf16>
    %16 = vector.shape_cast %15 : vector<1x1x8x48xbf16> to vector<8x48xbf16>
    %cst_17 = arith.constant dense<0.000000e+00> : vector<128x48xf32>
    %17 = tpu.matmul %14, %16, %cst_17 {dimension_numbers = #tpu.dot_dimension_numbers<[1], [0], [0], [1], [0, 0, 1, 1], [], []>} : vector<128x8xbf16>, vector<8x48xbf16>, vector<128x48xf32> -> vector<128x48xf32>
    %c1_18 = arith.constant 1 : index
    %c0_19 = arith.constant 0 : index
    %c0_20 = arith.constant 0 : index
    %18 = vector.load %arg4[%c1_18, %c0_19, %c0_20] : memref<2x1x48xf32, #tpu.memory_space<vmem>>, vector<1x1x48xf32>
    %19 = vector.shape_cast %18 : vector<1x1x48xf32> to vector<1x48xf32>
    %20 = vector.broadcast %19 : vector<1x48xf32> to vector<128x48xf32>
    %21 = arith.addf %17, %20 : vector<128x48xf32>
    %c1_21 = arith.constant 1 : index
    %c0_22 = arith.constant 0 : index
    %c0_23 = arith.constant 0 : index
    %22 = vector.load %arg9[%c1_21, %c0_22, %c0_23] : memref<2x128x48xf32, #tpu.memory_space<vmem>>, vector<1x128x48xf32>
    %23 = vector.shape_cast %22 : vector<1x128x48xf32> to vector<128x48xf32>
    %24 = vector.shape_cast %21 : vector<128x48xf32> to vector<1x128x48xf32>
    tpu.vector_store %arg9[%c1_21, %c0_22, %c0_23], %24 {strides = array<i32>} : memref<2x128x48xf32, #tpu.memory_space<vmem>>, vector<1x128x48xf32>,
    %c0_24 = arith.constant 0 : index
    %c0_25 = arith.constant 0 : index
    %c0_26 = arith.constant 0 : index
    %25 = vector.load %arg5[%c0_24, %c0_25, %c0_26] : memref<2x16x48xbf16, #tpu.memory_space<vmem>>, vector<1x16x48xbf16>
    %26 = vector.shape_cast %25 : vector<1x16x48xbf16> to vector<16x48xbf16>
    %c1_27 = arith.constant 1 : index
    %c0_28 = arith.constant 0 : index
    %c0_29 = arith.constant 0 : index
    %27 = vector.load %arg5[%c1_27, %c0_28, %c0_29] : memref<2x16x48xbf16, #tpu.memory_space<vmem>>, vector<1x16x48xbf16>
    %28 = vector.shape_cast %27 : vector<1x16x48xbf16> to vector<16x48xbf16>
    %c0_30 = arith.constant 0 : index
    %c0_31 = arith.constant 0 : index
    %c0_32 = arith.constant 0 : index
    %29 = vector.load %arg6[%c0_30, %c0_31, %c0_32] : memref<2x1x16xf32, #tpu.memory_space<vmem>>, vector<1x1x16xf32>
    %30 = vector.shape_cast %29 : vector<1x1x16xf32> to vector<1x16xf32>
    %c1_33 = arith.constant 1 : index
    %c0_34 = arith.constant 0 : index
    %c0_35 = arith.constant 0 : index
    %31 = vector.load %arg6[%c1_33, %c0_34, %c0_35] : memref<2x1x16xf32, #tpu.memory_space<vmem>>, vector<1x1x16xf32>
    %32 = vector.shape_cast %31 : vector<1x1x16xf32> to vector<1x16xf32>
    %c0_36 = arith.constant 0 : index
    %c0_37 = arith.constant 0 : index
    %c0_38 = arith.constant 0 : index
    %33 = vector.load %arg10[%c0_36, %c0_37, %c0_38] : memref<2x8x16xf32, #tpu.memory_space<vmem>>, vector<1x8x16xf32>
    %34 = vector.shape_cast %33 : vector<1x8x16xf32> to vector<8x16xf32>
    %c1_39 = arith.constant 1 : index
    %c0_40 = arith.constant 0 : index
    %c0_41 = arith.constant 0 : index
    %35 = vector.load %arg10[%c1_39, %c0_40, %c0_41] : memref<2x8x16xf32, #tpu.memory_space<vmem>>, vector<1x8x16xf32>
    %36 = vector.shape_cast %35 : vector<1x8x16xf32> to vector<8x16xf32>
    %c0_i32_42 = arith.constant 0 : i32
    %c15_i32 = arith.constant 15 : i32
    %37 = arith.subi %c15_i32, %c0_i32_42 : i32
    %c8_i32 = arith.constant 8 : i32
    %38 = arith.muli %c0_i32_42, %c8_i32 : i32
    %39 = tpu.assume_multiple %38, 8 : i32
    %c8_i32_43 = arith.constant 8 : i32
    %40 = arith.muli %37, %c8_i32_43 : i32
    %41 = tpu.assume_multiple %40, 8 : i32
    %c0_44 = arith.constant 0 : index
    %42 = arith.index_cast %39 : i32 to index
    %c0_45 = arith.constant 0 : index
    %43 = vector.load %arg9[%c0_44, %42, %c0_45] : memref<2x128x48xf32, #tpu.memory_space<vmem>>, vector<1x8x48xf32>
    %44 = vector.shape_cast %43 : vector<1x8x48xf32> to vector<8x48xf32>
    %c1_46 = arith.constant 1 : index
    %45 = arith.index_cast %41 : i32 to index
    %c0_47 = arith.constant 0 : index
    %46 = vector.load %arg9[%c1_46, %45, %c0_47] : memref<2x128x48xf32, #tpu.memory_space<vmem>>, vector<1x8x48xf32>
    %47 = vector.shape_cast %46 : vector<1x8x48xf32> to vector<8x48xf32>
    %48 = arith.truncf %34 : vector<8x16xf32> to vector<8x16xbf16>
    %cst_48 = arith.constant dense<0.000000e+00> : vector<8x48xf32>
    %49 = tpu.matmul %48, %26, %cst_48 {dimension_numbers = #tpu.dot_dimension_numbers<[1], [0], [0], [1], [0, 0, 1, 1], [], []>} : vector<8x16xbf16>, vector<16x48xbf16>, vector<8x48xf32> -> vector<8x48xf32>
    %50 = arith.truncf %36 : vector<8x16xf32> to vector<8x16xbf16>
    %cst_49 = arith.constant dense<0.000000e+00> : vector<8x48xf32>
    %51 = tpu.matmul %50, %28, %cst_49 {dimension_numbers = #tpu.dot_dimension_numbers<[1], [0], [0], [1], [0, 0, 1, 1], [], []>} : vector<8x16xbf16>, vector<16x48xbf16>, vector<8x48xf32> -> vector<8x48xf32>
    %52 = vector.extract_strided_slice %44 {offsets = [0, 0], sizes = [8, 16], strides = [1, 1]} : vector<8x48xf32> to vector<8x16xf32>
    %53 = vector.extract_strided_slice %49 {offsets = [0, 0], sizes = [8, 16], strides = [1, 1]} : vector<8x48xf32> to vector<8x16xf32>
    %54 = arith.addf %52, %53 : vector<8x16xf32>
    %55 = arith.negf %54 : vector<8x16xf32>
    %56 = math.exp %55 : vector<8x16xf32>
    %cst_50 = arith.constant 1.000000e+00 : f32
    %57 = vector.broadcast %cst_50 : f32 to vector<8x16xf32>
    %58 = arith.addf %57, %56 : vector<8x16xf32>
    %59 = arith.divf %57, %58 : vector<8x16xf32>
    %60 = vector.extract_strided_slice %44 {offsets = [0, 16], sizes = [8, 16], strides = [1, 1]} : vector<8x48xf32> to vector<8x16xf32>
    %61 = vector.extract_strided_slice %49 {offsets = [0, 16], sizes = [8, 16], strides = [1, 1]} : vector<8x48xf32> to vector<8x16xf32>
    %62 = arith.addf %60, %61 : vector<8x16xf32>
    %63 = arith.negf %62 : vector<8x16xf32>
    %64 = math.exp %63 : vector<8x16xf32>
    %cst_51 = arith.constant 1.000000e+00 : f32
    %65 = vector.broadcast %cst_51 : f32 to vector<8x16xf32>
    %66 = arith.addf %65, %64 : vector<8x16xf32>
    %67 = arith.divf %65, %66 : vector<8x16xf32>
    %68 = vector.extract_strided_slice %44 {offsets = [0, 32], sizes = [8, 16], strides = [1, 1]} : vector<8x48xf32> to vector<8x16xf32>
    %69 = vector.extract_strided_slice %49 {offsets = [0, 32], sizes = [8, 16], strides = [1, 1]} : vector<8x48xf32> to vector<8x16xf32>
    %70 = vector.broadcast %30 : vector<1x16xf32> to vector<8x16xf32>
    %71 = arith.addf %69, %70 : vector<8x16xf32>
    %72 = arith.mulf %59, %71 : vector<8x16xf32>
    %73 = arith.addf %68, %72 : vector<8x16xf32>
    %74 = math.tanh %73 : vector<8x16xf32>
    %75 = arith.subf %34, %74 : vector<8x16xf32>
    %76 = arith.mulf %67, %75 : vector<8x16xf32>
    %77 = arith.addf %74, %76 : vector<8x16xf32>
    %78 = vector.extract_strided_slice %47 {offsets = [0, 0], sizes = [8, 16], strides = [1, 1]} : vector<8x48xf32> to vector<8x16xf32>
    %79 = vector.extract_strided_slice %51 {offsets = [0, 0], sizes = [8, 16], strides = [1, 1]} : vector<8x48xf32> to vector<8x16xf32>
    %80 = arith.addf %78, %79 : vector<8x16xf32>
    %81 = arith.negf %80 : vector<8x16xf32>
    %82 = math.exp %81 : vector<8x16xf32>
    %cst_52 = arith.constant 1.000000e+00 : f32
    %83 = vector.broadcast %cst_52 : f32 to vector<8x16xf32>
    %84 = arith.addf %83, %82 : vector<8x16xf32>
    %85 = arith.divf %83, %84 : vector<8x16xf32>
    %86 = vector.extract_strided_slice %47 {offsets = [0, 16], sizes = [8, 16], strides = [1, 1]} : vector<8x48xf32> to vector<8x16xf32>
    %87 = vector.extract_strided_slice %51 {offsets = [0, 16], sizes = [8, 16], strides = [1, 1]} : vector<8x48xf32> to vector<8x16xf32>
    %88 = arith.addf %86, %87 : vector<8x16xf32>
    %89 = arith.negf %88 : vector<8x16xf32>
    %90 = math.exp %89 : vector<8x16xf32>
    %cst_53 = arith.constant 1.000000e+00 : f32
    %91 = vector.broadcast %cst_53 : f32 to vector<8x16xf32>
    %92 = arith.addf %91, %90 : vector<8x16xf32>
    %93 = arith.divf %91, %92 : vector<8x16xf32>
    %94 = vector.extract_strided_slice %47 {offsets = [0, 32], sizes = [8, 16], strides = [1, 1]} : vector<8x48xf32> to vector<8x16xf32>
    %95 = vector.extract_strided_slice %51 {offsets = [0, 32], sizes = [8, 16], strides = [1, 1]} : vector<8x48xf32> to vector<8x16xf32>
    %96 = vector.broadcast %32 : vector<1x16xf32> to vector<8x16xf32>
    %97 = arith.addf %95, %96 : vector<8x16xf32>
    %98 = arith.mulf %85, %97 : vector<8x16xf32>
    %99 = arith.addf %94, %98 : vector<8x16xf32>
    %100 = math.tanh %99 : vector<8x16xf32>
    %101 = arith.subf %36, %100 : vector<8x16xf32>
    %102 = arith.mulf %93, %101 : vector<8x16xf32>
    %103 = arith.addf %100, %102 : vector<8x16xf32>
    %104 = arith.truncf %77 : vector<8x16xf32> to vector<8x16xbf16>
    %105 = arith.index_cast %39 : i32 to index
    %c0_54 = arith.constant 0 : index
    %106 = vector.load %arg7[%105, %c0_54] : memref<128x16xbf16, #tpu.memory_space<vmem>>, vector<8x16xbf16>
    tpu.vector_store %arg7[%105, %c0_54], %104 {strides = array<i32>} : memref<128x16xbf16, #tpu.memory_space<vmem>>, vector<8x16xbf16>,
    %107 = arith.truncf %103 : vector<8x16xf32> to vector<8x16xbf16>
    %108 = arith.index_cast %41 : i32 to index
    %c0_55 = arith.constant 0 : index
    %109 = vector.load %arg8[%108, %c0_55] : memref<128x16xbf16, #tpu.memory_space<vmem>>, vector<8x16xbf16>
    tpu.vector_store %arg8[%108, %c0_55], %107 {strides = array<i32>} : memref<128x16xbf16, #tpu.memory_space<vmem>>, vector<8x16xbf16>,
    %c1_i32 = arith.constant 1 : i32
    %c15_i32_56 = arith.constant 15 : i32
    %110 = arith.subi %c15_i32_56, %c1_i32 : i32
    %c8_i32_57 = arith.constant 8 : i32
    %111 = arith.muli %c1_i32, %c8_i32_57 : i32
    %112 = tpu.assume_multiple %111, 8 : i32
    %c8_i32_58 = arith.constant 8 : i32
    %113 = arith.muli %110, %c8_i32_58 : i32
    %114 = tpu.assume_multiple %113, 8 : i32
    %c0_59 = arith.constant 0 : index
    %115 = arith.index_cast %112 : i32 to index
    %c0_60 = arith.constant 0 : index
    %116 = vector.load %arg9[%c0_59, %115, %c0_60] : memref<2x128x48xf32, #tpu.memory_space<vmem>>, vector<1x8x48xf32>
    %117 = vector.shape_cast %116 : vector<1x8x48xf32> to vector<8x48xf32>
    %c1_61 = arith.constant 1 : index
    %118 = arith.index_cast %114 : i32 to index
    %c0_62 = arith.constant 0 : index
    %119 = vector.load %arg9[%c1_61, %118, %c0_62] : memref<2x128x48xf32, #tpu.memory_space<vmem>>, vector<1x8x48xf32>
    %120 = vector.shape_cast %119 : vector<1x8x48xf32> to vector<8x48xf32>
    %121 = arith.truncf %77 : vector<8x16xf32> to vector<8x16xbf16>
    %cst_63 = arith.constant dense<0.000000e+00> : vector<8x48xf32>
    %122 = tpu.matmul %121, %26, %cst_63 {dimension_numbers = #tpu.dot_dimension_numbers<[1], [0], [0], [1], [0, 0, 1, 1], [], []>} : vector<8x16xbf16>, vector<16x48xbf16>, vector<8x48xf32> -> vector<8x48xf32>
    %123 = arith.truncf %103 : vector<8x16xf32> to vector<8x16xbf16>
    %cst_64 = arith.constant dense<0.000000e+00> : vector<8x48xf32>
    %124 = tpu.matmul %123, %28, %cst_64 {dimension_numbers = #tpu.dot_dimension_numbers<[1], [0], [0], [1], [0, 0, 1, 1], [], []>} : vector<8x16xbf16>, vector<16x48xbf16>, vector<8x48xf32> -> vector<8x48xf32>
    %125 = vector.extract_strided_slice %117 {offsets = [0, 0], sizes = [8, 16], strides = [1, 1]} : vector<8x48xf32> to vector<8x16xf32>
    %126 = vector.extract_strided_slice %122 {offsets = [0, 0], sizes = [8, 16], strides = [1, 1]} : vector<8x48xf32> to vector<8x16xf32>
    %127 = arith.addf %125, %126 : vector<8x16xf32>
    %128 = arith.negf %127 : vector<8x16xf32>
    %129 = math.exp %128 : vector<8x16xf32>
    %cst_65 = arith.constant 1.000000e+00 : f32
    %130 = vector.broadcast %cst_65 : f32 to vector<8x16xf32>
    %131 = arith.addf %130, %129 : vector<8x16xf32>
    %132 = arith.divf %130, %131 : vector<8x16xf32>
    %133 = vector.extract_strided_slice %117 {offsets = [0, 16], sizes = [8, 16], strides = [1, 1]} : vector<8x48xf32> to vector<8x16xf32>
    %134 = vector.extract_strided_slice %122 {offsets = [0, 16], sizes = [8, 16], strides = [1, 1]} : vector<8x48xf32> to vector<8x16xf32>
    %135 = arith.addf %133, %134 : vector<8x16xf32>
    %136 = arith.negf %135 : vector<8x16xf32>
    %137 = math.exp %136 : vector<8x16xf32>
    %cst_66 = arith.constant 1.000000e+00 : f32
    %138 = vector.broadcast %cst_66 : f32 to vector<8x16xf32>
    %139 = arith.addf %138, %137 : vector<8x16xf32>
    %140 = arith.divf %138, %139 : vector<8x16xf32>
    %141 = vector.extract_strided_slice %117 {offsets = [0, 32], sizes = [8, 16], strides = [1, 1]} : vector<8x48xf32> to vector<8x16xf32>
    %142 = vector.extract_strided_slice %122 {offsets = [0, 32], sizes = [8, 16], strides = [1, 1]} : vector<8x48xf32> to vector<8x16xf32>
    %143 = vector.broadcast %30 : vector<1x16xf32> to vector<8x16xf32>
    %144 = arith.addf %142, %143 : vector<8x16xf32>
    %145 = arith.mulf %132, %144 : vector<8x16xf32>
    %146 = arith.addf %141, %145 : vector<8x16xf32>
    %147 = math.tanh %146 : vector<8x16xf32>
    %148 = arith.subf %77, %147 : vector<8x16xf32>
    %149 = arith.mulf %140, %148 : vector<8x16xf32>
    %150 = arith.addf %147, %149 : vector<8x16xf32>
    %151 = vector.extract_strided_slice %120 {offsets = [0, 0], sizes = [8, 16], strides = [1, 1]} : vector<8x48xf32> to vector<8x16xf32>
    %152 = vector.extract_strided_slice %124 {offsets = [0, 0], sizes = [8, 16], strides = [1, 1]} : vector<8x48xf32> to vector<8x16xf32>
    %153 = arith.addf %151, %152 : vector<8x16xf32>
    %154 = arith.negf %153 : vector<8x16xf32>
    %155 = math.exp %154 : vector<8x16xf32>
    %cst_67 = arith.constant 1.000000e+00 : f32
    %156 = vector.broadcast %cst_67 : f32 to vector<8x16xf32>
    %157 = arith.addf %156, %155 : vector<8x16xf32>
    %158 = arith.divf %156, %157 : vector<8x16xf32>
    %159 = vector.extract_strided_slice %120 {offsets = [0, 16], sizes = [8, 16], strides = [1, 1]} : vector<8x48xf32> to vector<8x16xf32>
    %160 = vector.extract_strided_slice %124 {offsets = [0, 16], sizes = [8, 16], strides = [1, 1]} : vector<8x48xf32> to vector<8x16xf32>
    %161 = arith.addf %159, %160 : vector<8x16xf32>
    %162 = arith.negf %161 : vector<8x16xf32>
    %163 = math.exp %162 : vector<8x16xf32>
    %cst_68 = arith.constant 1.000000e+00 : f32
    %164 = vector.broadcast %cst_68 : f32 to vector<8x16xf32>
    %165 = arith.addf %164, %163 : vector<8x16xf32>
    %166 = arith.divf %164, %165 : vector<8x16xf32>
    %167 = vector.extract_strided_slice %120 {offsets = [0, 32], sizes = [8, 16], strides = [1, 1]} : vector<8x48xf32> to vector<8x16xf32>
    %168 = vector.extract_strided_slice %124 {offsets = [0, 32], sizes = [8, 16], strides = [1, 1]} : vector<8x48xf32> to vector<8x16xf32>
    %169 = vector.broadcast %32 : vector<1x16xf32> to vector<8x16xf32>
    %170 = arith.addf %168, %169 : vector<8x16xf32>
    %171 = arith.mulf %158, %170 : vector<8x16xf32>
    %172 = arith.addf %167, %171 : vector<8x16xf32>
    %173 = math.tanh %172 : vector<8x16xf32>
    %174 = arith.subf %103, %173 : vector<8x16xf32>
    %175 = arith.mulf %166, %174 : vector<8x16xf32>
    %176 = arith.addf %173, %175 : vector<8x16xf32>
    %177 = arith.truncf %150 : vector<8x16xf32> to vector<8x16xbf16>
    %178 = arith.index_cast %112 : i32 to index
    %c0_69 = arith.constant 0 : index
    %179 = vector.load %arg7[%178, %c0_69] : memref<128x16xbf16, #tpu.memory_space<vmem>>, vector<8x16xbf16>
    tpu.vector_store %arg7[%178, %c0_69], %177 {strides = array<i32>} : memref<128x16xbf16, #tpu.memory_space<vmem>>, vector<8x16xbf16>,
    %180 = arith.truncf %176 : vector<8x16xf32> to vector<8x16xbf16>
    %181 = arith.index_cast %114 : i32 to index
    %c0_70 = arith.constant 0 : index
    %182 = vector.load %arg8[%181, %c0_70] : memref<128x16xbf16, #tpu.memory_space<vmem>>, vector<8x16xbf16>
    tpu.vector_store %arg8[%181, %c0_70], %180 {strides = array<i32>} : memref<128x16xbf16, #tpu.memory_space<vmem>>, vector<8x16xbf16>,
    %c2_i32 = arith.constant 2 : i32
    %c15_i32_71 = arith.constant 15 : i32
    %183 = arith.subi %c15_i32_71, %c2_i32 : i32
    %c8_i32_72 = arith.constant 8 : i32
    %184 = arith.muli %c2_i32, %c8_i32_72 : i32
    %185 = tpu.assume_multiple %184, 8 : i32
    %c8_i32_73 = arith.constant 8 : i32
    %186 = arith.muli %183, %c8_i32_73 : i32
    %187 = tpu.assume_multiple %186, 8 : i32
    %c0_74 = arith.constant 0 : index
    %188 = arith.index_cast %185 : i32 to index
    %c0_75 = arith.constant 0 : index
    %189 = vector.load %arg9[%c0_74, %188, %c0_75] : memref<2x128x48xf32, #tpu.memory_space<vmem>>, vector<1x8x48xf32>
    %190 = vector.shape_cast %189 : vector<1x8x48xf32> to vector<8x48xf32>
    %c1_76 = arith.constant 1 : index
    %191 = arith.index_cast %187 : i32 to index
    %c0_77 = arith.constant 0 : index
    %192 = vector.load %arg9[%c1_76, %191, %c0_77] : memref<2x128x48xf32, #tpu.memory_space<vmem>>, vector<1x8x48xf32>
    %193 = vector.shape_cast %192 : vector<1x8x48xf32> to vector<8x48xf32>
    %194 = arith.truncf %150 : vector<8x16xf32> to vector<8x16xbf16>
    %cst_78 = arith.constant dense<0.000000e+00> : vector<8x48xf32>
    %195 = tpu.matmul %194, %26, %cst_78 {dimension_numbers = #tpu.dot_dimension_numbers<[1], [0], [0], [1], [0, 0, 1, 1], [], []>} : vector<8x16xbf16>, vector<16x48xbf16>, vector<8x48xf32> -> vector<8x48xf32>
    %196 = arith.truncf %176 : vector<8x16xf32> to vector<8x16xbf16>
    %cst_79 = arith.constant dense<0.000000e+00> : vector<8x48xf32>
    %197 = tpu.matmul %196, %28, %cst_79 {dimension_numbers = #tpu.dot_dimension_numbers<[1], [0], [0], [1], [0, 0, 1, 1], [], []>} : vector<8x16xbf16>, vector<16x48xbf16>, vector<8x48xf32> -> vector<8x48xf32>
    %198 = vector.extract_strided_slice %190 {offsets = [0, 0], sizes = [8, 16], strides = [1, 1]} : vector<8x48xf32> to vector<8x16xf32>
    %199 = vector.extract_strided_slice %195 {offsets = [0, 0], sizes = [8, 16], strides = [1, 1]} : vector<8x48xf32> to vector<8x16xf32>
    %200 = arith.addf %198, %199 : vector<8x16xf32>
    %201 = arith.negf %200 : vector<8x16xf32>
    %202 = math.exp %201 : vector<8x16xf32>
    %cst_80 = arith.constant 1.000000e+00 : f32
    %203 = vector.broadcast %cst_80 : f32 to vector<8x16xf32>
    %204 = arith.addf %203, %202 : vector<8x16xf32>
    %205 = arith.divf %203, %204 : vector<8x16xf32>
    %206 = vector.extract_strided_slice %190 {offsets = [0, 16], sizes = [8, 16], strides = [1, 1]} : vector<8x48xf32> to vector<8x16xf32>
    %207 = vector.extract_strided_slice %195 {offsets = [0, 16], sizes = [8, 16], strides = [1, 1]} : vector<8x48xf32> to vector<8x16xf32>
    %208 = arith.addf %206, %207 : vector<8x16xf32>
    %209 = arith.negf %208 : vector<8x16xf32>
    %210 = math.exp %209 : vector<8x16xf32>
    %cst_81 = arith.constant 1.000000e+00 : f32
    %211 = vector.broadcast %cst_81 : f32 to vector<8x16xf32>
    %212 = arith.addf %211, %210 : vector<8x16xf32>
    %213 = arith.divf %211, %212 : vector<8x16xf32>
    %214 = vector.extract_strided_slice %190 {offsets = [0, 32], sizes = [8, 16], strides = [1, 1]} : vector<8x48xf32> to vector<8x16xf32>
    %215 = vector.extract_strided_slice %195 {offsets = [0, 32], sizes = [8, 16], strides = [1, 1]} : vector<8x48xf32> to vector<8x16xf32>
    %216 = vector.broadcast %30 : vector<1x16xf32> to vector<8x16xf32>
    %217 = arith.addf %215, %216 : vector<8x16xf32>
    %218 = arith.mulf %205, %217 : vector<8x16xf32>
    %219 = arith.addf %214, %218 : vector<8x16xf32>
    %220 = math.tanh %219 : vector<8x16xf32>
    %221 = arith.subf %150, %220 : vector<8x16xf32>
    %222 = arith.mulf %213, %221 : vector<8x16xf32>
    %223 = arith.addf %220, %222 : vector<8x16xf32>
    %224 = vector.extract_strided_slice %193 {offsets = [0, 0], sizes = [8, 16], strides = [1, 1]} : vector<8x48xf32> to vector<8x16xf32>
    %225 = vector.extract_strided_slice %197 {offsets = [0, 0], sizes = [8, 16], strides = [1, 1]} : vector<8x48xf32> to vector<8x16xf32>
    %226 = arith.addf %224, %225 : vector<8x16xf32>
    %227 = arith.negf %226 : vector<8x16xf32>
    %228 = math.exp %227 : vector<8x16xf32>
    %cst_82 = arith.constant 1.000000e+00 : f32
    %229 = vector.broadcast %cst_82 : f32 to vector<8x16xf32>
    %230 = arith.addf %229, %228 : vector<8x16xf32>
    %231 = arith.divf %229, %230 : vector<8x16xf32>
    %232 = vector.extract_strided_slice %193 {offsets = [0, 16], sizes = [8, 16], strides = [1, 1]} : vector<8x48xf32> to vector<8x16xf32>
    %233 = vector.extract_strided_slice %197 {offsets = [0, 16], sizes = [8, 16], strides = [1, 1]} : vector<8x48xf32> to vector<8x16xf32>
    %234 = arith.addf %232, %233 : vector<8x16xf32>
    %235 = arith.negf %234 : vector<8x16xf32>
    %236 = math.exp %235 : vector<8x16xf32>
    %cst_83 = arith.constant 1.000000e+00 : f32
    %237 = vector.broadcast %cst_83 : f32 to vector<8x16xf32>
    %238 = arith.addf %237, %236 : vector<8x16xf32>
    %239 = arith.divf %237, %238 : vector<8x16xf32>
    %240 = vector.extract_strided_slice %193 {offsets = [0, 32], sizes = [8, 16], strides = [1, 1]} : vector<8x48xf32> to vector<8x16xf32>
    %241 = vector.extract_strided_slice %197 {offsets = [0, 32], sizes = [8, 16], strides = [1, 1]} : vector<8x48xf32> to vector<8x16xf32>
    %242 = vector.broadcast %32 : vector<1x16xf32> to vector<8x16xf32>
    %243 = arith.addf %241, %242 : vector<8x16xf32>
    %244 = arith.mulf %231, %243 : vector<8x16xf32>
    %245 = arith.addf %240, %244 : vector<8x16xf32>
    %246 = math.tanh %245 : vector<8x16xf32>
    %247 = arith.subf %176, %246 : vector<8x16xf32>
    %248 = arith.mulf %239, %247 : vector<8x16xf32>
    %249 = arith.addf %246, %248 : vector<8x16xf32>
    %250 = arith.truncf %223 : vector<8x16xf32> to vector<8x16xbf16>
    %251 = arith.index_cast %185 : i32 to index
    %c0_84 = arith.constant 0 : index
    %252 = vector.load %arg7[%251, %c0_84] : memref<128x16xbf16, #tpu.memory_space<vmem>>, vector<8x16xbf16>
    tpu.vector_store %arg7[%251, %c0_84], %250 {strides = array<i32>} : memref<128x16xbf16, #tpu.memory_space<vmem>>, vector<8x16xbf16>,
    %253 = arith.truncf %249 : vector<8x16xf32> to vector<8x16xbf16>
    %254 = arith.index_cast %187 : i32 to index
    %c0_85 = arith.constant 0 : index
    %255 = vector.load %arg8[%254, %c0_85] : memref<128x16xbf16, #tpu.memory_space<vmem>>, vector<8x16xbf16>
    tpu.vector_store %arg8[%254, %c0_85], %253 {strides = array<i32>} : memref<128x16xbf16, #tpu.memory_space<vmem>>, vector<8x16xbf16>,
    %c3_i32 = arith.constant 3 : i32
    %c15_i32_86 = arith.constant 15 : i32
    %256 = arith.subi %c15_i32_86, %c3_i32 : i32
    %c8_i32_87 = arith.constant 8 : i32
    %257 = arith.muli %c3_i32, %c8_i32_87 : i32
    %258 = tpu.assume_multiple %257, 8 : i32
    %c8_i32_88 = arith.constant 8 : i32
    %259 = arith.muli %256, %c8_i32_88 : i32
    %260 = tpu.assume_multiple %259, 8 : i32
    %c0_89 = arith.constant 0 : index
    %261 = arith.index_cast %258 : i32 to index
    %c0_90 = arith.constant 0 : index
    %262 = vector.load %arg9[%c0_89, %261, %c0_90] : memref<2x128x48xf32, #tpu.memory_space<vmem>>, vector<1x8x48xf32>
    %263 = vector.shape_cast %262 : vector<1x8x48xf32> to vector<8x48xf32>
    %c1_91 = arith.constant 1 : index
    %264 = arith.index_cast %260 : i32 to index
    %c0_92 = arith.constant 0 : index
    %265 = vector.load %arg9[%c1_91, %264, %c0_92] : memref<2x128x48xf32, #tpu.memory_space<vmem>>, vector<1x8x48xf32>
    %266 = vector.shape_cast %265 : vector<1x8x48xf32> to vector<8x48xf32>
    %267 = arith.truncf %223 : vector<8x16xf32> to vector<8x16xbf16>
    %cst_93 = arith.constant dense<0.000000e+00> : vector<8x48xf32>
    %268 = tpu.matmul %267, %26, %cst_93 {dimension_numbers = #tpu.dot_dimension_numbers<[1], [0], [0], [1], [0, 0, 1, 1], [], []>} : vector<8x16xbf16>, vector<16x48xbf16>, vector<8x48xf32> -> vector<8x48xf32>
    %269 = arith.truncf %249 : vector<8x16xf32> to vector<8x16xbf16>
    %cst_94 = arith.constant dense<0.000000e+00> : vector<8x48xf32>
    %270 = tpu.matmul %269, %28, %cst_94 {dimension_numbers = #tpu.dot_dimension_numbers<[1], [0], [0], [1], [0, 0, 1, 1], [], []>} : vector<8x16xbf16>, vector<16x48xbf16>, vector<8x48xf32> -> vector<8x48xf32>
    %271 = vector.extract_strided_slice %263 {offsets = [0, 0], sizes = [8, 16], strides = [1, 1]} : vector<8x48xf32> to vector<8x16xf32>
    %272 = vector.extract_strided_slice %268 {offsets = [0, 0], sizes = [8, 16], strides = [1, 1]} : vector<8x48xf32> to vector<8x16xf32>
    %273 = arith.addf %271, %272 : vector<8x16xf32>
    %274 = arith.negf %273 : vector<8x16xf32>
    %275 = math.exp %274 : vector<8x16xf32>
    %cst_95 = arith.constant 1.000000e+00 : f32
    %276 = vector.broadcast %cst_95 : f32 to vector<8x16xf32>
    %277 = arith.addf %276, %275 : vector<8x16xf32>
    %278 = arith.divf %276, %277 : vector<8x16xf32>
    %279 = vector.extract_strided_slice %263 {offsets = [0, 16], sizes = [8, 16], strides = [1, 1]} : vector<8x48xf32> to vector<8x16xf32>
    %280 = vector.extract_strided_slice %268 {offsets = [0, 16], sizes = [8, 16], strides = [1, 1]} : vector<8x48xf32> to vector<8x16xf32>
    %281 = arith.addf %279, %280 : vector<8x16xf32>
    %282 = arith.negf %281 : vector<8x16xf32>
    %283 = math.exp %282 : vector<8x16xf32>
    %cst_96 = arith.constant 1.000000e+00 : f32
    %284 = vector.broadcast %cst_96 : f32 to vector<8x16xf32>
    %285 = arith.addf %284, %283 : vector<8x16xf32>
    %286 = arith.divf %284, %285 : vector<8x16xf32>
    %287 = vector.extract_strided_slice %263 {offsets = [0, 32], sizes = [8, 16], strides = [1, 1]} : vector<8x48xf32> to vector<8x16xf32>
    %288 = vector.extract_strided_slice %268 {offsets = [0, 32], sizes = [8, 16], strides = [1, 1]} : vector<8x48xf32> to vector<8x16xf32>
    %289 = vector.broadcast %30 : vector<1x16xf32> to vector<8x16xf32>
    %290 = arith.addf %288, %289 : vector<8x16xf32>
    %291 = arith.mulf %278, %290 : vector<8x16xf32>
    %292 = arith.addf %287, %291 : vector<8x16xf32>
    %293 = math.tanh %292 : vector<8x16xf32>
    %294 = arith.subf %223, %293 : vector<8x16xf32>
    %295 = arith.mulf %286, %294 : vector<8x16xf32>
    %296 = arith.addf %293, %295 : vector<8x16xf32>
    %297 = vector.extract_strided_slice %266 {offsets = [0, 0], sizes = [8, 16], strides = [1, 1]} : vector<8x48xf32> to vector<8x16xf32>
    %298 = vector.extract_strided_slice %270 {offsets = [0, 0], sizes = [8, 16], strides = [1, 1]} : vector<8x48xf32> to vector<8x16xf32>
    %299 = arith.addf %297, %298 : vector<8x16xf32>
    %300 = arith.negf %299 : vector<8x16xf32>
    %301 = math.exp %300 : vector<8x16xf32>
    %cst_97 = arith.constant 1.000000e+00 : f32
    %302 = vector.broadcast %cst_97 : f32 to vector<8x16xf32>
    %303 = arith.addf %302, %301 : vector<8x16xf32>
    %304 = arith.divf %302, %303 : vector<8x16xf32>
    %305 = vector.extract_strided_slice %266 {offsets = [0, 16], sizes = [8, 16], strides = [1, 1]} : vector<8x48xf32> to vector<8x16xf32>
    %306 = vector.extract_strided_slice %270 {offsets = [0, 16], sizes = [8, 16], strides = [1, 1]} : vector<8x48xf32> to vector<8x16xf32>
    %307 = arith.addf %305, %306 : vector<8x16xf32>
    %308 = arith.negf %307 : vector<8x16xf32>
    %309 = math.exp %308 : vector<8x16xf32>
    %cst_98 = arith.constant 1.000000e+00 : f32
    %310 = vector.broadcast %cst_98 : f32 to vector<8x16xf32>
    %311 = arith.addf %310, %309 : vector<8x16xf32>
    %312 = arith.divf %310, %311 : vector<8x16xf32>
    %313 = vector.extract_strided_slice %266 {offsets = [0, 32], sizes = [8, 16], strides = [1, 1]} : vector<8x48xf32> to vector<8x16xf32>
    %314 = vector.extract_strided_slice %270 {offsets = [0, 32], sizes = [8, 16], strides = [1, 1]} : vector<8x48xf32> to vector<8x16xf32>
    %315 = vector.broadcast %32 : vector<1x16xf32> to vector<8x16xf32>
    %316 = arith.addf %314, %315 : vector<8x16xf32>
    %317 = arith.mulf %304, %316 : vector<8x16xf32>
    %318 = arith.addf %313, %317 : vector<8x16xf32>
    %319 = math.tanh %318 : vector<8x16xf32>
    %320 = arith.subf %249, %319 : vector<8x16xf32>
    %321 = arith.mulf %312, %320 : vector<8x16xf32>
    %322 = arith.addf %319, %321 : vector<8x16xf32>
    %323 = arith.truncf %296 : vector<8x16xf32> to vector<8x16xbf16>
    %324 = arith.index_cast %258 : i32 to index
    %c0_99 = arith.constant 0 : index
    %325 = vector.load %arg7[%324, %c0_99] : memref<128x16xbf16, #tpu.memory_space<vmem>>, vector<8x16xbf16>
    tpu.vector_store %arg7[%324, %c0_99], %323 {strides = array<i32>} : memref<128x16xbf16, #tpu.memory_space<vmem>>, vector<8x16xbf16>,
    %326 = arith.truncf %322 : vector<8x16xf32> to vector<8x16xbf16>
    %327 = arith.index_cast %260 : i32 to index
    %c0_100 = arith.constant 0 : index
    %328 = vector.load %arg8[%327, %c0_100] : memref<128x16xbf16, #tpu.memory_space<vmem>>, vector<8x16xbf16>
    tpu.vector_store %arg8[%327, %c0_100], %326 {strides = array<i32>} : memref<128x16xbf16, #tpu.memory_space<vmem>>, vector<8x16xbf16>,
    %c4_i32 = arith.constant 4 : i32
    %c15_i32_101 = arith.constant 15 : i32
    %329 = arith.subi %c15_i32_101, %c4_i32 : i32
    %c8_i32_102 = arith.constant 8 : i32
    %330 = arith.muli %c4_i32, %c8_i32_102 : i32
    %331 = tpu.assume_multiple %330, 8 : i32
    %c8_i32_103 = arith.constant 8 : i32
    %332 = arith.muli %329, %c8_i32_103 : i32
    %333 = tpu.assume_multiple %332, 8 : i32
    %c0_104 = arith.constant 0 : index
    %334 = arith.index_cast %331 : i32 to index
    %c0_105 = arith.constant 0 : index
    %335 = vector.load %arg9[%c0_104, %334, %c0_105] : memref<2x128x48xf32, #tpu.memory_space<vmem>>, vector<1x8x48xf32>
    %336 = vector.shape_cast %335 : vector<1x8x48xf32> to vector<8x48xf32>
    %c1_106 = arith.constant 1 : index
    %337 = arith.index_cast %333 : i32 to index
    %c0_107 = arith.constant 0 : index
    %338 = vector.load %arg9[%c1_106, %337, %c0_107] : memref<2x128x48xf32, #tpu.memory_space<vmem>>, vector<1x8x48xf32>
    %339 = vector.shape_cast %338 : vector<1x8x48xf32> to vector<8x48xf32>
    %340 = arith.truncf %296 : vector<8x16xf32> to vector<8x16xbf16>
    %cst_108 = arith.constant dense<0.000000e+00> : vector<8x48xf32>
    %341 = tpu.matmul %340, %26, %cst_108 {dimension_numbers = #tpu.dot_dimension_numbers<[1], [0], [0], [1], [0, 0, 1, 1], [], []>} : vector<8x16xbf16>, vector<16x48xbf16>, vector<8x48xf32> -> vector<8x48xf32>
    %342 = arith.truncf %322 : vector<8x16xf32> to vector<8x16xbf16>
    %cst_109 = arith.constant dense<0.000000e+00> : vector<8x48xf32>
    %343 = tpu.matmul %342, %28, %cst_109 {dimension_numbers = #tpu.dot_dimension_numbers<[1], [0], [0], [1], [0, 0, 1, 1], [], []>} : vector<8x16xbf16>, vector<16x48xbf16>, vector<8x48xf32> -> vector<8x48xf32>
    %344 = vector.extract_strided_slice %336 {offsets = [0, 0], sizes = [8, 16], strides = [1, 1]} : vector<8x48xf32> to vector<8x16xf32>
    %345 = vector.extract_strided_slice %341 {offsets = [0, 0], sizes = [8, 16], strides = [1, 1]} : vector<8x48xf32> to vector<8x16xf32>
    %346 = arith.addf %344, %345 : vector<8x16xf32>
    %347 = arith.negf %346 : vector<8x16xf32>
    %348 = math.exp %347 : vector<8x16xf32>
    %cst_110 = arith.constant 1.000000e+00 : f32
    %349 = vector.broadcast %cst_110 : f32 to vector<8x16xf32>
    %350 = arith.addf %349, %348 : vector<8x16xf32>
    %351 = arith.divf %349, %350 : vector<8x16xf32>
    %352 = vector.extract_strided_slice %336 {offsets = [0, 16], sizes = [8, 16], strides = [1, 1]} : vector<8x48xf32> to vector<8x16xf32>
    %353 = vector.extract_strided_slice %341 {offsets = [0, 16], sizes = [8, 16], strides = [1, 1]} : vector<8x48xf32> to vector<8x16xf32>
    %354 = arith.addf %352, %353 : vector<8x16xf32>
    %355 = arith.negf %354 : vector<8x16xf32>
    %356 = math.exp %355 : vector<8x16xf32>
    %cst_111 = arith.constant 1.000000e+00 : f32
    %357 = vector.broadcast %cst_111 : f32 to vector<8x16xf32>
    %358 = arith.addf %357, %356 : vector<8x16xf32>
    %359 = arith.divf %357, %358 : vector<8x16xf32>
    %360 = vector.extract_strided_slice %336 {offsets = [0, 32], sizes = [8, 16], strides = [1, 1]} : vector<8x48xf32> to vector<8x16xf32>
    %361 = vector.extract_strided_slice %341 {offsets = [0, 32], sizes = [8, 16], strides = [1, 1]} : vector<8x48xf32> to vector<8x16xf32>
    %362 = vector.broadcast %30 : vector<1x16xf32> to vector<8x16xf32>
    %363 = arith.addf %361, %362 : vector<8x16xf32>
    %364 = arith.mulf %351, %363 : vector<8x16xf32>
    %365 = arith.addf %360, %364 : vector<8x16xf32>
    %366 = math.tanh %365 : vector<8x16xf32>
    %367 = arith.subf %296, %366 : vector<8x16xf32>
    %368 = arith.mulf %359, %367 : vector<8x16xf32>
    %369 = arith.addf %366, %368 : vector<8x16xf32>
    %370 = vector.extract_strided_slice %339 {offsets = [0, 0], sizes = [8, 16], strides = [1, 1]} : vector<8x48xf32> to vector<8x16xf32>
    %371 = vector.extract_strided_slice %343 {offsets = [0, 0], sizes = [8, 16], strides = [1, 1]} : vector<8x48xf32> to vector<8x16xf32>
    %372 = arith.addf %370, %371 : vector<8x16xf32>
    %373 = arith.negf %372 : vector<8x16xf32>
    %374 = math.exp %373 : vector<8x16xf32>
    %cst_112 = arith.constant 1.000000e+00 : f32
    %375 = vector.broadcast %cst_112 : f32 to vector<8x16xf32>
    %376 = arith.addf %375, %374 : vector<8x16xf32>
    %377 = arith.divf %375, %376 : vector<8x16xf32>
    %378 = vector.extract_strided_slice %339 {offsets = [0, 16], sizes = [8, 16], strides = [1, 1]} : vector<8x48xf32> to vector<8x16xf32>
    %379 = vector.extract_strided_slice %343 {offsets = [0, 16], sizes = [8, 16], strides = [1, 1]} : vector<8x48xf32> to vector<8x16xf32>
    %380 = arith.addf %378, %379 : vector<8x16xf32>
    %381 = arith.negf %380 : vector<8x16xf32>
    %382 = math.exp %381 : vector<8x16xf32>
    %cst_113 = arith.constant 1.000000e+00 : f32
    %383 = vector.broadcast %cst_113 : f32 to vector<8x16xf32>
    %384 = arith.addf %383, %382 : vector<8x16xf32>
    %385 = arith.divf %383, %384 : vector<8x16xf32>
    %386 = vector.extract_strided_slice %339 {offsets = [0, 32], sizes = [8, 16], strides = [1, 1]} : vector<8x48xf32> to vector<8x16xf32>
    %387 = vector.extract_strided_slice %343 {offsets = [0, 32], sizes = [8, 16], strides = [1, 1]} : vector<8x48xf32> to vector<8x16xf32>
    %388 = vector.broadcast %32 : vector<1x16xf32> to vector<8x16xf32>
    %389 = arith.addf %387, %388 : vector<8x16xf32>
    %390 = arith.mulf %377, %389 : vector<8x16xf32>
    %391 = arith.addf %386, %390 : vector<8x16xf32>
    %392 = math.tanh %391 : vector<8x16xf32>
    %393 = arith.subf %322, %392 : vector<8x16xf32>
    %394 = arith.mulf %385, %393 : vector<8x16xf32>
    %395 = arith.addf %392, %394 : vector<8x16xf32>
    %396 = arith.truncf %369 : vector<8x16xf32> to vector<8x16xbf16>
    %397 = arith.index_cast %331 : i32 to index
    %c0_114 = arith.constant 0 : index
    %398 = vector.load %arg7[%397, %c0_114] : memref<128x16xbf16, #tpu.memory_space<vmem>>, vector<8x16xbf16>
    tpu.vector_store %arg7[%397, %c0_114], %396 {strides = array<i32>} : memref<128x16xbf16, #tpu.memory_space<vmem>>, vector<8x16xbf16>,
    %399 = arith.truncf %395 : vector<8x16xf32> to vector<8x16xbf16>
    %400 = arith.index_cast %333 : i32 to index
    %c0_115 = arith.constant 0 : index
    %401 = vector.load %arg8[%400, %c0_115] : memref<128x16xbf16, #tpu.memory_space<vmem>>, vector<8x16xbf16>
    tpu.vector_store %arg8[%400, %c0_115], %399 {strides = array<i32>} : memref<128x16xbf16, #tpu.memory_space<vmem>>, vector<8x16xbf16>,
    %c5_i32 = arith.constant 5 : i32
    %c15_i32_116 = arith.constant 15 : i32
    %402 = arith.subi %c15_i32_116, %c5_i32 : i32
    %c8_i32_117 = arith.constant 8 : i32
    %403 = arith.muli %c5_i32, %c8_i32_117 : i32
    %404 = tpu.assume_multiple %403, 8 : i32
    %c8_i32_118 = arith.constant 8 : i32
    %405 = arith.muli %402, %c8_i32_118 : i32
    %406 = tpu.assume_multiple %405, 8 : i32
    %c0_119 = arith.constant 0 : index
    %407 = arith.index_cast %404 : i32 to index
    %c0_120 = arith.constant 0 : index
    %408 = vector.load %arg9[%c0_119, %407, %c0_120] : memref<2x128x48xf32, #tpu.memory_space<vmem>>, vector<1x8x48xf32>
    %409 = vector.shape_cast %408 : vector<1x8x48xf32> to vector<8x48xf32>
    %c1_121 = arith.constant 1 : index
    %410 = arith.index_cast %406 : i32 to index
    %c0_122 = arith.constant 0 : index
    %411 = vector.load %arg9[%c1_121, %410, %c0_122] : memref<2x128x48xf32, #tpu.memory_space<vmem>>, vector<1x8x48xf32>
    %412 = vector.shape_cast %411 : vector<1x8x48xf32> to vector<8x48xf32>
    %413 = arith.truncf %369 : vector<8x16xf32> to vector<8x16xbf16>
    %cst_123 = arith.constant dense<0.000000e+00> : vector<8x48xf32>
    %414 = tpu.matmul %413, %26, %cst_123 {dimension_numbers = #tpu.dot_dimension_numbers<[1], [0], [0], [1], [0, 0, 1, 1], [], []>} : vector<8x16xbf16>, vector<16x48xbf16>, vector<8x48xf32> -> vector<8x48xf32>
    %415 = arith.truncf %395 : vector<8x16xf32> to vector<8x16xbf16>
    %cst_124 = arith.constant dense<0.000000e+00> : vector<8x48xf32>
    %416 = tpu.matmul %415, %28, %cst_124 {dimension_numbers = #tpu.dot_dimension_numbers<[1], [0], [0], [1], [0, 0, 1, 1], [], []>} : vector<8x16xbf16>, vector<16x48xbf16>, vector<8x48xf32> -> vector<8x48xf32>
    %417 = vector.extract_strided_slice %409 {offsets = [0, 0], sizes = [8, 16], strides = [1, 1]} : vector<8x48xf32> to vector<8x16xf32>
    %418 = vector.extract_strided_slice %414 {offsets = [0, 0], sizes = [8, 16], strides = [1, 1]} : vector<8x48xf32> to vector<8x16xf32>
    %419 = arith.addf %417, %418 : vector<8x16xf32>
    %420 = arith.negf %419 : vector<8x16xf32>
    %421 = math.exp %420 : vector<8x16xf32>
    %cst_125 = arith.constant 1.000000e+00 : f32
    %422 = vector.broadcast %cst_125 : f32 to vector<8x16xf32>
    %423 = arith.addf %422, %421 : vector<8x16xf32>
    %424 = arith.divf %422, %423 : vector<8x16xf32>
    %425 = vector.extract_strided_slice %409 {offsets = [0, 16], sizes = [8, 16], strides = [1, 1]} : vector<8x48xf32> to vector<8x16xf32>
    %426 = vector.extract_strided_slice %414 {offsets = [0, 16], sizes = [8, 16], strides = [1, 1]} : vector<8x48xf32> to vector<8x16xf32>
    %427 = arith.addf %425, %426 : vector<8x16xf32>
    %428 = arith.negf %427 : vector<8x16xf32>
    %429 = math.exp %428 : vector<8x16xf32>
    %cst_126 = arith.constant 1.000000e+00 : f32
    %430 = vector.broadcast %cst_126 : f32 to vector<8x16xf32>
    %431 = arith.addf %430, %429 : vector<8x16xf32>
    %432 = arith.divf %430, %431 : vector<8x16xf32>
    %433 = vector.extract_strided_slice %409 {offsets = [0, 32], sizes = [8, 16], strides = [1, 1]} : vector<8x48xf32> to vector<8x16xf32>
    %434 = vector.extract_strided_slice %414 {offsets = [0, 32], sizes = [8, 16], strides = [1, 1]} : vector<8x48xf32> to vector<8x16xf32>
    %435 = vector.broadcast %30 : vector<1x16xf32> to vector<8x16xf32>
    %436 = arith.addf %434, %435 : vector<8x16xf32>
    %437 = arith.mulf %424, %436 : vector<8x16xf32>
    %438 = arith.addf %433, %437 : vector<8x16xf32>
    %439 = math.tanh %438 : vector<8x16xf32>
    %440 = arith.subf %369, %439 : vector<8x16xf32>
    %441 = arith.mulf %432, %440 : vector<8x16xf32>
    %442 = arith.addf %439, %441 : vector<8x16xf32>
    %443 = vector.extract_strided_slice %412 {offsets = [0, 0], sizes = [8, 16], strides = [1, 1]} : vector<8x48xf32> to vector<8x16xf32>
    %444 = vector.extract_strided_slice %416 {offsets = [0, 0], sizes = [8, 16], strides = [1, 1]} : vector<8x48xf32> to vector<8x16xf32>
    %445 = arith.addf %443, %444 : vector<8x16xf32>
    %446 = arith.negf %445 : vector<8x16xf32>
    %447 = math.exp %446 : vector<8x16xf32>
    %cst_127 = arith.constant 1.000000e+00 : f32
    %448 = vector.broadcast %cst_127 : f32 to vector<8x16xf32>
    %449 = arith.addf %448, %447 : vector<8x16xf32>
    %450 = arith.divf %448, %449 : vector<8x16xf32>
    %451 = vector.extract_strided_slice %412 {offsets = [0, 16], sizes = [8, 16], strides = [1, 1]} : vector<8x48xf32> to vector<8x16xf32>
    %452 = vector.extract_strided_slice %416 {offsets = [0, 16], sizes = [8, 16], strides = [1, 1]} : vector<8x48xf32> to vector<8x16xf32>
    %453 = arith.addf %451, %452 : vector<8x16xf32>
    %454 = arith.negf %453 : vector<8x16xf32>
    %455 = math.exp %454 : vector<8x16xf32>
    %cst_128 = arith.constant 1.000000e+00 : f32
    %456 = vector.broadcast %cst_128 : f32 to vector<8x16xf32>
    %457 = arith.addf %456, %455 : vector<8x16xf32>
    %458 = arith.divf %456, %457 : vector<8x16xf32>
    %459 = vector.extract_strided_slice %412 {offsets = [0, 32], sizes = [8, 16], strides = [1, 1]} : vector<8x48xf32> to vector<8x16xf32>
    %460 = vector.extract_strided_slice %416 {offsets = [0, 32], sizes = [8, 16], strides = [1, 1]} : vector<8x48xf32> to vector<8x16xf32>
    %461 = vector.broadcast %32 : vector<1x16xf32> to vector<8x16xf32>
    %462 = arith.addf %460, %461 : vector<8x16xf32>
    %463 = arith.mulf %450, %462 : vector<8x16xf32>
    %464 = arith.addf %459, %463 : vector<8x16xf32>
    %465 = math.tanh %464 : vector<8x16xf32>
    %466 = arith.subf %395, %465 : vector<8x16xf32>
    %467 = arith.mulf %458, %466 : vector<8x16xf32>
    %468 = arith.addf %465, %467 : vector<8x16xf32>
    %469 = arith.truncf %442 : vector<8x16xf32> to vector<8x16xbf16>
    %470 = arith.index_cast %404 : i32 to index
    %c0_129 = arith.constant 0 : index
    %471 = vector.load %arg7[%470, %c0_129] : memref<128x16xbf16, #tpu.memory_space<vmem>>, vector<8x16xbf16>
    tpu.vector_store %arg7[%470, %c0_129], %469 {strides = array<i32>} : memref<128x16xbf16, #tpu.memory_space<vmem>>, vector<8x16xbf16>,
    %472 = arith.truncf %468 : vector<8x16xf32> to vector<8x16xbf16>
    %473 = arith.index_cast %406 : i32 to index
    %c0_130 = arith.constant 0 : index
    %474 = vector.load %arg8[%473, %c0_130] : memref<128x16xbf16, #tpu.memory_space<vmem>>, vector<8x16xbf16>
    tpu.vector_store %arg8[%473, %c0_130], %472 {strides = array<i32>} : memref<128x16xbf16, #tpu.memory_space<vmem>>, vector<8x16xbf16>,
    %c6_i32 = arith.constant 6 : i32
    %c15_i32_131 = arith.constant 15 : i32
    %475 = arith.subi %c15_i32_131, %c6_i32 : i32
    %c8_i32_132 = arith.constant 8 : i32
    %476 = arith.muli %c6_i32, %c8_i32_132 : i32
    %477 = tpu.assume_multiple %476, 8 : i32
    %c8_i32_133 = arith.constant 8 : i32
    %478 = arith.muli %475, %c8_i32_133 : i32
    %479 = tpu.assume_multiple %478, 8 : i32
    %c0_134 = arith.constant 0 : index
    %480 = arith.index_cast %477 : i32 to index
    %c0_135 = arith.constant 0 : index
    %481 = vector.load %arg9[%c0_134, %480, %c0_135] : memref<2x128x48xf32, #tpu.memory_space<vmem>>, vector<1x8x48xf32>
    %482 = vector.shape_cast %481 : vector<1x8x48xf32> to vector<8x48xf32>
    %c1_136 = arith.constant 1 : index
    %483 = arith.index_cast %479 : i32 to index
    %c0_137 = arith.constant 0 : index
    %484 = vector.load %arg9[%c1_136, %483, %c0_137] : memref<2x128x48xf32, #tpu.memory_space<vmem>>, vector<1x8x48xf32>
    %485 = vector.shape_cast %484 : vector<1x8x48xf32> to vector<8x48xf32>
    %486 = arith.truncf %442 : vector<8x16xf32> to vector<8x16xbf16>
    %cst_138 = arith.constant dense<0.000000e+00> : vector<8x48xf32>
    %487 = tpu.matmul %486, %26, %cst_138 {dimension_numbers = #tpu.dot_dimension_numbers<[1], [0], [0], [1], [0, 0, 1, 1], [], []>} : vector<8x16xbf16>, vector<16x48xbf16>, vector<8x48xf32> -> vector<8x48xf32>
    %488 = arith.truncf %468 : vector<8x16xf32> to vector<8x16xbf16>
    %cst_139 = arith.constant dense<0.000000e+00> : vector<8x48xf32>
    %489 = tpu.matmul %488, %28, %cst_139 {dimension_numbers = #tpu.dot_dimension_numbers<[1], [0], [0], [1], [0, 0, 1, 1], [], []>} : vector<8x16xbf16>, vector<16x48xbf16>, vector<8x48xf32> -> vector<8x48xf32>
    %490 = vector.extract_strided_slice %482 {offsets = [0, 0], sizes = [8, 16], strides = [1, 1]} : vector<8x48xf32> to vector<8x16xf32>
    %491 = vector.extract_strided_slice %487 {offsets = [0, 0], sizes = [8, 16], strides = [1, 1]} : vector<8x48xf32> to vector<8x16xf32>
    %492 = arith.addf %490, %491 : vector<8x16xf32>
    %493 = arith.negf %492 : vector<8x16xf32>
    %494 = math.exp %493 : vector<8x16xf32>
    %cst_140 = arith.constant 1.000000e+00 : f32
    %495 = vector.broadcast %cst_140 : f32 to vector<8x16xf32>
    %496 = arith.addf %495, %494 : vector<8x16xf32>
    %497 = arith.divf %495, %496 : vector<8x16xf32>
    %498 = vector.extract_strided_slice %482 {offsets = [0, 16], sizes = [8, 16], strides = [1, 1]} : vector<8x48xf32> to vector<8x16xf32>
    %499 = vector.extract_strided_slice %487 {offsets = [0, 16], sizes = [8, 16], strides = [1, 1]} : vector<8x48xf32> to vector<8x16xf32>
    %500 = arith.addf %498, %499 : vector<8x16xf32>
    %501 = arith.negf %500 : vector<8x16xf32>
    %502 = math.exp %501 : vector<8x16xf32>
    %cst_141 = arith.constant 1.000000e+00 : f32
    %503 = vector.broadcast %cst_141 : f32 to vector<8x16xf32>
    %504 = arith.addf %503, %502 : vector<8x16xf32>
    %505 = arith.divf %503, %504 : vector<8x16xf32>
    %506 = vector.extract_strided_slice %482 {offsets = [0, 32], sizes = [8, 16], strides = [1, 1]} : vector<8x48xf32> to vector<8x16xf32>
    %507 = vector.extract_strided_slice %487 {offsets = [0, 32], sizes = [8, 16], strides = [1, 1]} : vector<8x48xf32> to vector<8x16xf32>
    %508 = vector.broadcast %30 : vector<1x16xf32> to vector<8x16xf32>
    %509 = arith.addf %507, %508 : vector<8x16xf32>
    %510 = arith.mulf %497, %509 : vector<8x16xf32>
    %511 = arith.addf %506, %510 : vector<8x16xf32>
    %512 = math.tanh %511 : vector<8x16xf32>
    %513 = arith.subf %442, %512 : vector<8x16xf32>
    %514 = arith.mulf %505, %513 : vector<8x16xf32>
    %515 = arith.addf %512, %514 : vector<8x16xf32>
    %516 = vector.extract_strided_slice %485 {offsets = [0, 0], sizes = [8, 16], strides = [1, 1]} : vector<8x48xf32> to vector<8x16xf32>
    %517 = vector.extract_strided_slice %489 {offsets = [0, 0], sizes = [8, 16], strides = [1, 1]} : vector<8x48xf32> to vector<8x16xf32>
    %518 = arith.addf %516, %517 : vector<8x16xf32>
    %519 = arith.negf %518 : vector<8x16xf32>
    %520 = math.exp %519 : vector<8x16xf32>
    %cst_142 = arith.constant 1.000000e+00 : f32
    %521 = vector.broadcast %cst_142 : f32 to vector<8x16xf32>
    %522 = arith.addf %521, %520 : vector<8x16xf32>
    %523 = arith.divf %521, %522 : vector<8x16xf32>
    %524 = vector.extract_strided_slice %485 {offsets = [0, 16], sizes = [8, 16], strides = [1, 1]} : vector<8x48xf32> to vector<8x16xf32>
    %525 = vector.extract_strided_slice %489 {offsets = [0, 16], sizes = [8, 16], strides = [1, 1]} : vector<8x48xf32> to vector<8x16xf32>
    %526 = arith.addf %524, %525 : vector<8x16xf32>
    %527 = arith.negf %526 : vector<8x16xf32>
    %528 = math.exp %527 : vector<8x16xf32>
    %cst_143 = arith.constant 1.000000e+00 : f32
    %529 = vector.broadcast %cst_143 : f32 to vector<8x16xf32>
    %530 = arith.addf %529, %528 : vector<8x16xf32>
    %531 = arith.divf %529, %530 : vector<8x16xf32>
    %532 = vector.extract_strided_slice %485 {offsets = [0, 32], sizes = [8, 16], strides = [1, 1]} : vector<8x48xf32> to vector<8x16xf32>
    %533 = vector.extract_strided_slice %489 {offsets = [0, 32], sizes = [8, 16], strides = [1, 1]} : vector<8x48xf32> to vector<8x16xf32>
    %534 = vector.broadcast %32 : vector<1x16xf32> to vector<8x16xf32>
    %535 = arith.addf %533, %534 : vector<8x16xf32>
    %536 = arith.mulf %523, %535 : vector<8x16xf32>
    %537 = arith.addf %532, %536 : vector<8x16xf32>
    %538 = math.tanh %537 : vector<8x16xf32>
    %539 = arith.subf %468, %538 : vector<8x16xf32>
    %540 = arith.mulf %531, %539 : vector<8x16xf32>
    %541 = arith.addf %538, %540 : vector<8x16xf32>
    %542 = arith.truncf %515 : vector<8x16xf32> to vector<8x16xbf16>
    %543 = arith.index_cast %477 : i32 to index
    %c0_144 = arith.constant 0 : index
    %544 = vector.load %arg7[%543, %c0_144] : memref<128x16xbf16, #tpu.memory_space<vmem>>, vector<8x16xbf16>
    tpu.vector_store %arg7[%543, %c0_144], %542 {strides = array<i32>} : memref<128x16xbf16, #tpu.memory_space<vmem>>, vector<8x16xbf16>,
    %545 = arith.truncf %541 : vector<8x16xf32> to vector<8x16xbf16>
    %546 = arith.index_cast %479 : i32 to index
    %c0_145 = arith.constant 0 : index
    %547 = vector.load %arg8[%546, %c0_145] : memref<128x16xbf16, #tpu.memory_space<vmem>>, vector<8x16xbf16>
    tpu.vector_store %arg8[%546, %c0_145], %545 {strides = array<i32>} : memref<128x16xbf16, #tpu.memory_space<vmem>>, vector<8x16xbf16>,
    %c7_i32 = arith.constant 7 : i32
    %c15_i32_146 = arith.constant 15 : i32
    %548 = arith.subi %c15_i32_146, %c7_i32 : i32
    %c8_i32_147 = arith.constant 8 : i32
    %549 = arith.muli %c7_i32, %c8_i32_147 : i32
    %550 = tpu.assume_multiple %549, 8 : i32
    %c8_i32_148 = arith.constant 8 : i32
    %551 = arith.muli %548, %c8_i32_148 : i32
    %552 = tpu.assume_multiple %551, 8 : i32
    %c0_149 = arith.constant 0 : index
    %553 = arith.index_cast %550 : i32 to index
    %c0_150 = arith.constant 0 : index
    %554 = vector.load %arg9[%c0_149, %553, %c0_150] : memref<2x128x48xf32, #tpu.memory_space<vmem>>, vector<1x8x48xf32>
    %555 = vector.shape_cast %554 : vector<1x8x48xf32> to vector<8x48xf32>
    %c1_151 = arith.constant 1 : index
    %556 = arith.index_cast %552 : i32 to index
    %c0_152 = arith.constant 0 : index
    %557 = vector.load %arg9[%c1_151, %556, %c0_152] : memref<2x128x48xf32, #tpu.memory_space<vmem>>, vector<1x8x48xf32>
    %558 = vector.shape_cast %557 : vector<1x8x48xf32> to vector<8x48xf32>
    %559 = arith.truncf %515 : vector<8x16xf32> to vector<8x16xbf16>
    %cst_153 = arith.constant dense<0.000000e+00> : vector<8x48xf32>
    %560 = tpu.matmul %559, %26, %cst_153 {dimension_numbers = #tpu.dot_dimension_numbers<[1], [0], [0], [1], [0, 0, 1, 1], [], []>} : vector<8x16xbf16>, vector<16x48xbf16>, vector<8x48xf32> -> vector<8x48xf32>
    %561 = arith.truncf %541 : vector<8x16xf32> to vector<8x16xbf16>
    %cst_154 = arith.constant dense<0.000000e+00> : vector<8x48xf32>
    %562 = tpu.matmul %561, %28, %cst_154 {dimension_numbers = #tpu.dot_dimension_numbers<[1], [0], [0], [1], [0, 0, 1, 1], [], []>} : vector<8x16xbf16>, vector<16x48xbf16>, vector<8x48xf32> -> vector<8x48xf32>
    %563 = vector.extract_strided_slice %555 {offsets = [0, 0], sizes = [8, 16], strides = [1, 1]} : vector<8x48xf32> to vector<8x16xf32>
    %564 = vector.extract_strided_slice %560 {offsets = [0, 0], sizes = [8, 16], strides = [1, 1]} : vector<8x48xf32> to vector<8x16xf32>
    %565 = arith.addf %563, %564 : vector<8x16xf32>
    %566 = arith.negf %565 : vector<8x16xf32>
    %567 = math.exp %566 : vector<8x16xf32>
    %cst_155 = arith.constant 1.000000e+00 : f32
    %568 = vector.broadcast %cst_155 : f32 to vector<8x16xf32>
    %569 = arith.addf %568, %567 : vector<8x16xf32>
    %570 = arith.divf %568, %569 : vector<8x16xf32>
    %571 = vector.extract_strided_slice %555 {offsets = [0, 16], sizes = [8, 16], strides = [1, 1]} : vector<8x48xf32> to vector<8x16xf32>
    %572 = vector.extract_strided_slice %560 {offsets = [0, 16], sizes = [8, 16], strides = [1, 1]} : vector<8x48xf32> to vector<8x16xf32>
    %573 = arith.addf %571, %572 : vector<8x16xf32>
    %574 = arith.negf %573 : vector<8x16xf32>
    %575 = math.exp %574 : vector<8x16xf32>
    %cst_156 = arith.constant 1.000000e+00 : f32
    %576 = vector.broadcast %cst_156 : f32 to vector<8x16xf32>
    %577 = arith.addf %576, %575 : vector<8x16xf32>
    %578 = arith.divf %576, %577 : vector<8x16xf32>
    %579 = vector.extract_strided_slice %555 {offsets = [0, 32], sizes = [8, 16], strides = [1, 1]} : vector<8x48xf32> to vector<8x16xf32>
    %580 = vector.extract_strided_slice %560 {offsets = [0, 32], sizes = [8, 16], strides = [1, 1]} : vector<8x48xf32> to vector<8x16xf32>
    %581 = vector.broadcast %30 : vector<1x16xf32> to vector<8x16xf32>
    %582 = arith.addf %580, %581 : vector<8x16xf32>
    %583 = arith.mulf %570, %582 : vector<8x16xf32>
    %584 = arith.addf %579, %583 : vector<8x16xf32>
    %585 = math.tanh %584 : vector<8x16xf32>
    %586 = arith.subf %515, %585 : vector<8x16xf32>
    %587 = arith.mulf %578, %586 : vector<8x16xf32>
    %588 = arith.addf %585, %587 : vector<8x16xf32>
    %589 = vector.extract_strided_slice %558 {offsets = [0, 0], sizes = [8, 16], strides = [1, 1]} : vector<8x48xf32> to vector<8x16xf32>
    %590 = vector.extract_strided_slice %562 {offsets = [0, 0], sizes = [8, 16], strides = [1, 1]} : vector<8x48xf32> to vector<8x16xf32>
    %591 = arith.addf %589, %590 : vector<8x16xf32>
    %592 = arith.negf %591 : vector<8x16xf32>
    %593 = math.exp %592 : vector<8x16xf32>
    %cst_157 = arith.constant 1.000000e+00 : f32
    %594 = vector.broadcast %cst_157 : f32 to vector<8x16xf32>
    %595 = arith.addf %594, %593 : vector<8x16xf32>
    %596 = arith.divf %594, %595 : vector<8x16xf32>
    %597 = vector.extract_strided_slice %558 {offsets = [0, 16], sizes = [8, 16], strides = [1, 1]} : vector<8x48xf32> to vector<8x16xf32>
    %598 = vector.extract_strided_slice %562 {offsets = [0, 16], sizes = [8, 16], strides = [1, 1]} : vector<8x48xf32> to vector<8x16xf32>
    %599 = arith.addf %597, %598 : vector<8x16xf32>
    %600 = arith.negf %599 : vector<8x16xf32>
    %601 = math.exp %600 : vector<8x16xf32>
    %cst_158 = arith.constant 1.000000e+00 : f32
    %602 = vector.broadcast %cst_158 : f32 to vector<8x16xf32>
    %603 = arith.addf %602, %601 : vector<8x16xf32>
    %604 = arith.divf %602, %603 : vector<8x16xf32>
    %605 = vector.extract_strided_slice %558 {offsets = [0, 32], sizes = [8, 16], strides = [1, 1]} : vector<8x48xf32> to vector<8x16xf32>
    %606 = vector.extract_strided_slice %562 {offsets = [0, 32], sizes = [8, 16], strides = [1, 1]} : vector<8x48xf32> to vector<8x16xf32>
    %607 = vector.broadcast %32 : vector<1x16xf32> to vector<8x16xf32>
    %608 = arith.addf %606, %607 : vector<8x16xf32>
    %609 = arith.mulf %596, %608 : vector<8x16xf32>
    %610 = arith.addf %605, %609 : vector<8x16xf32>
    %611 = math.tanh %610 : vector<8x16xf32>
    %612 = arith.subf %541, %611 : vector<8x16xf32>
    %613 = arith.mulf %604, %612 : vector<8x16xf32>
    %614 = arith.addf %611, %613 : vector<8x16xf32>
    %615 = arith.truncf %588 : vector<8x16xf32> to vector<8x16xbf16>
    %616 = arith.index_cast %550 : i32 to index
    %c0_159 = arith.constant 0 : index
    %617 = vector.load %arg7[%616, %c0_159] : memref<128x16xbf16, #tpu.memory_space<vmem>>, vector<8x16xbf16>
    tpu.vector_store %arg7[%616, %c0_159], %615 {strides = array<i32>} : memref<128x16xbf16, #tpu.memory_space<vmem>>, vector<8x16xbf16>,
    %618 = arith.truncf %614 : vector<8x16xf32> to vector<8x16xbf16>
    %619 = arith.index_cast %552 : i32 to index
    %c0_160 = arith.constant 0 : index
    %620 = vector.load %arg8[%619, %c0_160] : memref<128x16xbf16, #tpu.memory_space<vmem>>, vector<8x16xbf16>
    tpu.vector_store %arg8[%619, %c0_160], %618 {strides = array<i32>} : memref<128x16xbf16, #tpu.memory_space<vmem>>, vector<8x16xbf16>,
    %c8_i32_161 = arith.constant 8 : i32
    %c15_i32_162 = arith.constant 15 : i32
    %621 = arith.subi %c15_i32_162, %c8_i32_161 : i32
    %c8_i32_163 = arith.constant 8 : i32
    %622 = arith.muli %c8_i32_161, %c8_i32_163 : i32
    %623 = tpu.assume_multiple %622, 8 : i32
    %c8_i32_164 = arith.constant 8 : i32
    %624 = arith.muli %621, %c8_i32_164 : i32
    %625 = tpu.assume_multiple %624, 8 : i32
    %c0_165 = arith.constant 0 : index
    %626 = arith.index_cast %623 : i32 to index
    %c0_166 = arith.constant 0 : index
    %627 = vector.load %arg9[%c0_165, %626, %c0_166] : memref<2x128x48xf32, #tpu.memory_space<vmem>>, vector<1x8x48xf32>
    %628 = vector.shape_cast %627 : vector<1x8x48xf32> to vector<8x48xf32>
    %c1_167 = arith.constant 1 : index
    %629 = arith.index_cast %625 : i32 to index
    %c0_168 = arith.constant 0 : index
    %630 = vector.load %arg9[%c1_167, %629, %c0_168] : memref<2x128x48xf32, #tpu.memory_space<vmem>>, vector<1x8x48xf32>
    %631 = vector.shape_cast %630 : vector<1x8x48xf32> to vector<8x48xf32>
    %632 = arith.truncf %588 : vector<8x16xf32> to vector<8x16xbf16>
    %cst_169 = arith.constant dense<0.000000e+00> : vector<8x48xf32>
    %633 = tpu.matmul %632, %26, %cst_169 {dimension_numbers = #tpu.dot_dimension_numbers<[1], [0], [0], [1], [0, 0, 1, 1], [], []>} : vector<8x16xbf16>, vector<16x48xbf16>, vector<8x48xf32> -> vector<8x48xf32>
    %634 = arith.truncf %614 : vector<8x16xf32> to vector<8x16xbf16>
    %cst_170 = arith.constant dense<0.000000e+00> : vector<8x48xf32>
    %635 = tpu.matmul %634, %28, %cst_170 {dimension_numbers = #tpu.dot_dimension_numbers<[1], [0], [0], [1], [0, 0, 1, 1], [], []>} : vector<8x16xbf16>, vector<16x48xbf16>, vector<8x48xf32> -> vector<8x48xf32>
    %636 = vector.extract_strided_slice %628 {offsets = [0, 0], sizes = [8, 16], strides = [1, 1]} : vector<8x48xf32> to vector<8x16xf32>
    %637 = vector.extract_strided_slice %633 {offsets = [0, 0], sizes = [8, 16], strides = [1, 1]} : vector<8x48xf32> to vector<8x16xf32>
    %638 = arith.addf %636, %637 : vector<8x16xf32>
    %639 = arith.negf %638 : vector<8x16xf32>
    %640 = math.exp %639 : vector<8x16xf32>
    %cst_171 = arith.constant 1.000000e+00 : f32
    %641 = vector.broadcast %cst_171 : f32 to vector<8x16xf32>
    %642 = arith.addf %641, %640 : vector<8x16xf32>
    %643 = arith.divf %641, %642 : vector<8x16xf32>
    %644 = vector.extract_strided_slice %628 {offsets = [0, 16], sizes = [8, 16], strides = [1, 1]} : vector<8x48xf32> to vector<8x16xf32>
    %645 = vector.extract_strided_slice %633 {offsets = [0, 16], sizes = [8, 16], strides = [1, 1]} : vector<8x48xf32> to vector<8x16xf32>
    %646 = arith.addf %644, %645 : vector<8x16xf32>
    %647 = arith.negf %646 : vector<8x16xf32>
    %648 = math.exp %647 : vector<8x16xf32>
    %cst_172 = arith.constant 1.000000e+00 : f32
    %649 = vector.broadcast %cst_172 : f32 to vector<8x16xf32>
    %650 = arith.addf %649, %648 : vector<8x16xf32>
    %651 = arith.divf %649, %650 : vector<8x16xf32>
    %652 = vector.extract_strided_slice %628 {offsets = [0, 32], sizes = [8, 16], strides = [1, 1]} : vector<8x48xf32> to vector<8x16xf32>
    %653 = vector.extract_strided_slice %633 {offsets = [0, 32], sizes = [8, 16], strides = [1, 1]} : vector<8x48xf32> to vector<8x16xf32>
    %654 = vector.broadcast %30 : vector<1x16xf32> to vector<8x16xf32>
    %655 = arith.addf %653, %654 : vector<8x16xf32>
    %656 = arith.mulf %643, %655 : vector<8x16xf32>
    %657 = arith.addf %652, %656 : vector<8x16xf32>
    %658 = math.tanh %657 : vector<8x16xf32>
    %659 = arith.subf %588, %658 : vector<8x16xf32>
    %660 = arith.mulf %651, %659 : vector<8x16xf32>
    %661 = arith.addf %658, %660 : vector<8x16xf32>
    %662 = vector.extract_strided_slice %631 {offsets = [0, 0], sizes = [8, 16], strides = [1, 1]} : vector<8x48xf32> to vector<8x16xf32>
    %663 = vector.extract_strided_slice %635 {offsets = [0, 0], sizes = [8, 16], strides = [1, 1]} : vector<8x48xf32> to vector<8x16xf32>
    %664 = arith.addf %662, %663 : vector<8x16xf32>
    %665 = arith.negf %664 : vector<8x16xf32>
    %666 = math.exp %665 : vector<8x16xf32>
    %cst_173 = arith.constant 1.000000e+00 : f32
    %667 = vector.broadcast %cst_173 : f32 to vector<8x16xf32>
    %668 = arith.addf %667, %666 : vector<8x16xf32>
    %669 = arith.divf %667, %668 : vector<8x16xf32>
    %670 = vector.extract_strided_slice %631 {offsets = [0, 16], sizes = [8, 16], strides = [1, 1]} : vector<8x48xf32> to vector<8x16xf32>
    %671 = vector.extract_strided_slice %635 {offsets = [0, 16], sizes = [8, 16], strides = [1, 1]} : vector<8x48xf32> to vector<8x16xf32>
    %672 = arith.addf %670, %671 : vector<8x16xf32>
    %673 = arith.negf %672 : vector<8x16xf32>
    %674 = math.exp %673 : vector<8x16xf32>
    %cst_174 = arith.constant 1.000000e+00 : f32
    %675 = vector.broadcast %cst_174 : f32 to vector<8x16xf32>
    %676 = arith.addf %675, %674 : vector<8x16xf32>
    %677 = arith.divf %675, %676 : vector<8x16xf32>
    %678 = vector.extract_strided_slice %631 {offsets = [0, 32], sizes = [8, 16], strides = [1, 1]} : vector<8x48xf32> to vector<8x16xf32>
    %679 = vector.extract_strided_slice %635 {offsets = [0, 32], sizes = [8, 16], strides = [1, 1]} : vector<8x48xf32> to vector<8x16xf32>
    %680 = vector.broadcast %32 : vector<1x16xf32> to vector<8x16xf32>
    %681 = arith.addf %679, %680 : vector<8x16xf32>
    %682 = arith.mulf %669, %681 : vector<8x16xf32>
    %683 = arith.addf %678, %682 : vector<8x16xf32>
    %684 = math.tanh %683 : vector<8x16xf32>
    %685 = arith.subf %614, %684 : vector<8x16xf32>
    %686 = arith.mulf %677, %685 : vector<8x16xf32>
    %687 = arith.addf %684, %686 : vector<8x16xf32>
    %688 = arith.truncf %661 : vector<8x16xf32> to vector<8x16xbf16>
    %689 = arith.index_cast %623 : i32 to index
    %c0_175 = arith.constant 0 : index
    %690 = vector.load %arg7[%689, %c0_175] : memref<128x16xbf16, #tpu.memory_space<vmem>>, vector<8x16xbf16>
    tpu.vector_store %arg7[%689, %c0_175], %688 {strides = array<i32>} : memref<128x16xbf16, #tpu.memory_space<vmem>>, vector<8x16xbf16>,
    %691 = arith.truncf %687 : vector<8x16xf32> to vector<8x16xbf16>
    %692 = arith.index_cast %625 : i32 to index
    %c0_176 = arith.constant 0 : index
    %693 = vector.load %arg8[%692, %c0_176] : memref<128x16xbf16, #tpu.memory_space<vmem>>, vector<8x16xbf16>
    tpu.vector_store %arg8[%692, %c0_176], %691 {strides = array<i32>} : memref<128x16xbf16, #tpu.memory_space<vmem>>, vector<8x16xbf16>,
    %c9_i32 = arith.constant 9 : i32
    %c15_i32_177 = arith.constant 15 : i32
    %694 = arith.subi %c15_i32_177, %c9_i32 : i32
    %c8_i32_178 = arith.constant 8 : i32
    %695 = arith.muli %c9_i32, %c8_i32_178 : i32
    %696 = tpu.assume_multiple %695, 8 : i32
    %c8_i32_179 = arith.constant 8 : i32
    %697 = arith.muli %694, %c8_i32_179 : i32
    %698 = tpu.assume_multiple %697, 8 : i32
    %c0_180 = arith.constant 0 : index
    %699 = arith.index_cast %696 : i32 to index
    %c0_181 = arith.constant 0 : index
    %700 = vector.load %arg9[%c0_180, %699, %c0_181] : memref<2x128x48xf32, #tpu.memory_space<vmem>>, vector<1x8x48xf32>
    %701 = vector.shape_cast %700 : vector<1x8x48xf32> to vector<8x48xf32>
    %c1_182 = arith.constant 1 : index
    %702 = arith.index_cast %698 : i32 to index
    %c0_183 = arith.constant 0 : index
    %703 = vector.load %arg9[%c1_182, %702, %c0_183] : memref<2x128x48xf32, #tpu.memory_space<vmem>>, vector<1x8x48xf32>
    %704 = vector.shape_cast %703 : vector<1x8x48xf32> to vector<8x48xf32>
    %705 = arith.truncf %661 : vector<8x16xf32> to vector<8x16xbf16>
    %cst_184 = arith.constant dense<0.000000e+00> : vector<8x48xf32>
    %706 = tpu.matmul %705, %26, %cst_184 {dimension_numbers = #tpu.dot_dimension_numbers<[1], [0], [0], [1], [0, 0, 1, 1], [], []>} : vector<8x16xbf16>, vector<16x48xbf16>, vector<8x48xf32> -> vector<8x48xf32>
    %707 = arith.truncf %687 : vector<8x16xf32> to vector<8x16xbf16>
    %cst_185 = arith.constant dense<0.000000e+00> : vector<8x48xf32>
    %708 = tpu.matmul %707, %28, %cst_185 {dimension_numbers = #tpu.dot_dimension_numbers<[1], [0], [0], [1], [0, 0, 1, 1], [], []>} : vector<8x16xbf16>, vector<16x48xbf16>, vector<8x48xf32> -> vector<8x48xf32>
    %709 = vector.extract_strided_slice %701 {offsets = [0, 0], sizes = [8, 16], strides = [1, 1]} : vector<8x48xf32> to vector<8x16xf32>
    %710 = vector.extract_strided_slice %706 {offsets = [0, 0], sizes = [8, 16], strides = [1, 1]} : vector<8x48xf32> to vector<8x16xf32>
    %711 = arith.addf %709, %710 : vector<8x16xf32>
    %712 = arith.negf %711 : vector<8x16xf32>
    %713 = math.exp %712 : vector<8x16xf32>
    %cst_186 = arith.constant 1.000000e+00 : f32
    %714 = vector.broadcast %cst_186 : f32 to vector<8x16xf32>
    %715 = arith.addf %714, %713 : vector<8x16xf32>
    %716 = arith.divf %714, %715 : vector<8x16xf32>
    %717 = vector.extract_strided_slice %701 {offsets = [0, 16], sizes = [8, 16], strides = [1, 1]} : vector<8x48xf32> to vector<8x16xf32>
    %718 = vector.extract_strided_slice %706 {offsets = [0, 16], sizes = [8, 16], strides = [1, 1]} : vector<8x48xf32> to vector<8x16xf32>
    %719 = arith.addf %717, %718 : vector<8x16xf32>
    %720 = arith.negf %719 : vector<8x16xf32>
    %721 = math.exp %720 : vector<8x16xf32>
    %cst_187 = arith.constant 1.000000e+00 : f32
    %722 = vector.broadcast %cst_187 : f32 to vector<8x16xf32>
    %723 = arith.addf %722, %721 : vector<8x16xf32>
    %724 = arith.divf %722, %723 : vector<8x16xf32>
    %725 = vector.extract_strided_slice %701 {offsets = [0, 32], sizes = [8, 16], strides = [1, 1]} : vector<8x48xf32> to vector<8x16xf32>
    %726 = vector.extract_strided_slice %706 {offsets = [0, 32], sizes = [8, 16], strides = [1, 1]} : vector<8x48xf32> to vector<8x16xf32>
    %727 = vector.broadcast %30 : vector<1x16xf32> to vector<8x16xf32>
    %728 = arith.addf %726, %727 : vector<8x16xf32>
    %729 = arith.mulf %716, %728 : vector<8x16xf32>
    %730 = arith.addf %725, %729 : vector<8x16xf32>
    %731 = math.tanh %730 : vector<8x16xf32>
    %732 = arith.subf %661, %731 : vector<8x16xf32>
    %733 = arith.mulf %724, %732 : vector<8x16xf32>
    %734 = arith.addf %731, %733 : vector<8x16xf32>
    %735 = vector.extract_strided_slice %704 {offsets = [0, 0], sizes = [8, 16], strides = [1, 1]} : vector<8x48xf32> to vector<8x16xf32>
    %736 = vector.extract_strided_slice %708 {offsets = [0, 0], sizes = [8, 16], strides = [1, 1]} : vector<8x48xf32> to vector<8x16xf32>
    %737 = arith.addf %735, %736 : vector<8x16xf32>
    %738 = arith.negf %737 : vector<8x16xf32>
    %739 = math.exp %738 : vector<8x16xf32>
    %cst_188 = arith.constant 1.000000e+00 : f32
    %740 = vector.broadcast %cst_188 : f32 to vector<8x16xf32>
    %741 = arith.addf %740, %739 : vector<8x16xf32>
    %742 = arith.divf %740, %741 : vector<8x16xf32>
    %743 = vector.extract_strided_slice %704 {offsets = [0, 16], sizes = [8, 16], strides = [1, 1]} : vector<8x48xf32> to vector<8x16xf32>
    %744 = vector.extract_strided_slice %708 {offsets = [0, 16], sizes = [8, 16], strides = [1, 1]} : vector<8x48xf32> to vector<8x16xf32>
    %745 = arith.addf %743, %744 : vector<8x16xf32>
    %746 = arith.negf %745 : vector<8x16xf32>
    %747 = math.exp %746 : vector<8x16xf32>
    %cst_189 = arith.constant 1.000000e+00 : f32
    %748 = vector.broadcast %cst_189 : f32 to vector<8x16xf32>
    %749 = arith.addf %748, %747 : vector<8x16xf32>
    %750 = arith.divf %748, %749 : vector<8x16xf32>
    %751 = vector.extract_strided_slice %704 {offsets = [0, 32], sizes = [8, 16], strides = [1, 1]} : vector<8x48xf32> to vector<8x16xf32>
    %752 = vector.extract_strided_slice %708 {offsets = [0, 32], sizes = [8, 16], strides = [1, 1]} : vector<8x48xf32> to vector<8x16xf32>
    %753 = vector.broadcast %32 : vector<1x16xf32> to vector<8x16xf32>
    %754 = arith.addf %752, %753 : vector<8x16xf32>
    %755 = arith.mulf %742, %754 : vector<8x16xf32>
    %756 = arith.addf %751, %755 : vector<8x16xf32>
    %757 = math.tanh %756 : vector<8x16xf32>
    %758 = arith.subf %687, %757 : vector<8x16xf32>
    %759 = arith.mulf %750, %758 : vector<8x16xf32>
    %760 = arith.addf %757, %759 : vector<8x16xf32>
    %761 = arith.truncf %734 : vector<8x16xf32> to vector<8x16xbf16>
    %762 = arith.index_cast %696 : i32 to index
    %c0_190 = arith.constant 0 : index
    %763 = vector.load %arg7[%762, %c0_190] : memref<128x16xbf16, #tpu.memory_space<vmem>>, vector<8x16xbf16>
    tpu.vector_store %arg7[%762, %c0_190], %761 {strides = array<i32>} : memref<128x16xbf16, #tpu.memory_space<vmem>>, vector<8x16xbf16>,
    %764 = arith.truncf %760 : vector<8x16xf32> to vector<8x16xbf16>
    %765 = arith.index_cast %698 : i32 to index
    %c0_191 = arith.constant 0 : index
    %766 = vector.load %arg8[%765, %c0_191] : memref<128x16xbf16, #tpu.memory_space<vmem>>, vector<8x16xbf16>
    tpu.vector_store %arg8[%765, %c0_191], %764 {strides = array<i32>} : memref<128x16xbf16, #tpu.memory_space<vmem>>, vector<8x16xbf16>,
    %c10_i32 = arith.constant 10 : i32
    %c15_i32_192 = arith.constant 15 : i32
    %767 = arith.subi %c15_i32_192, %c10_i32 : i32
    %c8_i32_193 = arith.constant 8 : i32
    %768 = arith.muli %c10_i32, %c8_i32_193 : i32
    %769 = tpu.assume_multiple %768, 8 : i32
    %c8_i32_194 = arith.constant 8 : i32
    %770 = arith.muli %767, %c8_i32_194 : i32
    %771 = tpu.assume_multiple %770, 8 : i32
    %c0_195 = arith.constant 0 : index
    %772 = arith.index_cast %769 : i32 to index
    %c0_196 = arith.constant 0 : index
    %773 = vector.load %arg9[%c0_195, %772, %c0_196] : memref<2x128x48xf32, #tpu.memory_space<vmem>>, vector<1x8x48xf32>
    %774 = vector.shape_cast %773 : vector<1x8x48xf32> to vector<8x48xf32>
    %c1_197 = arith.constant 1 : index
    %775 = arith.index_cast %771 : i32 to index
    %c0_198 = arith.constant 0 : index
    %776 = vector.load %arg9[%c1_197, %775, %c0_198] : memref<2x128x48xf32, #tpu.memory_space<vmem>>, vector<1x8x48xf32>
    %777 = vector.shape_cast %776 : vector<1x8x48xf32> to vector<8x48xf32>
    %778 = arith.truncf %734 : vector<8x16xf32> to vector<8x16xbf16>
    %cst_199 = arith.constant dense<0.000000e+00> : vector<8x48xf32>
    %779 = tpu.matmul %778, %26, %cst_199 {dimension_numbers = #tpu.dot_dimension_numbers<[1], [0], [0], [1], [0, 0, 1, 1], [], []>} : vector<8x16xbf16>, vector<16x48xbf16>, vector<8x48xf32> -> vector<8x48xf32>
    %780 = arith.truncf %760 : vector<8x16xf32> to vector<8x16xbf16>
    %cst_200 = arith.constant dense<0.000000e+00> : vector<8x48xf32>
    %781 = tpu.matmul %780, %28, %cst_200 {dimension_numbers = #tpu.dot_dimension_numbers<[1], [0], [0], [1], [0, 0, 1, 1], [], []>} : vector<8x16xbf16>, vector<16x48xbf16>, vector<8x48xf32> -> vector<8x48xf32>
    %782 = vector.extract_strided_slice %774 {offsets = [0, 0], sizes = [8, 16], strides = [1, 1]} : vector<8x48xf32> to vector<8x16xf32>
    %783 = vector.extract_strided_slice %779 {offsets = [0, 0], sizes = [8, 16], strides = [1, 1]} : vector<8x48xf32> to vector<8x16xf32>
    %784 = arith.addf %782, %783 : vector<8x16xf32>
    %785 = arith.negf %784 : vector<8x16xf32>
    %786 = math.exp %785 : vector<8x16xf32>
    %cst_201 = arith.constant 1.000000e+00 : f32
    %787 = vector.broadcast %cst_201 : f32 to vector<8x16xf32>
    %788 = arith.addf %787, %786 : vector<8x16xf32>
    %789 = arith.divf %787, %788 : vector<8x16xf32>
    %790 = vector.extract_strided_slice %774 {offsets = [0, 16], sizes = [8, 16], strides = [1, 1]} : vector<8x48xf32> to vector<8x16xf32>
    %791 = vector.extract_strided_slice %779 {offsets = [0, 16], sizes = [8, 16], strides = [1, 1]} : vector<8x48xf32> to vector<8x16xf32>
    %792 = arith.addf %790, %791 : vector<8x16xf32>
    %793 = arith.negf %792 : vector<8x16xf32>
    %794 = math.exp %793 : vector<8x16xf32>
    %cst_202 = arith.constant 1.000000e+00 : f32
    %795 = vector.broadcast %cst_202 : f32 to vector<8x16xf32>
    %796 = arith.addf %795, %794 : vector<8x16xf32>
    %797 = arith.divf %795, %796 : vector<8x16xf32>
    %798 = vector.extract_strided_slice %774 {offsets = [0, 32], sizes = [8, 16], strides = [1, 1]} : vector<8x48xf32> to vector<8x16xf32>
    %799 = vector.extract_strided_slice %779 {offsets = [0, 32], sizes = [8, 16], strides = [1, 1]} : vector<8x48xf32> to vector<8x16xf32>
    %800 = vector.broadcast %30 : vector<1x16xf32> to vector<8x16xf32>
    %801 = arith.addf %799, %800 : vector<8x16xf32>
    %802 = arith.mulf %789, %801 : vector<8x16xf32>
    %803 = arith.addf %798, %802 : vector<8x16xf32>
    %804 = math.tanh %803 : vector<8x16xf32>
    %805 = arith.subf %734, %804 : vector<8x16xf32>
    %806 = arith.mulf %797, %805 : vector<8x16xf32>
    %807 = arith.addf %804, %806 : vector<8x16xf32>
    %808 = vector.extract_strided_slice %777 {offsets = [0, 0], sizes = [8, 16], strides = [1, 1]} : vector<8x48xf32> to vector<8x16xf32>
    %809 = vector.extract_strided_slice %781 {offsets = [0, 0], sizes = [8, 16], strides = [1, 1]} : vector<8x48xf32> to vector<8x16xf32>
    %810 = arith.addf %808, %809 : vector<8x16xf32>
    %811 = arith.negf %810 : vector<8x16xf32>
    %812 = math.exp %811 : vector<8x16xf32>
    %cst_203 = arith.constant 1.000000e+00 : f32
    %813 = vector.broadcast %cst_203 : f32 to vector<8x16xf32>
    %814 = arith.addf %813, %812 : vector<8x16xf32>
    %815 = arith.divf %813, %814 : vector<8x16xf32>
    %816 = vector.extract_strided_slice %777 {offsets = [0, 16], sizes = [8, 16], strides = [1, 1]} : vector<8x48xf32> to vector<8x16xf32>
    %817 = vector.extract_strided_slice %781 {offsets = [0, 16], sizes = [8, 16], strides = [1, 1]} : vector<8x48xf32> to vector<8x16xf32>
    %818 = arith.addf %816, %817 : vector<8x16xf32>
    %819 = arith.negf %818 : vector<8x16xf32>
    %820 = math.exp %819 : vector<8x16xf32>
    %cst_204 = arith.constant 1.000000e+00 : f32
    %821 = vector.broadcast %cst_204 : f32 to vector<8x16xf32>
    %822 = arith.addf %821, %820 : vector<8x16xf32>
    %823 = arith.divf %821, %822 : vector<8x16xf32>
    %824 = vector.extract_strided_slice %777 {offsets = [0, 32], sizes = [8, 16], strides = [1, 1]} : vector<8x48xf32> to vector<8x16xf32>
    %825 = vector.extract_strided_slice %781 {offsets = [0, 32], sizes = [8, 16], strides = [1, 1]} : vector<8x48xf32> to vector<8x16xf32>
    %826 = vector.broadcast %32 : vector<1x16xf32> to vector<8x16xf32>
    %827 = arith.addf %825, %826 : vector<8x16xf32>
    %828 = arith.mulf %815, %827 : vector<8x16xf32>
    %829 = arith.addf %824, %828 : vector<8x16xf32>
    %830 = math.tanh %829 : vector<8x16xf32>
    %831 = arith.subf %760, %830 : vector<8x16xf32>
    %832 = arith.mulf %823, %831 : vector<8x16xf32>
    %833 = arith.addf %830, %832 : vector<8x16xf32>
    %834 = arith.truncf %807 : vector<8x16xf32> to vector<8x16xbf16>
    %835 = arith.index_cast %769 : i32 to index
    %c0_205 = arith.constant 0 : index
    %836 = vector.load %arg7[%835, %c0_205] : memref<128x16xbf16, #tpu.memory_space<vmem>>, vector<8x16xbf16>
    tpu.vector_store %arg7[%835, %c0_205], %834 {strides = array<i32>} : memref<128x16xbf16, #tpu.memory_space<vmem>>, vector<8x16xbf16>,
    %837 = arith.truncf %833 : vector<8x16xf32> to vector<8x16xbf16>
    %838 = arith.index_cast %771 : i32 to index
    %c0_206 = arith.constant 0 : index
    %839 = vector.load %arg8[%838, %c0_206] : memref<128x16xbf16, #tpu.memory_space<vmem>>, vector<8x16xbf16>
    tpu.vector_store %arg8[%838, %c0_206], %837 {strides = array<i32>} : memref<128x16xbf16, #tpu.memory_space<vmem>>, vector<8x16xbf16>,
    %c11_i32 = arith.constant 11 : i32
    %c15_i32_207 = arith.constant 15 : i32
    %840 = arith.subi %c15_i32_207, %c11_i32 : i32
    %c8_i32_208 = arith.constant 8 : i32
    %841 = arith.muli %c11_i32, %c8_i32_208 : i32
    %842 = tpu.assume_multiple %841, 8 : i32
    %c8_i32_209 = arith.constant 8 : i32
    %843 = arith.muli %840, %c8_i32_209 : i32
    %844 = tpu.assume_multiple %843, 8 : i32
    %c0_210 = arith.constant 0 : index
    %845 = arith.index_cast %842 : i32 to index
    %c0_211 = arith.constant 0 : index
    %846 = vector.load %arg9[%c0_210, %845, %c0_211] : memref<2x128x48xf32, #tpu.memory_space<vmem>>, vector<1x8x48xf32>
    %847 = vector.shape_cast %846 : vector<1x8x48xf32> to vector<8x48xf32>
    %c1_212 = arith.constant 1 : index
    %848 = arith.index_cast %844 : i32 to index
    %c0_213 = arith.constant 0 : index
    %849 = vector.load %arg9[%c1_212, %848, %c0_213] : memref<2x128x48xf32, #tpu.memory_space<vmem>>, vector<1x8x48xf32>
    %850 = vector.shape_cast %849 : vector<1x8x48xf32> to vector<8x48xf32>
    %851 = arith.truncf %807 : vector<8x16xf32> to vector<8x16xbf16>
    %cst_214 = arith.constant dense<0.000000e+00> : vector<8x48xf32>
    %852 = tpu.matmul %851, %26, %cst_214 {dimension_numbers = #tpu.dot_dimension_numbers<[1], [0], [0], [1], [0, 0, 1, 1], [], []>} : vector<8x16xbf16>, vector<16x48xbf16>, vector<8x48xf32> -> vector<8x48xf32>
    %853 = arith.truncf %833 : vector<8x16xf32> to vector<8x16xbf16>
    %cst_215 = arith.constant dense<0.000000e+00> : vector<8x48xf32>
    %854 = tpu.matmul %853, %28, %cst_215 {dimension_numbers = #tpu.dot_dimension_numbers<[1], [0], [0], [1], [0, 0, 1, 1], [], []>} : vector<8x16xbf16>, vector<16x48xbf16>, vector<8x48xf32> -> vector<8x48xf32>
    %855 = vector.extract_strided_slice %847 {offsets = [0, 0], sizes = [8, 16], strides = [1, 1]} : vector<8x48xf32> to vector<8x16xf32>
    %856 = vector.extract_strided_slice %852 {offsets = [0, 0], sizes = [8, 16], strides = [1, 1]} : vector<8x48xf32> to vector<8x16xf32>
    %857 = arith.addf %855, %856 : vector<8x16xf32>
    %858 = arith.negf %857 : vector<8x16xf32>
    %859 = math.exp %858 : vector<8x16xf32>
    %cst_216 = arith.constant 1.000000e+00 : f32
    %860 = vector.broadcast %cst_216 : f32 to vector<8x16xf32>
    %861 = arith.addf %860, %859 : vector<8x16xf32>
    %862 = arith.divf %860, %861 : vector<8x16xf32>
    %863 = vector.extract_strided_slice %847 {offsets = [0, 16], sizes = [8, 16], strides = [1, 1]} : vector<8x48xf32> to vector<8x16xf32>
    %864 = vector.extract_strided_slice %852 {offsets = [0, 16], sizes = [8, 16], strides = [1, 1]} : vector<8x48xf32> to vector<8x16xf32>
    %865 = arith.addf %863, %864 : vector<8x16xf32>
    %866 = arith.negf %865 : vector<8x16xf32>
    %867 = math.exp %866 : vector<8x16xf32>
    %cst_217 = arith.constant 1.000000e+00 : f32
    %868 = vector.broadcast %cst_217 : f32 to vector<8x16xf32>
    %869 = arith.addf %868, %867 : vector<8x16xf32>
    %870 = arith.divf %868, %869 : vector<8x16xf32>
    %871 = vector.extract_strided_slice %847 {offsets = [0, 32], sizes = [8, 16], strides = [1, 1]} : vector<8x48xf32> to vector<8x16xf32>
    %872 = vector.extract_strided_slice %852 {offsets = [0, 32], sizes = [8, 16], strides = [1, 1]} : vector<8x48xf32> to vector<8x16xf32>
    %873 = vector.broadcast %30 : vector<1x16xf32> to vector<8x16xf32>
    %874 = arith.addf %872, %873 : vector<8x16xf32>
    %875 = arith.mulf %862, %874 : vector<8x16xf32>
    %876 = arith.addf %871, %875 : vector<8x16xf32>
    %877 = math.tanh %876 : vector<8x16xf32>
    %878 = arith.subf %807, %877 : vector<8x16xf32>
    %879 = arith.mulf %870, %878 : vector<8x16xf32>
    %880 = arith.addf %877, %879 : vector<8x16xf32>
    %881 = vector.extract_strided_slice %850 {offsets = [0, 0], sizes = [8, 16], strides = [1, 1]} : vector<8x48xf32> to vector<8x16xf32>
    %882 = vector.extract_strided_slice %854 {offsets = [0, 0], sizes = [8, 16], strides = [1, 1]} : vector<8x48xf32> to vector<8x16xf32>
    %883 = arith.addf %881, %882 : vector<8x16xf32>
    %884 = arith.negf %883 : vector<8x16xf32>
    %885 = math.exp %884 : vector<8x16xf32>
    %cst_218 = arith.constant 1.000000e+00 : f32
    %886 = vector.broadcast %cst_218 : f32 to vector<8x16xf32>
    %887 = arith.addf %886, %885 : vector<8x16xf32>
    %888 = arith.divf %886, %887 : vector<8x16xf32>
    %889 = vector.extract_strided_slice %850 {offsets = [0, 16], sizes = [8, 16], strides = [1, 1]} : vector<8x48xf32> to vector<8x16xf32>
    %890 = vector.extract_strided_slice %854 {offsets = [0, 16], sizes = [8, 16], strides = [1, 1]} : vector<8x48xf32> to vector<8x16xf32>
    %891 = arith.addf %889, %890 : vector<8x16xf32>
    %892 = arith.negf %891 : vector<8x16xf32>
    %893 = math.exp %892 : vector<8x16xf32>
    %cst_219 = arith.constant 1.000000e+00 : f32
    %894 = vector.broadcast %cst_219 : f32 to vector<8x16xf32>
    %895 = arith.addf %894, %893 : vector<8x16xf32>
    %896 = arith.divf %894, %895 : vector<8x16xf32>
    %897 = vector.extract_strided_slice %850 {offsets = [0, 32], sizes = [8, 16], strides = [1, 1]} : vector<8x48xf32> to vector<8x16xf32>
    %898 = vector.extract_strided_slice %854 {offsets = [0, 32], sizes = [8, 16], strides = [1, 1]} : vector<8x48xf32> to vector<8x16xf32>
    %899 = vector.broadcast %32 : vector<1x16xf32> to vector<8x16xf32>
    %900 = arith.addf %898, %899 : vector<8x16xf32>
    %901 = arith.mulf %888, %900 : vector<8x16xf32>
    %902 = arith.addf %897, %901 : vector<8x16xf32>
    %903 = math.tanh %902 : vector<8x16xf32>
    %904 = arith.subf %833, %903 : vector<8x16xf32>
    %905 = arith.mulf %896, %904 : vector<8x16xf32>
    %906 = arith.addf %903, %905 : vector<8x16xf32>
    %907 = arith.truncf %880 : vector<8x16xf32> to vector<8x16xbf16>
    %908 = arith.index_cast %842 : i32 to index
    %c0_220 = arith.constant 0 : index
    %909 = vector.load %arg7[%908, %c0_220] : memref<128x16xbf16, #tpu.memory_space<vmem>>, vector<8x16xbf16>
    tpu.vector_store %arg7[%908, %c0_220], %907 {strides = array<i32>} : memref<128x16xbf16, #tpu.memory_space<vmem>>, vector<8x16xbf16>,
    %910 = arith.truncf %906 : vector<8x16xf32> to vector<8x16xbf16>
    %911 = arith.index_cast %844 : i32 to index
    %c0_221 = arith.constant 0 : index
    %912 = vector.load %arg8[%911, %c0_221] : memref<128x16xbf16, #tpu.memory_space<vmem>>, vector<8x16xbf16>
    tpu.vector_store %arg8[%911, %c0_221], %910 {strides = array<i32>} : memref<128x16xbf16, #tpu.memory_space<vmem>>, vector<8x16xbf16>,
    %c12_i32 = arith.constant 12 : i32
    %c15_i32_222 = arith.constant 15 : i32
    %913 = arith.subi %c15_i32_222, %c12_i32 : i32
    %c8_i32_223 = arith.constant 8 : i32
    %914 = arith.muli %c12_i32, %c8_i32_223 : i32
    %915 = tpu.assume_multiple %914, 8 : i32
    %c8_i32_224 = arith.constant 8 : i32
    %916 = arith.muli %913, %c8_i32_224 : i32
    %917 = tpu.assume_multiple %916, 8 : i32
    %c0_225 = arith.constant 0 : index
    %918 = arith.index_cast %915 : i32 to index
    %c0_226 = arith.constant 0 : index
    %919 = vector.load %arg9[%c0_225, %918, %c0_226] : memref<2x128x48xf32, #tpu.memory_space<vmem>>, vector<1x8x48xf32>
    %920 = vector.shape_cast %919 : vector<1x8x48xf32> to vector<8x48xf32>
    %c1_227 = arith.constant 1 : index
    %921 = arith.index_cast %917 : i32 to index
    %c0_228 = arith.constant 0 : index
    %922 = vector.load %arg9[%c1_227, %921, %c0_228] : memref<2x128x48xf32, #tpu.memory_space<vmem>>, vector<1x8x48xf32>
    %923 = vector.shape_cast %922 : vector<1x8x48xf32> to vector<8x48xf32>
    %924 = arith.truncf %880 : vector<8x16xf32> to vector<8x16xbf16>
    %cst_229 = arith.constant dense<0.000000e+00> : vector<8x48xf32>
    %925 = tpu.matmul %924, %26, %cst_229 {dimension_numbers = #tpu.dot_dimension_numbers<[1], [0], [0], [1], [0, 0, 1, 1], [], []>} : vector<8x16xbf16>, vector<16x48xbf16>, vector<8x48xf32> -> vector<8x48xf32>
    %926 = arith.truncf %906 : vector<8x16xf32> to vector<8x16xbf16>
    %cst_230 = arith.constant dense<0.000000e+00> : vector<8x48xf32>
    %927 = tpu.matmul %926, %28, %cst_230 {dimension_numbers = #tpu.dot_dimension_numbers<[1], [0], [0], [1], [0, 0, 1, 1], [], []>} : vector<8x16xbf16>, vector<16x48xbf16>, vector<8x48xf32> -> vector<8x48xf32>
    %928 = vector.extract_strided_slice %920 {offsets = [0, 0], sizes = [8, 16], strides = [1, 1]} : vector<8x48xf32> to vector<8x16xf32>
    %929 = vector.extract_strided_slice %925 {offsets = [0, 0], sizes = [8, 16], strides = [1, 1]} : vector<8x48xf32> to vector<8x16xf32>
    %930 = arith.addf %928, %929 : vector<8x16xf32>
    %931 = arith.negf %930 : vector<8x16xf32>
    %932 = math.exp %931 : vector<8x16xf32>
    %cst_231 = arith.constant 1.000000e+00 : f32
    %933 = vector.broadcast %cst_231 : f32 to vector<8x16xf32>
    %934 = arith.addf %933, %932 : vector<8x16xf32>
    %935 = arith.divf %933, %934 : vector<8x16xf32>
    %936 = vector.extract_strided_slice %920 {offsets = [0, 16], sizes = [8, 16], strides = [1, 1]} : vector<8x48xf32> to vector<8x16xf32>
    %937 = vector.extract_strided_slice %925 {offsets = [0, 16], sizes = [8, 16], strides = [1, 1]} : vector<8x48xf32> to vector<8x16xf32>
    %938 = arith.addf %936, %937 : vector<8x16xf32>
    %939 = arith.negf %938 : vector<8x16xf32>
    %940 = math.exp %939 : vector<8x16xf32>
    %cst_232 = arith.constant 1.000000e+00 : f32
    %941 = vector.broadcast %cst_232 : f32 to vector<8x16xf32>
    %942 = arith.addf %941, %940 : vector<8x16xf32>
    %943 = arith.divf %941, %942 : vector<8x16xf32>
    %944 = vector.extract_strided_slice %920 {offsets = [0, 32], sizes = [8, 16], strides = [1, 1]} : vector<8x48xf32> to vector<8x16xf32>
    %945 = vector.extract_strided_slice %925 {offsets = [0, 32], sizes = [8, 16], strides = [1, 1]} : vector<8x48xf32> to vector<8x16xf32>
    %946 = vector.broadcast %30 : vector<1x16xf32> to vector<8x16xf32>
    %947 = arith.addf %945, %946 : vector<8x16xf32>
    %948 = arith.mulf %935, %947 : vector<8x16xf32>
    %949 = arith.addf %944, %948 : vector<8x16xf32>
    %950 = math.tanh %949 : vector<8x16xf32>
    %951 = arith.subf %880, %950 : vector<8x16xf32>
    %952 = arith.mulf %943, %951 : vector<8x16xf32>
    %953 = arith.addf %950, %952 : vector<8x16xf32>
    %954 = vector.extract_strided_slice %923 {offsets = [0, 0], sizes = [8, 16], strides = [1, 1]} : vector<8x48xf32> to vector<8x16xf32>
    %955 = vector.extract_strided_slice %927 {offsets = [0, 0], sizes = [8, 16], strides = [1, 1]} : vector<8x48xf32> to vector<8x16xf32>
    %956 = arith.addf %954, %955 : vector<8x16xf32>
    %957 = arith.negf %956 : vector<8x16xf32>
    %958 = math.exp %957 : vector<8x16xf32>
    %cst_233 = arith.constant 1.000000e+00 : f32
    %959 = vector.broadcast %cst_233 : f32 to vector<8x16xf32>
    %960 = arith.addf %959, %958 : vector<8x16xf32>
    %961 = arith.divf %959, %960 : vector<8x16xf32>
    %962 = vector.extract_strided_slice %923 {offsets = [0, 16], sizes = [8, 16], strides = [1, 1]} : vector<8x48xf32> to vector<8x16xf32>
    %963 = vector.extract_strided_slice %927 {offsets = [0, 16], sizes = [8, 16], strides = [1, 1]} : vector<8x48xf32> to vector<8x16xf32>
    %964 = arith.addf %962, %963 : vector<8x16xf32>
    %965 = arith.negf %964 : vector<8x16xf32>
    %966 = math.exp %965 : vector<8x16xf32>
    %cst_234 = arith.constant 1.000000e+00 : f32
    %967 = vector.broadcast %cst_234 : f32 to vector<8x16xf32>
    %968 = arith.addf %967, %966 : vector<8x16xf32>
    %969 = arith.divf %967, %968 : vector<8x16xf32>
    %970 = vector.extract_strided_slice %923 {offsets = [0, 32], sizes = [8, 16], strides = [1, 1]} : vector<8x48xf32> to vector<8x16xf32>
    %971 = vector.extract_strided_slice %927 {offsets = [0, 32], sizes = [8, 16], strides = [1, 1]} : vector<8x48xf32> to vector<8x16xf32>
    %972 = vector.broadcast %32 : vector<1x16xf32> to vector<8x16xf32>
    %973 = arith.addf %971, %972 : vector<8x16xf32>
    %974 = arith.mulf %961, %973 : vector<8x16xf32>
    %975 = arith.addf %970, %974 : vector<8x16xf32>
    %976 = math.tanh %975 : vector<8x16xf32>
    %977 = arith.subf %906, %976 : vector<8x16xf32>
    %978 = arith.mulf %969, %977 : vector<8x16xf32>
    %979 = arith.addf %976, %978 : vector<8x16xf32>
    %980 = arith.truncf %953 : vector<8x16xf32> to vector<8x16xbf16>
    %981 = arith.index_cast %915 : i32 to index
    %c0_235 = arith.constant 0 : index
    %982 = vector.load %arg7[%981, %c0_235] : memref<128x16xbf16, #tpu.memory_space<vmem>>, vector<8x16xbf16>
    tpu.vector_store %arg7[%981, %c0_235], %980 {strides = array<i32>} : memref<128x16xbf16, #tpu.memory_space<vmem>>, vector<8x16xbf16>,
    %983 = arith.truncf %979 : vector<8x16xf32> to vector<8x16xbf16>
    %984 = arith.index_cast %917 : i32 to index
    %c0_236 = arith.constant 0 : index
    %985 = vector.load %arg8[%984, %c0_236] : memref<128x16xbf16, #tpu.memory_space<vmem>>, vector<8x16xbf16>
    tpu.vector_store %arg8[%984, %c0_236], %983 {strides = array<i32>} : memref<128x16xbf16, #tpu.memory_space<vmem>>, vector<8x16xbf16>,
    %c13_i32 = arith.constant 13 : i32
    %c15_i32_237 = arith.constant 15 : i32
    %986 = arith.subi %c15_i32_237, %c13_i32 : i32
    %c8_i32_238 = arith.constant 8 : i32
    %987 = arith.muli %c13_i32, %c8_i32_238 : i32
    %988 = tpu.assume_multiple %987, 8 : i32
    %c8_i32_239 = arith.constant 8 : i32
    %989 = arith.muli %986, %c8_i32_239 : i32
    %990 = tpu.assume_multiple %989, 8 : i32
    %c0_240 = arith.constant 0 : index
    %991 = arith.index_cast %988 : i32 to index
    %c0_241 = arith.constant 0 : index
    %992 = vector.load %arg9[%c0_240, %991, %c0_241] : memref<2x128x48xf32, #tpu.memory_space<vmem>>, vector<1x8x48xf32>
    %993 = vector.shape_cast %992 : vector<1x8x48xf32> to vector<8x48xf32>
    %c1_242 = arith.constant 1 : index
    %994 = arith.index_cast %990 : i32 to index
    %c0_243 = arith.constant 0 : index
    %995 = vector.load %arg9[%c1_242, %994, %c0_243] : memref<2x128x48xf32, #tpu.memory_space<vmem>>, vector<1x8x48xf32>
    %996 = vector.shape_cast %995 : vector<1x8x48xf32> to vector<8x48xf32>
    %997 = arith.truncf %953 : vector<8x16xf32> to vector<8x16xbf16>
    %cst_244 = arith.constant dense<0.000000e+00> : vector<8x48xf32>
    %998 = tpu.matmul %997, %26, %cst_244 {dimension_numbers = #tpu.dot_dimension_numbers<[1], [0], [0], [1], [0, 0, 1, 1], [], []>} : vector<8x16xbf16>, vector<16x48xbf16>, vector<8x48xf32> -> vector<8x48xf32>
    %999 = arith.truncf %979 : vector<8x16xf32> to vector<8x16xbf16>
    %cst_245 = arith.constant dense<0.000000e+00> : vector<8x48xf32>
    %1000 = tpu.matmul %999, %28, %cst_245 {dimension_numbers = #tpu.dot_dimension_numbers<[1], [0], [0], [1], [0, 0, 1, 1], [], []>} : vector<8x16xbf16>, vector<16x48xbf16>, vector<8x48xf32> -> vector<8x48xf32>
    %1001 = vector.extract_strided_slice %993 {offsets = [0, 0], sizes = [8, 16], strides = [1, 1]} : vector<8x48xf32> to vector<8x16xf32>
    %1002 = vector.extract_strided_slice %998 {offsets = [0, 0], sizes = [8, 16], strides = [1, 1]} : vector<8x48xf32> to vector<8x16xf32>
    %1003 = arith.addf %1001, %1002 : vector<8x16xf32>
    %1004 = arith.negf %1003 : vector<8x16xf32>
    %1005 = math.exp %1004 : vector<8x16xf32>
    %cst_246 = arith.constant 1.000000e+00 : f32
    %1006 = vector.broadcast %cst_246 : f32 to vector<8x16xf32>
    %1007 = arith.addf %1006, %1005 : vector<8x16xf32>
    %1008 = arith.divf %1006, %1007 : vector<8x16xf32>
    %1009 = vector.extract_strided_slice %993 {offsets = [0, 16], sizes = [8, 16], strides = [1, 1]} : vector<8x48xf32> to vector<8x16xf32>
    %1010 = vector.extract_strided_slice %998 {offsets = [0, 16], sizes = [8, 16], strides = [1, 1]} : vector<8x48xf32> to vector<8x16xf32>
    %1011 = arith.addf %1009, %1010 : vector<8x16xf32>
    %1012 = arith.negf %1011 : vector<8x16xf32>
    %1013 = math.exp %1012 : vector<8x16xf32>
    %cst_247 = arith.constant 1.000000e+00 : f32
    %1014 = vector.broadcast %cst_247 : f32 to vector<8x16xf32>
    %1015 = arith.addf %1014, %1013 : vector<8x16xf32>
    %1016 = arith.divf %1014, %1015 : vector<8x16xf32>
    %1017 = vector.extract_strided_slice %993 {offsets = [0, 32], sizes = [8, 16], strides = [1, 1]} : vector<8x48xf32> to vector<8x16xf32>
    %1018 = vector.extract_strided_slice %998 {offsets = [0, 32], sizes = [8, 16], strides = [1, 1]} : vector<8x48xf32> to vector<8x16xf32>
    %1019 = vector.broadcast %30 : vector<1x16xf32> to vector<8x16xf32>
    %1020 = arith.addf %1018, %1019 : vector<8x16xf32>
    %1021 = arith.mulf %1008, %1020 : vector<8x16xf32>
    %1022 = arith.addf %1017, %1021 : vector<8x16xf32>
    %1023 = math.tanh %1022 : vector<8x16xf32>
    %1024 = arith.subf %953, %1023 : vector<8x16xf32>
    %1025 = arith.mulf %1016, %1024 : vector<8x16xf32>
    %1026 = arith.addf %1023, %1025 : vector<8x16xf32>
    %1027 = vector.extract_strided_slice %996 {offsets = [0, 0], sizes = [8, 16], strides = [1, 1]} : vector<8x48xf32> to vector<8x16xf32>
    %1028 = vector.extract_strided_slice %1000 {offsets = [0, 0], sizes = [8, 16], strides = [1, 1]} : vector<8x48xf32> to vector<8x16xf32>
    %1029 = arith.addf %1027, %1028 : vector<8x16xf32>
    %1030 = arith.negf %1029 : vector<8x16xf32>
    %1031 = math.exp %1030 : vector<8x16xf32>
    %cst_248 = arith.constant 1.000000e+00 : f32
    %1032 = vector.broadcast %cst_248 : f32 to vector<8x16xf32>
    %1033 = arith.addf %1032, %1031 : vector<8x16xf32>
    %1034 = arith.divf %1032, %1033 : vector<8x16xf32>
    %1035 = vector.extract_strided_slice %996 {offsets = [0, 16], sizes = [8, 16], strides = [1, 1]} : vector<8x48xf32> to vector<8x16xf32>
    %1036 = vector.extract_strided_slice %1000 {offsets = [0, 16], sizes = [8, 16], strides = [1, 1]} : vector<8x48xf32> to vector<8x16xf32>
    %1037 = arith.addf %1035, %1036 : vector<8x16xf32>
    %1038 = arith.negf %1037 : vector<8x16xf32>
    %1039 = math.exp %1038 : vector<8x16xf32>
    %cst_249 = arith.constant 1.000000e+00 : f32
    %1040 = vector.broadcast %cst_249 : f32 to vector<8x16xf32>
    %1041 = arith.addf %1040, %1039 : vector<8x16xf32>
    %1042 = arith.divf %1040, %1041 : vector<8x16xf32>
    %1043 = vector.extract_strided_slice %996 {offsets = [0, 32], sizes = [8, 16], strides = [1, 1]} : vector<8x48xf32> to vector<8x16xf32>
    %1044 = vector.extract_strided_slice %1000 {offsets = [0, 32], sizes = [8, 16], strides = [1, 1]} : vector<8x48xf32> to vector<8x16xf32>
    %1045 = vector.broadcast %32 : vector<1x16xf32> to vector<8x16xf32>
    %1046 = arith.addf %1044, %1045 : vector<8x16xf32>
    %1047 = arith.mulf %1034, %1046 : vector<8x16xf32>
    %1048 = arith.addf %1043, %1047 : vector<8x16xf32>
    %1049 = math.tanh %1048 : vector<8x16xf32>
    %1050 = arith.subf %979, %1049 : vector<8x16xf32>
    %1051 = arith.mulf %1042, %1050 : vector<8x16xf32>
    %1052 = arith.addf %1049, %1051 : vector<8x16xf32>
    %1053 = arith.truncf %1026 : vector<8x16xf32> to vector<8x16xbf16>
    %1054 = arith.index_cast %988 : i32 to index
    %c0_250 = arith.constant 0 : index
    %1055 = vector.load %arg7[%1054, %c0_250] : memref<128x16xbf16, #tpu.memory_space<vmem>>, vector<8x16xbf16>
    tpu.vector_store %arg7[%1054, %c0_250], %1053 {strides = array<i32>} : memref<128x16xbf16, #tpu.memory_space<vmem>>, vector<8x16xbf16>,
    %1056 = arith.truncf %1052 : vector<8x16xf32> to vector<8x16xbf16>
    %1057 = arith.index_cast %990 : i32 to index
    %c0_251 = arith.constant 0 : index
    %1058 = vector.load %arg8[%1057, %c0_251] : memref<128x16xbf16, #tpu.memory_space<vmem>>, vector<8x16xbf16>
    tpu.vector_store %arg8[%1057, %c0_251], %1056 {strides = array<i32>} : memref<128x16xbf16, #tpu.memory_space<vmem>>, vector<8x16xbf16>,
    %c14_i32 = arith.constant 14 : i32
    %c15_i32_252 = arith.constant 15 : i32
    %1059 = arith.subi %c15_i32_252, %c14_i32 : i32
    %c8_i32_253 = arith.constant 8 : i32
    %1060 = arith.muli %c14_i32, %c8_i32_253 : i32
    %1061 = tpu.assume_multiple %1060, 8 : i32
    %c8_i32_254 = arith.constant 8 : i32
    %1062 = arith.muli %1059, %c8_i32_254 : i32
    %1063 = tpu.assume_multiple %1062, 8 : i32
    %c0_255 = arith.constant 0 : index
    %1064 = arith.index_cast %1061 : i32 to index
    %c0_256 = arith.constant 0 : index
    %1065 = vector.load %arg9[%c0_255, %1064, %c0_256] : memref<2x128x48xf32, #tpu.memory_space<vmem>>, vector<1x8x48xf32>
    %1066 = vector.shape_cast %1065 : vector<1x8x48xf32> to vector<8x48xf32>
    %c1_257 = arith.constant 1 : index
    %1067 = arith.index_cast %1063 : i32 to index
    %c0_258 = arith.constant 0 : index
    %1068 = vector.load %arg9[%c1_257, %1067, %c0_258] : memref<2x128x48xf32, #tpu.memory_space<vmem>>, vector<1x8x48xf32>
    %1069 = vector.shape_cast %1068 : vector<1x8x48xf32> to vector<8x48xf32>
    %1070 = arith.truncf %1026 : vector<8x16xf32> to vector<8x16xbf16>
    %cst_259 = arith.constant dense<0.000000e+00> : vector<8x48xf32>
    %1071 = tpu.matmul %1070, %26, %cst_259 {dimension_numbers = #tpu.dot_dimension_numbers<[1], [0], [0], [1], [0, 0, 1, 1], [], []>} : vector<8x16xbf16>, vector<16x48xbf16>, vector<8x48xf32> -> vector<8x48xf32>
    %1072 = arith.truncf %1052 : vector<8x16xf32> to vector<8x16xbf16>
    %cst_260 = arith.constant dense<0.000000e+00> : vector<8x48xf32>
    %1073 = tpu.matmul %1072, %28, %cst_260 {dimension_numbers = #tpu.dot_dimension_numbers<[1], [0], [0], [1], [0, 0, 1, 1], [], []>} : vector<8x16xbf16>, vector<16x48xbf16>, vector<8x48xf32> -> vector<8x48xf32>
    %1074 = vector.extract_strided_slice %1066 {offsets = [0, 0], sizes = [8, 16], strides = [1, 1]} : vector<8x48xf32> to vector<8x16xf32>
    %1075 = vector.extract_strided_slice %1071 {offsets = [0, 0], sizes = [8, 16], strides = [1, 1]} : vector<8x48xf32> to vector<8x16xf32>
    %1076 = arith.addf %1074, %1075 : vector<8x16xf32>
    %1077 = arith.negf %1076 : vector<8x16xf32>
    %1078 = math.exp %1077 : vector<8x16xf32>
    %cst_261 = arith.constant 1.000000e+00 : f32
    %1079 = vector.broadcast %cst_261 : f32 to vector<8x16xf32>
    %1080 = arith.addf %1079, %1078 : vector<8x16xf32>
    %1081 = arith.divf %1079, %1080 : vector<8x16xf32>
    %1082 = vector.extract_strided_slice %1066 {offsets = [0, 16], sizes = [8, 16], strides = [1, 1]} : vector<8x48xf32> to vector<8x16xf32>
    %1083 = vector.extract_strided_slice %1071 {offsets = [0, 16], sizes = [8, 16], strides = [1, 1]} : vector<8x48xf32> to vector<8x16xf32>
    %1084 = arith.addf %1082, %1083 : vector<8x16xf32>
    %1085 = arith.negf %1084 : vector<8x16xf32>
    %1086 = math.exp %1085 : vector<8x16xf32>
    %cst_262 = arith.constant 1.000000e+00 : f32
    %1087 = vector.broadcast %cst_262 : f32 to vector<8x16xf32>
    %1088 = arith.addf %1087, %1086 : vector<8x16xf32>
    %1089 = arith.divf %1087, %1088 : vector<8x16xf32>
    %1090 = vector.extract_strided_slice %1066 {offsets = [0, 32], sizes = [8, 16], strides = [1, 1]} : vector<8x48xf32> to vector<8x16xf32>
    %1091 = vector.extract_strided_slice %1071 {offsets = [0, 32], sizes = [8, 16], strides = [1, 1]} : vector<8x48xf32> to vector<8x16xf32>
    %1092 = vector.broadcast %30 : vector<1x16xf32> to vector<8x16xf32>
    %1093 = arith.addf %1091, %1092 : vector<8x16xf32>
    %1094 = arith.mulf %1081, %1093 : vector<8x16xf32>
    %1095 = arith.addf %1090, %1094 : vector<8x16xf32>
    %1096 = math.tanh %1095 : vector<8x16xf32>
    %1097 = arith.subf %1026, %1096 : vector<8x16xf32>
    %1098 = arith.mulf %1089, %1097 : vector<8x16xf32>
    %1099 = arith.addf %1096, %1098 : vector<8x16xf32>
    %1100 = vector.extract_strided_slice %1069 {offsets = [0, 0], sizes = [8, 16], strides = [1, 1]} : vector<8x48xf32> to vector<8x16xf32>
    %1101 = vector.extract_strided_slice %1073 {offsets = [0, 0], sizes = [8, 16], strides = [1, 1]} : vector<8x48xf32> to vector<8x16xf32>
    %1102 = arith.addf %1100, %1101 : vector<8x16xf32>
    %1103 = arith.negf %1102 : vector<8x16xf32>
    %1104 = math.exp %1103 : vector<8x16xf32>
    %cst_263 = arith.constant 1.000000e+00 : f32
    %1105 = vector.broadcast %cst_263 : f32 to vector<8x16xf32>
    %1106 = arith.addf %1105, %1104 : vector<8x16xf32>
    %1107 = arith.divf %1105, %1106 : vector<8x16xf32>
    %1108 = vector.extract_strided_slice %1069 {offsets = [0, 16], sizes = [8, 16], strides = [1, 1]} : vector<8x48xf32> to vector<8x16xf32>
    %1109 = vector.extract_strided_slice %1073 {offsets = [0, 16], sizes = [8, 16], strides = [1, 1]} : vector<8x48xf32> to vector<8x16xf32>
    %1110 = arith.addf %1108, %1109 : vector<8x16xf32>
    %1111 = arith.negf %1110 : vector<8x16xf32>
    %1112 = math.exp %1111 : vector<8x16xf32>
    %cst_264 = arith.constant 1.000000e+00 : f32
    %1113 = vector.broadcast %cst_264 : f32 to vector<8x16xf32>
    %1114 = arith.addf %1113, %1112 : vector<8x16xf32>
    %1115 = arith.divf %1113, %1114 : vector<8x16xf32>
    %1116 = vector.extract_strided_slice %1069 {offsets = [0, 32], sizes = [8, 16], strides = [1, 1]} : vector<8x48xf32> to vector<8x16xf32>
    %1117 = vector.extract_strided_slice %1073 {offsets = [0, 32], sizes = [8, 16], strides = [1, 1]} : vector<8x48xf32> to vector<8x16xf32>
    %1118 = vector.broadcast %32 : vector<1x16xf32> to vector<8x16xf32>
    %1119 = arith.addf %1117, %1118 : vector<8x16xf32>
    %1120 = arith.mulf %1107, %1119 : vector<8x16xf32>
    %1121 = arith.addf %1116, %1120 : vector<8x16xf32>
    %1122 = math.tanh %1121 : vector<8x16xf32>
    %1123 = arith.subf %1052, %1122 : vector<8x16xf32>
    %1124 = arith.mulf %1115, %1123 : vector<8x16xf32>
    %1125 = arith.addf %1122, %1124 : vector<8x16xf32>
    %1126 = arith.truncf %1099 : vector<8x16xf32> to vector<8x16xbf16>
    %1127 = arith.index_cast %1061 : i32 to index
    %c0_265 = arith.constant 0 : index
    %1128 = vector.load %arg7[%1127, %c0_265] : memref<128x16xbf16, #tpu.memory_space<vmem>>, vector<8x16xbf16>
    tpu.vector_store %arg7[%1127, %c0_265], %1126 {strides = array<i32>} : memref<128x16xbf16, #tpu.memory_space<vmem>>, vector<8x16xbf16>,
    %1129 = arith.truncf %1125 : vector<8x16xf32> to vector<8x16xbf16>
    %1130 = arith.index_cast %1063 : i32 to index
    %c0_266 = arith.constant 0 : index
    %1131 = vector.load %arg8[%1130, %c0_266] : memref<128x16xbf16, #tpu.memory_space<vmem>>, vector<8x16xbf16>
    tpu.vector_store %arg8[%1130, %c0_266], %1129 {strides = array<i32>} : memref<128x16xbf16, #tpu.memory_space<vmem>>, vector<8x16xbf16>,
    %c15_i32_267 = arith.constant 15 : i32
    %c15_i32_268 = arith.constant 15 : i32
    %1132 = arith.subi %c15_i32_268, %c15_i32_267 : i32
    %c8_i32_269 = arith.constant 8 : i32
    %1133 = arith.muli %c15_i32_267, %c8_i32_269 : i32
    %1134 = tpu.assume_multiple %1133, 8 : i32
    %c8_i32_270 = arith.constant 8 : i32
    %1135 = arith.muli %1132, %c8_i32_270 : i32
    %1136 = tpu.assume_multiple %1135, 8 : i32
    %c0_271 = arith.constant 0 : index
    %1137 = arith.index_cast %1134 : i32 to index
    %c0_272 = arith.constant 0 : index
    %1138 = vector.load %arg9[%c0_271, %1137, %c0_272] : memref<2x128x48xf32, #tpu.memory_space<vmem>>, vector<1x8x48xf32>
    %1139 = vector.shape_cast %1138 : vector<1x8x48xf32> to vector<8x48xf32>
    %c1_273 = arith.constant 1 : index
    %1140 = arith.index_cast %1136 : i32 to index
    %c0_274 = arith.constant 0 : index
    %1141 = vector.load %arg9[%c1_273, %1140, %c0_274] : memref<2x128x48xf32, #tpu.memory_space<vmem>>, vector<1x8x48xf32>
    %1142 = vector.shape_cast %1141 : vector<1x8x48xf32> to vector<8x48xf32>
    %1143 = arith.truncf %1099 : vector<8x16xf32> to vector<8x16xbf16>
    %cst_275 = arith.constant dense<0.000000e+00> : vector<8x48xf32>
    %1144 = tpu.matmul %1143, %26, %cst_275 {dimension_numbers = #tpu.dot_dimension_numbers<[1], [0], [0], [1], [0, 0, 1, 1], [], []>} : vector<8x16xbf16>, vector<16x48xbf16>, vector<8x48xf32> -> vector<8x48xf32>
    %1145 = arith.truncf %1125 : vector<8x16xf32> to vector<8x16xbf16>
    %cst_276 = arith.constant dense<0.000000e+00> : vector<8x48xf32>
    %1146 = tpu.matmul %1145, %28, %cst_276 {dimension_numbers = #tpu.dot_dimension_numbers<[1], [0], [0], [1], [0, 0, 1, 1], [], []>} : vector<8x16xbf16>, vector<16x48xbf16>, vector<8x48xf32> -> vector<8x48xf32>
    %1147 = vector.extract_strided_slice %1139 {offsets = [0, 0], sizes = [8, 16], strides = [1, 1]} : vector<8x48xf32> to vector<8x16xf32>
    %1148 = vector.extract_strided_slice %1144 {offsets = [0, 0], sizes = [8, 16], strides = [1, 1]} : vector<8x48xf32> to vector<8x16xf32>
    %1149 = arith.addf %1147, %1148 : vector<8x16xf32>
    %1150 = arith.negf %1149 : vector<8x16xf32>
    %1151 = math.exp %1150 : vector<8x16xf32>
    %cst_277 = arith.constant 1.000000e+00 : f32
    %1152 = vector.broadcast %cst_277 : f32 to vector<8x16xf32>
    %1153 = arith.addf %1152, %1151 : vector<8x16xf32>
    %1154 = arith.divf %1152, %1153 : vector<8x16xf32>
    %1155 = vector.extract_strided_slice %1139 {offsets = [0, 16], sizes = [8, 16], strides = [1, 1]} : vector<8x48xf32> to vector<8x16xf32>
    %1156 = vector.extract_strided_slice %1144 {offsets = [0, 16], sizes = [8, 16], strides = [1, 1]} : vector<8x48xf32> to vector<8x16xf32>
    %1157 = arith.addf %1155, %1156 : vector<8x16xf32>
    %1158 = arith.negf %1157 : vector<8x16xf32>
    %1159 = math.exp %1158 : vector<8x16xf32>
    %cst_278 = arith.constant 1.000000e+00 : f32
    %1160 = vector.broadcast %cst_278 : f32 to vector<8x16xf32>
    %1161 = arith.addf %1160, %1159 : vector<8x16xf32>
    %1162 = arith.divf %1160, %1161 : vector<8x16xf32>
    %1163 = vector.extract_strided_slice %1139 {offsets = [0, 32], sizes = [8, 16], strides = [1, 1]} : vector<8x48xf32> to vector<8x16xf32>
    %1164 = vector.extract_strided_slice %1144 {offsets = [0, 32], sizes = [8, 16], strides = [1, 1]} : vector<8x48xf32> to vector<8x16xf32>
    %1165 = vector.broadcast %30 : vector<1x16xf32> to vector<8x16xf32>
    %1166 = arith.addf %1164, %1165 : vector<8x16xf32>
    %1167 = arith.mulf %1154, %1166 : vector<8x16xf32>
    %1168 = arith.addf %1163, %1167 : vector<8x16xf32>
    %1169 = math.tanh %1168 : vector<8x16xf32>
    %1170 = arith.subf %1099, %1169 : vector<8x16xf32>
    %1171 = arith.mulf %1162, %1170 : vector<8x16xf32>
    %1172 = arith.addf %1169, %1171 : vector<8x16xf32>
    %1173 = vector.extract_strided_slice %1142 {offsets = [0, 0], sizes = [8, 16], strides = [1, 1]} : vector<8x48xf32> to vector<8x16xf32>
    %1174 = vector.extract_strided_slice %1146 {offsets = [0, 0], sizes = [8, 16], strides = [1, 1]} : vector<8x48xf32> to vector<8x16xf32>
    %1175 = arith.addf %1173, %1174 : vector<8x16xf32>
    %1176 = arith.negf %1175 : vector<8x16xf32>
    %1177 = math.exp %1176 : vector<8x16xf32>
    %cst_279 = arith.constant 1.000000e+00 : f32
    %1178 = vector.broadcast %cst_279 : f32 to vector<8x16xf32>
    %1179 = arith.addf %1178, %1177 : vector<8x16xf32>
    %1180 = arith.divf %1178, %1179 : vector<8x16xf32>
    %1181 = vector.extract_strided_slice %1142 {offsets = [0, 16], sizes = [8, 16], strides = [1, 1]} : vector<8x48xf32> to vector<8x16xf32>
    %1182 = vector.extract_strided_slice %1146 {offsets = [0, 16], sizes = [8, 16], strides = [1, 1]} : vector<8x48xf32> to vector<8x16xf32>
    %1183 = arith.addf %1181, %1182 : vector<8x16xf32>
    %1184 = arith.negf %1183 : vector<8x16xf32>
    %1185 = math.exp %1184 : vector<8x16xf32>
    %cst_280 = arith.constant 1.000000e+00 : f32
    %1186 = vector.broadcast %cst_280 : f32 to vector<8x16xf32>
    %1187 = arith.addf %1186, %1185 : vector<8x16xf32>
    %1188 = arith.divf %1186, %1187 : vector<8x16xf32>
    %1189 = vector.extract_strided_slice %1142 {offsets = [0, 32], sizes = [8, 16], strides = [1, 1]} : vector<8x48xf32> to vector<8x16xf32>
    %1190 = vector.extract_strided_slice %1146 {offsets = [0, 32], sizes = [8, 16], strides = [1, 1]} : vector<8x48xf32> to vector<8x16xf32>
    %1191 = vector.broadcast %32 : vector<1x16xf32> to vector<8x16xf32>
    %1192 = arith.addf %1190, %1191 : vector<8x16xf32>
    %1193 = arith.mulf %1180, %1192 : vector<8x16xf32>
    %1194 = arith.addf %1189, %1193 : vector<8x16xf32>
    %1195 = math.tanh %1194 : vector<8x16xf32>
    %1196 = arith.subf %1125, %1195 : vector<8x16xf32>
    %1197 = arith.mulf %1188, %1196 : vector<8x16xf32>
    %1198 = arith.addf %1195, %1197 : vector<8x16xf32>
    %1199 = arith.truncf %1172 : vector<8x16xf32> to vector<8x16xbf16>
    %1200 = arith.index_cast %1134 : i32 to index
    %c0_281 = arith.constant 0 : index
    %1201 = vector.load %arg7[%1200, %c0_281] : memref<128x16xbf16, #tpu.memory_space<vmem>>, vector<8x16xbf16>
    tpu.vector_store %arg7[%1200, %c0_281], %1199 {strides = array<i32>} : memref<128x16xbf16, #tpu.memory_space<vmem>>, vector<8x16xbf16>,
    %1202 = arith.truncf %1198 : vector<8x16xf32> to vector<8x16xbf16>
    %1203 = arith.index_cast %1136 : i32 to index
    %c0_282 = arith.constant 0 : index
    %1204 = vector.load %arg8[%1203, %c0_282] : memref<128x16xbf16, #tpu.memory_space<vmem>>, vector<8x16xbf16>
    tpu.vector_store %arg8[%1203, %c0_282], %1202 {strides = array<i32>} : memref<128x16xbf16, #tpu.memory_space<vmem>>, vector<8x16xbf16>,
    %c16_i32 = arith.constant 16 : i32
    %c0_283 = arith.constant 0 : index
    %c0_284 = arith.constant 0 : index
    %c0_285 = arith.constant 0 : index
    %1205 = vector.load %arg10[%c0_283, %c0_284, %c0_285] : memref<2x8x16xf32, #tpu.memory_space<vmem>>, vector<1x8x16xf32>
    %1206 = vector.shape_cast %1205 : vector<1x8x16xf32> to vector<8x16xf32>
    %1207 = vector.shape_cast %1172 : vector<8x16xf32> to vector<1x8x16xf32>
    tpu.vector_store %arg10[%c0_283, %c0_284, %c0_285], %1207 {strides = array<i32>} : memref<2x8x16xf32, #tpu.memory_space<vmem>>, vector<1x8x16xf32>,
    %c1_286 = arith.constant 1 : index
    %c0_287 = arith.constant 0 : index
    %c0_288 = arith.constant 0 : index
    %1208 = vector.load %arg10[%c1_286, %c0_287, %c0_288] : memref<2x8x16xf32, #tpu.memory_space<vmem>>, vector<1x8x16xf32>
    %1209 = vector.shape_cast %1208 : vector<1x8x16xf32> to vector<8x16xf32>
    %1210 = vector.shape_cast %1198 : vector<8x16xf32> to vector<1x8x16xf32>
    tpu.vector_store %arg10[%c1_286, %c0_287, %c0_288], %1210 {strides = array<i32>} : memref<2x8x16xf32, #tpu.memory_space<vmem>>, vector<1x8x16xf32>,
    return
  }
  func.func @transform_0(%arg0: i32) -> (i32, i32) {
    %c0_i32 = arith.constant 0 : i32
    %c0_i32_0 = arith.constant 0 : i32
    return %arg0, %c0_i32 : i32, i32
  }
  func.func @transform_1(%arg0: i32) -> (i32, i32) {
    %c0_i32 = arith.constant 0 : i32
    %0 = arith.subi %c0_i32, %arg0 : i32
    %c0_i32_0 = arith.constant 0 : i32
    %c0_i32_1 = arith.constant 0 : i32
    return %0, %c0_i32_0 : i32, i32
  }
  func.func @transform_2(%arg0: i32) -> (i32, i32, i32, i32) {
    %c0_i32 = arith.constant 0 : i32
    %c0_i32_0 = arith.constant 0 : i32
    %c0_i32_1 = arith.constant 0 : i32
    %c0_i32_2 = arith.constant 0 : i32
    %c0_i32_3 = arith.constant 0 : i32
    return %c0_i32, %c0_i32_0, %c0_i32_1, %c0_i32_2 : i32, i32, i32, i32
  }
  func.func @transform_3(%arg0: i32) -> (i32, i32, i32) {
    %c0_i32 = arith.constant 0 : i32
    %c0_i32_0 = arith.constant 0 : i32
    %c0_i32_1 = arith.constant 0 : i32
    %c0_i32_2 = arith.constant 0 : i32
    return %c0_i32, %c0_i32_0, %c0_i32_1 : i32, i32, i32
  }
  func.func @transform_4(%arg0: i32) -> (i32, i32, i32) {
    %c0_i32 = arith.constant 0 : i32
    %c0_i32_0 = arith.constant 0 : i32
    %c0_i32_1 = arith.constant 0 : i32
    %c0_i32_2 = arith.constant 0 : i32
    return %c0_i32, %c0_i32_0, %c0_i32_1 : i32, i32, i32
  }
  func.func @transform_5(%arg0: i32) -> (i32, i32, i32) {
    %c0_i32 = arith.constant 0 : i32
    %c0_i32_0 = arith.constant 0 : i32
    %c0_i32_1 = arith.constant 0 : i32
    %c0_i32_2 = arith.constant 0 : i32
    return %c0_i32, %c0_i32_0, %c0_i32_1 : i32, i32, i32
  }
  func.func @transform_6(%arg0: i32) -> (i32, i32) {
    %c0_i32 = arith.constant 0 : i32
    %c0_i32_0 = arith.constant 0 : i32
    return %arg0, %c0_i32 : i32, i32
  }
  func.func @transform_7(%arg0: i32) -> (i32, i32) {
    %c0_i32 = arith.constant 0 : i32
    %0 = arith.subi %c0_i32, %arg0 : i32
    %c0_i32_0 = arith.constant 0 : i32
    %c0_i32_1 = arith.constant 0 : i32
    return %0, %c0_i32_0 : i32, i32
  }
}

module attributes {stable_mosaic.version = 11 : i64} {
  func.func @_bigru_block_kernel(%arg0: i32, %arg1: memref<32x16xbf16, #tpu.memory_space<vmem>>, %arg2: memref<32x16xbf16, #tpu.memory_space<vmem>>, %arg3: memref<32x16xbf16, #tpu.memory_space<vmem>>, %arg4: memref<32x16xbf16, #tpu.memory_space<vmem>>, %arg5: memref<2x2x16x48xbf16, #tpu.memory_space<vmem>>, %arg6: memref<2x1x48xf32, #tpu.memory_space<vmem>>, %arg7: memref<2x16x48xbf16, #tpu.memory_space<vmem>>, %arg8: memref<2x1x16xf32, #tpu.memory_space<vmem>>, %arg9: memref<32x16xbf16, #tpu.memory_space<vmem>>, %arg10: memref<32x16xbf16, #tpu.memory_space<vmem>>, %arg11: memref<2x32x48xf32, #tpu.memory_space<vmem>>, %arg12: memref<2x8x16xf32, #tpu.memory_space<vmem>>) attributes {dimension_semantics = [#tpu.dimension_semantics<arbitrary>], iteration_bounds = array<i64: 1>, scalar_prefetch = 0 : i64, scratch_operands = 2 : i64, tpu.core_type = #tpu.core_type<tc>, window_params = [{transform_indices = @transform_0, window_bounds = array<i64: 32, 16>}, {transform_indices = @transform_1, window_bounds = array<i64: 32, 16>}, {transform_indices = @transform_2, window_bounds = array<i64: 32, 16>}, {transform_indices = @transform_3, window_bounds = array<i64: 32, 16>}, {pipeline_mode = #tpu.pipeline_mode<synchronous>, transform_indices = @transform_4, window_bounds = array<i64: 2, 2, 16, 48>}, {pipeline_mode = #tpu.pipeline_mode<synchronous>, transform_indices = @transform_5, window_bounds = array<i64: 2, 1, 48>}, {pipeline_mode = #tpu.pipeline_mode<synchronous>, transform_indices = @transform_6, window_bounds = array<i64: 2, 16, 48>}, {pipeline_mode = #tpu.pipeline_mode<synchronous>, transform_indices = @transform_7, window_bounds = array<i64: 2, 1, 16>}, {transform_indices = @transform_8, window_bounds = array<i64: 32, 16>}, {transform_indices = @transform_9, window_bounds = array<i64: 32, 16>}]} {
    %c0_i32 = arith.constant 0 : i32
    %0 = arith.cmpi eq, %arg0, %c0_i32 : i32
    %1 = arith.extui %0 : i1 to i32
    %c0_i32_0 = arith.constant 0 : i32
    %2 = arith.cmpi ne, %1, %c0_i32_0 : i32
    scf.if %2 {
      %cst_122 = arith.constant 0.000000e+00 : f32
      %345 = vector.broadcast %cst_122 : f32 to vector<2x8x16xf32>
      %c0_123 = arith.constant 0 : index
      %c0_124 = arith.constant 0 : index
      %c0_125 = arith.constant 0 : index
      %346 = vector.load %arg12[%c0_123, %c0_124, %c0_125] : memref<2x8x16xf32, #tpu.memory_space<vmem>>, vector<2x8x16xf32>
      tpu.vector_store %arg12[%c0_123, %c0_124, %c0_125], %345 {strides = array<i32>} : memref<2x8x16xf32, #tpu.memory_space<vmem>>, vector<2x8x16xf32>,
    } else {
    }
    %c0 = arith.constant 0 : index
    %c0_1 = arith.constant 0 : index
    %3 = vector.load %arg1[%c0, %c0_1] : memref<32x16xbf16, #tpu.memory_space<vmem>>, vector<32x16xbf16>
    %c0_2 = arith.constant 0 : index
    %c0_3 = arith.constant 0 : index
    %c0_4 = arith.constant 0 : index
    %c0_5 = arith.constant 0 : index
    %4 = vector.load %arg5[%c0_2, %c0_3, %c0_4, %c0_5] : memref<2x2x16x48xbf16, #tpu.memory_space<vmem>>, vector<1x1x16x48xbf16>
    %5 = vector.shape_cast %4 : vector<1x1x16x48xbf16> to vector<16x48xbf16>
    %cst = arith.constant dense<0.000000e+00> : vector<32x48xf32>
    %6 = tpu.matmul %3, %5, %cst {dimension_numbers = #tpu.dot_dimension_numbers<[1], [0], [0], [1], [0, 0, 1, 1], [], []>} : vector<32x16xbf16>, vector<16x48xbf16>, vector<32x48xf32> -> vector<32x48xf32>
    %c0_6 = arith.constant 0 : index
    %c0_7 = arith.constant 0 : index
    %7 = vector.load %arg2[%c0_6, %c0_7] : memref<32x16xbf16, #tpu.memory_space<vmem>>, vector<32x16xbf16>
    %c0_8 = arith.constant 0 : index
    %c1 = arith.constant 1 : index
    %c0_9 = arith.constant 0 : index
    %c0_10 = arith.constant 0 : index
    %8 = vector.load %arg5[%c0_8, %c1, %c0_9, %c0_10] : memref<2x2x16x48xbf16, #tpu.memory_space<vmem>>, vector<1x1x16x48xbf16>
    %9 = vector.shape_cast %8 : vector<1x1x16x48xbf16> to vector<16x48xbf16>
    %cst_11 = arith.constant dense<0.000000e+00> : vector<32x48xf32>
    %10 = tpu.matmul %7, %9, %cst_11 {dimension_numbers = #tpu.dot_dimension_numbers<[1], [0], [0], [1], [0, 0, 1, 1], [], []>} : vector<32x16xbf16>, vector<16x48xbf16>, vector<32x48xf32> -> vector<32x48xf32>
    %11 = arith.addf %6, %10 : vector<32x48xf32>
    %c0_12 = arith.constant 0 : index
    %c0_13 = arith.constant 0 : index
    %c0_14 = arith.constant 0 : index
    %12 = vector.load %arg6[%c0_12, %c0_13, %c0_14] : memref<2x1x48xf32, #tpu.memory_space<vmem>>, vector<1x1x48xf32>
    %13 = vector.shape_cast %12 : vector<1x1x48xf32> to vector<1x48xf32>
    %14 = vector.broadcast %13 : vector<1x48xf32> to vector<32x48xf32>
    %15 = arith.addf %11, %14 : vector<32x48xf32>
    %c0_15 = arith.constant 0 : index
    %c0_16 = arith.constant 0 : index
    %c0_17 = arith.constant 0 : index
    %16 = vector.load %arg11[%c0_15, %c0_16, %c0_17] : memref<2x32x48xf32, #tpu.memory_space<vmem>>, vector<1x32x48xf32>
    %17 = vector.shape_cast %16 : vector<1x32x48xf32> to vector<32x48xf32>
    %18 = vector.shape_cast %15 : vector<32x48xf32> to vector<1x32x48xf32>
    tpu.vector_store %arg11[%c0_15, %c0_16, %c0_17], %18 {strides = array<i32>} : memref<2x32x48xf32, #tpu.memory_space<vmem>>, vector<1x32x48xf32>,
    %c0_18 = arith.constant 0 : index
    %c0_19 = arith.constant 0 : index
    %19 = vector.load %arg3[%c0_18, %c0_19] : memref<32x16xbf16, #tpu.memory_space<vmem>>, vector<32x16xbf16>
    %c1_20 = arith.constant 1 : index
    %c0_21 = arith.constant 0 : index
    %c0_22 = arith.constant 0 : index
    %c0_23 = arith.constant 0 : index
    %20 = vector.load %arg5[%c1_20, %c0_21, %c0_22, %c0_23] : memref<2x2x16x48xbf16, #tpu.memory_space<vmem>>, vector<1x1x16x48xbf16>
    %21 = vector.shape_cast %20 : vector<1x1x16x48xbf16> to vector<16x48xbf16>
    %cst_24 = arith.constant dense<0.000000e+00> : vector<32x48xf32>
    %22 = tpu.matmul %19, %21, %cst_24 {dimension_numbers = #tpu.dot_dimension_numbers<[1], [0], [0], [1], [0, 0, 1, 1], [], []>} : vector<32x16xbf16>, vector<16x48xbf16>, vector<32x48xf32> -> vector<32x48xf32>
    %c0_25 = arith.constant 0 : index
    %c0_26 = arith.constant 0 : index
    %23 = vector.load %arg4[%c0_25, %c0_26] : memref<32x16xbf16, #tpu.memory_space<vmem>>, vector<32x16xbf16>
    %c1_27 = arith.constant 1 : index
    %c1_28 = arith.constant 1 : index
    %c0_29 = arith.constant 0 : index
    %c0_30 = arith.constant 0 : index
    %24 = vector.load %arg5[%c1_27, %c1_28, %c0_29, %c0_30] : memref<2x2x16x48xbf16, #tpu.memory_space<vmem>>, vector<1x1x16x48xbf16>
    %25 = vector.shape_cast %24 : vector<1x1x16x48xbf16> to vector<16x48xbf16>
    %cst_31 = arith.constant dense<0.000000e+00> : vector<32x48xf32>
    %26 = tpu.matmul %23, %25, %cst_31 {dimension_numbers = #tpu.dot_dimension_numbers<[1], [0], [0], [1], [0, 0, 1, 1], [], []>} : vector<32x16xbf16>, vector<16x48xbf16>, vector<32x48xf32> -> vector<32x48xf32>
    %27 = arith.addf %22, %26 : vector<32x48xf32>
    %c1_32 = arith.constant 1 : index
    %c0_33 = arith.constant 0 : index
    %c0_34 = arith.constant 0 : index
    %28 = vector.load %arg6[%c1_32, %c0_33, %c0_34] : memref<2x1x48xf32, #tpu.memory_space<vmem>>, vector<1x1x48xf32>
    %29 = vector.shape_cast %28 : vector<1x1x48xf32> to vector<1x48xf32>
    %30 = vector.broadcast %29 : vector<1x48xf32> to vector<32x48xf32>
    %31 = arith.addf %27, %30 : vector<32x48xf32>
    %c1_35 = arith.constant 1 : index
    %c0_36 = arith.constant 0 : index
    %c0_37 = arith.constant 0 : index
    %32 = vector.load %arg11[%c1_35, %c0_36, %c0_37] : memref<2x32x48xf32, #tpu.memory_space<vmem>>, vector<1x32x48xf32>
    %33 = vector.shape_cast %32 : vector<1x32x48xf32> to vector<32x48xf32>
    %34 = vector.shape_cast %31 : vector<32x48xf32> to vector<1x32x48xf32>
    tpu.vector_store %arg11[%c1_35, %c0_36, %c0_37], %34 {strides = array<i32>} : memref<2x32x48xf32, #tpu.memory_space<vmem>>, vector<1x32x48xf32>,
    %c0_38 = arith.constant 0 : index
    %c0_39 = arith.constant 0 : index
    %c0_40 = arith.constant 0 : index
    %35 = vector.load %arg7[%c0_38, %c0_39, %c0_40] : memref<2x16x48xbf16, #tpu.memory_space<vmem>>, vector<1x16x48xbf16>
    %36 = vector.shape_cast %35 : vector<1x16x48xbf16> to vector<16x48xbf16>
    %c1_41 = arith.constant 1 : index
    %c0_42 = arith.constant 0 : index
    %c0_43 = arith.constant 0 : index
    %37 = vector.load %arg7[%c1_41, %c0_42, %c0_43] : memref<2x16x48xbf16, #tpu.memory_space<vmem>>, vector<1x16x48xbf16>
    %38 = vector.shape_cast %37 : vector<1x16x48xbf16> to vector<16x48xbf16>
    %c0_44 = arith.constant 0 : index
    %c0_45 = arith.constant 0 : index
    %c0_46 = arith.constant 0 : index
    %39 = vector.load %arg8[%c0_44, %c0_45, %c0_46] : memref<2x1x16xf32, #tpu.memory_space<vmem>>, vector<1x1x16xf32>
    %40 = vector.shape_cast %39 : vector<1x1x16xf32> to vector<1x16xf32>
    %c1_47 = arith.constant 1 : index
    %c0_48 = arith.constant 0 : index
    %c0_49 = arith.constant 0 : index
    %41 = vector.load %arg8[%c1_47, %c0_48, %c0_49] : memref<2x1x16xf32, #tpu.memory_space<vmem>>, vector<1x1x16xf32>
    %42 = vector.shape_cast %41 : vector<1x1x16xf32> to vector<1x16xf32>
    %c0_50 = arith.constant 0 : index
    %c0_51 = arith.constant 0 : index
    %c0_52 = arith.constant 0 : index
    %43 = vector.load %arg12[%c0_50, %c0_51, %c0_52] : memref<2x8x16xf32, #tpu.memory_space<vmem>>, vector<1x8x16xf32>
    %44 = vector.shape_cast %43 : vector<1x8x16xf32> to vector<8x16xf32>
    %c1_53 = arith.constant 1 : index
    %c0_54 = arith.constant 0 : index
    %c0_55 = arith.constant 0 : index
    %45 = vector.load %arg12[%c1_53, %c0_54, %c0_55] : memref<2x8x16xf32, #tpu.memory_space<vmem>>, vector<1x8x16xf32>
    %46 = vector.shape_cast %45 : vector<1x8x16xf32> to vector<8x16xf32>
    %c0_i32_56 = arith.constant 0 : i32
    %c3_i32 = arith.constant 3 : i32
    %47 = arith.subi %c3_i32, %c0_i32_56 : i32
    %c8_i32 = arith.constant 8 : i32
    %48 = arith.muli %c0_i32_56, %c8_i32 : i32
    %49 = tpu.assume_multiple %48, 8 : i32
    %c8_i32_57 = arith.constant 8 : i32
    %50 = arith.muli %47, %c8_i32_57 : i32
    %51 = tpu.assume_multiple %50, 8 : i32
    %c0_58 = arith.constant 0 : index
    %52 = arith.index_cast %49 : i32 to index
    %c0_59 = arith.constant 0 : index
    %53 = vector.load %arg11[%c0_58, %52, %c0_59] : memref<2x32x48xf32, #tpu.memory_space<vmem>>, vector<1x8x48xf32>
    %54 = vector.shape_cast %53 : vector<1x8x48xf32> to vector<8x48xf32>
    %c1_60 = arith.constant 1 : index
    %55 = arith.index_cast %51 : i32 to index
    %c0_61 = arith.constant 0 : index
    %56 = vector.load %arg11[%c1_60, %55, %c0_61] : memref<2x32x48xf32, #tpu.memory_space<vmem>>, vector<1x8x48xf32>
    %57 = vector.shape_cast %56 : vector<1x8x48xf32> to vector<8x48xf32>
    %58 = arith.truncf %44 : vector<8x16xf32> to vector<8x16xbf16>
    %cst_62 = arith.constant dense<0.000000e+00> : vector<8x48xf32>
    %59 = tpu.matmul %58, %36, %cst_62 {dimension_numbers = #tpu.dot_dimension_numbers<[1], [0], [0], [1], [0, 0, 1, 1], [], []>} : vector<8x16xbf16>, vector<16x48xbf16>, vector<8x48xf32> -> vector<8x48xf32>
    %60 = arith.truncf %46 : vector<8x16xf32> to vector<8x16xbf16>
    %cst_63 = arith.constant dense<0.000000e+00> : vector<8x48xf32>
    %61 = tpu.matmul %60, %38, %cst_63 {dimension_numbers = #tpu.dot_dimension_numbers<[1], [0], [0], [1], [0, 0, 1, 1], [], []>} : vector<8x16xbf16>, vector<16x48xbf16>, vector<8x48xf32> -> vector<8x48xf32>
    %62 = vector.extract_strided_slice %54 {offsets = [0, 0], sizes = [8, 16], strides = [1, 1]} : vector<8x48xf32> to vector<8x16xf32>
    %63 = vector.extract_strided_slice %59 {offsets = [0, 0], sizes = [8, 16], strides = [1, 1]} : vector<8x48xf32> to vector<8x16xf32>
    %64 = arith.addf %62, %63 : vector<8x16xf32>
    %65 = arith.negf %64 : vector<8x16xf32>
    %66 = math.exp %65 : vector<8x16xf32>
    %cst_64 = arith.constant 1.000000e+00 : f32
    %67 = vector.broadcast %cst_64 : f32 to vector<8x16xf32>
    %68 = arith.addf %67, %66 : vector<8x16xf32>
    %69 = arith.divf %67, %68 : vector<8x16xf32>
    %70 = vector.extract_strided_slice %54 {offsets = [0, 16], sizes = [8, 16], strides = [1, 1]} : vector<8x48xf32> to vector<8x16xf32>
    %71 = vector.extract_strided_slice %59 {offsets = [0, 16], sizes = [8, 16], strides = [1, 1]} : vector<8x48xf32> to vector<8x16xf32>
    %72 = arith.addf %70, %71 : vector<8x16xf32>
    %73 = arith.negf %72 : vector<8x16xf32>
    %74 = math.exp %73 : vector<8x16xf32>
    %cst_65 = arith.constant 1.000000e+00 : f32
    %75 = vector.broadcast %cst_65 : f32 to vector<8x16xf32>
    %76 = arith.addf %75, %74 : vector<8x16xf32>
    %77 = arith.divf %75, %76 : vector<8x16xf32>
    %78 = vector.extract_strided_slice %54 {offsets = [0, 32], sizes = [8, 16], strides = [1, 1]} : vector<8x48xf32> to vector<8x16xf32>
    %79 = vector.extract_strided_slice %59 {offsets = [0, 32], sizes = [8, 16], strides = [1, 1]} : vector<8x48xf32> to vector<8x16xf32>
    %80 = vector.broadcast %40 : vector<1x16xf32> to vector<8x16xf32>
    %81 = arith.addf %79, %80 : vector<8x16xf32>
    %82 = arith.mulf %69, %81 : vector<8x16xf32>
    %83 = arith.addf %78, %82 : vector<8x16xf32>
    %84 = math.tanh %83 : vector<8x16xf32>
    %85 = arith.subf %44, %84 : vector<8x16xf32>
    %86 = arith.mulf %77, %85 : vector<8x16xf32>
    %87 = arith.addf %84, %86 : vector<8x16xf32>
    %88 = vector.extract_strided_slice %57 {offsets = [0, 0], sizes = [8, 16], strides = [1, 1]} : vector<8x48xf32> to vector<8x16xf32>
    %89 = vector.extract_strided_slice %61 {offsets = [0, 0], sizes = [8, 16], strides = [1, 1]} : vector<8x48xf32> to vector<8x16xf32>
    %90 = arith.addf %88, %89 : vector<8x16xf32>
    %91 = arith.negf %90 : vector<8x16xf32>
    %92 = math.exp %91 : vector<8x16xf32>
    %cst_66 = arith.constant 1.000000e+00 : f32
    %93 = vector.broadcast %cst_66 : f32 to vector<8x16xf32>
    %94 = arith.addf %93, %92 : vector<8x16xf32>
    %95 = arith.divf %93, %94 : vector<8x16xf32>
    %96 = vector.extract_strided_slice %57 {offsets = [0, 16], sizes = [8, 16], strides = [1, 1]} : vector<8x48xf32> to vector<8x16xf32>
    %97 = vector.extract_strided_slice %61 {offsets = [0, 16], sizes = [8, 16], strides = [1, 1]} : vector<8x48xf32> to vector<8x16xf32>
    %98 = arith.addf %96, %97 : vector<8x16xf32>
    %99 = arith.negf %98 : vector<8x16xf32>
    %100 = math.exp %99 : vector<8x16xf32>
    %cst_67 = arith.constant 1.000000e+00 : f32
    %101 = vector.broadcast %cst_67 : f32 to vector<8x16xf32>
    %102 = arith.addf %101, %100 : vector<8x16xf32>
    %103 = arith.divf %101, %102 : vector<8x16xf32>
    %104 = vector.extract_strided_slice %57 {offsets = [0, 32], sizes = [8, 16], strides = [1, 1]} : vector<8x48xf32> to vector<8x16xf32>
    %105 = vector.extract_strided_slice %61 {offsets = [0, 32], sizes = [8, 16], strides = [1, 1]} : vector<8x48xf32> to vector<8x16xf32>
    %106 = vector.broadcast %42 : vector<1x16xf32> to vector<8x16xf32>
    %107 = arith.addf %105, %106 : vector<8x16xf32>
    %108 = arith.mulf %95, %107 : vector<8x16xf32>
    %109 = arith.addf %104, %108 : vector<8x16xf32>
    %110 = math.tanh %109 : vector<8x16xf32>
    %111 = arith.subf %46, %110 : vector<8x16xf32>
    %112 = arith.mulf %103, %111 : vector<8x16xf32>
    %113 = arith.addf %110, %112 : vector<8x16xf32>
    %114 = arith.truncf %87 : vector<8x16xf32> to vector<8x16xbf16>
    %115 = arith.index_cast %49 : i32 to index
    %c0_68 = arith.constant 0 : index
    %116 = vector.load %arg9[%115, %c0_68] : memref<32x16xbf16, #tpu.memory_space<vmem>>, vector<8x16xbf16>
    tpu.vector_store %arg9[%115, %c0_68], %114 {strides = array<i32>} : memref<32x16xbf16, #tpu.memory_space<vmem>>, vector<8x16xbf16>,
    %117 = arith.truncf %113 : vector<8x16xf32> to vector<8x16xbf16>
    %118 = arith.index_cast %51 : i32 to index
    %c0_69 = arith.constant 0 : index
    %119 = vector.load %arg10[%118, %c0_69] : memref<32x16xbf16, #tpu.memory_space<vmem>>, vector<8x16xbf16>
    tpu.vector_store %arg10[%118, %c0_69], %117 {strides = array<i32>} : memref<32x16xbf16, #tpu.memory_space<vmem>>, vector<8x16xbf16>,
    %c1_i32 = arith.constant 1 : i32
    %c3_i32_70 = arith.constant 3 : i32
    %120 = arith.subi %c3_i32_70, %c1_i32 : i32
    %c8_i32_71 = arith.constant 8 : i32
    %121 = arith.muli %c1_i32, %c8_i32_71 : i32
    %122 = tpu.assume_multiple %121, 8 : i32
    %c8_i32_72 = arith.constant 8 : i32
    %123 = arith.muli %120, %c8_i32_72 : i32
    %124 = tpu.assume_multiple %123, 8 : i32
    %c0_73 = arith.constant 0 : index
    %125 = arith.index_cast %122 : i32 to index
    %c0_74 = arith.constant 0 : index
    %126 = vector.load %arg11[%c0_73, %125, %c0_74] : memref<2x32x48xf32, #tpu.memory_space<vmem>>, vector<1x8x48xf32>
    %127 = vector.shape_cast %126 : vector<1x8x48xf32> to vector<8x48xf32>
    %c1_75 = arith.constant 1 : index
    %128 = arith.index_cast %124 : i32 to index
    %c0_76 = arith.constant 0 : index
    %129 = vector.load %arg11[%c1_75, %128, %c0_76] : memref<2x32x48xf32, #tpu.memory_space<vmem>>, vector<1x8x48xf32>
    %130 = vector.shape_cast %129 : vector<1x8x48xf32> to vector<8x48xf32>
    %131 = arith.truncf %87 : vector<8x16xf32> to vector<8x16xbf16>
    %cst_77 = arith.constant dense<0.000000e+00> : vector<8x48xf32>
    %132 = tpu.matmul %131, %36, %cst_77 {dimension_numbers = #tpu.dot_dimension_numbers<[1], [0], [0], [1], [0, 0, 1, 1], [], []>} : vector<8x16xbf16>, vector<16x48xbf16>, vector<8x48xf32> -> vector<8x48xf32>
    %133 = arith.truncf %113 : vector<8x16xf32> to vector<8x16xbf16>
    %cst_78 = arith.constant dense<0.000000e+00> : vector<8x48xf32>
    %134 = tpu.matmul %133, %38, %cst_78 {dimension_numbers = #tpu.dot_dimension_numbers<[1], [0], [0], [1], [0, 0, 1, 1], [], []>} : vector<8x16xbf16>, vector<16x48xbf16>, vector<8x48xf32> -> vector<8x48xf32>
    %135 = vector.extract_strided_slice %127 {offsets = [0, 0], sizes = [8, 16], strides = [1, 1]} : vector<8x48xf32> to vector<8x16xf32>
    %136 = vector.extract_strided_slice %132 {offsets = [0, 0], sizes = [8, 16], strides = [1, 1]} : vector<8x48xf32> to vector<8x16xf32>
    %137 = arith.addf %135, %136 : vector<8x16xf32>
    %138 = arith.negf %137 : vector<8x16xf32>
    %139 = math.exp %138 : vector<8x16xf32>
    %cst_79 = arith.constant 1.000000e+00 : f32
    %140 = vector.broadcast %cst_79 : f32 to vector<8x16xf32>
    %141 = arith.addf %140, %139 : vector<8x16xf32>
    %142 = arith.divf %140, %141 : vector<8x16xf32>
    %143 = vector.extract_strided_slice %127 {offsets = [0, 16], sizes = [8, 16], strides = [1, 1]} : vector<8x48xf32> to vector<8x16xf32>
    %144 = vector.extract_strided_slice %132 {offsets = [0, 16], sizes = [8, 16], strides = [1, 1]} : vector<8x48xf32> to vector<8x16xf32>
    %145 = arith.addf %143, %144 : vector<8x16xf32>
    %146 = arith.negf %145 : vector<8x16xf32>
    %147 = math.exp %146 : vector<8x16xf32>
    %cst_80 = arith.constant 1.000000e+00 : f32
    %148 = vector.broadcast %cst_80 : f32 to vector<8x16xf32>
    %149 = arith.addf %148, %147 : vector<8x16xf32>
    %150 = arith.divf %148, %149 : vector<8x16xf32>
    %151 = vector.extract_strided_slice %127 {offsets = [0, 32], sizes = [8, 16], strides = [1, 1]} : vector<8x48xf32> to vector<8x16xf32>
    %152 = vector.extract_strided_slice %132 {offsets = [0, 32], sizes = [8, 16], strides = [1, 1]} : vector<8x48xf32> to vector<8x16xf32>
    %153 = vector.broadcast %40 : vector<1x16xf32> to vector<8x16xf32>
    %154 = arith.addf %152, %153 : vector<8x16xf32>
    %155 = arith.mulf %142, %154 : vector<8x16xf32>
    %156 = arith.addf %151, %155 : vector<8x16xf32>
    %157 = math.tanh %156 : vector<8x16xf32>
    %158 = arith.subf %87, %157 : vector<8x16xf32>
    %159 = arith.mulf %150, %158 : vector<8x16xf32>
    %160 = arith.addf %157, %159 : vector<8x16xf32>
    %161 = vector.extract_strided_slice %130 {offsets = [0, 0], sizes = [8, 16], strides = [1, 1]} : vector<8x48xf32> to vector<8x16xf32>
    %162 = vector.extract_strided_slice %134 {offsets = [0, 0], sizes = [8, 16], strides = [1, 1]} : vector<8x48xf32> to vector<8x16xf32>
    %163 = arith.addf %161, %162 : vector<8x16xf32>
    %164 = arith.negf %163 : vector<8x16xf32>
    %165 = math.exp %164 : vector<8x16xf32>
    %cst_81 = arith.constant 1.000000e+00 : f32
    %166 = vector.broadcast %cst_81 : f32 to vector<8x16xf32>
    %167 = arith.addf %166, %165 : vector<8x16xf32>
    %168 = arith.divf %166, %167 : vector<8x16xf32>
    %169 = vector.extract_strided_slice %130 {offsets = [0, 16], sizes = [8, 16], strides = [1, 1]} : vector<8x48xf32> to vector<8x16xf32>
    %170 = vector.extract_strided_slice %134 {offsets = [0, 16], sizes = [8, 16], strides = [1, 1]} : vector<8x48xf32> to vector<8x16xf32>
    %171 = arith.addf %169, %170 : vector<8x16xf32>
    %172 = arith.negf %171 : vector<8x16xf32>
    %173 = math.exp %172 : vector<8x16xf32>
    %cst_82 = arith.constant 1.000000e+00 : f32
    %174 = vector.broadcast %cst_82 : f32 to vector<8x16xf32>
    %175 = arith.addf %174, %173 : vector<8x16xf32>
    %176 = arith.divf %174, %175 : vector<8x16xf32>
    %177 = vector.extract_strided_slice %130 {offsets = [0, 32], sizes = [8, 16], strides = [1, 1]} : vector<8x48xf32> to vector<8x16xf32>
    %178 = vector.extract_strided_slice %134 {offsets = [0, 32], sizes = [8, 16], strides = [1, 1]} : vector<8x48xf32> to vector<8x16xf32>
    %179 = vector.broadcast %42 : vector<1x16xf32> to vector<8x16xf32>
    %180 = arith.addf %178, %179 : vector<8x16xf32>
    %181 = arith.mulf %168, %180 : vector<8x16xf32>
    %182 = arith.addf %177, %181 : vector<8x16xf32>
    %183 = math.tanh %182 : vector<8x16xf32>
    %184 = arith.subf %113, %183 : vector<8x16xf32>
    %185 = arith.mulf %176, %184 : vector<8x16xf32>
    %186 = arith.addf %183, %185 : vector<8x16xf32>
    %187 = arith.truncf %160 : vector<8x16xf32> to vector<8x16xbf16>
    %188 = arith.index_cast %122 : i32 to index
    %c0_83 = arith.constant 0 : index
    %189 = vector.load %arg9[%188, %c0_83] : memref<32x16xbf16, #tpu.memory_space<vmem>>, vector<8x16xbf16>
    tpu.vector_store %arg9[%188, %c0_83], %187 {strides = array<i32>} : memref<32x16xbf16, #tpu.memory_space<vmem>>, vector<8x16xbf16>,
    %190 = arith.truncf %186 : vector<8x16xf32> to vector<8x16xbf16>
    %191 = arith.index_cast %124 : i32 to index
    %c0_84 = arith.constant 0 : index
    %192 = vector.load %arg10[%191, %c0_84] : memref<32x16xbf16, #tpu.memory_space<vmem>>, vector<8x16xbf16>
    tpu.vector_store %arg10[%191, %c0_84], %190 {strides = array<i32>} : memref<32x16xbf16, #tpu.memory_space<vmem>>, vector<8x16xbf16>,
    %c2_i32 = arith.constant 2 : i32
    %c3_i32_85 = arith.constant 3 : i32
    %193 = arith.subi %c3_i32_85, %c2_i32 : i32
    %c8_i32_86 = arith.constant 8 : i32
    %194 = arith.muli %c2_i32, %c8_i32_86 : i32
    %195 = tpu.assume_multiple %194, 8 : i32
    %c8_i32_87 = arith.constant 8 : i32
    %196 = arith.muli %193, %c8_i32_87 : i32
    %197 = tpu.assume_multiple %196, 8 : i32
    %c0_88 = arith.constant 0 : index
    %198 = arith.index_cast %195 : i32 to index
    %c0_89 = arith.constant 0 : index
    %199 = vector.load %arg11[%c0_88, %198, %c0_89] : memref<2x32x48xf32, #tpu.memory_space<vmem>>, vector<1x8x48xf32>
    %200 = vector.shape_cast %199 : vector<1x8x48xf32> to vector<8x48xf32>
    %c1_90 = arith.constant 1 : index
    %201 = arith.index_cast %197 : i32 to index
    %c0_91 = arith.constant 0 : index
    %202 = vector.load %arg11[%c1_90, %201, %c0_91] : memref<2x32x48xf32, #tpu.memory_space<vmem>>, vector<1x8x48xf32>
    %203 = vector.shape_cast %202 : vector<1x8x48xf32> to vector<8x48xf32>
    %204 = arith.truncf %160 : vector<8x16xf32> to vector<8x16xbf16>
    %cst_92 = arith.constant dense<0.000000e+00> : vector<8x48xf32>
    %205 = tpu.matmul %204, %36, %cst_92 {dimension_numbers = #tpu.dot_dimension_numbers<[1], [0], [0], [1], [0, 0, 1, 1], [], []>} : vector<8x16xbf16>, vector<16x48xbf16>, vector<8x48xf32> -> vector<8x48xf32>
    %206 = arith.truncf %186 : vector<8x16xf32> to vector<8x16xbf16>
    %cst_93 = arith.constant dense<0.000000e+00> : vector<8x48xf32>
    %207 = tpu.matmul %206, %38, %cst_93 {dimension_numbers = #tpu.dot_dimension_numbers<[1], [0], [0], [1], [0, 0, 1, 1], [], []>} : vector<8x16xbf16>, vector<16x48xbf16>, vector<8x48xf32> -> vector<8x48xf32>
    %208 = vector.extract_strided_slice %200 {offsets = [0, 0], sizes = [8, 16], strides = [1, 1]} : vector<8x48xf32> to vector<8x16xf32>
    %209 = vector.extract_strided_slice %205 {offsets = [0, 0], sizes = [8, 16], strides = [1, 1]} : vector<8x48xf32> to vector<8x16xf32>
    %210 = arith.addf %208, %209 : vector<8x16xf32>
    %211 = arith.negf %210 : vector<8x16xf32>
    %212 = math.exp %211 : vector<8x16xf32>
    %cst_94 = arith.constant 1.000000e+00 : f32
    %213 = vector.broadcast %cst_94 : f32 to vector<8x16xf32>
    %214 = arith.addf %213, %212 : vector<8x16xf32>
    %215 = arith.divf %213, %214 : vector<8x16xf32>
    %216 = vector.extract_strided_slice %200 {offsets = [0, 16], sizes = [8, 16], strides = [1, 1]} : vector<8x48xf32> to vector<8x16xf32>
    %217 = vector.extract_strided_slice %205 {offsets = [0, 16], sizes = [8, 16], strides = [1, 1]} : vector<8x48xf32> to vector<8x16xf32>
    %218 = arith.addf %216, %217 : vector<8x16xf32>
    %219 = arith.negf %218 : vector<8x16xf32>
    %220 = math.exp %219 : vector<8x16xf32>
    %cst_95 = arith.constant 1.000000e+00 : f32
    %221 = vector.broadcast %cst_95 : f32 to vector<8x16xf32>
    %222 = arith.addf %221, %220 : vector<8x16xf32>
    %223 = arith.divf %221, %222 : vector<8x16xf32>
    %224 = vector.extract_strided_slice %200 {offsets = [0, 32], sizes = [8, 16], strides = [1, 1]} : vector<8x48xf32> to vector<8x16xf32>
    %225 = vector.extract_strided_slice %205 {offsets = [0, 32], sizes = [8, 16], strides = [1, 1]} : vector<8x48xf32> to vector<8x16xf32>
    %226 = vector.broadcast %40 : vector<1x16xf32> to vector<8x16xf32>
    %227 = arith.addf %225, %226 : vector<8x16xf32>
    %228 = arith.mulf %215, %227 : vector<8x16xf32>
    %229 = arith.addf %224, %228 : vector<8x16xf32>
    %230 = math.tanh %229 : vector<8x16xf32>
    %231 = arith.subf %160, %230 : vector<8x16xf32>
    %232 = arith.mulf %223, %231 : vector<8x16xf32>
    %233 = arith.addf %230, %232 : vector<8x16xf32>
    %234 = vector.extract_strided_slice %203 {offsets = [0, 0], sizes = [8, 16], strides = [1, 1]} : vector<8x48xf32> to vector<8x16xf32>
    %235 = vector.extract_strided_slice %207 {offsets = [0, 0], sizes = [8, 16], strides = [1, 1]} : vector<8x48xf32> to vector<8x16xf32>
    %236 = arith.addf %234, %235 : vector<8x16xf32>
    %237 = arith.negf %236 : vector<8x16xf32>
    %238 = math.exp %237 : vector<8x16xf32>
    %cst_96 = arith.constant 1.000000e+00 : f32
    %239 = vector.broadcast %cst_96 : f32 to vector<8x16xf32>
    %240 = arith.addf %239, %238 : vector<8x16xf32>
    %241 = arith.divf %239, %240 : vector<8x16xf32>
    %242 = vector.extract_strided_slice %203 {offsets = [0, 16], sizes = [8, 16], strides = [1, 1]} : vector<8x48xf32> to vector<8x16xf32>
    %243 = vector.extract_strided_slice %207 {offsets = [0, 16], sizes = [8, 16], strides = [1, 1]} : vector<8x48xf32> to vector<8x16xf32>
    %244 = arith.addf %242, %243 : vector<8x16xf32>
    %245 = arith.negf %244 : vector<8x16xf32>
    %246 = math.exp %245 : vector<8x16xf32>
    %cst_97 = arith.constant 1.000000e+00 : f32
    %247 = vector.broadcast %cst_97 : f32 to vector<8x16xf32>
    %248 = arith.addf %247, %246 : vector<8x16xf32>
    %249 = arith.divf %247, %248 : vector<8x16xf32>
    %250 = vector.extract_strided_slice %203 {offsets = [0, 32], sizes = [8, 16], strides = [1, 1]} : vector<8x48xf32> to vector<8x16xf32>
    %251 = vector.extract_strided_slice %207 {offsets = [0, 32], sizes = [8, 16], strides = [1, 1]} : vector<8x48xf32> to vector<8x16xf32>
    %252 = vector.broadcast %42 : vector<1x16xf32> to vector<8x16xf32>
    %253 = arith.addf %251, %252 : vector<8x16xf32>
    %254 = arith.mulf %241, %253 : vector<8x16xf32>
    %255 = arith.addf %250, %254 : vector<8x16xf32>
    %256 = math.tanh %255 : vector<8x16xf32>
    %257 = arith.subf %186, %256 : vector<8x16xf32>
    %258 = arith.mulf %249, %257 : vector<8x16xf32>
    %259 = arith.addf %256, %258 : vector<8x16xf32>
    %260 = arith.truncf %233 : vector<8x16xf32> to vector<8x16xbf16>
    %261 = arith.index_cast %195 : i32 to index
    %c0_98 = arith.constant 0 : index
    %262 = vector.load %arg9[%261, %c0_98] : memref<32x16xbf16, #tpu.memory_space<vmem>>, vector<8x16xbf16>
    tpu.vector_store %arg9[%261, %c0_98], %260 {strides = array<i32>} : memref<32x16xbf16, #tpu.memory_space<vmem>>, vector<8x16xbf16>,
    %263 = arith.truncf %259 : vector<8x16xf32> to vector<8x16xbf16>
    %264 = arith.index_cast %197 : i32 to index
    %c0_99 = arith.constant 0 : index
    %265 = vector.load %arg10[%264, %c0_99] : memref<32x16xbf16, #tpu.memory_space<vmem>>, vector<8x16xbf16>
    tpu.vector_store %arg10[%264, %c0_99], %263 {strides = array<i32>} : memref<32x16xbf16, #tpu.memory_space<vmem>>, vector<8x16xbf16>,
    %c3_i32_100 = arith.constant 3 : i32
    %c3_i32_101 = arith.constant 3 : i32
    %266 = arith.subi %c3_i32_101, %c3_i32_100 : i32
    %c8_i32_102 = arith.constant 8 : i32
    %267 = arith.muli %c3_i32_100, %c8_i32_102 : i32
    %268 = tpu.assume_multiple %267, 8 : i32
    %c8_i32_103 = arith.constant 8 : i32
    %269 = arith.muli %266, %c8_i32_103 : i32
    %270 = tpu.assume_multiple %269, 8 : i32
    %c0_104 = arith.constant 0 : index
    %271 = arith.index_cast %268 : i32 to index
    %c0_105 = arith.constant 0 : index
    %272 = vector.load %arg11[%c0_104, %271, %c0_105] : memref<2x32x48xf32, #tpu.memory_space<vmem>>, vector<1x8x48xf32>
    %273 = vector.shape_cast %272 : vector<1x8x48xf32> to vector<8x48xf32>
    %c1_106 = arith.constant 1 : index
    %274 = arith.index_cast %270 : i32 to index
    %c0_107 = arith.constant 0 : index
    %275 = vector.load %arg11[%c1_106, %274, %c0_107] : memref<2x32x48xf32, #tpu.memory_space<vmem>>, vector<1x8x48xf32>
    %276 = vector.shape_cast %275 : vector<1x8x48xf32> to vector<8x48xf32>
    %277 = arith.truncf %233 : vector<8x16xf32> to vector<8x16xbf16>
    %cst_108 = arith.constant dense<0.000000e+00> : vector<8x48xf32>
    %278 = tpu.matmul %277, %36, %cst_108 {dimension_numbers = #tpu.dot_dimension_numbers<[1], [0], [0], [1], [0, 0, 1, 1], [], []>} : vector<8x16xbf16>, vector<16x48xbf16>, vector<8x48xf32> -> vector<8x48xf32>
    %279 = arith.truncf %259 : vector<8x16xf32> to vector<8x16xbf16>
    %cst_109 = arith.constant dense<0.000000e+00> : vector<8x48xf32>
    %280 = tpu.matmul %279, %38, %cst_109 {dimension_numbers = #tpu.dot_dimension_numbers<[1], [0], [0], [1], [0, 0, 1, 1], [], []>} : vector<8x16xbf16>, vector<16x48xbf16>, vector<8x48xf32> -> vector<8x48xf32>
    %281 = vector.extract_strided_slice %273 {offsets = [0, 0], sizes = [8, 16], strides = [1, 1]} : vector<8x48xf32> to vector<8x16xf32>
    %282 = vector.extract_strided_slice %278 {offsets = [0, 0], sizes = [8, 16], strides = [1, 1]} : vector<8x48xf32> to vector<8x16xf32>
    %283 = arith.addf %281, %282 : vector<8x16xf32>
    %284 = arith.negf %283 : vector<8x16xf32>
    %285 = math.exp %284 : vector<8x16xf32>
    %cst_110 = arith.constant 1.000000e+00 : f32
    %286 = vector.broadcast %cst_110 : f32 to vector<8x16xf32>
    %287 = arith.addf %286, %285 : vector<8x16xf32>
    %288 = arith.divf %286, %287 : vector<8x16xf32>
    %289 = vector.extract_strided_slice %273 {offsets = [0, 16], sizes = [8, 16], strides = [1, 1]} : vector<8x48xf32> to vector<8x16xf32>
    %290 = vector.extract_strided_slice %278 {offsets = [0, 16], sizes = [8, 16], strides = [1, 1]} : vector<8x48xf32> to vector<8x16xf32>
    %291 = arith.addf %289, %290 : vector<8x16xf32>
    %292 = arith.negf %291 : vector<8x16xf32>
    %293 = math.exp %292 : vector<8x16xf32>
    %cst_111 = arith.constant 1.000000e+00 : f32
    %294 = vector.broadcast %cst_111 : f32 to vector<8x16xf32>
    %295 = arith.addf %294, %293 : vector<8x16xf32>
    %296 = arith.divf %294, %295 : vector<8x16xf32>
    %297 = vector.extract_strided_slice %273 {offsets = [0, 32], sizes = [8, 16], strides = [1, 1]} : vector<8x48xf32> to vector<8x16xf32>
    %298 = vector.extract_strided_slice %278 {offsets = [0, 32], sizes = [8, 16], strides = [1, 1]} : vector<8x48xf32> to vector<8x16xf32>
    %299 = vector.broadcast %40 : vector<1x16xf32> to vector<8x16xf32>
    %300 = arith.addf %298, %299 : vector<8x16xf32>
    %301 = arith.mulf %288, %300 : vector<8x16xf32>
    %302 = arith.addf %297, %301 : vector<8x16xf32>
    %303 = math.tanh %302 : vector<8x16xf32>
    %304 = arith.subf %233, %303 : vector<8x16xf32>
    %305 = arith.mulf %296, %304 : vector<8x16xf32>
    %306 = arith.addf %303, %305 : vector<8x16xf32>
    %307 = vector.extract_strided_slice %276 {offsets = [0, 0], sizes = [8, 16], strides = [1, 1]} : vector<8x48xf32> to vector<8x16xf32>
    %308 = vector.extract_strided_slice %280 {offsets = [0, 0], sizes = [8, 16], strides = [1, 1]} : vector<8x48xf32> to vector<8x16xf32>
    %309 = arith.addf %307, %308 : vector<8x16xf32>
    %310 = arith.negf %309 : vector<8x16xf32>
    %311 = math.exp %310 : vector<8x16xf32>
    %cst_112 = arith.constant 1.000000e+00 : f32
    %312 = vector.broadcast %cst_112 : f32 to vector<8x16xf32>
    %313 = arith.addf %312, %311 : vector<8x16xf32>
    %314 = arith.divf %312, %313 : vector<8x16xf32>
    %315 = vector.extract_strided_slice %276 {offsets = [0, 16], sizes = [8, 16], strides = [1, 1]} : vector<8x48xf32> to vector<8x16xf32>
    %316 = vector.extract_strided_slice %280 {offsets = [0, 16], sizes = [8, 16], strides = [1, 1]} : vector<8x48xf32> to vector<8x16xf32>
    %317 = arith.addf %315, %316 : vector<8x16xf32>
    %318 = arith.negf %317 : vector<8x16xf32>
    %319 = math.exp %318 : vector<8x16xf32>
    %cst_113 = arith.constant 1.000000e+00 : f32
    %320 = vector.broadcast %cst_113 : f32 to vector<8x16xf32>
    %321 = arith.addf %320, %319 : vector<8x16xf32>
    %322 = arith.divf %320, %321 : vector<8x16xf32>
    %323 = vector.extract_strided_slice %276 {offsets = [0, 32], sizes = [8, 16], strides = [1, 1]} : vector<8x48xf32> to vector<8x16xf32>
    %324 = vector.extract_strided_slice %280 {offsets = [0, 32], sizes = [8, 16], strides = [1, 1]} : vector<8x48xf32> to vector<8x16xf32>
    %325 = vector.broadcast %42 : vector<1x16xf32> to vector<8x16xf32>
    %326 = arith.addf %324, %325 : vector<8x16xf32>
    %327 = arith.mulf %314, %326 : vector<8x16xf32>
    %328 = arith.addf %323, %327 : vector<8x16xf32>
    %329 = math.tanh %328 : vector<8x16xf32>
    %330 = arith.subf %259, %329 : vector<8x16xf32>
    %331 = arith.mulf %322, %330 : vector<8x16xf32>
    %332 = arith.addf %329, %331 : vector<8x16xf32>
    %333 = arith.truncf %306 : vector<8x16xf32> to vector<8x16xbf16>
    %334 = arith.index_cast %268 : i32 to index
    %c0_114 = arith.constant 0 : index
    %335 = vector.load %arg9[%334, %c0_114] : memref<32x16xbf16, #tpu.memory_space<vmem>>, vector<8x16xbf16>
    tpu.vector_store %arg9[%334, %c0_114], %333 {strides = array<i32>} : memref<32x16xbf16, #tpu.memory_space<vmem>>, vector<8x16xbf16>,
    %336 = arith.truncf %332 : vector<8x16xf32> to vector<8x16xbf16>
    %337 = arith.index_cast %270 : i32 to index
    %c0_115 = arith.constant 0 : index
    %338 = vector.load %arg10[%337, %c0_115] : memref<32x16xbf16, #tpu.memory_space<vmem>>, vector<8x16xbf16>
    tpu.vector_store %arg10[%337, %c0_115], %336 {strides = array<i32>} : memref<32x16xbf16, #tpu.memory_space<vmem>>, vector<8x16xbf16>,
    %c4_i32 = arith.constant 4 : i32
    %c0_116 = arith.constant 0 : index
    %c0_117 = arith.constant 0 : index
    %c0_118 = arith.constant 0 : index
    %339 = vector.load %arg12[%c0_116, %c0_117, %c0_118] : memref<2x8x16xf32, #tpu.memory_space<vmem>>, vector<1x8x16xf32>
    %340 = vector.shape_cast %339 : vector<1x8x16xf32> to vector<8x16xf32>
    %341 = vector.shape_cast %306 : vector<8x16xf32> to vector<1x8x16xf32>
    tpu.vector_store %arg12[%c0_116, %c0_117, %c0_118], %341 {strides = array<i32>} : memref<2x8x16xf32, #tpu.memory_space<vmem>>, vector<1x8x16xf32>,
    %c1_119 = arith.constant 1 : index
    %c0_120 = arith.constant 0 : index
    %c0_121 = arith.constant 0 : index
    %342 = vector.load %arg12[%c1_119, %c0_120, %c0_121] : memref<2x8x16xf32, #tpu.memory_space<vmem>>, vector<1x8x16xf32>
    %343 = vector.shape_cast %342 : vector<1x8x16xf32> to vector<8x16xf32>
    %344 = vector.shape_cast %332 : vector<8x16xf32> to vector<1x8x16xf32>
    tpu.vector_store %arg12[%c1_119, %c0_120, %c0_121], %344 {strides = array<i32>} : memref<2x8x16xf32, #tpu.memory_space<vmem>>, vector<1x8x16xf32>,
    return
  }
  func.func @transform_0(%arg0: i32) -> (i32, i32) {
    %c0_i32 = arith.constant 0 : i32
    %c0_i32_0 = arith.constant 0 : i32
    return %arg0, %c0_i32 : i32, i32
  }
  func.func @transform_1(%arg0: i32) -> (i32, i32) {
    %c0_i32 = arith.constant 0 : i32
    %c0_i32_0 = arith.constant 0 : i32
    return %arg0, %c0_i32 : i32, i32
  }
  func.func @transform_2(%arg0: i32) -> (i32, i32) {
    %c0_i32 = arith.constant 0 : i32
    %0 = arith.subi %c0_i32, %arg0 : i32
    %c0_i32_0 = arith.constant 0 : i32
    %c0_i32_1 = arith.constant 0 : i32
    return %0, %c0_i32_0 : i32, i32
  }
  func.func @transform_3(%arg0: i32) -> (i32, i32) {
    %c0_i32 = arith.constant 0 : i32
    %0 = arith.subi %c0_i32, %arg0 : i32
    %c0_i32_0 = arith.constant 0 : i32
    %c0_i32_1 = arith.constant 0 : i32
    return %0, %c0_i32_0 : i32, i32
  }
  func.func @transform_4(%arg0: i32) -> (i32, i32, i32, i32) {
    %c0_i32 = arith.constant 0 : i32
    %c0_i32_0 = arith.constant 0 : i32
    %c0_i32_1 = arith.constant 0 : i32
    %c0_i32_2 = arith.constant 0 : i32
    %c0_i32_3 = arith.constant 0 : i32
    return %c0_i32, %c0_i32_0, %c0_i32_1, %c0_i32_2 : i32, i32, i32, i32
  }
  func.func @transform_5(%arg0: i32) -> (i32, i32, i32) {
    %c0_i32 = arith.constant 0 : i32
    %c0_i32_0 = arith.constant 0 : i32
    %c0_i32_1 = arith.constant 0 : i32
    %c0_i32_2 = arith.constant 0 : i32
    return %c0_i32, %c0_i32_0, %c0_i32_1 : i32, i32, i32
  }
  func.func @transform_6(%arg0: i32) -> (i32, i32, i32) {
    %c0_i32 = arith.constant 0 : i32
    %c0_i32_0 = arith.constant 0 : i32
    %c0_i32_1 = arith.constant 0 : i32
    %c0_i32_2 = arith.constant 0 : i32
    return %c0_i32, %c0_i32_0, %c0_i32_1 : i32, i32, i32
  }
  func.func @transform_7(%arg0: i32) -> (i32, i32, i32) {
    %c0_i32 = arith.constant 0 : i32
    %c0_i32_0 = arith.constant 0 : i32
    %c0_i32_1 = arith.constant 0 : i32
    %c0_i32_2 = arith.constant 0 : i32
    return %c0_i32, %c0_i32_0, %c0_i32_1 : i32, i32, i32
  }
  func.func @transform_8(%arg0: i32) -> (i32, i32) {
    %c0_i32 = arith.constant 0 : i32
    %c0_i32_0 = arith.constant 0 : i32
    return %arg0, %c0_i32 : i32, i32
  }
  func.func @transform_9(%arg0: i32) -> (i32, i32) {
    %c0_i32 = arith.constant 0 : i32
    %0 = arith.subi %c0_i32, %arg0 : i32
    %c0_i32_0 = arith.constant 0 : i32
    %c0_i32_1 = arith.constant 0 : i32
    return %0, %c0_i32_0 : i32, i32
  }
}

</mosaic_0001>

<llo_original>
// kernel: sub_sampling_encoder_forward.5
$region0: #{sub_sampling_encoder_forward.5}
  #allocation0 [shape = 'u32[]', space=smem, size = 0x4, offset = 0x4, fixed_abs, tag = 'smem constant byte address 0x4 - core index']
  #allocation1 [shape = 'u32[72,128]{1,0:T(1,128)}', space=vmem, size = 0x9000, scoped, tag = 'internal scratch']
  #allocation2 [shape = 'f32[2,32,48]{2,1,0:T(8,128)}', space=vmem, size = 0x8000, scoped, tag = 'scratch operand']
  #allocation3 [shape = 'f32[2,8,16]{2,1,0:T(8,128)}', space=vmem, size = 0x2000, scoped, tag = 'scratch operand']
  %s0 = inlined_call_operand.vmem [shape: bf16[32,16], index: 0, kind: input, shape index: {}, may-alias: {0,2}]
  %s1 = inlined_call_operand.vmem [shape: bf16[32,16], index: 1, kind: input, shape index: {}, may-alias: {1,3}]
  %s2 = inlined_call_operand.vmem [shape: bf16[32,16], index: 2, kind: input, shape index: {}, may-alias: {0,2}]
  %s3 = inlined_call_operand.vmem [shape: bf16[32,16], index: 3, kind: input, shape index: {}, may-alias: {1,3}]
  %s4 = inlined_call_operand.vmem [shape: bf16[2,2,16,48], index: 4, kind: input, shape index: {}]
  %s5 = inlined_call_operand.vmem [shape: f32[2,1,48], index: 5, kind: input, shape index: {}]
  %s6 = inlined_call_operand.vmem [shape: bf16[2,16,48], index: 6, kind: input, shape index: {}]
  %s7 = inlined_call_operand.vmem [shape: f32[2,1,16], index: 7, kind: input, shape index: {}]
  %s8 = inlined_call_operand.vmem [shape: bf16[32,16], index: 8, kind: output, shape index: {0}]
  %s9 = inlined_call_operand.vmem [shape: bf16[32,16], index: 9, kind: output, shape index: {1}]
  %10 = xla_tuple %s8, %s9
  %s11 = sld [smem:[#allocation0]]
  $region54: #{sub_sampling_encoder_forward.5} parent=0
    _
  %s13 = ssub.s32 1, %s11
  %s14 = scalar_select 0, %s13, %s11
  // Predicated region
  $region2: #{sub_sampling_encoder_forward.5} parent=0 // pred_check
    _
  $region3: #{sub_sampling_encoder_forward.5} parent=0 // pred_check_branch
    %16 = sbr.rel (0) target = $region5
  $region4: #{sub_sampling_encoder_forward.5} parent=0 // pred_region
    _
  $region5: #{sub_sampling_encoder_forward.5} parent=0 // pred_fallthru
    _
  // Predicated region
  $region6: #{sub_sampling_encoder_forward.5} parent=0 // pred_check
    _
  $region7: #{sub_sampling_encoder_forward.5} parent=0 // pred_check_branch
    %18 = sbr.rel (0) target = $region9
  $region8: #{sub_sampling_encoder_forward.5} parent=0 // pred_region
    _
  $region9: #{sub_sampling_encoder_forward.5} parent=0 // pred_fallthru
    _
  // Predicated region
  $region10: #{sub_sampling_encoder_forward.5} parent=0 // pred_check
    _
  $region11: #{sub_sampling_encoder_forward.5} parent=0 // pred_check_branch
    %20 = sbr.rel (0) target = $region13
  $region12: #{sub_sampling_encoder_forward.5} parent=0 // pred_region
    %s21 = ssub.s32 0, 0
    %s22 = smul.u32 4, %s21
    %p23 = scmp.lt.s32.totalorder %s22, 3
    %s24 = scalar_select %p23, %s22, 3
    %s25 = smul.addr %s24, 4
    %s26 = scalar_lea.vmem %s2, %s25
    %s27 = ssub.s32 0, 0
    %s28 = smul.u32 4, %s27
  $region13: #{sub_sampling_encoder_forward.5} parent=0 // pred_fallthru
    _
  // Predicated region
  $region14: #{sub_sampling_encoder_forward.5} parent=0 // pred_check
    _
  $region15: #{sub_sampling_encoder_forward.5} parent=0 // pred_check_branch
    %30 = sbr.rel (0) target = $region17
  $region16: #{sub_sampling_encoder_forward.5} parent=0 // pred_region
    %s31 = ssub.s32 0, 0
    %s32 = smul.u32 4, %s31
    %p33 = scmp.lt.s32.totalorder %s32, 3
    %s34 = scalar_select %p33, %s32, 3
    %s35 = smul.addr %s34, 4
    %s36 = scalar_lea.vmem %s3, %s35
    %s37 = ssub.s32 0, 0
    %s38 = smul.u32 4, %s37
  $region17: #{sub_sampling_encoder_forward.5} parent=0 // pred_fallthru
    _
  // Predicated region
  $region18: #{sub_sampling_encoder_forward.5} parent=0 // pred_check
    _
  $region19: #{sub_sampling_encoder_forward.5} parent=0 // pred_check_branch
    %40 = sbr.rel (0) target = $region21
  $region20: #{sub_sampling_encoder_forward.5} parent=0 // pred_region
    _
  $region21: #{sub_sampling_encoder_forward.5} parent=0 // pred_fallthru
    _
  // Predicated region
  $region22: #{sub_sampling_encoder_forward.5} parent=0 // pred_check
    _
  $region23: #{sub_sampling_encoder_forward.5} parent=0 // pred_check_branch
    %42 = sbr.rel (0) target = $region25
  $region24: #{sub_sampling_encoder_forward.5} parent=0 // pred_region
    _
  $region25: #{sub_sampling_encoder_forward.5} parent=0 // pred_fallthru
    _
  // Predicated region
  $region26: #{sub_sampling_encoder_forward.5} parent=0 // pred_check
    _
  $region27: #{sub_sampling_encoder_forward.5} parent=0 // pred_check_branch
    %44 = sbr.rel (0) target = $region29
  $region28: #{sub_sampling_encoder_forward.5} parent=0 // pred_region
    _
  $region29: #{sub_sampling_encoder_forward.5} parent=0 // pred_fallthru
    _
  // Predicated region
  $region30: #{sub_sampling_encoder_forward.5} parent=0 // pred_check
    _
  $region31: #{sub_sampling_encoder_forward.5} parent=0 // pred_check_branch
    %46 = sbr.rel (0) target = $region33
  $region32: #{sub_sampling_encoder_forward.5} parent=0 // pred_region
    _
  $region33: #{sub_sampling_encoder_forward.5} parent=0 // pred_fallthru
    _
  %s47 = ssub.s32 0, 0
  %s48 = smul.u32 4, %s47
  %p49 = scmp.lt.s32.totalorder %s48, 3
  %s50 = scalar_select %p49, %s48, 3
  %s51 = smul.addr %s50, 4
  %s52 = scalar_lea.vmem %s2, %s51
  %s53 = ssub.s32 0, 0
  %s54 = smul.u32 4, %s53
  %p55 = scmp.lt.s32.totalorder %s54, 3
  %s56 = scalar_select %p55, %s54, 3
  %s57 = smul.addr %s56, 4
  %s58 = scalar_lea.vmem %s3, %s57
  %s59 = ssub.s32 0, 0
  %s60 = smul.u32 4, %s59
  %p61 = scmp.lt.s32.totalorder %s60, 3
  %s62 = scalar_select %p61, %s60, 3
  %s63 = smul.addr %s62, 4
  %s64 = scalar_lea.vmem %s9, %s63
  %s65 = ssub.s32 0, 0
  %s66 = smul.u32 4, %s65
  %p67 = scmp.lt.s32.totalorder %s66, 3
  %s68 = scalar_select %p67, %s66, 3
  %s69 = smul.addr %s68, 4
  %s70 = scalar_lea.vmem %s2, %s69
  %s71 = ssub.s32 0, 0
  %s72 = smul.u32 4, %s71
  %s73 = ssub.s32 0, 0
  %s74 = smul.u32 4, %s73
  %p75 = scmp.lt.s32.totalorder %s74, 3
  %s76 = scalar_select %p75, %s74, 3
  %s77 = smul.addr %s76, 4
  %s78 = scalar_lea.vmem %s3, %s77
  %s79 = ssub.s32 0, 0
  %s80 = smul.u32 4, %s79
  %s81 = ssub.s32 0, 0
  %s82 = smul.u32 4, %s81
  %p83 = scmp.lt.s32.totalorder %s82, 3
  %s84 = scalar_select %p83, %s82, 3
  %s85 = smul.addr %s84, 4
  %s86 = scalar_lea.vmem %s9, %s85
  %s87 = ssub.s32 0, 0
  %s88 = smul.u32 4, %s87
  %p90 = scmp.eq.s32.totalorder 0, 0
  // Predicated region
  $region34: #{sub_sampling_encoder_forward.5} parent=0 // pred_check
    %p91 = pneg %p90
  $region35: #{sub_sampling_encoder_forward.5} parent=0 // pred_check_branch
    %93 = sbr.rel (%p91) target = $region37
  $region36: #{sub_sampling_encoder_forward.5} parent=0 // pred_region
    %vm94 = vcmask 130048
    %95 = vst.msk [vmem:[#allocation3] sm:$0xff] %vm94, 0.0
    %96 = vst.msk [vmem:[#allocation3 + $0x8] sm:$0xff] %vm94, 0.0
  $region37: #{sub_sampling_encoder_forward.5} parent=0 // pred_fallthru
    _
  %v97 = vld [vmem:[%s0] sm:$0xf]
  %v98 = vld [vmem:[%s0 + $0x4] sm:$0xf]
  %v99 = vld [vmem:[%s0 + $0x8] sm:$0xf]
  %v100 = vld [vmem:[%s0 + $0xc] sm:$0xf]
  %v101 = vld [vmem:[%s4] sm:$0xf]
  %v102 = vld [vmem:[%s4 + $0x4] sm:$0xf]
  %v103 = vld [vmem:[%s1] sm:$0xf]
  %v104 = vld [vmem:[%s1 + $0x4] sm:$0xf]
  %v105 = vld [vmem:[%s1 + $0x8] sm:$0xf]
  %v106 = vld [vmem:[%s1 + $0xc] sm:$0xf]
  %s107 = scalar_lea.vmem %s4, 8
  %v108 = vld [vmem:[%s107] sm:$0xf]
  %v109 = vld [vmem:[%s107 + $0x4] sm:$0xf]
  %v114 = vunpack.c.l.b16 %v103
  %v115 = vunpack.c.l.b16 %v104
  %v116 = vunpack.c.l.b16 %v105
  %v117 = vunpack.c.l.b16 %v106
  %v118 = vpack.c.b16 %v115, %v114
  %v119 = vpack.c.b16 %v117, %v116
  %v122 = vunpack.c.l.b16 %v108
  %v123 = vunpack.c.l.b16 %v109
  %v124 = vpack.c.b16 %v123, %v122
  %vm126 = vcmask 130048
  %v128 = vsel %vm126, %v118, 0
  %v131 = vsel %vm126, %v119, 0
  %133 = vmatpush.bf16.msra.mxu0 0
  %134 = vmatpush.bf16.msra.mxu0 0
  %135 = vmatpush.bf16.msra.mxu0 0
  %136 = vmatpush.bf16.msra.mxu0 0
  %137 = vmatpush.bf16.msra.mxu0 0
  %138 = vmatpush.bf16.msra.mxu0 0
  %139 = vmatpush.bf16.msra.mxu0 0
  %140 = vmatpush.bf16.msra.mxu0 %v124
  %141 = vmatmul.bf16.gmra.mxu0 %v128
  %v142 = vpop.f32.mrf.mxu0
  %v143 = vadd.f32 0.0, %v142
  %v144 = vpop.f32.mrf.mxu0
  %v145 = vadd.f32 0.0, %v144
  %146 = vmatmul.bf16.gmra.mxu0 %v131
  %v147 = vpop.f32.mrf.mxu0
  %v148 = vadd.f32 0.0, %v147
  %v149 = vpop.f32.mrf.mxu0
  %v150 = vadd.f32 0.0, %v149
  %151 = vdwg.mxu0
  %v156 = vunpack.c.l.b16 %v97
  %v157 = vunpack.c.l.b16 %v98
  %v158 = vunpack.c.l.b16 %v99
  %v159 = vunpack.c.l.b16 %v100
  %v160 = vpack.c.b16 %v157, %v156
  %v161 = vpack.c.b16 %v159, %v158
  %v164 = vunpack.c.l.b16 %v101
  %v165 = vunpack.c.l.b16 %v102
  %v166 = vpack.c.b16 %v165, %v164
  %v169 = vsel %vm126, %v160, 0
  %v172 = vsel %vm126, %v161, 0
  %174 = vmatpush.bf16.msra.mxu0 0
  %175 = vmatpush.bf16.msra.mxu0 0
  %176 = vmatpush.bf16.msra.mxu0 0
  %177 = vmatpush.bf16.msra.mxu0 0
  %178 = vmatpush.bf16.msra.mxu0 0
  %179 = vmatpush.bf16.msra.mxu0 0
  %180 = vmatpush.bf16.msra.mxu0 0
  %181 = vmatpush.bf16.msra.mxu0 %v166
  %182 = vmatmul.bf16.gmra.mxu0 %v169
  %v183 = vpop.f32.mrf.mxu0
  %v184 = vadd.f32 %v143, %v183
  %v185 = vpop.f32.mrf.mxu0
  %v186 = vadd.f32 %v145, %v185
  %187 = vmatmul.bf16.gmra.mxu0 %v172
  %v188 = vpop.f32.mrf.mxu0
  %v189 = vadd.f32 %v148, %v188
  %v190 = vpop.f32.mrf.mxu0
  %v191 = vadd.f32 %v150, %v190
  %192 = vdwg.mxu0
  %v193 = vld [vmem:[%s5] sm:$0x1]
  %v195 = vperm.slane %v193, 0
  %v197 = vadd.f32 %v184, %v195
  %v198 = vadd.f32 %v186, %v195
  %v199 = vadd.f32 %v189, %v195
  %v200 = vadd.f32 %v191, %v195
  %vm201 = vcmask 392192
  %202 = vst.msk [vmem:[#allocation2] sm:$0xff] %vm201, %v197
  %203 = vst.msk [vmem:[#allocation2 + $0x8] sm:$0xff] %vm201, %v198
  %204 = vst.msk [vmem:[#allocation2 + $0x10] sm:$0xff] %vm201, %v199
  %205 = vst.msk [vmem:[#allocation2 + $0x18] sm:$0xff] %vm201, %v200
  %v206 = vld [vmem:[%s70] sm:$0xf]
  %v207 = vld [vmem:[%s70 + $0x4] sm:$0xf]
  %v208 = vld [vmem:[%s70 + $0x8] sm:$0xf]
  %v209 = vld [vmem:[%s70 + $0xc] sm:$0xf]
  %s210 = scalar_lea.vmem %s4, 16
  %v211 = vld [vmem:[%s210] sm:$0xf]
  %v212 = vld [vmem:[%s210 + $0x4] sm:$0xf]
  %v213 = vld [vmem:[%s78] sm:$0xf]
  %v214 = vld [vmem:[%s78 + $0x4] sm:$0xf]
  %v215 = vld [vmem:[%s78 + $0x8] sm:$0xf]
  %v216 = vld [vmem:[%s78 + $0xc] sm:$0xf]
  %s217 = scalar_lea.vmem %s4, 24
  %v218 = vld [vmem:[%s217] sm:$0xf]
  %v219 = vld [vmem:[%s217 + $0x4] sm:$0xf]
  %v224 = vunpack.c.l.b16 %v213
  %v225 = vunpack.c.l.b16 %v214
  %v226 = vunpack.c.l.b16 %v215
  %v227 = vunpack.c.l.b16 %v216
  %v228 = vpack.c.b16 %v225, %v224
  %v229 = vpack.c.b16 %v227, %v226
  %v232 = vunpack.c.l.b16 %v218
  %v233 = vunpack.c.l.b16 %v219
  %v234 = vpack.c.b16 %v233, %v232
  %v237 = vsel %vm126, %v228, 0
  %v240 = vsel %vm126, %v229, 0
  %242 = vmatpush.bf16.msra.mxu0 0
  %243 = vmatpush.bf16.msra.mxu0 0
  %244 = vmatpush.bf16.msra.mxu0 0
  %245 = vmatpush.bf16.msra.mxu0 0
  %246 = vmatpush.bf16.msra.mxu0 0
  %247 = vmatpush.bf16.msra.mxu0 0
  %248 = vmatpush.bf16.msra.mxu0 0
  %249 = vmatpush.bf16.msra.mxu0 %v234
  %250 = vmatmul.bf16.gmra.mxu0 %v237
  %v251 = vpop.f32.mrf.mxu0
  %v252 = vadd.f32 0.0, %v251
  %v253 = vpop.f32.mrf.mxu0
  %v254 = vadd.f32 0.0, %v253
  %255 = vmatmul.bf16.gmra.mxu0 %v240
  %v256 = vpop.f32.mrf.mxu0
  %v257 = vadd.f32 0.0, %v256
  %v258 = vpop.f32.mrf.mxu0
  %v259 = vadd.f32 0.0, %v258
  %260 = vdwg.mxu0
  %v265 = vunpack.c.l.b16 %v206
  %v266 = vunpack.c.l.b16 %v207
  %v267 = vunpack.c.l.b16 %v208
  %v268 = vunpack.c.l.b16 %v209
  %v269 = vpack.c.b16 %v266, %v265
  %v270 = vpack.c.b16 %v268, %v267
  %v273 = vunpack.c.l.b16 %v211
  %v274 = vunpack.c.l.b16 %v212
  %v275 = vpack.c.b16 %v274, %v273
  %v278 = vsel %vm126, %v269, 0
  %v281 = vsel %vm126, %v270, 0
  %283 = vmatpush.bf16.msra.mxu0 0
  %284 = vmatpush.bf16.msra.mxu0 0
  %285 = vmatpush.bf16.msra.mxu0 0
  %286 = vmatpush.bf16.msra.mxu0 0
  %287 = vmatpush.bf16.msra.mxu0 0
  %288 = vmatpush.bf16.msra.mxu0 0
  %289 = vmatpush.bf16.msra.mxu0 0
  %290 = vmatpush.bf16.msra.mxu0 %v275
  %291 = vmatmul.bf16.gmra.mxu0 %v278
  %v292 = vpop.f32.mrf.mxu0
  %v293 = vadd.f32 %v252, %v292
  %v294 = vpop.f32.mrf.mxu0
  %v295 = vadd.f32 %v254, %v294
  %296 = vmatmul.bf16.gmra.mxu0 %v281
  %v297 = vpop.f32.mrf.mxu0
  %v298 = vadd.f32 %v257, %v297
  %v299 = vpop.f32.mrf.mxu0
  %v300 = vadd.f32 %v259, %v299
  %301 = vdwg.mxu0
  %s302 = scalar_lea.vmem %s5, 1
  %v303 = vld [vmem:[%s302] sm:$0x1]
  %v305 = vperm.slane %v303, 0
  %v307 = vadd.f32 %v293, %v305
  %v308 = vadd.f32 %v295, %v305
  %v309 = vadd.f32 %v298, %v305
  %v310 = vadd.f32 %v300, %v305
  %s311 = scalar_lea.vmem [#allocation2], 32
  %312 = vst.msk [vmem:[%s311] sm:$0xff] %vm201, %v307
  %313 = vst.msk [vmem:[%s311 + $0x8] sm:$0xff] %vm201, %v308
  %314 = vst.msk [vmem:[%s311 + $0x10] sm:$0xff] %vm201, %v309
  %315 = vst.msk [vmem:[%s311 + $0x18] sm:$0xff] %vm201, %v310
  %v316 = vld [vmem:[%s6] sm:$0xf]
  %v317 = vld [vmem:[%s6 + $0x4] sm:$0xf]
  %s318 = scalar_lea.vmem %s6, 8
  %v319 = vld [vmem:[%s318] sm:$0xf]
  %v320 = vld [vmem:[%s318 + $0x4] sm:$0xf]
  %v321 = vld [vmem:[%s7] sm:$0x1]
  %s322 = scalar_lea.vmem %s7, 1
  %v323 = vld [vmem:[%s322] sm:$0x1]
  %v324 = vld [vmem:[#allocation3] sm:$0xff]
  %s325 = scalar_lea.vmem [#allocation3], 8
  %v326 = vld [vmem:[%s325] sm:$0xff]
  %v327 = vld [vmem:[#allocation2] sm:$0xff]
  %s328 = sadd.s32 24, 32
  %s329 = scalar_lea.vmem [#allocation2], %s328
  %v330 = vld [vmem:[%s329] sm:$0xff]
  %v331 = vpack.c.bf16 %v324, %v324
  %v334 = vunpack.c.l.b16 %v316
  %v335 = vunpack.c.l.b16 %v317
  %v336 = vpack.c.b16 %v335, %v334
  %v339 = vsel %vm126, %v331, 0
  %341 = vmatpush.bf16.msra.mxu0 0
  %342 = vmatpush.bf16.msra.mxu0 0
  %343 = vmatpush.bf16.msra.mxu0 0
  %344 = vmatpush.bf16.msra.mxu0 0
  %345 = vmatpush.bf16.msra.mxu0 0
  %346 = vmatpush.bf16.msra.mxu0 0
  %347 = vmatpush.bf16.msra.mxu0 0
  %348 = vmatpush.bf16.msra.mxu0 %v336
  %349 = vmatmul.bf16.gmra.mxu0 %v339
  %v350 = vpop.f32.mrf.mxu0
  %v351 = vadd.f32 0.0, %v350
  %v352 = vpop.f32.mrf.mxu0
  %353 = vdwg.mxu0
  %v354 = vpack.c.bf16 %v326, %v326
  %v357 = vunpack.c.l.b16 %v319
  %v358 = vunpack.c.l.b16 %v320
  %v359 = vpack.c.b16 %v358, %v357
  %v362 = vsel %vm126, %v354, 0
  %364 = vmatpush.bf16.msra.mxu0 0
  %365 = vmatpush.bf16.msra.mxu0 0
  %366 = vmatpush.bf16.msra.mxu0 0
  %367 = vmatpush.bf16.msra.mxu0 0
  %368 = vmatpush.bf16.msra.mxu0 0
  %369 = vmatpush.bf16.msra.mxu0 0
  %370 = vmatpush.bf16.msra.mxu0 0
  %371 = vmatpush.bf16.msra.mxu0 %v359
  %372 = vmatmul.bf16.gmra.mxu0 %v362
  %v373 = vpop.f32.mrf.mxu0
  %v374 = vadd.f32 0.0, %v373
  %v375 = vpop.f32.mrf.mxu0
  %376 = vdwg.mxu0
  %v377 = vadd.f32 %v327, %v351
  %v378 = vxor.u32 %v377, 2147483648
  %v379 = vmul.f32 %v378, 1.442695
  %v380 = vpow.pop %v379
  %v381 = vadd.f32 %v380, 1.0
  %v382 = vrcp.pop %v381
  %v383 = vmul.f32 %v381, %v382
  %v384 = vsub.f32 1.0, %v383
  %v385 = vmul.f32 %v382, %v384
  %v386 = vadd.f32 %v382, %v385
  %vm387 = vweird.f32 %v381
  %vm388 = vweird.f32 %v382
  %vm389 = vmor %vm387, %vm388
  %v390 = vsel %vm389, %v382, %v386
  %v391 = vand.u32 2147483647, %v381
  %vm392 = vcmp.eq.f32.partialorder %v391, 8.507059e+37
  %v393 = vand.u32 %v381, 2147483648
  %v394 = vor.u32 1.1754944e-38, %v393
  %v395 = vsel %vm392, %v394, %v390
  %v396 = vmul.f32 1.0, %v395
  %v398 = vperm.slane %v321, 0
  %399 = vrot.lane.b32.xlu0 %v398, 32
  %v400 = vpop.permute.xlu0 %399
  %v402 = vadd.f32 %v351, %v400
  %404 = vrot.lane.b32.xlu0 %v402, 96
  %v405 = vpop.permute.xlu0 %404
  %v407 = vmul.f32 %v396, %v405
  %409 = vrot.lane.b32.xlu0 %v407, 32
  %v410 = vpop.permute.xlu0 %409
  %v412 = vadd.f32 %v327, %v410
  %v413 = vtanh.pop %v412
  %415 = vrot.lane.b32.xlu0 %v413, 96
  %v416 = vpop.permute.xlu0 %415
  %v418 = vsub.f32 %v324, %v416
  %420 = vrot.lane.b32.xlu0 %v418, 16
  %v421 = vpop.permute.xlu0 %420
  %v423 = vmul.f32 %v396, %v421
  %425 = vrot.lane.b32.xlu0 %v423, 16
  %v426 = vpop.permute.xlu0 %425
  %v428 = vadd.f32 %v413, %v426
  %v429 = vadd.f32 %v330, %v374
  %v430 = vxor.u32 %v429, 2147483648
  %v431 = vmul.f32 %v430, 1.442695
  %v432 = vpow.pop %v431
  %v433 = vadd.f32 %v432, 1.0
  %v434 = vrcp.pop %v433
  %v435 = vmul.f32 %v433, %v434
  %v436 = vsub.f32 1.0, %v435
  %v437 = vmul.f32 %v434, %v436
  %v438 = vadd.f32 %v434, %v437
  %vm439 = vweird.f32 %v433
  %vm440 = vweird.f32 %v434
  %vm441 = vmor %vm439, %vm440
  %v442 = vsel %vm441, %v434, %v438
  %v443 = vand.u32 2147483647, %v433
  %vm444 = vcmp.eq.f32.partialorder %v443, 8.507059e+37
  %v445 = vand.u32 %v433, 2147483648
  %v446 = vor.u32 1.1754944e-38, %v445
  %v447 = vsel %vm444, %v446, %v442
  %v448 = vmul.f32 1.0, %v447
  %v450 = vperm.slane %v323, 0
  %451 = vrot.lane.b32.xlu0 %v450, 32
  %v452 = vpop.permute.xlu0 %451
  %v454 = vadd.f32 %v374, %v452
  %456 = vrot.lane.b32.xlu0 %v454, 96
  %v457 = vpop.permute.xlu0 %456
  %v459 = vmul.f32 %v448, %v457
  %461 = vrot.lane.b32.xlu0 %v459, 32
  %v462 = vpop.permute.xlu0 %461
  %v464 = vadd.f32 %v330, %v462
  %v465 = vtanh.pop %v464
  %467 = vrot.lane.b32.xlu0 %v465, 96
  %v468 = vpop.permute.xlu0 %467
  %v470 = vsub.f32 %v326, %v468
  %472 = vrot.lane.b32.xlu0 %v470, 16
  %v473 = vpop.permute.xlu0 %472
  %v475 = vmul.f32 %v448, %v473
  %477 = vrot.lane.b32.xlu0 %v475, 16
  %v478 = vpop.permute.xlu0 %477
  %v480 = vadd.f32 %v465, %v478
  %v481 = vpack.c.bf16 %v428, %v428
  %483 = vrot.lane.b32.xlu0 %v481, 96
  %v484 = vpop.permute.xlu0 %483
  %vm486 = vcmask 125952
  %487 = vst.msk [vmem:[%s8] sm:$0xf] %vm486, %v484
  %v488 = vpack.c.bf16 %v480, %v480
  %490 = vrot.lane.b32.xlu0 %v488, 96
  %v491 = vpop.permute.xlu0 %490
  %s493 = scalar_lea.vmem %s86, 12
  %494 = vst.msk [vmem:[%s493] sm:$0xf] %vm486, %v491
  %s495 = scalar_lea.vmem [#allocation2], 8
  %v496 = vld [vmem:[%s495] sm:$0xff]
  %s497 = sadd.s32 16, 32
  %s498 = scalar_lea.vmem [#allocation2], %s497
  %v499 = vld [vmem:[%s498] sm:$0xff]
  %v500 = vunpack.c.l.b16 %v481
  %v501 = vpack.c.b16 %v500, %v500
  %502 = vrot.lane.b32.xlu0 %v501, 96
  %v503 = vpop.permute.xlu0 %502
  %v505 = vsel %vm126, %v503, 0
  %507 = vmatpush.bf16.msra.mxu0 0
  %508 = vmatpush.bf16.msra.mxu0 0
  %509 = vmatpush.bf16.msra.mxu0 0
  %510 = vmatpush.bf16.msra.mxu0 0
  %511 = vmatpush.bf16.msra.mxu0 0
  %512 = vmatpush.bf16.msra.mxu0 0
  %513 = vmatpush.bf16.msra.mxu0 0
  %514 = vmatpush.bf16.msra.mxu0 %v336
  %515 = vmatmul.bf16.gmra.mxu0 %v505
  %v516 = vpop.f32.mrf.mxu0
  %v517 = vadd.f32 0.0, %v516
  %v518 = vpop.f32.mrf.mxu0
  %519 = vdwg.mxu0
  %v520 = vunpack.c.l.b16 %v488
  %v521 = vpack.c.b16 %v520, %v520
  %522 = vrot.lane.b32.xlu0 %v521, 96
  %v523 = vpop.permute.xlu0 %522
  %v525 = vsel %vm126, %v523, 0
  %527 = vmatpush.bf16.msra.mxu0 0
  %528 = vmatpush.bf16.msra.mxu0 0
  %529 = vmatpush.bf16.msra.mxu0 0
  %530 = vmatpush.bf16.msra.mxu0 0
  %531 = vmatpush.bf16.msra.mxu0 0
  %532 = vmatpush.bf16.msra.mxu0 0
  %533 = vmatpush.bf16.msra.mxu0 0
  %534 = vmatpush.bf16.msra.mxu0 %v359
  %535 = vmatmul.bf16.gmra.mxu0 %v525
  %v536 = vpop.f32.mrf.mxu0
  %v537 = vadd.f32 0.0, %v536
  %v538 = vpop.f32.mrf.mxu0
  %539 = vdwg.mxu0
  %v540 = vadd.f32 %v496, %v517
  %v541 = vxor.u32 %v540, 2147483648
  %v542 = vmul.f32 %v541, 1.442695
  %v543 = vpow.pop %v542
  %v544 = vadd.f32 %v543, 1.0
  %v545 = vrcp.pop %v544
  %v546 = vmul.f32 %v544, %v545
  %v547 = vsub.f32 1.0, %v546
  %v548 = vmul.f32 %v545, %v547
  %v549 = vadd.f32 %v545, %v548
  %vm550 = vweird.f32 %v544
  %vm551 = vweird.f32 %v545
  %vm552 = vmor %vm550, %vm551
  %v553 = vsel %vm552, %v545, %v549
  %v554 = vand.u32 2147483647, %v544
  %vm555 = vcmp.eq.f32.partialorder %v554, 8.507059e+37
  %v556 = vand.u32 %v544, 2147483648
  %v557 = vor.u32 1.1754944e-38, %v556
  %v558 = vsel %vm555, %v557, %v553
  %v559 = vmul.f32 1.0, %v558
  %v560 = vadd.f32 %v517, %v400
  %562 = vrot.lane.b32.xlu0 %v560, 96
  %v563 = vpop.permute.xlu0 %562
  %v565 = vmul.f32 %v559, %v563
  %567 = vrot.lane.b32.xlu0 %v565, 32
  %v568 = vpop.permute.xlu0 %567
  %v570 = vadd.f32 %v496, %v568
  %v571 = vtanh.pop %v570
  %v572 = vsub.f32 %v428, %v571
  %574 = vrot.lane.b32.xlu0 %v572, 112
  %v575 = vpop.permute.xlu0 %574
  %v577 = vmul.f32 %v559, %v575
  %579 = vrot.lane.b32.xlu0 %v577, 16
  %v580 = vpop.permute.xlu0 %579
  %v582 = vadd.f32 %v571, %v580
  %v583 = vadd.f32 %v499, %v537
  %v584 = vxor.u32 %v583, 2147483648
  %v585 = vmul.f32 %v584, 1.442695
  %v586 = vpow.pop %v585
  %v587 = vadd.f32 %v586, 1.0
  %v588 = vrcp.pop %v587
  %v589 = vmul.f32 %v587, %v588
  %v590 = vsub.f32 1.0, %v589
  %v591 = vmul.f32 %v588, %v590
  %v592 = vadd.f32 %v588, %v591
  %vm593 = vweird.f32 %v587
  %vm594 = vweird.f32 %v588
  %vm595 = vmor %vm593, %vm594
  %v596 = vsel %vm595, %v588, %v592
  %v597 = vand.u32 2147483647, %v587
  %vm598 = vcmp.eq.f32.partialorder %v597, 8.507059e+37
  %v599 = vand.u32 %v587, 2147483648
  %v600 = vor.u32 1.1754944e-38, %v599
  %v601 = vsel %vm598, %v600, %v596
  %v602 = vmul.f32 1.0, %v601
  %v603 = vadd.f32 %v537, %v452
  %605 = vrot.lane.b32.xlu0 %v603, 96
  %v606 = vpop.permute.xlu0 %605
  %v608 = vmul.f32 %v602, %v606
  %610 = vrot.lane.b32.xlu0 %v608, 32
  %v611 = vpop.permute.xlu0 %610
  %v613 = vadd.f32 %v499, %v611
  %v614 = vtanh.pop %v613
  %v615 = vsub.f32 %v480, %v614
  %617 = vrot.lane.b32.xlu0 %v615, 112
  %v618 = vpop.permute.xlu0 %617
  %v620 = vmul.f32 %v602, %v618
  %622 = vrot.lane.b32.xlu0 %v620, 16
  %v623 = vpop.permute.xlu0 %622
  %v625 = vadd.f32 %v614, %v623
  %v626 = vpack.c.bf16 %v582, %v582
  %628 = vrot.lane.b32.xlu0 %v626, 96
  %v629 = vpop.permute.xlu0 %628
  %s631 = scalar_lea.vmem %s8, 4
  %632 = vst.msk [vmem:[%s631] sm:$0xf] %vm486, %v629
  %v633 = vpack.c.bf16 %v625, %v625
  %635 = vrot.lane.b32.xlu0 %v633, 96
  %v636 = vpop.permute.xlu0 %635
  %s638 = scalar_lea.vmem %s86, 8
  %639 = vst.msk [vmem:[%s638] sm:$0xf] %vm486, %v636
  %s640 = scalar_lea.vmem [#allocation2], 16
  %v641 = vld [vmem:[%s640] sm:$0xff]
  %s642 = sadd.s32 8, 32
  %s643 = scalar_lea.vmem [#allocation2], %s642
  %v644 = vld [vmem:[%s643] sm:$0xff]
  %v645 = vunpack.c.l.b16 %v626
  %v646 = vpack.c.b16 %v645, %v645
  %647 = vrot.lane.b32.xlu0 %v646, 96
  %v648 = vpop.permute.xlu0 %647
  %v650 = vsel %vm126, %v648, 0
  %652 = vmatpush.bf16.msra.mxu0 0
  %653 = vmatpush.bf16.msra.mxu0 0
  %654 = vmatpush.bf16.msra.mxu0 0
  %655 = vmatpush.bf16.msra.mxu0 0
  %656 = vmatpush.bf16.msra.mxu0 0
  %657 = vmatpush.bf16.msra.mxu0 0
  %658 = vmatpush.bf16.msra.mxu0 0
  %659 = vmatpush.bf16.msra.mxu0 %v336
  %660 = vmatmul.bf16.gmra.mxu0 %v650
  %v661 = vpop.f32.mrf.mxu0
  %v662 = vadd.f32 0.0, %v661
  %v663 = vpop.f32.mrf.mxu0
  %664 = vdwg.mxu0
  %v665 = vunpack.c.l.b16 %v633
  %v666 = vpack.c.b16 %v665, %v665
  %667 = vrot.lane.b32.xlu0 %v666, 96
  %v668 = vpop.permute.xlu0 %667
  %v670 = vsel %vm126, %v668, 0
  %672 = vmatpush.bf16.msra.mxu0 0
  %673 = vmatpush.bf16.msra.mxu0 0
  %674 = vmatpush.bf16.msra.mxu0 0
  %675 = vmatpush.bf16.msra.mxu0 0
  %676 = vmatpush.bf16.msra.mxu0 0
  %677 = vmatpush.bf16.msra.mxu0 0
  %678 = vmatpush.bf16.msra.mxu0 0
  %679 = vmatpush.bf16.msra.mxu0 %v359
  %680 = vmatmul.bf16.gmra.mxu0 %v670
  %v681 = vpop.f32.mrf.mxu0
  %v682 = vadd.f32 0.0, %v681
  %v683 = vpop.f32.mrf.mxu0
  %684 = vdwg.mxu0
  %v685 = vadd.f32 %v641, %v662
  %v686 = vxor.u32 %v685, 2147483648
  %v687 = vmul.f32 %v686, 1.442695
  %v688 = vpow.pop %v687
  %v689 = vadd.f32 %v688, 1.0
  %v690 = vrcp.pop %v689
  %v691 = vmul.f32 %v689, %v690
  %v692 = vsub.f32 1.0, %v691
  %v693 = vmul.f32 %v690, %v692
  %v694 = vadd.f32 %v690, %v693
  %vm695 = vweird.f32 %v689
  %vm696 = vweird.f32 %v690
  %vm697 = vmor %vm695, %vm696
  %v698 = vsel %vm697, %v690, %v694
  %v699 = vand.u32 2147483647, %v689
  %vm700 = vcmp.eq.f32.partialorder %v699, 8.507059e+37
  %v701 = vand.u32 %v689, 2147483648
  %v702 = vor.u32 1.1754944e-38, %v701
  %v703 = vsel %vm700, %v702, %v698
  %v704 = vmul.f32 1.0, %v703
  %v705 = vadd.f32 %v662, %v400
  %707 = vrot.lane.b32.xlu0 %v705, 96
  %v708 = vpop.permute.xlu0 %707
  %v710 = vmul.f32 %v704, %v708
  %712 = vrot.lane.b32.xlu0 %v710, 32
  %v713 = vpop.permute.xlu0 %712
  %v715 = vadd.f32 %v641, %v713
  %v716 = vtanh.pop %v715
  %v717 = vsub.f32 %v582, %v716
  %719 = vrot.lane.b32.xlu0 %v717, 112
  %v720 = vpop.permute.xlu0 %719
  %v722 = vmul.f32 %v704, %v720
  %724 = vrot.lane.b32.xlu0 %v722, 16
  %v725 = vpop.permute.xlu0 %724
  %v727 = vadd.f32 %v716, %v725
  %v728 = vadd.f32 %v644, %v682
  %v729 = vxor.u32 %v728, 2147483648
  %v730 = vmul.f32 %v729, 1.442695
  %v731 = vpow.pop %v730
  %v732 = vadd.f32 %v731, 1.0
  %v733 = vrcp.pop %v732
  %v734 = vmul.f32 %v732, %v733
  %v735 = vsub.f32 1.0, %v734
  %v736 = vmul.f32 %v733, %v735
  %v737 = vadd.f32 %v733, %v736
  %vm738 = vweird.f32 %v732
  %vm739 = vweird.f32 %v733
  %vm740 = vmor %vm738, %vm739
  %v741 = vsel %vm740, %v733, %v737
  %v742 = vand.u32 2147483647, %v732
  %vm743 = vcmp.eq.f32.partialorder %v742, 8.507059e+37
  %v744 = vand.u32 %v732, 2147483648
  %v745 = vor.u32 1.1754944e-38, %v744
  %v746 = vsel %vm743, %v745, %v741
  %v747 = vmul.f32 1.0, %v746
  %v748 = vadd.f32 %v682, %v452
  %750 = vrot.lane.b32.xlu0 %v748, 96
  %v751 = vpop.permute.xlu0 %750
  %v753 = vmul.f32 %v747, %v751
  %755 = vrot.lane.b32.xlu0 %v753, 32
  %v756 = vpop.permute.xlu0 %755
  %v758 = vadd.f32 %v644, %v756
  %v759 = vtanh.pop %v758
  %v760 = vsub.f32 %v625, %v759
  %762 = vrot.lane.b32.xlu0 %v760, 112
  %v763 = vpop.permute.xlu0 %762
  %v765 = vmul.f32 %v747, %v763
  %767 = vrot.lane.b32.xlu0 %v765, 16
  %v768 = vpop.permute.xlu0 %767
  %v770 = vadd.f32 %v759, %v768
  %v771 = vpack.c.bf16 %v727, %v727
  %773 = vrot.lane.b32.xlu0 %v771, 96
  %v774 = vpop.permute.xlu0 %773
  %s776 = scalar_lea.vmem %s8, 8
  %777 = vst.msk [vmem:[%s776] sm:$0xf] %vm486, %v774
  %v778 = vpack.c.bf16 %v770, %v770
  %780 = vrot.lane.b32.xlu0 %v778, 96
  %v781 = vpop.permute.xlu0 %780
  %s783 = scalar_lea.vmem %s86, 4
  %784 = vst.msk [vmem:[%s783] sm:$0xf] %vm486, %v781
  %s785 = scalar_lea.vmem [#allocation2], 24
  %v786 = vld [vmem:[%s785] sm:$0xff]
  %s787 = sadd.s32 0, 32
  %s788 = scalar_lea.vmem [#allocation2], %s787
  %v789 = vld [vmem:[%s788] sm:$0xff]
  %v790 = vunpack.c.l.b16 %v771
  %v791 = vpack.c.b16 %v790, %v790
  %792 = vrot.lane.b32.xlu0 %v791, 96
  %v793 = vpop.permute.xlu0 %792
  %v795 = vsel %vm126, %v793, 0
  %797 = vmatpush.bf16.msra.mxu0 0
  %798 = vmatpush.bf16.msra.mxu0 0
  %799 = vmatpush.bf16.msra.mxu0 0
  %800 = vmatpush.bf16.msra.mxu0 0
  %801 = vmatpush.bf16.msra.mxu0 0
  %802 = vmatpush.bf16.msra.mxu0 0
  %803 = vmatpush.bf16.msra.mxu0 0
  %804 = vmatpush.bf16.msra.mxu0 %v336
  %805 = vmatmul.bf16.gmra.mxu0 %v795
  %v806 = vpop.f32.mrf.mxu0
  %v807 = vadd.f32 0.0, %v806
  %v808 = vpop.f32.mrf.mxu0
  %809 = vdwg.mxu0
  %v810 = vunpack.c.l.b16 %v778
  %v811 = vpack.c.b16 %v810, %v810
  %812 = vrot.lane.b32.xlu0 %v811, 96
  %v813 = vpop.permute.xlu0 %812
  %v815 = vsel %vm126, %v813, 0
  %817 = vmatpush.bf16.msra.mxu0 0
  %818 = vmatpush.bf16.msra.mxu0 0
  %819 = vmatpush.bf16.msra.mxu0 0
  %820 = vmatpush.bf16.msra.mxu0 0
  %821 = vmatpush.bf16.msra.mxu0 0
  %822 = vmatpush.bf16.msra.mxu0 0
  %823 = vmatpush.bf16.msra.mxu0 0
  %824 = vmatpush.bf16.msra.mxu0 %v359
  %825 = vmatmul.bf16.gmra.mxu0 %v815
  %v826 = vpop.f32.mrf.mxu0
  %v827 = vadd.f32 0.0, %v826
  %v828 = vpop.f32.mrf.mxu0
  %829 = vdwg.mxu0
  %v830 = vadd.f32 %v786, %v807
  %v831 = vxor.u32 %v830, 2147483648
  %v832 = vmul.f32 %v831, 1.442695
  %v833 = vpow.pop %v832
  %v834 = vadd.f32 %v833, 1.0
  %v835 = vrcp.pop %v834
  %v836 = vmul.f32 %v834, %v835
  %v837 = vsub.f32 1.0, %v836
  %v838 = vmul.f32 %v835, %v837
  %v839 = vadd.f32 %v835, %v838
  %vm840 = vweird.f32 %v834
  %vm841 = vweird.f32 %v835
  %vm842 = vmor %vm840, %vm841
  %v843 = vsel %vm842, %v835, %v839
  %v844 = vand.u32 2147483647, %v834
  %vm845 = vcmp.eq.f32.partialorder %v844, 8.507059e+37
  %v846 = vand.u32 %v834, 2147483648
  %v847 = vor.u32 1.1754944e-38, %v846
  %v848 = vsel %vm845, %v847, %v843
  %v849 = vmul.f32 1.0, %v848
  %v850 = vadd.f32 %v807, %v400
  %852 = vrot.lane.b32.xlu0 %v850, 96
  %v853 = vpop.permute.xlu0 %852
  %v855 = vmul.f32 %v849, %v853
  %857 = vrot.lane.b32.xlu0 %v855, 32
  %v858 = vpop.permute.xlu0 %857
  %v860 = vadd.f32 %v786, %v858
  %v861 = vtanh.pop %v860
  %v862 = vsub.f32 %v727, %v861
  %864 = vrot.lane.b32.xlu0 %v862, 112
  %v865 = vpop.permute.xlu0 %864
  %v867 = vmul.f32 %v849, %v865
  %869 = vrot.lane.b32.xlu0 %v867, 16
  %v870 = vpop.permute.xlu0 %869
  %v872 = vadd.f32 %v861, %v870
  %v873 = vadd.f32 %v789, %v827
  %v874 = vxor.u32 %v873, 2147483648
  %v875 = vmul.f32 %v874, 1.442695
  %v876 = vpow.pop %v875
  %v877 = vadd.f32 %v876, 1.0
  %v878 = vrcp.pop %v877
  %v879 = vmul.f32 %v877, %v878
  %v880 = vsub.f32 1.0, %v879
  %v881 = vmul.f32 %v878, %v880
  %v882 = vadd.f32 %v878, %v881
  %vm883 = vweird.f32 %v877
  %vm884 = vweird.f32 %v878
  %vm885 = vmor %vm883, %vm884
  %v886 = vsel %vm885, %v878, %v882
  %v887 = vand.u32 2147483647, %v877
  %vm888 = vcmp.eq.f32.partialorder %v887, 8.507059e+37
  %v889 = vand.u32 %v877, 2147483648
  %v890 = vor.u32 1.1754944e-38, %v889
  %v891 = vsel %vm888, %v890, %v886
  %v892 = vmul.f32 1.0, %v891
  %v893 = vadd.f32 %v827, %v452
  %895 = vrot.lane.b32.xlu0 %v893, 96
  %v896 = vpop.permute.xlu0 %895
  %v898 = vmul.f32 %v892, %v896
  %900 = vrot.lane.b32.xlu0 %v898, 32
  %v901 = vpop.permute.xlu0 %900
  %v903 = vadd.f32 %v789, %v901
  %v904 = vtanh.pop %v903
  %v905 = vsub.f32 %v770, %v904
  %907 = vrot.lane.b32.xlu0 %v905, 112
  %v908 = vpop.permute.xlu0 %907
  %v910 = vmul.f32 %v892, %v908
  %912 = vrot.lane.b32.xlu0 %v910, 16
  %v913 = vpop.permute.xlu0 %912
  %v915 = vadd.f32 %v904, %v913
  %v916 = vpack.c.bf16 %v872, %v872
  %918 = vrot.lane.b32.xlu0 %v916, 96
  %v919 = vpop.permute.xlu0 %918
  %s921 = scalar_lea.vmem %s8, 12
  %922 = vst.msk [vmem:[%s921] sm:$0xf] %vm486, %v919
  %v923 = vpack.c.bf16 %v915, %v915
  %925 = vrot.lane.b32.xlu0 %v923, 96
  %v926 = vpop.permute.xlu0 %925
  %928 = vst.msk [vmem:[%s86] sm:$0xf] %vm486, %v926
  %930 = vrot.lane.b32.xlu0 %v872, 96
  %v931 = vpop.permute.xlu0 %930
  %933 = vst.msk [vmem:[#allocation3] sm:$0xff] %vm126, %v931
  %935 = vrot.lane.b32.xlu0 %v915, 96
  %v936 = vpop.permute.xlu0 %935
  %938 = vst.msk [vmem:[%s325] sm:$0xff] %vm126, %v936
  %s939 = ssub.s32 0, 0
  %s940 = smul.u32 4, %s939
  %p941 = scmp.lt.s32.totalorder %s940, 3
  %s942 = scalar_select %p941, %s940, 3
  %s943 = smul.addr %s942, 4
  %s944 = scalar_lea.vmem %s9, %s943
  // Predicated region
  $region38: #{sub_sampling_encoder_forward.5} parent=0 // pred_check
    _
  $region39: #{sub_sampling_encoder_forward.5} parent=0 // pred_check_branch
    %946 = sbr.rel (0) target = $region41
  $region40: #{sub_sampling_encoder_forward.5} parent=0 // pred_region
    _
  $region41: #{sub_sampling_encoder_forward.5} parent=0 // pred_fallthru
    _
  // Predicated region
  $region42: #{sub_sampling_encoder_forward.5} parent=0 // pred_check
    _
  $region43: #{sub_sampling_encoder_forward.5} parent=0 // pred_check_branch
    %948 = sbr.rel (0) target = $region45
  $region44: #{sub_sampling_encoder_forward.5} parent=0 // pred_region
    %s949 = ssub.s32 0, 0
    %s950 = smul.u32 4, %s949
  $region45: #{sub_sampling_encoder_forward.5} parent=0 // pred_fallthru
    _
  // Predicated region
  $region46: #{sub_sampling_encoder_forward.5} parent=0 // pred_check
    _
  $region47: #{sub_sampling_encoder_forward.5} parent=0 // pred_check_branch
    %952 = sbr.rel (0) target = $region49
  $region48: #{sub_sampling_encoder_forward.5} parent=0 // pred_region
    _
  $region49: #{sub_sampling_encoder_forward.5} parent=0 // pred_fallthru
    _
  // Predicated region
  $region50: #{sub_sampling_encoder_forward.5} parent=0 // pred_check
    _
  $region51: #{sub_sampling_encoder_forward.5} parent=0 // pred_check_branch
    %954 = sbr.rel (0) target = $region53
  $region52: #{sub_sampling_encoder_forward.5} parent=0 // pred_region
    %s955 = ssub.s32 0, 0
    %s956 = smul.u32 4, %s955
    %p957 = scmp.lt.s32.totalorder %s956, 3
    %s958 = scalar_select %p957, %s956, 3
    %s959 = smul.addr %s958, 4
    %s960 = scalar_lea.vmem %s9, %s959
  $region53: #{sub_sampling_encoder_forward.5} parent=0 // pred_fallthru
    _

// kernel: sub_sampling_encoder_forward.4
$region0: #{sub_sampling_encoder_forward.4}
  #allocation0 [shape = 'u32[]', space=smem, size = 0x4, offset = 0x4, fixed_abs, tag = 'smem constant byte address 0x4 - core index']
  #allocation1 [shape = 'u32[72,128]{1,0:T(1,128)}', space=vmem, size = 0x9000, scoped, tag = 'internal scratch']
  #allocation2 [shape = 'f32[2,64,48]{2,1,0:T(8,128)}', space=vmem, size = 0x10000, scoped, tag = 'scratch operand']
  #allocation3 [shape = 'f32[2,8,16]{2,1,0:T(8,128)}', space=vmem, size = 0x2000, scoped, tag = 'scratch operand']
  %s0 = inlined_call_operand.vmem [shape: bf16[64,16], index: 0, kind: input, shape index: {}, may-alias: {0,2}]
  %s1 = inlined_call_operand.vmem [shape: bf16[64,16], index: 1, kind: input, shape index: {}, may-alias: {1,3}]
  %s2 = inlined_call_operand.vmem [shape: bf16[64,16], index: 2, kind: input, shape index: {}, may-alias: {0,2}]
  %s3 = inlined_call_operand.vmem [shape: bf16[64,16], index: 3, kind: input, shape index: {}, may-alias: {1,3}]
  %s4 = inlined_call_operand.vmem [shape: bf16[2,2,16,48], index: 4, kind: input, shape index: {}]
  %s5 = inlined_call_operand.vmem [shape: f32[2,1,48], index: 5, kind: input, shape index: {}]
  %s6 = inlined_call_operand.vmem [shape: bf16[2,16,48], index: 6, kind: input, shape index: {}]
  %s7 = inlined_call_operand.vmem [shape: f32[2,1,16], index: 7, kind: input, shape index: {}]
  %s8 = inlined_call_operand.vmem [shape: bf16[64,16], index: 8, kind: output, shape index: {0}]
  %s9 = inlined_call_operand.vmem [shape: bf16[64,16], index: 9, kind: output, shape index: {1}]
  %10 = xla_tuple %s8, %s9
  %s11 = sld [smem:[#allocation0]]
  $region54: #{sub_sampling_encoder_forward.4} parent=0
    _
  %s13 = ssub.s32 1, %s11
  %s14 = scalar_select 0, %s13, %s11
  // Predicated region
  $region2: #{sub_sampling_encoder_forward.4} parent=0 // pred_check
    _
  $region3: #{sub_sampling_encoder_forward.4} parent=0 // pred_check_branch
    %16 = sbr.rel (0) target = $region5
  $region4: #{sub_sampling_encoder_forward.4} parent=0 // pred_region
    _
  $region5: #{sub_sampling_encoder_forward.4} parent=0 // pred_fallthru
    _
  // Predicated region
  $region6: #{sub_sampling_encoder_forward.4} parent=0 // pred_check
    _
  $region7: #{sub_sampling_encoder_forward.4} parent=0 // pred_check_branch
    %18 = sbr.rel (0) target = $region9
  $region8: #{sub_sampling_encoder_forward.4} parent=0 // pred_region
    _
  $region9: #{sub_sampling_encoder_forward.4} parent=0 // pred_fallthru
    _
  // Predicated region
  $region10: #{sub_sampling_encoder_forward.4} parent=0 // pred_check
    _
  $region11: #{sub_sampling_encoder_forward.4} parent=0 // pred_check_branch
    %20 = sbr.rel (0) target = $region13
  $region12: #{sub_sampling_encoder_forward.4} parent=0 // pred_region
    %s21 = ssub.s32 0, 0
    %s22 = smul.u32 8, %s21
    %p23 = scmp.lt.s32.totalorder %s22, 7
    %s24 = scalar_select %p23, %s22, 7
    %s25 = smul.addr %s24, 4
    %s26 = scalar_lea.vmem %s2, %s25
    %s27 = ssub.s32 0, 0
    %s28 = smul.u32 8, %s27
  $region13: #{sub_sampling_encoder_forward.4} parent=0 // pred_fallthru
    _
  // Predicated region
  $region14: #{sub_sampling_encoder_forward.4} parent=0 // pred_check
    _
  $region15: #{sub_sampling_encoder_forward.4} parent=0 // pred_check_branch
    %30 = sbr.rel (0) target = $region17
  $region16: #{sub_sampling_encoder_forward.4} parent=0 // pred_region
    %s31 = ssub.s32 0, 0
    %s32 = smul.u32 8, %s31
    %p33 = scmp.lt.s32.totalorder %s32, 7
    %s34 = scalar_select %p33, %s32, 7
    %s35 = smul.addr %s34, 4
    %s36 = scalar_lea.vmem %s3, %s35
    %s37 = ssub.s32 0, 0
    %s38 = smul.u32 8, %s37
  $region17: #{sub_sampling_encoder_forward.4} parent=0 // pred_fallthru
    _
  // Predicated region
  $region18: #{sub_sampling_encoder_forward.4} parent=0 // pred_check
    _
  $region19: #{sub_sampling_encoder_forward.4} parent=0 // pred_check_branch
    %40 = sbr.rel (0) target = $region21
  $region20: #{sub_sampling_encoder_forward.4} parent=0 // pred_region
    _
  $region21: #{sub_sampling_encoder_forward.4} parent=0 // pred_fallthru
    _
  // Predicated region
  $region22: #{sub_sampling_encoder_forward.4} parent=0 // pred_check
    _
  $region23: #{sub_sampling_encoder_forward.4} parent=0 // pred_check_branch
    %42 = sbr.rel (0) target = $region25
  $region24: #{sub_sampling_encoder_forward.4} parent=0 // pred_region
    _
  $region25: #{sub_sampling_encoder_forward.4} parent=0 // pred_fallthru
    _
  // Predicated region
  $region26: #{sub_sampling_encoder_forward.4} parent=0 // pred_check
    _
  $region27: #{sub_sampling_encoder_forward.4} parent=0 // pred_check_branch
    %44 = sbr.rel (0) target = $region29
  $region28: #{sub_sampling_encoder_forward.4} parent=0 // pred_region
    _
  $region29: #{sub_sampling_encoder_forward.4} parent=0 // pred_fallthru
    _
  // Predicated region
  $region30: #{sub_sampling_encoder_forward.4} parent=0 // pred_check
    _
  $region31: #{sub_sampling_encoder_forward.4} parent=0 // pred_check_branch
    %46 = sbr.rel (0) target = $region33
  $region32: #{sub_sampling_encoder_forward.4} parent=0 // pred_region
    _
  $region33: #{sub_sampling_encoder_forward.4} parent=0 // pred_fallthru
    _
  %s47 = ssub.s32 0, 0
  %s48 = smul.u32 8, %s47
  %p49 = scmp.lt.s32.totalorder %s48, 7
  %s50 = scalar_select %p49, %s48, 7
  %s51 = smul.addr %s50, 4
  %s52 = scalar_lea.vmem %s2, %s51
  %s53 = ssub.s32 0, 0
  %s54 = smul.u32 8, %s53
  %p55 = scmp.lt.s32.totalorder %s54, 7
  %s56 = scalar_select %p55, %s54, 7
  %s57 = smul.addr %s56, 4
  %s58 = scalar_lea.vmem %s3, %s57
  %s59 = ssub.s32 0, 0
  %s60 = smul.u32 8, %s59
  %p61 = scmp.lt.s32.totalorder %s60, 7
  %s62 = scalar_select %p61, %s60, 7
  %s63 = smul.addr %s62, 4
  %s64 = scalar_lea.vmem %s9, %s63
  %s65 = ssub.s32 0, 0
  %s66 = smul.u32 8, %s65
  %p67 = scmp.lt.s32.totalorder %s66, 7
  %s68 = scalar_select %p67, %s66, 7
  %s69 = smul.addr %s68, 4
  %s70 = scalar_lea.vmem %s2, %s69
  %s71 = ssub.s32 0, 0
  %s72 = smul.u32 8, %s71
  %s73 = ssub.s32 0, 0
  %s74 = smul.u32 8, %s73
  %p75 = scmp.lt.s32.totalorder %s74, 7
  %s76 = scalar_select %p75, %s74, 7
  %s77 = smul.addr %s76, 4
  %s78 = scalar_lea.vmem %s3, %s77
  %s79 = ssub.s32 0, 0
  %s80 = smul.u32 8, %s79
  %s81 = ssub.s32 0, 0
  %s82 = smul.u32 8, %s81
  %p83 = scmp.lt.s32.totalorder %s82, 7
  %s84 = scalar_select %p83, %s82, 7
  %s85 = smul.addr %s84, 4
  %s86 = scalar_lea.vmem %s9, %s85
  %s87 = ssub.s32 0, 0
  %s88 = smul.u32 8, %s87
  %p90 = scmp.eq.s32.totalorder 0, 0
  // Predicated region
  $region34: #{sub_sampling_encoder_forward.4} parent=0 // pred_check
    %p91 = pneg %p90
  $region35: #{sub_sampling_encoder_forward.4} parent=0 // pred_check_branch
    %93 = sbr.rel (%p91) target = $region37
  $region36: #{sub_sampling_encoder_forward.4} parent=0 // pred_region
    %vm94 = vcmask 130048
    %95 = vst.msk [vmem:[#allocation3] sm:$0xff] %vm94, 0.0
    %96 = vst.msk [vmem:[#allocation3 + $0x8] sm:$0xff] %vm94, 0.0
  $region37: #{sub_sampling_encoder_forward.4} parent=0 // pred_fallthru
    _
  %v97 = vld [vmem:[%s0] sm:$0xf]
  %v98 = vld [vmem:[%s0 + $0x4] sm:$0xf]
  %v99 = vld [vmem:[%s0 + $0x8] sm:$0xf]
  %v100 = vld [vmem:[%s0 + $0xc] sm:$0xf]
  %v101 = vld [vmem:[%s0 + $0x10] sm:$0xf]
  %v102 = vld [vmem:[%s0 + $0x14] sm:$0xf]
  %v103 = vld [vmem:[%s0 + $0x18] sm:$0xf]
  %v104 = vld [vmem:[%s0 + $0x1c] sm:$0xf]
  %v105 = vld [vmem:[%s4] sm:$0xf]
  %v106 = vld [vmem:[%s4 + $0x4] sm:$0xf]
  %v107 = vld [vmem:[%s1] sm:$0xf]
  %v108 = vld [vmem:[%s1 + $0x4] sm:$0xf]
  %v109 = vld [vmem:[%s1 + $0x8] sm:$0xf]
  %v110 = vld [vmem:[%s1 + $0xc] sm:$0xf]
  %v111 = vld [vmem:[%s1 + $0x10] sm:$0xf]
  %v112 = vld [vmem:[%s1 + $0x14] sm:$0xf]
  %v113 = vld [vmem:[%s1 + $0x18] sm:$0xf]
  %v114 = vld [vmem:[%s1 + $0x1c] sm:$0xf]
  %s115 = scalar_lea.vmem %s4, 8
  %v116 = vld [vmem:[%s115] sm:$0xf]
  %v117 = vld [vmem:[%s115 + $0x4] sm:$0xf]
  %v126 = vunpack.c.l.b16 %v107
  %v127 = vunpack.c.l.b16 %v108
  %v128 = vunpack.c.l.b16 %v109
  %v129 = vunpack.c.l.b16 %v110
  %v130 = vunpack.c.l.b16 %v111
  %v131 = vunpack.c.l.b16 %v112
  %v132 = vunpack.c.l.b16 %v113
  %v133 = vunpack.c.l.b16 %v114
  %v134 = vpack.c.b16 %v127, %v126
  %v135 = vpack.c.b16 %v129, %v128
  %v136 = vpack.c.b16 %v131, %v130
  %v137 = vpack.c.b16 %v133, %v132
  %v140 = vunpack.c.l.b16 %v116
  %v141 = vunpack.c.l.b16 %v117
  %v142 = vpack.c.b16 %v141, %v140
  %vm144 = vcmask 130048
  %v146 = vsel %vm144, %v134, 0
  %v149 = vsel %vm144, %v135, 0
  %v152 = vsel %vm144, %v136, 0
  %v155 = vsel %vm144, %v137, 0
  %157 = vmatpush.bf16.msra.mxu0 0
  %158 = vmatpush.bf16.msra.mxu0 0
  %159 = vmatpush.bf16.msra.mxu0 0
  %160 = vmatpush.bf16.msra.mxu0 0
  %161 = vmatpush.bf16.msra.mxu0 0
  %162 = vmatpush.bf16.msra.mxu0 0
  %163 = vmatpush.bf16.msra.mxu0 0
  %164 = vmatpush.bf16.msra.mxu0 %v142
  %165 = vmatmul.bf16.gmra.mxu0 %v146
  %v166 = vpop.f32.mrf.mxu0
  %v167 = vadd.f32 0.0, %v166
  %v168 = vpop.f32.mrf.mxu0
  %v169 = vadd.f32 0.0, %v168
  %170 = vmatmul.bf16.gmra.mxu0 %v149
  %v171 = vpop.f32.mrf.mxu0
  %v172 = vadd.f32 0.0, %v171
  %v173 = vpop.f32.mrf.mxu0
  %v174 = vadd.f32 0.0, %v173
  %175 = vmatmul.bf16.gmra.mxu0 %v152
  %v176 = vpop.f32.mrf.mxu0
  %v177 = vadd.f32 0.0, %v176
  %v178 = vpop.f32.mrf.mxu0
  %v179 = vadd.f32 0.0, %v178
  %180 = vmatmul.bf16.gmra.mxu0 %v155
  %v181 = vpop.f32.mrf.mxu0
  %v182 = vadd.f32 0.0, %v181
  %v183 = vpop.f32.mrf.mxu0
  %v184 = vadd.f32 0.0, %v183
  %185 = vdwg.mxu0
  %v194 = vunpack.c.l.b16 %v97
  %v195 = vunpack.c.l.b16 %v98
  %v196 = vunpack.c.l.b16 %v99
  %v197 = vunpack.c.l.b16 %v100
  %v198 = vunpack.c.l.b16 %v101
  %v199 = vunpack.c.l.b16 %v102
  %v200 = vunpack.c.l.b16 %v103
  %v201 = vunpack.c.l.b16 %v104
  %v202 = vpack.c.b16 %v195, %v194
  %v203 = vpack.c.b16 %v197, %v196
  %v204 = vpack.c.b16 %v199, %v198
  %v205 = vpack.c.b16 %v201, %v200
  %v208 = vunpack.c.l.b16 %v105
  %v209 = vunpack.c.l.b16 %v106
  %v210 = vpack.c.b16 %v209, %v208
  %v213 = vsel %vm144, %v202, 0
  %v216 = vsel %vm144, %v203, 0
  %v219 = vsel %vm144, %v204, 0
  %v222 = vsel %vm144, %v205, 0
  %224 = vmatpush.bf16.msra.mxu0 0
  %225 = vmatpush.bf16.msra.mxu0 0
  %226 = vmatpush.bf16.msra.mxu0 0
  %227 = vmatpush.bf16.msra.mxu0 0
  %228 = vmatpush.bf16.msra.mxu0 0
  %229 = vmatpush.bf16.msra.mxu0 0
  %230 = vmatpush.bf16.msra.mxu0 0
  %231 = vmatpush.bf16.msra.mxu0 %v210
  %232 = vmatmul.bf16.gmra.mxu0 %v213
  %v233 = vpop.f32.mrf.mxu0
  %v234 = vadd.f32 %v167, %v233
  %v235 = vpop.f32.mrf.mxu0
  %v236 = vadd.f32 %v169, %v235
  %237 = vmatmul.bf16.gmra.mxu0 %v216
  %v238 = vpop.f32.mrf.mxu0
  %v239 = vadd.f32 %v172, %v238
  %v240 = vpop.f32.mrf.mxu0
  %v241 = vadd.f32 %v174, %v240
  %242 = vmatmul.bf16.gmra.mxu0 %v219
  %v243 = vpop.f32.mrf.mxu0
  %v244 = vadd.f32 %v177, %v243
  %v245 = vpop.f32.mrf.mxu0
  %v246 = vadd.f32 %v179, %v245
  %247 = vmatmul.bf16.gmra.mxu0 %v222
  %v248 = vpop.f32.mrf.mxu0
  %v249 = vadd.f32 %v182, %v248
  %v250 = vpop.f32.mrf.mxu0
  %v251 = vadd.f32 %v184, %v250
  %252 = vdwg.mxu0
  %v253 = vld [vmem:[%s5] sm:$0x1]
  %v255 = vperm.slane %v253, 0
  %v257 = vadd.f32 %v234, %v255
  %v258 = vadd.f32 %v236, %v255
  %v259 = vadd.f32 %v239, %v255
  %v260 = vadd.f32 %v241, %v255
  %v261 = vadd.f32 %v244, %v255
  %v262 = vadd.f32 %v246, %v255
  %v263 = vadd.f32 %v249, %v255
  %v264 = vadd.f32 %v251, %v255
  %vm265 = vcmask 392192
  %266 = vst.msk [vmem:[#allocation2] sm:$0xff] %vm265, %v257
  %267 = vst.msk [vmem:[#allocation2 + $0x8] sm:$0xff] %vm265, %v258
  %268 = vst.msk [vmem:[#allocation2 + $0x10] sm:$0xff] %vm265, %v259
  %269 = vst.msk [vmem:[#allocation2 + $0x18] sm:$0xff] %vm265, %v260
  %270 = vst.msk [vmem:[#allocation2 + $0x20] sm:$0xff] %vm265, %v261
  %271 = vst.msk [vmem:[#allocation2 + $0x28] sm:$0xff] %vm265, %v262
  %272 = vst.msk [vmem:[#allocation2 + $0x30] sm:$0xff] %vm265, %v263
  %273 = vst.msk [vmem:[#allocation2 + $0x38] sm:$0xff] %vm265, %v264
  %v274 = vld [vmem:[%s70] sm:$0xf]
  %v275 = vld [vmem:[%s70 + $0x4] sm:$0xf]
  %v276 = vld [vmem:[%s70 + $0x8] sm:$0xf]
  %v277 = vld [vmem:[%s70 + $0xc] sm:$0xf]
  %v278 = vld [vmem:[%s70 + $0x10] sm:$0xf]
  %v279 = vld [vmem:[%s70 + $0x14] sm:$0xf]
  %v280 = vld [vmem:[%s70 + $0x18] sm:$0xf]
  %v281 = vld [vmem:[%s70 + $0x1c] sm:$0xf]
  %s282 = scalar_lea.vmem %s4, 16
  %v283 = vld [vmem:[%s282] sm:$0xf]
  %v284 = vld [vmem:[%s282 + $0x4] sm:$0xf]
  %v285 = vld [vmem:[%s78] sm:$0xf]
  %v286 = vld [vmem:[%s78 + $0x4] sm:$0xf]
  %v287 = vld [vmem:[%s78 + $0x8] sm:$0xf]
  %v288 = vld [vmem:[%s78 + $0xc] sm:$0xf]
  %v289 = vld [vmem:[%s78 + $0x10] sm:$0xf]
  %v290 = vld [vmem:[%s78 + $0x14] sm:$0xf]
  %v291 = vld [vmem:[%s78 + $0x18] sm:$0xf]
  %v292 = vld [vmem:[%s78 + $0x1c] sm:$0xf]
  %s293 = scalar_lea.vmem %s4, 24
  %v294 = vld [vmem:[%s293] sm:$0xf]
  %v295 = vld [vmem:[%s293 + $0x4] sm:$0xf]
  %v304 = vunpack.c.l.b16 %v285
  %v305 = vunpack.c.l.b16 %v286
  %v306 = vunpack.c.l.b16 %v287
  %v307 = vunpack.c.l.b16 %v288
  %v308 = vunpack.c.l.b16 %v289
  %v309 = vunpack.c.l.b16 %v290
  %v310 = vunpack.c.l.b16 %v291
  %v311 = vunpack.c.l.b16 %v292
  %v312 = vpack.c.b16 %v305, %v304
  %v313 = vpack.c.b16 %v307, %v306
  %v314 = vpack.c.b16 %v309, %v308
  %v315 = vpack.c.b16 %v311, %v310
  %v318 = vunpack.c.l.b16 %v294
  %v319 = vunpack.c.l.b16 %v295
  %v320 = vpack.c.b16 %v319, %v318
  %v323 = vsel %vm144, %v312, 0
  %v326 = vsel %vm144, %v313, 0
  %v329 = vsel %vm144, %v314, 0
  %v332 = vsel %vm144, %v315, 0
  %334 = vmatpush.bf16.msra.mxu0 0
  %335 = vmatpush.bf16.msra.mxu0 0
  %336 = vmatpush.bf16.msra.mxu0 0
  %337 = vmatpush.bf16.msra.mxu0 0
  %338 = vmatpush.bf16.msra.mxu0 0
  %339 = vmatpush.bf16.msra.mxu0 0
  %340 = vmatpush.bf16.msra.mxu0 0
  %341 = vmatpush.bf16.msra.mxu0 %v320
  %342 = vmatmul.bf16.gmra.mxu0 %v323
  %v343 = vpop.f32.mrf.mxu0
  %v344 = vadd.f32 0.0, %v343
  %v345 = vpop.f32.mrf.mxu0
  %v346 = vadd.f32 0.0, %v345
  %347 = vmatmul.bf16.gmra.mxu0 %v326
  %v348 = vpop.f32.mrf.mxu0
  %v349 = vadd.f32 0.0, %v348
  %v350 = vpop.f32.mrf.mxu0
  %v351 = vadd.f32 0.0, %v350
  %352 = vmatmul.bf16.gmra.mxu0 %v329
  %v353 = vpop.f32.mrf.mxu0
  %v354 = vadd.f32 0.0, %v353
  %v355 = vpop.f32.mrf.mxu0
  %v356 = vadd.f32 0.0, %v355
  %357 = vmatmul.bf16.gmra.mxu0 %v332
  %v358 = vpop.f32.mrf.mxu0
  %v359 = vadd.f32 0.0, %v358
  %v360 = vpop.f32.mrf.mxu0
  %v361 = vadd.f32 0.0, %v360
  %362 = vdwg.mxu0
  %v371 = vunpack.c.l.b16 %v274
  %v372 = vunpack.c.l.b16 %v275
  %v373 = vunpack.c.l.b16 %v276
  %v374 = vunpack.c.l.b16 %v277
  %v375 = vunpack.c.l.b16 %v278
  %v376 = vunpack.c.l.b16 %v279
  %v377 = vunpack.c.l.b16 %v280
  %v378 = vunpack.c.l.b16 %v281
  %v379 = vpack.c.b16 %v372, %v371
  %v380 = vpack.c.b16 %v374, %v373
  %v381 = vpack.c.b16 %v376, %v375
  %v382 = vpack.c.b16 %v378, %v377
  %v385 = vunpack.c.l.b16 %v283
  %v386 = vunpack.c.l.b16 %v284
  %v387 = vpack.c.b16 %v386, %v385
  %v390 = vsel %vm144, %v379, 0
  %v393 = vsel %vm144, %v380, 0
  %v396 = vsel %vm144, %v381, 0
  %v399 = vsel %vm144, %v382, 0
  %401 = vmatpush.bf16.msra.mxu0 0
  %402 = vmatpush.bf16.msra.mxu0 0
  %403 = vmatpush.bf16.msra.mxu0 0
  %404 = vmatpush.bf16.msra.mxu0 0
  %405 = vmatpush.bf16.msra.mxu0 0
  %406 = vmatpush.bf16.msra.mxu0 0
  %407 = vmatpush.bf16.msra.mxu0 0
  %408 = vmatpush.bf16.msra.mxu0 %v387
  %409 = vmatmul.bf16.gmra.mxu0 %v390
  %v410 = vpop.f32.mrf.mxu0
  %v411 = vadd.f32 %v344, %v410
  %v412 = vpop.f32.mrf.mxu0
  %v413 = vadd.f32 %v346, %v412
  %414 = vmatmul.bf16.gmra.mxu0 %v393
  %v415 = vpop.f32.mrf.mxu0
  %v416 = vadd.f32 %v349, %v415
  %v417 = vpop.f32.mrf.mxu0
  %v418 = vadd.f32 %v351, %v417
  %419 = vmatmul.bf16.gmra.mxu0 %v396
  %v420 = vpop.f32.mrf.mxu0
  %v421 = vadd.f32 %v354, %v420
  %v422 = vpop.f32.mrf.mxu0
  %v423 = vadd.f32 %v356, %v422
  %424 = vmatmul.bf16.gmra.mxu0 %v399
  %v425 = vpop.f32.mrf.mxu0
  %v426 = vadd.f32 %v359, %v425
  %v427 = vpop.f32.mrf.mxu0
  %v428 = vadd.f32 %v361, %v427
  %429 = vdwg.mxu0
  %s430 = scalar_lea.vmem %s5, 1
  %v431 = vld [vmem:[%s430] sm:$0x1]
  %v433 = vperm.slane %v431, 0
  %v435 = vadd.f32 %v411, %v433
  %v436 = vadd.f32 %v413, %v433
  %v437 = vadd.f32 %v416, %v433
  %v438 = vadd.f32 %v418, %v433
  %v439 = vadd.f32 %v421, %v433
  %v440 = vadd.f32 %v423, %v433
  %v441 = vadd.f32 %v426, %v433
  %v442 = vadd.f32 %v428, %v433
  %s443 = scalar_lea.vmem [#allocation2], 64
  %444 = vst.msk [vmem:[%s443] sm:$0xff] %vm265, %v435
  %445 = vst.msk [vmem:[%s443 + $0x8] sm:$0xff] %vm265, %v436
  %446 = vst.msk [vmem:[%s443 + $0x10] sm:$0xff] %vm265, %v437
  %447 = vst.msk [vmem:[%s443 + $0x18] sm:$0xff] %vm265, %v438
  %448 = vst.msk [vmem:[%s443 + $0x20] sm:$0xff] %vm265, %v439
  %449 = vst.msk [vmem:[%s443 + $0x28] sm:$0xff] %vm265, %v440
  %450 = vst.msk [vmem:[%s443 + $0x30] sm:$0xff] %vm265, %v441
  %451 = vst.msk [vmem:[%s443 + $0x38] sm:$0xff] %vm265, %v442
  %v452 = vld [vmem:[%s6] sm:$0xf]
  %v453 = vld [vmem:[%s6 + $0x4] sm:$0xf]
  %s454 = scalar_lea.vmem %s6, 8
  %v455 = vld [vmem:[%s454] sm:$0xf]
  %v456 = vld [vmem:[%s454 + $0x4] sm:$0xf]
  %v457 = vld [vmem:[%s7] sm:$0x1]
  %s458 = scalar_lea.vmem %s7, 1
  %v459 = vld [vmem:[%s458] sm:$0x1]
  %v460 = vld [vmem:[#allocation3] sm:$0xff]
  %s461 = scalar_lea.vmem [#allocation3], 8
  %v462 = vld [vmem:[%s461] sm:$0xff]
  %v463 = vld [vmem:[#allocation2] sm:$0xff]
  %s464 = sadd.s32 56, 64
  %s465 = scalar_lea.vmem [#allocation2], %s464
  %v466 = vld [vmem:[%s465] sm:$0xff]
  %v467 = vpack.c.bf16 %v460, %v460
  %v470 = vunpack.c.l.b16 %v452
  %v471 = vunpack.c.l.b16 %v453
  %v472 = vpack.c.b16 %v471, %v470
  %v475 = vsel %vm144, %v467, 0
  %477 = vmatpush.bf16.msra.mxu0 0
  %478 = vmatpush.bf16.msra.mxu0 0
  %479 = vmatpush.bf16.msra.mxu0 0
  %480 = vmatpush.bf16.msra.mxu0 0
  %481 = vmatpush.bf16.msra.mxu0 0
  %482 = vmatpush.bf16.msra.mxu0 0
  %483 = vmatpush.bf16.msra.mxu0 0
  %484 = vmatpush.bf16.msra.mxu0 %v472
  %485 = vmatmul.bf16.gmra.mxu0 %v475
  %v486 = vpop.f32.mrf.mxu0
  %v487 = vadd.f32 0.0, %v486
  %v488 = vpop.f32.mrf.mxu0
  %489 = vdwg.mxu0
  %v490 = vpack.c.bf16 %v462, %v462
  %v493 = vunpack.c.l.b16 %v455
  %v494 = vunpack.c.l.b16 %v456
  %v495 = vpack.c.b16 %v494, %v493
  %v498 = vsel %vm144, %v490, 0
  %500 = vmatpush.bf16.msra.mxu0 0
  %501 = vmatpush.bf16.msra.mxu0 0
  %502 = vmatpush.bf16.msra.mxu0 0
  %503 = vmatpush.bf16.msra.mxu0 0
  %504 = vmatpush.bf16.msra.mxu0 0
  %505 = vmatpush.bf16.msra.mxu0 0
  %506 = vmatpush.bf16.msra.mxu0 0
  %507 = vmatpush.bf16.msra.mxu0 %v495
  %508 = vmatmul.bf16.gmra.mxu0 %v498
  %v509 = vpop.f32.mrf.mxu0
  %v510 = vadd.f32 0.0, %v509
  %v511 = vpop.f32.mrf.mxu0
  %512 = vdwg.mxu0
  %v513 = vadd.f32 %v463, %v487
  %v514 = vxor.u32 %v513, 2147483648
  %v515 = vmul.f32 %v514, 1.442695
  %v516 = vpow.pop %v515
  %v517 = vadd.f32 %v516, 1.0
  %v518 = vrcp.pop %v517
  %v519 = vmul.f32 %v517, %v518
  %v520 = vsub.f32 1.0, %v519
  %v521 = vmul.f32 %v518, %v520
  %v522 = vadd.f32 %v518, %v521
  %vm523 = vweird.f32 %v517
  %vm524 = vweird.f32 %v518
  %vm525 = vmor %vm523, %vm524
  %v526 = vsel %vm525, %v518, %v522
  %v527 = vand.u32 2147483647, %v517
  %vm528 = vcmp.eq.f32.partialorder %v527, 8.507059e+37
  %v529 = vand.u32 %v517, 2147483648
  %v530 = vor.u32 1.1754944e-38, %v529
  %v531 = vsel %vm528, %v530, %v526
  %v532 = vmul.f32 1.0, %v531
  %v534 = vperm.slane %v457, 0
  %535 = vrot.lane.b32.xlu0 %v534, 32
  %v536 = vpop.permute.xlu0 %535
  %v538 = vadd.f32 %v487, %v536
  %540 = vrot.lane.b32.xlu0 %v538, 96
  %v541 = vpop.permute.xlu0 %540
  %v543 = vmul.f32 %v532, %v541
  %545 = vrot.lane.b32.xlu0 %v543, 32
  %v546 = vpop.permute.xlu0 %545
  %v548 = vadd.f32 %v463, %v546
  %v549 = vtanh.pop %v548
  %551 = vrot.lane.b32.xlu0 %v549, 96
  %v552 = vpop.permute.xlu0 %551
  %v554 = vsub.f32 %v460, %v552
  %556 = vrot.lane.b32.xlu0 %v554, 16
  %v557 = vpop.permute.xlu0 %556
  %v559 = vmul.f32 %v532, %v557
  %561 = vrot.lane.b32.xlu0 %v559, 16
  %v562 = vpop.permute.xlu0 %561
  %v564 = vadd.f32 %v549, %v562
  %v565 = vadd.f32 %v466, %v510
  %v566 = vxor.u32 %v565, 2147483648
  %v567 = vmul.f32 %v566, 1.442695
  %v568 = vpow.pop %v567
  %v569 = vadd.f32 %v568, 1.0
  %v570 = vrcp.pop %v569
  %v571 = vmul.f32 %v569, %v570
  %v572 = vsub.f32 1.0, %v571
  %v573 = vmul.f32 %v570, %v572
  %v574 = vadd.f32 %v570, %v573
  %vm575 = vweird.f32 %v569
  %vm576 = vweird.f32 %v570
  %vm577 = vmor %vm575, %vm576
  %v578 = vsel %vm577, %v570, %v574
  %v579 = vand.u32 2147483647, %v569
  %vm580 = vcmp.eq.f32.partialorder %v579, 8.507059e+37
  %v581 = vand.u32 %v569, 2147483648
  %v582 = vor.u32 1.1754944e-38, %v581
  %v583 = vsel %vm580, %v582, %v578
  %v584 = vmul.f32 1.0, %v583
  %v586 = vperm.slane %v459, 0
  %587 = vrot.lane.b32.xlu0 %v586, 32
  %v588 = vpop.permute.xlu0 %587
  %v590 = vadd.f32 %v510, %v588
  %592 = vrot.lane.b32.xlu0 %v590, 96
  %v593 = vpop.permute.xlu0 %592
  %v595 = vmul.f32 %v584, %v593
  %597 = vrot.lane.b32.xlu0 %v595, 32
  %v598 = vpop.permute.xlu0 %597
  %v600 = vadd.f32 %v466, %v598
  %v601 = vtanh.pop %v600
  %603 = vrot.lane.b32.xlu0 %v601, 96
  %v604 = vpop.permute.xlu0 %603
  %v606 = vsub.f32 %v462, %v604
  %608 = vrot.lane.b32.xlu0 %v606, 16
  %v609 = vpop.permute.xlu0 %608
  %v611 = vmul.f32 %v584, %v609
  %613 = vrot.lane.b32.xlu0 %v611, 16
  %v614 = vpop.permute.xlu0 %613
  %v616 = vadd.f32 %v601, %v614
  %v617 = vld [vmem:[%s0] sm:$0xf]
  %v618 = vunpack.c.l.bf16 %v617
  %620 = vrot.lane.b32.xlu0 %v618, 32
  %v621 = vpop.permute.xlu0 %620
  %v623 = vadd.f32 %v564, %v621
  %s624 = scalar_lea.vmem %s78, 28
  %v625 = vld [vmem:[%s624] sm:$0xf]
  %v626 = vunpack.c.l.bf16 %v625
  %628 = vrot.lane.b32.xlu0 %v626, 32
  %v629 = vpop.permute.xlu0 %628
  %v631 = vadd.f32 %v616, %v629
  %v632 = vpack.c.bf16 %v623, %v623
  %634 = vrot.lane.b32.xlu0 %v632, 96
  %v635 = vpop.permute.xlu0 %634
  %vm637 = vcmask 125952
  %638 = vst.msk [vmem:[%s8] sm:$0xf] %vm637, %v635
  %v639 = vpack.c.bf16 %v631, %v631
  %641 = vrot.lane.b32.xlu0 %v639, 96
  %v642 = vpop.permute.xlu0 %641
  %s644 = scalar_lea.vmem %s86, 28
  %645 = vst.msk [vmem:[%s644] sm:$0xf] %vm637, %v642
  %s646 = scalar_lea.vmem [#allocation2], 8
  %v647 = vld [vmem:[%s646] sm:$0xff]
  %s648 = sadd.s32 48, 64
  %s649 = scalar_lea.vmem [#allocation2], %s648
  %v650 = vld [vmem:[%s649] sm:$0xff]
  %v651 = vpack.c.bf16 %v564, %v564
  %653 = vrot.lane.b32.xlu0 %v651, 96
  %v654 = vpop.permute.xlu0 %653
  %v656 = vsel %vm144, %v654, 0
  %658 = vmatpush.bf16.msra.mxu0 0
  %659 = vmatpush.bf16.msra.mxu0 0
  %660 = vmatpush.bf16.msra.mxu0 0
  %661 = vmatpush.bf16.msra.mxu0 0
  %662 = vmatpush.bf16.msra.mxu0 0
  %663 = vmatpush.bf16.msra.mxu0 0
  %664 = vmatpush.bf16.msra.mxu0 0
  %665 = vmatpush.bf16.msra.mxu0 %v472
  %666 = vmatmul.bf16.gmra.mxu0 %v656
  %v667 = vpop.f32.mrf.mxu0
  %v668 = vadd.f32 0.0, %v667
  %v669 = vpop.f32.mrf.mxu0
  %670 = vdwg.mxu0
  %v671 = vpack.c.bf16 %v616, %v616
  %673 = vrot.lane.b32.xlu0 %v671, 96
  %v674 = vpop.permute.xlu0 %673
  %v676 = vsel %vm144, %v674, 0
  %678 = vmatpush.bf16.msra.mxu0 0
  %679 = vmatpush.bf16.msra.mxu0 0
  %680 = vmatpush.bf16.msra.mxu0 0
  %681 = vmatpush.bf16.msra.mxu0 0
  %682 = vmatpush.bf16.msra.mxu0 0
  %683 = vmatpush.bf16.msra.mxu0 0
  %684 = vmatpush.bf16.msra.mxu0 0
  %685 = vmatpush.bf16.msra.mxu0 %v495
  %686 = vmatmul.bf16.gmra.mxu0 %v676
  %v687 = vpop.f32.mrf.mxu0
  %v688 = vadd.f32 0.0, %v687
  %v689 = vpop.f32.mrf.mxu0
  %690 = vdwg.mxu0
  %v691 = vadd.f32 %v647, %v668
  %v692 = vxor.u32 %v691, 2147483648
  %v693 = vmul.f32 %v692, 1.442695
  %v694 = vpow.pop %v693
  %v695 = vadd.f32 %v694, 1.0
  %v696 = vrcp.pop %v695
  %v697 = vmul.f32 %v695, %v696
  %v698 = vsub.f32 1.0, %v697
  %v699 = vmul.f32 %v696, %v698
  %v700 = vadd.f32 %v696, %v699
  %vm701 = vweird.f32 %v695
  %vm702 = vweird.f32 %v696
  %vm703 = vmor %vm701, %vm702
  %v704 = vsel %vm703, %v696, %v700
  %v705 = vand.u32 2147483647, %v695
  %vm706 = vcmp.eq.f32.partialorder %v705, 8.507059e+37
  %v707 = vand.u32 %v695, 2147483648
  %v708 = vor.u32 1.1754944e-38, %v707
  %v709 = vsel %vm706, %v708, %v704
  %v710 = vmul.f32 1.0, %v709
  %v711 = vadd.f32 %v668, %v536
  %713 = vrot.lane.b32.xlu0 %v711, 96
  %v714 = vpop.permute.xlu0 %713
  %v716 = vmul.f32 %v710, %v714
  %718 = vrot.lane.b32.xlu0 %v716, 32
  %v719 = vpop.permute.xlu0 %718
  %v721 = vadd.f32 %v647, %v719
  %v722 = vtanh.pop %v721
  %v723 = vsub.f32 %v564, %v722
  %725 = vrot.lane.b32.xlu0 %v723, 112
  %v726 = vpop.permute.xlu0 %725
  %v728 = vmul.f32 %v710, %v726
  %730 = vrot.lane.b32.xlu0 %v728, 16
  %v731 = vpop.permute.xlu0 %730
  %v733 = vadd.f32 %v722, %v731
  %v734 = vadd.f32 %v650, %v688
  %v735 = vxor.u32 %v734, 2147483648
  %v736 = vmul.f32 %v735, 1.442695
  %v737 = vpow.pop %v736
  %v738 = vadd.f32 %v737, 1.0
  %v739 = vrcp.pop %v738
  %v740 = vmul.f32 %v738, %v739
  %v741 = vsub.f32 1.0, %v740
  %v742 = vmul.f32 %v739, %v741
  %v743 = vadd.f32 %v739, %v742
  %vm744 = vweird.f32 %v738
  %vm745 = vweird.f32 %v739
  %vm746 = vmor %vm744, %vm745
  %v747 = vsel %vm746, %v739, %v743
  %v748 = vand.u32 2147483647, %v738
  %vm749 = vcmp.eq.f32.partialorder %v748, 8.507059e+37
  %v750 = vand.u32 %v738, 2147483648
  %v751 = vor.u32 1.1754944e-38, %v750
  %v752 = vsel %vm749, %v751, %v747
  %v753 = vmul.f32 1.0, %v752
  %v754 = vadd.f32 %v688, %v588
  %756 = vrot.lane.b32.xlu0 %v754, 96
  %v757 = vpop.permute.xlu0 %756
  %v759 = vmul.f32 %v753, %v757
  %761 = vrot.lane.b32.xlu0 %v759, 32
  %v762 = vpop.permute.xlu0 %761
  %v764 = vadd.f32 %v650, %v762
  %v765 = vtanh.pop %v764
  %v766 = vsub.f32 %v616, %v765
  %768 = vrot.lane.b32.xlu0 %v766, 112
  %v769 = vpop.permute.xlu0 %768
  %v771 = vmul.f32 %v753, %v769
  %773 = vrot.lane.b32.xlu0 %v771, 16
  %v774 = vpop.permute.xlu0 %773
  %v776 = vadd.f32 %v765, %v774
  %s777 = scalar_lea.vmem %s0, 4
  %v778 = vld [vmem:[%s777] sm:$0xf]
  %v779 = vunpack.c.l.bf16 %v778
  %781 = vrot.lane.b32.xlu0 %v779, 32
  %v782 = vpop.permute.xlu0 %781
  %v784 = vadd.f32 %v733, %v782
  %s785 = scalar_lea.vmem %s78, 24
  %v786 = vld [vmem:[%s785] sm:$0xf]
  %v787 = vunpack.c.l.bf16 %v786
  %789 = vrot.lane.b32.xlu0 %v787, 32
  %v790 = vpop.permute.xlu0 %789
  %v792 = vadd.f32 %v776, %v790
  %v793 = vpack.c.bf16 %v784, %v784
  %795 = vrot.lane.b32.xlu0 %v793, 96
  %v796 = vpop.permute.xlu0 %795
  %s798 = scalar_lea.vmem %s8, 4
  %799 = vst.msk [vmem:[%s798] sm:$0xf] %vm637, %v796
  %v800 = vpack.c.bf16 %v792, %v792
  %802 = vrot.lane.b32.xlu0 %v800, 96
  %v803 = vpop.permute.xlu0 %802
  %s805 = scalar_lea.vmem %s86, 24
  %806 = vst.msk [vmem:[%s805] sm:$0xf] %vm637, %v803
  %s807 = scalar_lea.vmem [#allocation2], 16
  %v808 = vld [vmem:[%s807] sm:$0xff]
  %s809 = sadd.s32 40, 64
  %s810 = scalar_lea.vmem [#allocation2], %s809
  %v811 = vld [vmem:[%s810] sm:$0xff]
  %v812 = vpack.c.bf16 %v733, %v733
  %814 = vrot.lane.b32.xlu0 %v812, 96
  %v815 = vpop.permute.xlu0 %814
  %v817 = vsel %vm144, %v815, 0
  %819 = vmatpush.bf16.msra.mxu0 0
  %820 = vmatpush.bf16.msra.mxu0 0
  %821 = vmatpush.bf16.msra.mxu0 0
  %822 = vmatpush.bf16.msra.mxu0 0
  %823 = vmatpush.bf16.msra.mxu0 0
  %824 = vmatpush.bf16.msra.mxu0 0
  %825 = vmatpush.bf16.msra.mxu0 0
  %826 = vmatpush.bf16.msra.mxu0 %v472
  %827 = vmatmul.bf16.gmra.mxu0 %v817
  %v828 = vpop.f32.mrf.mxu0
  %v829 = vadd.f32 0.0, %v828
  %v830 = vpop.f32.mrf.mxu0
  %831 = vdwg.mxu0
  %v832 = vpack.c.bf16 %v776, %v776
  %834 = vrot.lane.b32.xlu0 %v832, 96
  %v835 = vpop.permute.xlu0 %834
  %v837 = vsel %vm144, %v835, 0
  %839 = vmatpush.bf16.msra.mxu0 0
  %840 = vmatpush.bf16.msra.mxu0 0
  %841 = vmatpush.bf16.msra.mxu0 0
  %842 = vmatpush.bf16.msra.mxu0 0
  %843 = vmatpush.bf16.msra.mxu0 0
  %844 = vmatpush.bf16.msra.mxu0 0
  %845 = vmatpush.bf16.msra.mxu0 0
  %846 = vmatpush.bf16.msra.mxu0 %v495
  %847 = vmatmul.bf16.gmra.mxu0 %v837
  %v848 = vpop.f32.mrf.mxu0
  %v849 = vadd.f32 0.0, %v848
  %v850 = vpop.f32.mrf.mxu0
  %851 = vdwg.mxu0
  %v852 = vadd.f32 %v808, %v829
  %v853 = vxor.u32 %v852, 2147483648
  %v854 = vmul.f32 %v853, 1.442695
  %v855 = vpow.pop %v854
  %v856 = vadd.f32 %v855, 1.0
  %v857 = vrcp.pop %v856
  %v858 = vmul.f32 %v856, %v857
  %v859 = vsub.f32 1.0, %v858
  %v860 = vmul.f32 %v857, %v859
  %v861 = vadd.f32 %v857, %v860
  %vm862 = vweird.f32 %v856
  %vm863 = vweird.f32 %v857
  %vm864 = vmor %vm862, %vm863
  %v865 = vsel %vm864, %v857, %v861
  %v866 = vand.u32 2147483647, %v856
  %vm867 = vcmp.eq.f32.partialorder %v866, 8.507059e+37
  %v868 = vand.u32 %v856, 2147483648
  %v869 = vor.u32 1.1754944e-38, %v868
  %v870 = vsel %vm867, %v869, %v865
  %v871 = vmul.f32 1.0, %v870
  %v872 = vadd.f32 %v829, %v536
  %874 = vrot.lane.b32.xlu0 %v872, 96
  %v875 = vpop.permute.xlu0 %874
  %v877 = vmul.f32 %v871, %v875
  %879 = vrot.lane.b32.xlu0 %v877, 32
  %v880 = vpop.permute.xlu0 %879
  %v882 = vadd.f32 %v808, %v880
  %v883 = vtanh.pop %v882
  %v884 = vsub.f32 %v733, %v883
  %886 = vrot.lane.b32.xlu0 %v884, 112
  %v887 = vpop.permute.xlu0 %886
  %v889 = vmul.f32 %v871, %v887
  %891 = vrot.lane.b32.xlu0 %v889, 16
  %v892 = vpop.permute.xlu0 %891
  %v894 = vadd.f32 %v883, %v892
  %v895 = vadd.f32 %v811, %v849
  %v896 = vxor.u32 %v895, 2147483648
  %v897 = vmul.f32 %v896, 1.442695
  %v898 = vpow.pop %v897
  %v899 = vadd.f32 %v898, 1.0
  %v900 = vrcp.pop %v899
  %v901 = vmul.f32 %v899, %v900
  %v902 = vsub.f32 1.0, %v901
  %v903 = vmul.f32 %v900, %v902
  %v904 = vadd.f32 %v900, %v903
  %vm905 = vweird.f32 %v899
  %vm906 = vweird.f32 %v900
  %vm907 = vmor %vm905, %vm906
  %v908 = vsel %vm907, %v900, %v904
  %v909 = vand.u32 2147483647, %v899
  %vm910 = vcmp.eq.f32.partialorder %v909, 8.507059e+37
  %v911 = vand.u32 %v899, 2147483648
  %v912 = vor.u32 1.1754944e-38, %v911
  %v913 = vsel %vm910, %v912, %v908
  %v914 = vmul.f32 1.0, %v913
  %v915 = vadd.f32 %v849, %v588
  %917 = vrot.lane.b32.xlu0 %v915, 96
  %v918 = vpop.permute.xlu0 %917
  %v920 = vmul.f32 %v914, %v918
  %922 = vrot.lane.b32.xlu0 %v920, 32
  %v923 = vpop.permute.xlu0 %922
  %v925 = vadd.f32 %v811, %v923
  %v926 = vtanh.pop %v925
  %v927 = vsub.f32 %v776, %v926
  %929 = vrot.lane.b32.xlu0 %v927, 112
  %v930 = vpop.permute.xlu0 %929
  %v932 = vmul.f32 %v914, %v930
  %934 = vrot.lane.b32.xlu0 %v932, 16
  %v935 = vpop.permute.xlu0 %934
  %v937 = vadd.f32 %v926, %v935
  %s938 = scalar_lea.vmem %s0, 8
  %v939 = vld [vmem:[%s938] sm:$0xf]
  %v940 = vunpack.c.l.bf16 %v939
  %942 = vrot.lane.b32.xlu0 %v940, 32
  %v943 = vpop.permute.xlu0 %942
  %v945 = vadd.f32 %v894, %v943
  %s946 = scalar_lea.vmem %s78, 20
  %v947 = vld [vmem:[%s946] sm:$0xf]
  %v948 = vunpack.c.l.bf16 %v947
  %950 = vrot.lane.b32.xlu0 %v948, 32
  %v951 = vpop.permute.xlu0 %950
  %v953 = vadd.f32 %v937, %v951
  %v954 = vpack.c.bf16 %v945, %v945
  %956 = vrot.lane.b32.xlu0 %v954, 96
  %v957 = vpop.permute.xlu0 %956
  %s959 = scalar_lea.vmem %s8, 8
  %960 = vst.msk [vmem:[%s959] sm:$0xf] %vm637, %v957
  %v961 = vpack.c.bf16 %v953, %v953
  %963 = vrot.lane.b32.xlu0 %v961, 96
  %v964 = vpop.permute.xlu0 %963
  %s966 = scalar_lea.vmem %s86, 20
  %967 = vst.msk [vmem:[%s966] sm:$0xf] %vm637, %v964
  %s968 = scalar_lea.vmem [#allocation2], 24
  %v969 = vld [vmem:[%s968] sm:$0xff]
  %s970 = sadd.s32 32, 64
  %s971 = scalar_lea.vmem [#allocation2], %s970
  %v972 = vld [vmem:[%s971] sm:$0xff]
  %v973 = vpack.c.bf16 %v894, %v894
  %975 = vrot.lane.b32.xlu0 %v973, 96
  %v976 = vpop.permute.xlu0 %975
  %v978 = vsel %vm144, %v976, 0
  %980 = vmatpush.bf16.msra.mxu0 0
  %981 = vmatpush.bf16.msra.mxu0 0
  %982 = vmatpush.bf16.msra.mxu0 0
  %983 = vmatpush.bf16.msra.mxu0 0
  %984 = vmatpush.bf16.msra.mxu0 0
  %985 = vmatpush.bf16.msra.mxu0 0
  %986 = vmatpush.bf16.msra.mxu0 0
  %987 = vmatpush.bf16.msra.mxu0 %v472
  %988 = vmatmul.bf16.gmra.mxu0 %v978
  %v989 = vpop.f32.mrf.mxu0
  %v990 = vadd.f32 0.0, %v989
  %v991 = vpop.f32.mrf.mxu0
  %992 = vdwg.mxu0
  %v993 = vpack.c.bf16 %v937, %v937
  %995 = vrot.lane.b32.xlu0 %v993, 96
  %v996 = vpop.permute.xlu0 %995
  %v998 = vsel %vm144, %v996, 0
  %1000 = vmatpush.bf16.msra.mxu0 0
  %1001 = vmatpush.bf16.msra.mxu0 0
  %1002 = vmatpush.bf16.msra.mxu0 0
  %1003 = vmatpush.bf16.msra.mxu0 0
  %1004 = vmatpush.bf16.msra.mxu0 0
  %1005 = vmatpush.bf16.msra.mxu0 0
  %1006 = vmatpush.bf16.msra.mxu0 0
  %1007 = vmatpush.bf16.msra.mxu0 %v495
  %1008 = vmatmul.bf16.gmra.mxu0 %v998
  %v1009 = vpop.f32.mrf.mxu0
  %v1010 = vadd.f32 0.0, %v1009
  %v1011 = vpop.f32.mrf.mxu0
  %1012 = vdwg.mxu0
  %v1013 = vadd.f32 %v969, %v990
  %v1014 = vxor.u32 %v1013, 2147483648
  %v1015 = vmul.f32 %v1014, 1.442695
  %v1016 = vpow.pop %v1015
  %v1017 = vadd.f32 %v1016, 1.0
  %v1018 = vrcp.pop %v1017
  %v1019 = vmul.f32 %v1017, %v1018
  %v1020 = vsub.f32 1.0, %v1019
  %v1021 = vmul.f32 %v1018, %v1020
  %v1022 = vadd.f32 %v1018, %v1021
  %vm1023 = vweird.f32 %v1017
  %vm1024 = vweird.f32 %v1018
  %vm1025 = vmor %vm1023, %vm1024
  %v1026 = vsel %vm1025, %v1018, %v1022
  %v1027 = vand.u32 2147483647, %v1017
  %vm1028 = vcmp.eq.f32.partialorder %v1027, 8.507059e+37
  %v1029 = vand.u32 %v1017, 2147483648
  %v1030 = vor.u32 1.1754944e-38, %v1029
  %v1031 = vsel %vm1028, %v1030, %v1026
  %v1032 = vmul.f32 1.0, %v1031
  %v1033 = vadd.f32 %v990, %v536
  %1035 = vrot.lane.b32.xlu0 %v1033, 96
  %v1036 = vpop.permute.xlu0 %1035
  %v1038 = vmul.f32 %v1032, %v1036
  %1040 = vrot.lane.b32.xlu0 %v1038, 32
  %v1041 = vpop.permute.xlu0 %1040
  %v1043 = vadd.f32 %v969, %v1041
  %v1044 = vtanh.pop %v1043
  %v1045 = vsub.f32 %v894, %v1044
  %1047 = vrot.lane.b32.xlu0 %v1045, 112
  %v1048 = vpop.permute.xlu0 %1047
  %v1050 = vmul.f32 %v1032, %v1048
  %1052 = vrot.lane.b32.xlu0 %v1050, 16
  %v1053 = vpop.permute.xlu0 %1052
  %v1055 = vadd.f32 %v1044, %v1053
  %v1056 = vadd.f32 %v972, %v1010
  %v1057 = vxor.u32 %v1056, 2147483648
  %v1058 = vmul.f32 %v1057, 1.442695
  %v1059 = vpow.pop %v1058
  %v1060 = vadd.f32 %v1059, 1.0
  %v1061 = vrcp.pop %v1060
  %v1062 = vmul.f32 %v1060, %v1061
  %v1063 = vsub.f32 1.0, %v1062
  %v1064 = vmul.f32 %v1061, %v1063
  %v1065 = vadd.f32 %v1061, %v1064
  %vm1066 = vweird.f32 %v1060
  %vm1067 = vweird.f32 %v1061
  %vm1068 = vmor %vm1066, %vm1067
  %v1069 = vsel %vm1068, %v1061, %v1065
  %v1070 = vand.u32 2147483647, %v1060
  %vm1071 = vcmp.eq.f32.partialorder %v1070, 8.507059e+37
  %v1072 = vand.u32 %v1060, 2147483648
  %v1073 = vor.u32 1.1754944e-38, %v1072
  %v1074 = vsel %vm1071, %v1073, %v1069
  %v1075 = vmul.f32 1.0, %v1074
  %v1076 = vadd.f32 %v1010, %v588
  %1078 = vrot.lane.b32.xlu0 %v1076, 96
  %v1079 = vpop.permute.xlu0 %1078
  %v1081 = vmul.f32 %v1075, %v1079
  %1083 = vrot.lane.b32.xlu0 %v1081, 32
  %v1084 = vpop.permute.xlu0 %1083
  %v1086 = vadd.f32 %v972, %v1084
  %v1087 = vtanh.pop %v1086
  %v1088 = vsub.f32 %v937, %v1087
  %1090 = vrot.lane.b32.xlu0 %v1088, 112
  %v1091 = vpop.permute.xlu0 %1090
  %v1093 = vmul.f32 %v1075, %v1091
  %1095 = vrot.lane.b32.xlu0 %v1093, 16
  %v1096 = vpop.permute.xlu0 %1095
  %v1098 = vadd.f32 %v1087, %v1096
  %s1099 = scalar_lea.vmem %s0, 12
  %v1100 = vld [vmem:[%s1099] sm:$0xf]
  %v1101 = vunpack.c.l.bf16 %v1100
  %1103 = vrot.lane.b32.xlu0 %v1101, 32
  %v1104 = vpop.permute.xlu0 %1103
  %v1106 = vadd.f32 %v1055, %v1104
  %s1107 = scalar_lea.vmem %s78, 16
  %v1108 = vld [vmem:[%s1107] sm:$0xf]
  %v1109 = vunpack.c.l.bf16 %v1108
  %1111 = vrot.lane.b32.xlu0 %v1109, 32
  %v1112 = vpop.permute.xlu0 %1111
  %v1114 = vadd.f32 %v1098, %v1112
  %v1115 = vpack.c.bf16 %v1106, %v1106
  %1117 = vrot.lane.b32.xlu0 %v1115, 96
  %v1118 = vpop.permute.xlu0 %1117
  %s1120 = scalar_lea.vmem %s8, 12
  %1121 = vst.msk [vmem:[%s1120] sm:$0xf] %vm637, %v1118
  %v1122 = vpack.c.bf16 %v1114, %v1114
  %1124 = vrot.lane.b32.xlu0 %v1122, 96
  %v1125 = vpop.permute.xlu0 %1124
  %s1127 = scalar_lea.vmem %s86, 16
  %1128 = vst.msk [vmem:[%s1127] sm:$0xf] %vm637, %v1125
  %s1129 = scalar_lea.vmem [#allocation2], 32
  %v1130 = vld [vmem:[%s1129] sm:$0xff]
  %s1131 = sadd.s32 24, 64
  %s1132 = scalar_lea.vmem [#allocation2], %s1131
  %v1133 = vld [vmem:[%s1132] sm:$0xff]
  %v1134 = vpack.c.bf16 %v1055, %v1055
  %1136 = vrot.lane.b32.xlu0 %v1134, 96
  %v1137 = vpop.permute.xlu0 %1136
  %v1139 = vsel %vm144, %v1137, 0
  %1141 = vmatpush.bf16.msra.mxu0 0
  %1142 = vmatpush.bf16.msra.mxu0 0
  %1143 = vmatpush.bf16.msra.mxu0 0
  %1144 = vmatpush.bf16.msra.mxu0 0
  %1145 = vmatpush.bf16.msra.mxu0 0
  %1146 = vmatpush.bf16.msra.mxu0 0
  %1147 = vmatpush.bf16.msra.mxu0 0
  %1148 = vmatpush.bf16.msra.mxu0 %v472
  %1149 = vmatmul.bf16.gmra.mxu0 %v1139
  %v1150 = vpop.f32.mrf.mxu0
  %v1151 = vadd.f32 0.0, %v1150
  %v1152 = vpop.f32.mrf.mxu0
  %1153 = vdwg.mxu0
  %v1154 = vpack.c.bf16 %v1098, %v1098
  %1156 = vrot.lane.b32.xlu0 %v1154, 96
  %v1157 = vpop.permute.xlu0 %1156
  %v1159 = vsel %vm144, %v1157, 0
  %1161 = vmatpush.bf16.msra.mxu0 0
  %1162 = vmatpush.bf16.msra.mxu0 0
  %1163 = vmatpush.bf16.msra.mxu0 0
  %1164 = vmatpush.bf16.msra.mxu0 0
  %1165 = vmatpush.bf16.msra.mxu0 0
  %1166 = vmatpush.bf16.msra.mxu0 0
  %1167 = vmatpush.bf16.msra.mxu0 0
  %1168 = vmatpush.bf16.msra.mxu0 %v495
  %1169 = vmatmul.bf16.gmra.mxu0 %v1159
  %v1170 = vpop.f32.mrf.mxu0
  %v1171 = vadd.f32 0.0, %v1170
  %v1172 = vpop.f32.mrf.mxu0
  %1173 = vdwg.mxu0
  %v1174 = vadd.f32 %v1130, %v1151
  %v1175 = vxor.u32 %v1174, 2147483648
  %v1176 = vmul.f32 %v1175, 1.442695
  %v1177 = vpow.pop %v1176
  %v1178 = vadd.f32 %v1177, 1.0
  %v1179 = vrcp.pop %v1178
  %v1180 = vmul.f32 %v1178, %v1179
  %v1181 = vsub.f32 1.0, %v1180
  %v1182 = vmul.f32 %v1179, %v1181
  %v1183 = vadd.f32 %v1179, %v1182
  %vm1184 = vweird.f32 %v1178
  %vm1185 = vweird.f32 %v1179
  %vm1186 = vmor %vm1184, %vm1185
  %v1187 = vsel %vm1186, %v1179, %v1183
  %v1188 = vand.u32 2147483647, %v1178
  %vm1189 = vcmp.eq.f32.partialorder %v1188, 8.507059e+37
  %v1190 = vand.u32 %v1178, 2147483648
  %v1191 = vor.u32 1.1754944e-38, %v1190
  %v1192 = vsel %vm1189, %v1191, %v1187
  %v1193 = vmul.f32 1.0, %v1192
  %v1194 = vadd.f32 %v1151, %v536
  %1196 = vrot.lane.b32.xlu0 %v1194, 96
  %v1197 = vpop.permute.xlu0 %1196
  %v1199 = vmul.f32 %v1193, %v1197
  %1201 = vrot.lane.b32.xlu0 %v1199, 32
  %v1202 = vpop.permute.xlu0 %1201
  %v1204 = vadd.f32 %v1130, %v1202
  %v1205 = vtanh.pop %v1204
  %v1206 = vsub.f32 %v1055, %v1205
  %1208 = vrot.lane.b32.xlu0 %v1206, 112
  %v1209 = vpop.permute.xlu0 %1208
  %v1211 = vmul.f32 %v1193, %v1209
  %1213 = vrot.lane.b32.xlu0 %v1211, 16
  %v1214 = vpop.permute.xlu0 %1213
  %v1216 = vadd.f32 %v1205, %v1214
  %v1217 = vadd.f32 %v1133, %v1171
  %v1218 = vxor.u32 %v1217, 2147483648
  %v1219 = vmul.f32 %v1218, 1.442695
  %v1220 = vpow.pop %v1219
  %v1221 = vadd.f32 %v1220, 1.0
  %v1222 = vrcp.pop %v1221
  %v1223 = vmul.f32 %v1221, %v1222
  %v1224 = vsub.f32 1.0, %v1223
  %v1225 = vmul.f32 %v1222, %v1224
  %v1226 = vadd.f32 %v1222, %v1225
  %vm1227 = vweird.f32 %v1221
  %vm1228 = vweird.f32 %v1222
  %vm1229 = vmor %vm1227, %vm1228
  %v1230 = vsel %vm1229, %v1222, %v1226
  %v1231 = vand.u32 2147483647, %v1221
  %vm1232 = vcmp.eq.f32.partialorder %v1231, 8.507059e+37
  %v1233 = vand.u32 %v1221, 2147483648
  %v1234 = vor.u32 1.1754944e-38, %v1233
  %v1235 = vsel %vm1232, %v1234, %v1230
  %v1236 = vmul.f32 1.0, %v1235
  %v1237 = vadd.f32 %v1171, %v588
  %1239 = vrot.lane.b32.xlu0 %v1237, 96
  %v1240 = vpop.permute.xlu0 %1239
  %v1242 = vmul.f32 %v1236, %v1240
  %1244 = vrot.lane.b32.xlu0 %v1242, 32
  %v1245 = vpop.permute.xlu0 %1244
  %v1247 = vadd.f32 %v1133, %v1245
  %v1248 = vtanh.pop %v1247
  %v1249 = vsub.f32 %v1098, %v1248
  %1251 = vrot.lane.b32.xlu0 %v1249, 112
  %v1252 = vpop.permute.xlu0 %1251
  %v1254 = vmul.f32 %v1236, %v1252
  %1256 = vrot.lane.b32.xlu0 %v1254, 16
  %v1257 = vpop.permute.xlu0 %1256
  %v1259 = vadd.f32 %v1248, %v1257
  %s1260 = scalar_lea.vmem %s0, 16
  %v1261 = vld [vmem:[%s1260] sm:$0xf]
  %v1262 = vunpack.c.l.bf16 %v1261
  %1264 = vrot.lane.b32.xlu0 %v1262, 32
  %v1265 = vpop.permute.xlu0 %1264
  %v1267 = vadd.f32 %v1216, %v1265
  %s1268 = scalar_lea.vmem %s78, 12
  %v1269 = vld [vmem:[%s1268] sm:$0xf]
  %v1270 = vunpack.c.l.bf16 %v1269
  %1272 = vrot.lane.b32.xlu0 %v1270, 32
  %v1273 = vpop.permute.xlu0 %1272
  %v1275 = vadd.f32 %v1259, %v1273
  %v1276 = vpack.c.bf16 %v1267, %v1267
  %1278 = vrot.lane.b32.xlu0 %v1276, 96
  %v1279 = vpop.permute.xlu0 %1278
  %s1281 = scalar_lea.vmem %s8, 16
  %1282 = vst.msk [vmem:[%s1281] sm:$0xf] %vm637, %v1279
  %v1283 = vpack.c.bf16 %v1275, %v1275
  %1285 = vrot.lane.b32.xlu0 %v1283, 96
  %v1286 = vpop.permute.xlu0 %1285
  %s1288 = scalar_lea.vmem %s86, 12
  %1289 = vst.msk [vmem:[%s1288] sm:$0xf] %vm637, %v1286
  %s1290 = scalar_lea.vmem [#allocation2], 40
  %v1291 = vld [vmem:[%s1290] sm:$0xff]
  %s1292 = sadd.s32 16, 64
  %s1293 = scalar_lea.vmem [#allocation2], %s1292
  %v1294 = vld [vmem:[%s1293] sm:$0xff]
  %v1295 = vpack.c.bf16 %v1216, %v1216
  %1297 = vrot.lane.b32.xlu0 %v1295, 96
  %v1298 = vpop.permute.xlu0 %1297
  %v1300 = vsel %vm144, %v1298, 0
  %1302 = vmatpush.bf16.msra.mxu0 0
  %1303 = vmatpush.bf16.msra.mxu0 0
  %1304 = vmatpush.bf16.msra.mxu0 0
  %1305 = vmatpush.bf16.msra.mxu0 0
  %1306 = vmatpush.bf16.msra.mxu0 0
  %1307 = vmatpush.bf16.msra.mxu0 0
  %1308 = vmatpush.bf16.msra.mxu0 0
  %1309 = vmatpush.bf16.msra.mxu0 %v472
  %1310 = vmatmul.bf16.gmra.mxu0 %v1300
  %v1311 = vpop.f32.mrf.mxu0
  %v1312 = vadd.f32 0.0, %v1311
  %v1313 = vpop.f32.mrf.mxu0
  %1314 = vdwg.mxu0
  %v1315 = vpack.c.bf16 %v1259, %v1259
  %1317 = vrot.lane.b32.xlu0 %v1315, 96
  %v1318 = vpop.permute.xlu0 %1317
  %v1320 = vsel %vm144, %v1318, 0
  %1322 = vmatpush.bf16.msra.mxu0 0
  %1323 = vmatpush.bf16.msra.mxu0 0
  %1324 = vmatpush.bf16.msra.mxu0 0
  %1325 = vmatpush.bf16.msra.mxu0 0
  %1326 = vmatpush.bf16.msra.mxu0 0
  %1327 = vmatpush.bf16.msra.mxu0 0
  %1328 = vmatpush.bf16.msra.mxu0 0
  %1329 = vmatpush.bf16.msra.mxu0 %v495
  %1330 = vmatmul.bf16.gmra.mxu0 %v1320
  %v1331 = vpop.f32.mrf.mxu0
  %v1332 = vadd.f32 0.0, %v1331
  %v1333 = vpop.f32.mrf.mxu0
  %1334 = vdwg.mxu0
  %v1335 = vadd.f32 %v1291, %v1312
  %v1336 = vxor.u32 %v1335, 2147483648
  %v1337 = vmul.f32 %v1336, 1.442695
  %v1338 = vpow.pop %v1337
  %v1339 = vadd.f32 %v1338, 1.0
  %v1340 = vrcp.pop %v1339
  %v1341 = vmul.f32 %v1339, %v1340
  %v1342 = vsub.f32 1.0, %v1341
  %v1343 = vmul.f32 %v1340, %v1342
  %v1344 = vadd.f32 %v1340, %v1343
  %vm1345 = vweird.f32 %v1339
  %vm1346 = vweird.f32 %v1340
  %vm1347 = vmor %vm1345, %vm1346
  %v1348 = vsel %vm1347, %v1340, %v1344
  %v1349 = vand.u32 2147483647, %v1339
  %vm1350 = vcmp.eq.f32.partialorder %v1349, 8.507059e+37
  %v1351 = vand.u32 %v1339, 2147483648
  %v1352 = vor.u32 1.1754944e-38, %v1351
  %v1353 = vsel %vm1350, %v1352, %v1348
  %v1354 = vmul.f32 1.0, %v1353
  %v1355 = vadd.f32 %v1312, %v536
  %1357 = vrot.lane.b32.xlu0 %v1355, 96
  %v1358 = vpop.permute.xlu0 %1357
  %v1360 = vmul.f32 %v1354, %v1358
  %1362 = vrot.lane.b32.xlu0 %v1360, 32
  %v1363 = vpop.permute.xlu0 %1362
  %v1365 = vadd.f32 %v1291, %v1363
  %v1366 = vtanh.pop %v1365
  %v1367 = vsub.f32 %v1216, %v1366
  %1369 = vrot.lane.b32.xlu0 %v1367, 112
  %v1370 = vpop.permute.xlu0 %1369
  %v1372 = vmul.f32 %v1354, %v1370
  %1374 = vrot.lane.b32.xlu0 %v1372, 16
  %v1375 = vpop.permute.xlu0 %1374
  %v1377 = vadd.f32 %v1366, %v1375
  %v1378 = vadd.f32 %v1294, %v1332
  %v1379 = vxor.u32 %v1378, 2147483648
  %v1380 = vmul.f32 %v1379, 1.442695
  %v1381 = vpow.pop %v1380
  %v1382 = vadd.f32 %v1381, 1.0
  %v1383 = vrcp.pop %v1382
  %v1384 = vmul.f32 %v1382, %v1383
  %v1385 = vsub.f32 1.0, %v1384
  %v1386 = vmul.f32 %v1383, %v1385
  %v1387 = vadd.f32 %v1383, %v1386
  %vm1388 = vweird.f32 %v1382
  %vm1389 = vweird.f32 %v1383
  %vm1390 = vmor %vm1388, %vm1389
  %v1391 = vsel %vm1390, %v1383, %v1387
  %v1392 = vand.u32 2147483647, %v1382
  %vm1393 = vcmp.eq.f32.partialorder %v1392, 8.507059e+37
  %v1394 = vand.u32 %v1382, 2147483648
  %v1395 = vor.u32 1.1754944e-38, %v1394
  %v1396 = vsel %vm1393, %v1395, %v1391
  %v1397 = vmul.f32 1.0, %v1396
  %v1398 = vadd.f32 %v1332, %v588
  %1400 = vrot.lane.b32.xlu0 %v1398, 96
  %v1401 = vpop.permute.xlu0 %1400
  %v1403 = vmul.f32 %v1397, %v1401
  %1405 = vrot.lane.b32.xlu0 %v1403, 32
  %v1406 = vpop.permute.xlu0 %1405
  %v1408 = vadd.f32 %v1294, %v1406
  %v1409 = vtanh.pop %v1408
  %v1410 = vsub.f32 %v1259, %v1409
  %1412 = vrot.lane.b32.xlu0 %v1410, 112
  %v1413 = vpop.permute.xlu0 %1412
  %v1415 = vmul.f32 %v1397, %v1413
  %1417 = vrot.lane.b32.xlu0 %v1415, 16
  %v1418 = vpop.permute.xlu0 %1417
  %v1420 = vadd.f32 %v1409, %v1418
  %s1421 = scalar_lea.vmem %s0, 20
  %v1422 = vld [vmem:[%s1421] sm:$0xf]
  %v1423 = vunpack.c.l.bf16 %v1422
  %1425 = vrot.lane.b32.xlu0 %v1423, 32
  %v1426 = vpop.permute.xlu0 %1425
  %v1428 = vadd.f32 %v1377, %v1426
  %s1429 = scalar_lea.vmem %s78, 8
  %v1430 = vld [vmem:[%s1429] sm:$0xf]
  %v1431 = vunpack.c.l.bf16 %v1430
  %1433 = vrot.lane.b32.xlu0 %v1431, 32
  %v1434 = vpop.permute.xlu0 %1433
  %v1436 = vadd.f32 %v1420, %v1434
  %v1437 = vpack.c.bf16 %v1428, %v1428
  %1439 = vrot.lane.b32.xlu0 %v1437, 96
  %v1440 = vpop.permute.xlu0 %1439
  %s1442 = scalar_lea.vmem %s8, 20
  %1443 = vst.msk [vmem:[%s1442] sm:$0xf] %vm637, %v1440
  %v1444 = vpack.c.bf16 %v1436, %v1436
  %1446 = vrot.lane.b32.xlu0 %v1444, 96
  %v1447 = vpop.permute.xlu0 %1446
  %s1449 = scalar_lea.vmem %s86, 8
  %1450 = vst.msk [vmem:[%s1449] sm:$0xf] %vm637, %v1447
  %s1451 = scalar_lea.vmem [#allocation2], 48
  %v1452 = vld [vmem:[%s1451] sm:$0xff]
  %s1453 = sadd.s32 8, 64
  %s1454 = scalar_lea.vmem [#allocation2], %s1453
  %v1455 = vld [vmem:[%s1454] sm:$0xff]
  %v1456 = vpack.c.bf16 %v1377, %v1377
  %1458 = vrot.lane.b32.xlu0 %v1456, 96
  %v1459 = vpop.permute.xlu0 %1458
  %v1461 = vsel %vm144, %v1459, 0
  %1463 = vmatpush.bf16.msra.mxu0 0
  %1464 = vmatpush.bf16.msra.mxu0 0
  %1465 = vmatpush.bf16.msra.mxu0 0
  %1466 = vmatpush.bf16.msra.mxu0 0
  %1467 = vmatpush.bf16.msra.mxu0 0
  %1468 = vmatpush.bf16.msra.mxu0 0
  %1469 = vmatpush.bf16.msra.mxu0 0
  %1470 = vmatpush.bf16.msra.mxu0 %v472
  %1471 = vmatmul.bf16.gmra.mxu0 %v1461
  %v1472 = vpop.f32.mrf.mxu0
  %v1473 = vadd.f32 0.0, %v1472
  %v1474 = vpop.f32.mrf.mxu0
  %1475 = vdwg.mxu0
  %v1476 = vpack.c.bf16 %v1420, %v1420
  %1478 = vrot.lane.b32.xlu0 %v1476, 96
  %v1479 = vpop.permute.xlu0 %1478
  %v1481 = vsel %vm144, %v1479, 0
  %1483 = vmatpush.bf16.msra.mxu0 0
  %1484 = vmatpush.bf16.msra.mxu0 0
  %1485 = vmatpush.bf16.msra.mxu0 0
  %1486 = vmatpush.bf16.msra.mxu0 0
  %1487 = vmatpush.bf16.msra.mxu0 0
  %1488 = vmatpush.bf16.msra.mxu0 0
  %1489 = vmatpush.bf16.msra.mxu0 0
  %1490 = vmatpush.bf16.msra.mxu0 %v495
  %1491 = vmatmul.bf16.gmra.mxu0 %v1481
  %v1492 = vpop.f32.mrf.mxu0
  %v1493 = vadd.f32 0.0, %v1492
  %v1494 = vpop.f32.mrf.mxu0
  %1495 = vdwg.mxu0
  %v1496 = vadd.f32 %v1452, %v1473
  %v1497 = vxor.u32 %v1496, 2147483648
  %v1498 = vmul.f32 %v1497, 1.442695
  %v1499 = vpow.pop %v1498
  %v1500 = vadd.f32 %v1499, 1.0
  %v1501 = vrcp.pop %v1500
  %v1502 = vmul.f32 %v1500, %v1501
  %v1503 = vsub.f32 1.0, %v1502
  %v1504 = vmul.f32 %v1501, %v1503
  %v1505 = vadd.f32 %v1501, %v1504
  %vm1506 = vweird.f32 %v1500
  %vm1507 = vweird.f32 %v1501
  %vm1508 = vmor %vm1506, %vm1507
  %v1509 = vsel %vm1508, %v1501, %v1505
  %v1510 = vand.u32 2147483647, %v1500
  %vm1511 = vcmp.eq.f32.partialorder %v1510, 8.507059e+37
  %v1512 = vand.u32 %v1500, 2147483648
  %v1513 = vor.u32 1.1754944e-38, %v1512
  %v1514 = vsel %vm1511, %v1513, %v1509
  %v1515 = vmul.f32 1.0, %v1514
  %v1516 = vadd.f32 %v1473, %v536
  %1518 = vrot.lane.b32.xlu0 %v1516, 96
  %v1519 = vpop.permute.xlu0 %1518
  %v1521 = vmul.f32 %v1515, %v1519
  %1523 = vrot.lane.b32.xlu0 %v1521, 32
  %v1524 = vpop.permute.xlu0 %1523
  %v1526 = vadd.f32 %v1452, %v1524
  %v1527 = vtanh.pop %v1526
  %v1528 = vsub.f32 %v1377, %v1527
  %1530 = vrot.lane.b32.xlu0 %v1528, 112
  %v1531 = vpop.permute.xlu0 %1530
  %v1533 = vmul.f32 %v1515, %v1531
  %1535 = vrot.lane.b32.xlu0 %v1533, 16
  %v1536 = vpop.permute.xlu0 %1535
  %v1538 = vadd.f32 %v1527, %v1536
  %v1539 = vadd.f32 %v1455, %v1493
  %v1540 = vxor.u32 %v1539, 2147483648
  %v1541 = vmul.f32 %v1540, 1.442695
  %v1542 = vpow.pop %v1541
  %v1543 = vadd.f32 %v1542, 1.0
  %v1544 = vrcp.pop %v1543
  %v1545 = vmul.f32 %v1543, %v1544
  %v1546 = vsub.f32 1.0, %v1545
  %v1547 = vmul.f32 %v1544, %v1546
  %v1548 = vadd.f32 %v1544, %v1547
  %vm1549 = vweird.f32 %v1543
  %vm1550 = vweird.f32 %v1544
  %vm1551 = vmor %vm1549, %vm1550
  %v1552 = vsel %vm1551, %v1544, %v1548
  %v1553 = vand.u32 2147483647, %v1543
  %vm1554 = vcmp.eq.f32.partialorder %v1553, 8.507059e+37
  %v1555 = vand.u32 %v1543, 2147483648
  %v1556 = vor.u32 1.1754944e-38, %v1555
  %v1557 = vsel %vm1554, %v1556, %v1552
  %v1558 = vmul.f32 1.0, %v1557
  %v1559 = vadd.f32 %v1493, %v588
  %1561 = vrot.lane.b32.xlu0 %v1559, 96
  %v1562 = vpop.permute.xlu0 %1561
  %v1564 = vmul.f32 %v1558, %v1562
  %1566 = vrot.lane.b32.xlu0 %v1564, 32
  %v1567 = vpop.permute.xlu0 %1566
  %v1569 = vadd.f32 %v1455, %v1567
  %v1570 = vtanh.pop %v1569
  %v1571 = vsub.f32 %v1420, %v1570
  %1573 = vrot.lane.b32.xlu0 %v1571, 112
  %v1574 = vpop.permute.xlu0 %1573
  %v1576 = vmul.f32 %v1558, %v1574
  %1578 = vrot.lane.b32.xlu0 %v1576, 16
  %v1579 = vpop.permute.xlu0 %1578
  %v1581 = vadd.f32 %v1570, %v1579
  %s1582 = scalar_lea.vmem %s0, 24
  %v1583 = vld [vmem:[%s1582] sm:$0xf]
  %v1584 = vunpack.c.l.bf16 %v1583
  %1586 = vrot.lane.b32.xlu0 %v1584, 32
  %v1587 = vpop.permute.xlu0 %1586
  %v1589 = vadd.f32 %v1538, %v1587
  %s1590 = scalar_lea.vmem %s78, 4
  %v1591 = vld [vmem:[%s1590] sm:$0xf]
  %v1592 = vunpack.c.l.bf16 %v1591
  %1594 = vrot.lane.b32.xlu0 %v1592, 32
  %v1595 = vpop.permute.xlu0 %1594
  %v1597 = vadd.f32 %v1581, %v1595
  %v1598 = vpack.c.bf16 %v1589, %v1589
  %1600 = vrot.lane.b32.xlu0 %v1598, 96
  %v1601 = vpop.permute.xlu0 %1600
  %s1603 = scalar_lea.vmem %s8, 24
  %1604 = vst.msk [vmem:[%s1603] sm:$0xf] %vm637, %v1601
  %v1605 = vpack.c.bf16 %v1597, %v1597
  %1607 = vrot.lane.b32.xlu0 %v1605, 96
  %v1608 = vpop.permute.xlu0 %1607
  %s1610 = scalar_lea.vmem %s86, 4
  %1611 = vst.msk [vmem:[%s1610] sm:$0xf] %vm637, %v1608
  %s1612 = scalar_lea.vmem [#allocation2], 56
  %v1613 = vld [vmem:[%s1612] sm:$0xff]
  %s1614 = sadd.s32 0, 64
  %s1615 = scalar_lea.vmem [#allocation2], %s1614
  %v1616 = vld [vmem:[%s1615] sm:$0xff]
  %v1617 = vpack.c.bf16 %v1538, %v1538
  %1619 = vrot.lane.b32.xlu0 %v1617, 96
  %v1620 = vpop.permute.xlu0 %1619
  %v1622 = vsel %vm144, %v1620, 0
  %1624 = vmatpush.bf16.msra.mxu0 0
  %1625 = vmatpush.bf16.msra.mxu0 0
  %1626 = vmatpush.bf16.msra.mxu0 0
  %1627 = vmatpush.bf16.msra.mxu0 0
  %1628 = vmatpush.bf16.msra.mxu0 0
  %1629 = vmatpush.bf16.msra.mxu0 0
  %1630 = vmatpush.bf16.msra.mxu0 0
  %1631 = vmatpush.bf16.msra.mxu0 %v472
  %1632 = vmatmul.bf16.gmra.mxu0 %v1622
  %v1633 = vpop.f32.mrf.mxu0
  %v1634 = vadd.f32 0.0, %v1633
  %v1635 = vpop.f32.mrf.mxu0
  %1636 = vdwg.mxu0
  %v1637 = vpack.c.bf16 %v1581, %v1581
  %1639 = vrot.lane.b32.xlu0 %v1637, 96
  %v1640 = vpop.permute.xlu0 %1639
  %v1642 = vsel %vm144, %v1640, 0
  %1644 = vmatpush.bf16.msra.mxu0 0
  %1645 = vmatpush.bf16.msra.mxu0 0
  %1646 = vmatpush.bf16.msra.mxu0 0
  %1647 = vmatpush.bf16.msra.mxu0 0
  %1648 = vmatpush.bf16.msra.mxu0 0
  %1649 = vmatpush.bf16.msra.mxu0 0
  %1650 = vmatpush.bf16.msra.mxu0 0
  %1651 = vmatpush.bf16.msra.mxu0 %v495
  %1652 = vmatmul.bf16.gmra.mxu0 %v1642
  %v1653 = vpop.f32.mrf.mxu0
  %v1654 = vadd.f32 0.0, %v1653
  %v1655 = vpop.f32.mrf.mxu0
  %1656 = vdwg.mxu0
  %v1657 = vadd.f32 %v1613, %v1634
  %v1658 = vxor.u32 %v1657, 2147483648
  %v1659 = vmul.f32 %v1658, 1.442695
  %v1660 = vpow.pop %v1659
  %v1661 = vadd.f32 %v1660, 1.0
  %v1662 = vrcp.pop %v1661
  %v1663 = vmul.f32 %v1661, %v1662
  %v1664 = vsub.f32 1.0, %v1663
  %v1665 = vmul.f32 %v1662, %v1664
  %v1666 = vadd.f32 %v1662, %v1665
  %vm1667 = vweird.f32 %v1661
  %vm1668 = vweird.f32 %v1662
  %vm1669 = vmor %vm1667, %vm1668
  %v1670 = vsel %vm1669, %v1662, %v1666
  %v1671 = vand.u32 2147483647, %v1661
  %vm1672 = vcmp.eq.f32.partialorder %v1671, 8.507059e+37
  %v1673 = vand.u32 %v1661, 2147483648
  %v1674 = vor.u32 1.1754944e-38, %v1673
  %v1675 = vsel %vm1672, %v1674, %v1670
  %v1676 = vmul.f32 1.0, %v1675
  %v1677 = vadd.f32 %v1634, %v536
  %1679 = vrot.lane.b32.xlu0 %v1677, 96
  %v1680 = vpop.permute.xlu0 %1679
  %v1682 = vmul.f32 %v1676, %v1680
  %1684 = vrot.lane.b32.xlu0 %v1682, 32
  %v1685 = vpop.permute.xlu0 %1684
  %v1687 = vadd.f32 %v1613, %v1685
  %v1688 = vtanh.pop %v1687
  %v1689 = vsub.f32 %v1538, %v1688
  %1691 = vrot.lane.b32.xlu0 %v1689, 112
  %v1692 = vpop.permute.xlu0 %1691
  %v1694 = vmul.f32 %v1676, %v1692
  %1696 = vrot.lane.b32.xlu0 %v1694, 16
  %v1697 = vpop.permute.xlu0 %1696
  %v1699 = vadd.f32 %v1688, %v1697
  %v1700 = vadd.f32 %v1616, %v1654
  %v1701 = vxor.u32 %v1700, 2147483648
  %v1702 = vmul.f32 %v1701, 1.442695
  %v1703 = vpow.pop %v1702
  %v1704 = vadd.f32 %v1703, 1.0
  %v1705 = vrcp.pop %v1704
  %v1706 = vmul.f32 %v1704, %v1705
  %v1707 = vsub.f32 1.0, %v1706
  %v1708 = vmul.f32 %v1705, %v1707
  %v1709 = vadd.f32 %v1705, %v1708
  %vm1710 = vweird.f32 %v1704
  %vm1711 = vweird.f32 %v1705
  %vm1712 = vmor %vm1710, %vm1711
  %v1713 = vsel %vm1712, %v1705, %v1709
  %v1714 = vand.u32 2147483647, %v1704
  %vm1715 = vcmp.eq.f32.partialorder %v1714, 8.507059e+37
  %v1716 = vand.u32 %v1704, 2147483648
  %v1717 = vor.u32 1.1754944e-38, %v1716
  %v1718 = vsel %vm1715, %v1717, %v1713
  %v1719 = vmul.f32 1.0, %v1718
  %v1720 = vadd.f32 %v1654, %v588
  %1722 = vrot.lane.b32.xlu0 %v1720, 96
  %v1723 = vpop.permute.xlu0 %1722
  %v1725 = vmul.f32 %v1719, %v1723
  %1727 = vrot.lane.b32.xlu0 %v1725, 32
  %v1728 = vpop.permute.xlu0 %1727
  %v1730 = vadd.f32 %v1616, %v1728
  %v1731 = vtanh.pop %v1730
  %v1732 = vsub.f32 %v1581, %v1731
  %1734 = vrot.lane.b32.xlu0 %v1732, 112
  %v1735 = vpop.permute.xlu0 %1734
  %v1737 = vmul.f32 %v1719, %v1735
  %1739 = vrot.lane.b32.xlu0 %v1737, 16
  %v1740 = vpop.permute.xlu0 %1739
  %v1742 = vadd.f32 %v1731, %v1740
  %s1743 = scalar_lea.vmem %s0, 28
  %v1744 = vld [vmem:[%s1743] sm:$0xf]
  %v1745 = vunpack.c.l.bf16 %v1744
  %1747 = vrot.lane.b32.xlu0 %v1745, 32
  %v1748 = vpop.permute.xlu0 %1747
  %v1750 = vadd.f32 %v1699, %v1748
  %v1751 = vld [vmem:[%s78] sm:$0xf]
  %v1752 = vunpack.c.l.bf16 %v1751
  %1754 = vrot.lane.b32.xlu0 %v1752, 32
  %v1755 = vpop.permute.xlu0 %1754
  %v1757 = vadd.f32 %v1742, %v1755
  %v1758 = vpack.c.bf16 %v1750, %v1750
  %1760 = vrot.lane.b32.xlu0 %v1758, 96
  %v1761 = vpop.permute.xlu0 %1760
  %s1763 = scalar_lea.vmem %s8, 28
  %1764 = vst.msk [vmem:[%s1763] sm:$0xf] %vm637, %v1761
  %v1765 = vpack.c.bf16 %v1757, %v1757
  %1767 = vrot.lane.b32.xlu0 %v1765, 96
  %v1768 = vpop.permute.xlu0 %1767
  %1770 = vst.msk [vmem:[%s86] sm:$0xf] %vm637, %v1768
  %1772 = vrot.lane.b32.xlu0 %v1699, 96
  %v1773 = vpop.permute.xlu0 %1772
  %1775 = vst.msk [vmem:[#allocation3] sm:$0xff] %vm144, %v1773
  %1777 = vrot.lane.b32.xlu0 %v1742, 96
  %v1778 = vpop.permute.xlu0 %1777
  %1780 = vst.msk [vmem:[%s461] sm:$0xff] %vm144, %v1778
  %s1781 = ssub.s32 0, 0
  %s1782 = smul.u32 8, %s1781
  %p1783 = scmp.lt.s32.totalorder %s1782, 7
  %s1784 = scalar_select %p1783, %s1782, 7
  %s1785 = smul.addr %s1784, 4
  %s1786 = scalar_lea.vmem %s9, %s1785
  // Predicated region
  $region38: #{sub_sampling_encoder_forward.4} parent=0 // pred_check
    _
  $region39: #{sub_sampling_encoder_forward.4} parent=0 // pred_check_branch
    %1788 = sbr.rel (0) target = $region41
  $region40: #{sub_sampling_encoder_forward.4} parent=0 // pred_region
    _
  $region41: #{sub_sampling_encoder_forward.4} parent=0 // pred_fallthru
    _
  // Predicated region
  $region42: #{sub_sampling_encoder_forward.4} parent=0 // pred_check
    _
  $region43: #{sub_sampling_encoder_forward.4} parent=0 // pred_check_branch
    %1790 = sbr.rel (0) target = $region45
  $region44: #{sub_sampling_encoder_forward.4} parent=0 // pred_region
    %s1791 = ssub.s32 0, 0
    %s1792 = smul.u32 8, %s1791
  $region45: #{sub_sampling_encoder_forward.4} parent=0 // pred_fallthru
    _
  // Predicated region
  $region46: #{sub_sampling_encoder_forward.4} parent=0 // pred_check
    _
  $region47: #{sub_sampling_encoder_forward.4} parent=0 // pred_check_branch
    %1794 = sbr.rel (0) target = $region49
  $region48: #{sub_sampling_encoder_forward.4} parent=0 // pred_region
    _
  $region49: #{sub_sampling_encoder_forward.4} parent=0 // pred_fallthru
    _
  // Predicated region
  $region50: #{sub_sampling_encoder_forward.4} parent=0 // pred_check
    _
  $region51: #{sub_sampling_encoder_forward.4} parent=0 // pred_check_branch
    %1796 = sbr.rel (0) target = $region53
  $region52: #{sub_sampling_encoder_forward.4} parent=0 // pred_region
    %s1797 = ssub.s32 0, 0
    %s1798 = smul.u32 8, %s1797
    %p1799 = scmp.lt.s32.totalorder %s1798, 7
    %s1800 = scalar_select %p1799, %s1798, 7
    %s1801 = smul.addr %s1800, 4
    %s1802 = scalar_lea.vmem %s9, %s1801
  $region53: #{sub_sampling_encoder_forward.4} parent=0 // pred_fallthru
    _

// kernel: sub_sampling_encoder_forward.3
$region0: #{sub_sampling_encoder_forward.3}
  #allocation0 [shape = 'u32[]', space=smem, size = 0x4, offset = 0x4, fixed_abs, tag = 'smem constant byte address 0x4 - core index']
  #allocation1 [shape = 'u32[72,128]{1,0:T(1,128)}', space=vmem, size = 0x9000, scoped, tag = 'internal scratch']
  #allocation2 [shape = 'f32[2,128,48]{2,1,0:T(8,128)}', space=vmem, size = 0x20000, scoped, tag = 'scratch operand']
  #allocation3 [shape = 'f32[2,8,16]{2,1,0:T(8,128)}', space=vmem, size = 0x2000, scoped, tag = 'scratch operand']
  %s0 = inlined_call_operand.vmem [shape: bf16[128,8], index: 0, kind: input, shape index: {}, may-alias: {0,1}]
  %s1 = inlined_call_operand.vmem [shape: bf16[128,8], index: 1, kind: input, shape index: {}, may-alias: {0,1}]
  %s2 = inlined_call_operand.vmem [shape: bf16[2,1,8,48], index: 2, kind: input, shape index: {}]
  %s3 = inlined_call_operand.vmem [shape: f32[2,1,48], index: 3, kind: input, shape index: {}]
  %s4 = inlined_call_operand.vmem [shape: bf16[2,16,48], index: 4, kind: input, shape index: {}]
  %s5 = inlined_call_operand.vmem [shape: f32[2,1,16], index: 5, kind: input, shape index: {}]
  %s6 = inlined_call_operand.vmem [shape: bf16[128,16], index: 6, kind: output, shape index: {0}]
  %s7 = inlined_call_operand.vmem [shape: bf16[128,16], index: 7, kind: output, shape index: {1}]
  %8 = xla_tuple %s6, %s7
  %s9 = sld [smem:[#allocation0]]
  $region46: #{sub_sampling_encoder_forward.3} parent=0
    _
  %s11 = ssub.s32 1, %s9
  %s12 = scalar_select 0, %s11, %s9
  // Predicated region
  $region2: #{sub_sampling_encoder_forward.3} parent=0 // pred_check
    _
  $region3: #{sub_sampling_encoder_forward.3} parent=0 // pred_check_branch
    %14 = sbr.rel (0) target = $region5
  $region4: #{sub_sampling_encoder_forward.3} parent=0 // pred_region
    _
  $region5: #{sub_sampling_encoder_forward.3} parent=0 // pred_fallthru
    _
  // Predicated region
  $region6: #{sub_sampling_encoder_forward.3} parent=0 // pred_check
    _
  $region7: #{sub_sampling_encoder_forward.3} parent=0 // pred_check_branch
    %16 = sbr.rel (0) target = $region9
  $region8: #{sub_sampling_encoder_forward.3} parent=0 // pred_region
    %s17 = ssub.s32 0, 0
    %s18 = smul.u32 16, %s17
    %p19 = scmp.lt.s32.totalorder %s18, 15
    %s20 = scalar_select %p19, %s18, 15
    %s21 = smul.addr %s20, 4
    %s22 = scalar_lea.vmem %s1, %s21
    %s23 = ssub.s32 0, 0
    %s24 = smul.u32 16, %s23
  $region9: #{sub_sampling_encoder_forward.3} parent=0 // pred_fallthru
    _
  // Predicated region
  $region10: #{sub_sampling_encoder_forward.3} parent=0 // pred_check
    _
  $region11: #{sub_sampling_encoder_forward.3} parent=0 // pred_check_branch
    %26 = sbr.rel (0) target = $region13
  $region12: #{sub_sampling_encoder_forward.3} parent=0 // pred_region
    _
  $region13: #{sub_sampling_encoder_forward.3} parent=0 // pred_fallthru
    _
  // Predicated region
  $region14: #{sub_sampling_encoder_forward.3} parent=0 // pred_check
    _
  $region15: #{sub_sampling_encoder_forward.3} parent=0 // pred_check_branch
    %28 = sbr.rel (0) target = $region17
  $region16: #{sub_sampling_encoder_forward.3} parent=0 // pred_region
    _
  $region17: #{sub_sampling_encoder_forward.3} parent=0 // pred_fallthru
    _
  // Predicated region
  $region18: #{sub_sampling_encoder_forward.3} parent=0 // pred_check
    _
  $region19: #{sub_sampling_encoder_forward.3} parent=0 // pred_check_branch
    %30 = sbr.rel (0) target = $region21
  $region20: #{sub_sampling_encoder_forward.3} parent=0 // pred_region
    _
  $region21: #{sub_sampling_encoder_forward.3} parent=0 // pred_fallthru
    _
  // Predicated region
  $region22: #{sub_sampling_encoder_forward.3} parent=0 // pred_check
    _
  $region23: #{sub_sampling_encoder_forward.3} parent=0 // pred_check_branch
    %32 = sbr.rel (0) target = $region25
  $region24: #{sub_sampling_encoder_forward.3} parent=0 // pred_region
    _
  $region25: #{sub_sampling_encoder_forward.3} parent=0 // pred_fallthru
    _
  %s33 = ssub.s32 0, 0
  %s34 = smul.u32 16, %s33
  %p35 = scmp.lt.s32.totalorder %s34, 15
  %s36 = scalar_select %p35, %s34, 15
  %s37 = smul.addr %s36, 4
  %s38 = scalar_lea.vmem %s1, %s37
  %s39 = ssub.s32 0, 0
  %s40 = smul.u32 16, %s39
  %p41 = scmp.lt.s32.totalorder %s40, 15
  %s42 = scalar_select %p41, %s40, 15
  %s43 = smul.addr %s42, 4
  %s44 = scalar_lea.vmem %s7, %s43
  %s45 = ssub.s32 0, 0
  %s46 = smul.u32 16, %s45
  %p47 = scmp.lt.s32.totalorder %s46, 15
  %s48 = scalar_select %p47, %s46, 15
  %s49 = smul.addr %s48, 4
  %s50 = scalar_lea.vmem %s1, %s49
  %s51 = ssub.s32 0, 0
  %s52 = smul.u32 16, %s51
  %s53 = ssub.s32 0, 0
  %s54 = smul.u32 16, %s53
  %p55 = scmp.lt.s32.totalorder %s54, 15
  %s56 = scalar_select %p55, %s54, 15
  %s57 = smul.addr %s56, 4
  %s58 = scalar_lea.vmem %s7, %s57
  %s59 = ssub.s32 0, 0
  %s60 = smul.u32 16, %s59
  %p62 = scmp.eq.s32.totalorder 0, 0
  // Predicated region
  $region26: #{sub_sampling_encoder_forward.3} parent=0 // pred_check
    %p63 = pneg %p62
  $region27: #{sub_sampling_encoder_forward.3} parent=0 // pred_check_branch
    %65 = sbr.rel (%p63) target = $region29
  $region28: #{sub_sampling_encoder_forward.3} parent=0 // pred_region
    %vm66 = vcmask 130048
    %67 = vst.msk [vmem:[#allocation3] sm:$0xff] %vm66, 0.0
    %68 = vst.msk [vmem:[#allocation3 + $0x8] sm:$0xff] %vm66, 0.0
  $region29: #{sub_sampling_encoder_forward.3} parent=0 // pred_fallthru
    _
  %v69 = vld [vmem:[%s0] sm:$0xf]
  %v70 = vld [vmem:[%s0 + $0x4] sm:$0xf]
  %v71 = vld [vmem:[%s0 + $0x8] sm:$0xf]
  %v72 = vld [vmem:[%s0 + $0xc] sm:$0xf]
  %v73 = vld [vmem:[%s0 + $0x10] sm:$0xf]
  %v74 = vld [vmem:[%s0 + $0x14] sm:$0xf]
  %v75 = vld [vmem:[%s0 + $0x18] sm:$0xf]
  %v76 = vld [vmem:[%s0 + $0x1c] sm:$0xf]
  %v77 = vld [vmem:[%s0 + $0x20] sm:$0xf]
  %v78 = vld [vmem:[%s0 + $0x24] sm:$0xf]
  %v79 = vld [vmem:[%s0 + $0x28] sm:$0xf]
  %v80 = vld [vmem:[%s0 + $0x2c] sm:$0xf]
  %v81 = vld [vmem:[%s0 + $0x30] sm:$0xf]
  %v82 = vld [vmem:[%s0 + $0x34] sm:$0xf]
  %v83 = vld [vmem:[%s0 + $0x38] sm:$0xf]
  %v84 = vld [vmem:[%s0 + $0x3c] sm:$0xf]
  %v85 = vld [vmem:[%s2] sm:$0xf]
  %v86 = vld [vmem:[%s3] sm:$0x1]
  %v88 = vperm.slane %v86, 0
  %v106 = vunpack.c.l.b16 %v69
  %v107 = vunpack.c.l.b16 %v70
  %v108 = vunpack.c.l.b16 %v71
  %v109 = vunpack.c.l.b16 %v72
  %v110 = vunpack.c.l.b16 %v73
  %v111 = vunpack.c.l.b16 %v74
  %v112 = vunpack.c.l.b16 %v75
  %v113 = vunpack.c.l.b16 %v76
  %v114 = vunpack.c.l.b16 %v77
  %v115 = vunpack.c.l.b16 %v78
  %v116 = vunpack.c.l.b16 %v79
  %v117 = vunpack.c.l.b16 %v80
  %v118 = vunpack.c.l.b16 %v81
  %v119 = vunpack.c.l.b16 %v82
  %v120 = vunpack.c.l.b16 %v83
  %v121 = vunpack.c.l.b16 %v84
  %v122 = vpack.c.b16 %v107, %v106
  %v123 = vpack.c.b16 %v109, %v108
  %v124 = vpack.c.b16 %v111, %v110
  %v125 = vpack.c.b16 %v113, %v112
  %v126 = vpack.c.b16 %v115, %v114
  %v127 = vpack.c.b16 %v117, %v116
  %v128 = vpack.c.b16 %v119, %v118
  %v129 = vpack.c.b16 %v121, %v120
  %vm130 = vcmask 64512
  %v132 = vsel %vm130, %v122, 0
  %v135 = vsel %vm130, %v123, 0
  %v138 = vsel %vm130, %v124, 0
  %v141 = vsel %vm130, %v125, 0
  %v144 = vsel %vm130, %v126, 0
  %v147 = vsel %vm130, %v127, 0
  %v150 = vsel %vm130, %v128, 0
  %v153 = vsel %vm130, %v129, 0
  %vm155 = vcmask 1043456
  %v157 = vsel %vm155, %v85, 0
  %159 = vmatpush.bf16.msra.mxu0 0
  %160 = vmatpush.bf16.msra.mxu0 0
  %161 = vmatpush.bf16.msra.mxu0 0
  %162 = vmatpush.bf16.msra.mxu0 0
  %163 = vmatpush.bf16.msra.mxu0 0
  %164 = vmatpush.bf16.msra.mxu0 0
  %165 = vmatpush.bf16.msra.mxu0 0
  %166 = vmatpush.bf16.msra.mxu0 %v157
  %167 = vmatmul.bf16.gmra.mxu0 %v132
  %v168 = vpop.f32.mrf.mxu0
  %v169 = vadd.f32 %v88, %v168
  %v170 = vpop.f32.mrf.mxu0
  %v171 = vadd.f32 %v88, %v170
  %172 = vmatmul.bf16.gmra.mxu0 %v135
  %v173 = vpop.f32.mrf.mxu0
  %v174 = vadd.f32 %v88, %v173
  %v175 = vpop.f32.mrf.mxu0
  %v176 = vadd.f32 %v88, %v175
  %177 = vmatmul.bf16.gmra.mxu0 %v138
  %v178 = vpop.f32.mrf.mxu0
  %v179 = vadd.f32 %v88, %v178
  %v180 = vpop.f32.mrf.mxu0
  %v181 = vadd.f32 %v88, %v180
  %182 = vmatmul.bf16.gmra.mxu0 %v141
  %v183 = vpop.f32.mrf.mxu0
  %v184 = vadd.f32 %v88, %v183
  %v185 = vpop.f32.mrf.mxu0
  %v186 = vadd.f32 %v88, %v185
  %187 = vmatmul.bf16.gmra.mxu0 %v144
  %v188 = vpop.f32.mrf.mxu0
  %v189 = vadd.f32 %v88, %v188
  %v190 = vpop.f32.mrf.mxu0
  %v191 = vadd.f32 %v88, %v190
  %192 = vmatmul.bf16.gmra.mxu0 %v147
  %v193 = vpop.f32.mrf.mxu0
  %v194 = vadd.f32 %v88, %v193
  %v195 = vpop.f32.mrf.mxu0
  %v196 = vadd.f32 %v88, %v195
  %197 = vmatmul.bf16.gmra.mxu0 %v150
  %v198 = vpop.f32.mrf.mxu0
  %v199 = vadd.f32 %v88, %v198
  %v200 = vpop.f32.mrf.mxu0
  %v201 = vadd.f32 %v88, %v200
  %202 = vmatmul.bf16.gmra.mxu0 %v153
  %v203 = vpop.f32.mrf.mxu0
  %v204 = vadd.f32 %v88, %v203
  %v205 = vpop.f32.mrf.mxu0
  %v206 = vadd.f32 %v88, %v205
  %207 = vdwg.mxu0
  %vm208 = vcmask 392192
  %209 = vst.msk [vmem:[#allocation2] sm:$0xff] %vm208, %v169
  %210 = vst.msk [vmem:[#allocation2 + $0x8] sm:$0xff] %vm208, %v171
  %211 = vst.msk [vmem:[#allocation2 + $0x10] sm:$0xff] %vm208, %v174
  %212 = vst.msk [vmem:[#allocation2 + $0x18] sm:$0xff] %vm208, %v176
  %213 = vst.msk [vmem:[#allocation2 + $0x20] sm:$0xff] %vm208, %v179
  %214 = vst.msk [vmem:[#allocation2 + $0x28] sm:$0xff] %vm208, %v181
  %215 = vst.msk [vmem:[#allocation2 + $0x30] sm:$0xff] %vm208, %v184
  %216 = vst.msk [vmem:[#allocation2 + $0x38] sm:$0xff] %vm208, %v186
  %217 = vst.msk [vmem:[#allocation2 + $0x40] sm:$0xff] %vm208, %v189
  %218 = vst.msk [vmem:[#allocation2 + $0x48] sm:$0xff] %vm208, %v191
  %219 = vst.msk [vmem:[#allocation2 + $0x50] sm:$0xff] %vm208, %v194
  %220 = vst.msk [vmem:[#allocation2 + $0x58] sm:$0xff] %vm208, %v196
  %221 = vst.msk [vmem:[#allocation2 + $0x60] sm:$0xff] %vm208, %v199
  %222 = vst.msk [vmem:[#allocation2 + $0x68] sm:$0xff] %vm208, %v201
  %223 = vst.msk [vmem:[#allocation2 + $0x70] sm:$0xff] %vm208, %v204
  %224 = vst.msk [vmem:[#allocation2 + $0x78] sm:$0xff] %vm208, %v206
  %v225 = vld [vmem:[%s50] sm:$0xf]
  %v226 = vld [vmem:[%s50 + $0x4] sm:$0xf]
  %v227 = vld [vmem:[%s50 + $0x8] sm:$0xf]
  %v228 = vld [vmem:[%s50 + $0xc] sm:$0xf]
  %v229 = vld [vmem:[%s50 + $0x10] sm:$0xf]
  %v230 = vld [vmem:[%s50 + $0x14] sm:$0xf]
  %v231 = vld [vmem:[%s50 + $0x18] sm:$0xf]
  %v232 = vld [vmem:[%s50 + $0x1c] sm:$0xf]
  %v233 = vld [vmem:[%s50 + $0x20] sm:$0xf]
  %v234 = vld [vmem:[%s50 + $0x24] sm:$0xf]
  %v235 = vld [vmem:[%s50 + $0x28] sm:$0xf]
  %v236 = vld [vmem:[%s50 + $0x2c] sm:$0xf]
  %v237 = vld [vmem:[%s50 + $0x30] sm:$0xf]
  %v238 = vld [vmem:[%s50 + $0x34] sm:$0xf]
  %v239 = vld [vmem:[%s50 + $0x38] sm:$0xf]
  %v240 = vld [vmem:[%s50 + $0x3c] sm:$0xf]
  %s241 = scalar_lea.vmem %s2, 4
  %v242 = vld [vmem:[%s241] sm:$0xf]
  %s243 = scalar_lea.vmem %s3, 1
  %v244 = vld [vmem:[%s243] sm:$0x1]
  %v246 = vperm.slane %v244, 0
  %v264 = vunpack.c.l.b16 %v225
  %v265 = vunpack.c.l.b16 %v226
  %v266 = vunpack.c.l.b16 %v227
  %v267 = vunpack.c.l.b16 %v228
  %v268 = vunpack.c.l.b16 %v229
  %v269 = vunpack.c.l.b16 %v230
  %v270 = vunpack.c.l.b16 %v231
  %v271 = vunpack.c.l.b16 %v232
  %v272 = vunpack.c.l.b16 %v233
  %v273 = vunpack.c.l.b16 %v234
  %v274 = vunpack.c.l.b16 %v235
  %v275 = vunpack.c.l.b16 %v236
  %v276 = vunpack.c.l.b16 %v237
  %v277 = vunpack.c.l.b16 %v238
  %v278 = vunpack.c.l.b16 %v239
  %v279 = vunpack.c.l.b16 %v240
  %v280 = vpack.c.b16 %v265, %v264
  %v281 = vpack.c.b16 %v267, %v266
  %v282 = vpack.c.b16 %v269, %v268
  %v283 = vpack.c.b16 %v271, %v270
  %v284 = vpack.c.b16 %v273, %v272
  %v285 = vpack.c.b16 %v275, %v274
  %v286 = vpack.c.b16 %v277, %v276
  %v287 = vpack.c.b16 %v279, %v278
  %v289 = vsel %vm130, %v280, 0
  %v292 = vsel %vm130, %v281, 0
  %v295 = vsel %vm130, %v282, 0
  %v298 = vsel %vm130, %v283, 0
  %v301 = vsel %vm130, %v284, 0
  %v304 = vsel %vm130, %v285, 0
  %v307 = vsel %vm130, %v286, 0
  %v310 = vsel %vm130, %v287, 0
  %v313 = vsel %vm155, %v242, 0
  %315 = vmatpush.bf16.msra.mxu0 0
  %316 = vmatpush.bf16.msra.mxu0 0
  %317 = vmatpush.bf16.msra.mxu0 0
  %318 = vmatpush.bf16.msra.mxu0 0
  %319 = vmatpush.bf16.msra.mxu0 0
  %320 = vmatpush.bf16.msra.mxu0 0
  %321 = vmatpush.bf16.msra.mxu0 0
  %322 = vmatpush.bf16.msra.mxu0 %v313
  %323 = vmatmul.bf16.gmra.mxu0 %v289
  %v324 = vpop.f32.mrf.mxu0
  %v325 = vadd.f32 %v246, %v324
  %v326 = vpop.f32.mrf.mxu0
  %v327 = vadd.f32 %v246, %v326
  %328 = vmatmul.bf16.gmra.mxu0 %v292
  %v329 = vpop.f32.mrf.mxu0
  %v330 = vadd.f32 %v246, %v329
  %v331 = vpop.f32.mrf.mxu0
  %v332 = vadd.f32 %v246, %v331
  %333 = vmatmul.bf16.gmra.mxu0 %v295
  %v334 = vpop.f32.mrf.mxu0
  %v335 = vadd.f32 %v246, %v334
  %v336 = vpop.f32.mrf.mxu0
  %v337 = vadd.f32 %v246, %v336
  %338 = vmatmul.bf16.gmra.mxu0 %v298
  %v339 = vpop.f32.mrf.mxu0
  %v340 = vadd.f32 %v246, %v339
  %v341 = vpop.f32.mrf.mxu0
  %v342 = vadd.f32 %v246, %v341
  %343 = vmatmul.bf16.gmra.mxu0 %v301
  %v344 = vpop.f32.mrf.mxu0
  %v345 = vadd.f32 %v246, %v344
  %v346 = vpop.f32.mrf.mxu0
  %v347 = vadd.f32 %v246, %v346
  %348 = vmatmul.bf16.gmra.mxu0 %v304
  %v349 = vpop.f32.mrf.mxu0
  %v350 = vadd.f32 %v246, %v349
  %v351 = vpop.f32.mrf.mxu0
  %v352 = vadd.f32 %v246, %v351
  %353 = vmatmul.bf16.gmra.mxu0 %v307
  %v354 = vpop.f32.mrf.mxu0
  %v355 = vadd.f32 %v246, %v354
  %v356 = vpop.f32.mrf.mxu0
  %v357 = vadd.f32 %v246, %v356
  %358 = vmatmul.bf16.gmra.mxu0 %v310
  %v359 = vpop.f32.mrf.mxu0
  %v360 = vadd.f32 %v246, %v359
  %v361 = vpop.f32.mrf.mxu0
  %v362 = vadd.f32 %v246, %v361
  %363 = vdwg.mxu0
  %s364 = scalar_lea.vmem [#allocation2], 128
  %365 = vst.msk [vmem:[%s364] sm:$0xff] %vm208, %v325
  %366 = vst.msk [vmem:[%s364 + $0x8] sm:$0xff] %vm208, %v327
  %367 = vst.msk [vmem:[%s364 + $0x10] sm:$0xff] %vm208, %v330
  %368 = vst.msk [vmem:[%s364 + $0x18] sm:$0xff] %vm208, %v332
  %369 = vst.msk [vmem:[%s364 + $0x20] sm:$0xff] %vm208, %v335
  %370 = vst.msk [vmem:[%s364 + $0x28] sm:$0xff] %vm208, %v337
  %371 = vst.msk [vmem:[%s364 + $0x30] sm:$0xff] %vm208, %v340
  %372 = vst.msk [vmem:[%s364 + $0x38] sm:$0xff] %vm208, %v342
  %373 = vst.msk [vmem:[%s364 + $0x40] sm:$0xff] %vm208, %v345
  %374 = vst.msk [vmem:[%s364 + $0x48] sm:$0xff] %vm208, %v347
  %375 = vst.msk [vmem:[%s364 + $0x50] sm:$0xff] %vm208, %v350
  %376 = vst.msk [vmem:[%s364 + $0x58] sm:$0xff] %vm208, %v352
  %377 = vst.msk [vmem:[%s364 + $0x60] sm:$0xff] %vm208, %v355
  %378 = vst.msk [vmem:[%s364 + $0x68] sm:$0xff] %vm208, %v357
  %379 = vst.msk [vmem:[%s364 + $0x70] sm:$0xff] %vm208, %v360
  %380 = vst.msk [vmem:[%s364 + $0x78] sm:$0xff] %vm208, %v362
  %v381 = vld [vmem:[%s4] sm:$0xf]
  %v382 = vld [vmem:[%s4 + $0x4] sm:$0xf]
  %s383 = scalar_lea.vmem %s4, 8
  %v384 = vld [vmem:[%s383] sm:$0xf]
  %v385 = vld [vmem:[%s383 + $0x4] sm:$0xf]
  %v386 = vld [vmem:[%s5] sm:$0x1]
  %s387 = scalar_lea.vmem %s5, 1
  %v388 = vld [vmem:[%s387] sm:$0x1]
  %v389 = vld [vmem:[#allocation3] sm:$0xff]
  %s390 = scalar_lea.vmem [#allocation3], 8
  %v391 = vld [vmem:[%s390] sm:$0xff]
  %v392 = vld [vmem:[#allocation2] sm:$0xff]
  %s393 = sadd.s32 120, 128
  %s394 = scalar_lea.vmem [#allocation2], %s393
  %v395 = vld [vmem:[%s394] sm:$0xff]
  %v396 = vpack.c.bf16 %v389, %v389
  %v399 = vunpack.c.l.b16 %v381
  %v400 = vunpack.c.l.b16 %v382
  %v401 = vpack.c.b16 %v400, %v399
  %vm403 = vcmask 130048
  %v405 = vsel %vm403, %v396, 0
  %407 = vmatpush.bf16.msra.mxu0 0
  %408 = vmatpush.bf16.msra.mxu0 0
  %409 = vmatpush.bf16.msra.mxu0 0
  %410 = vmatpush.bf16.msra.mxu0 0
  %411 = vmatpush.bf16.msra.mxu0 0
  %412 = vmatpush.bf16.msra.mxu0 0
  %413 = vmatpush.bf16.msra.mxu0 0
  %414 = vmatpush.bf16.msra.mxu0 %v401
  %415 = vmatmul.bf16.gmra.mxu0 %v405
  %v416 = vpop.f32.mrf.mxu0
  %v417 = vadd.f32 0.0, %v416
  %v418 = vpop.f32.mrf.mxu0
  %419 = vdwg.mxu0
  %v420 = vpack.c.bf16 %v391, %v391
  %v423 = vunpack.c.l.b16 %v384
  %v424 = vunpack.c.l.b16 %v385
  %v425 = vpack.c.b16 %v424, %v423
  %v428 = vsel %vm403, %v420, 0
  %430 = vmatpush.bf16.msra.mxu0 0
  %431 = vmatpush.bf16.msra.mxu0 0
  %432 = vmatpush.bf16.msra.mxu0 0
  %433 = vmatpush.bf16.msra.mxu0 0
  %434 = vmatpush.bf16.msra.mxu0 0
  %435 = vmatpush.bf16.msra.mxu0 0
  %436 = vmatpush.bf16.msra.mxu0 0
  %437 = vmatpush.bf16.msra.mxu0 %v425
  %438 = vmatmul.bf16.gmra.mxu0 %v428
  %v439 = vpop.f32.mrf.mxu0
  %v440 = vadd.f32 0.0, %v439
  %v441 = vpop.f32.mrf.mxu0
  %442 = vdwg.mxu0
  %v443 = vadd.f32 %v392, %v417
  %v444 = vxor.u32 %v443, 2147483648
  %v445 = vmul.f32 %v444, 1.442695
  %v446 = vpow.pop %v445
  %v447 = vadd.f32 %v446, 1.0
  %v448 = vrcp.pop %v447
  %v449 = vmul.f32 %v447, %v448
  %v450 = vsub.f32 1.0, %v449
  %v451 = vmul.f32 %v448, %v450
  %v452 = vadd.f32 %v448, %v451
  %vm453 = vweird.f32 %v447
  %vm454 = vweird.f32 %v448
  %vm455 = vmor %vm453, %vm454
  %v456 = vsel %vm455, %v448, %v452
  %v457 = vand.u32 2147483647, %v447
  %vm458 = vcmp.eq.f32.partialorder %v457, 8.507059e+37
  %v459 = vand.u32 %v447, 2147483648
  %v460 = vor.u32 1.1754944e-38, %v459
  %v461 = vsel %vm458, %v460, %v456
  %v462 = vmul.f32 1.0, %v461
  %v464 = vperm.slane %v386, 0
  %465 = vrot.lane.b32.xlu0 %v464, 32
  %v466 = vpop.permute.xlu0 %465
  %v468 = vadd.f32 %v417, %v466
  %470 = vrot.lane.b32.xlu0 %v468, 96
  %v471 = vpop.permute.xlu0 %470
  %v473 = vmul.f32 %v462, %v471
  %475 = vrot.lane.b32.xlu0 %v473, 32
  %v476 = vpop.permute.xlu0 %475
  %v478 = vadd.f32 %v392, %v476
  %v479 = vtanh.pop %v478
  %481 = vrot.lane.b32.xlu0 %v479, 96
  %v482 = vpop.permute.xlu0 %481
  %v484 = vsub.f32 %v389, %v482
  %486 = vrot.lane.b32.xlu0 %v484, 16
  %v487 = vpop.permute.xlu0 %486
  %v489 = vmul.f32 %v462, %v487
  %491 = vrot.lane.b32.xlu0 %v489, 16
  %v492 = vpop.permute.xlu0 %491
  %v494 = vadd.f32 %v479, %v492
  %v495 = vadd.f32 %v395, %v440
  %v496 = vxor.u32 %v495, 2147483648
  %v497 = vmul.f32 %v496, 1.442695
  %v498 = vpow.pop %v497
  %v499 = vadd.f32 %v498, 1.0
  %v500 = vrcp.pop %v499
  %v501 = vmul.f32 %v499, %v500
  %v502 = vsub.f32 1.0, %v501
  %v503 = vmul.f32 %v500, %v502
  %v504 = vadd.f32 %v500, %v503
  %vm505 = vweird.f32 %v499
  %vm506 = vweird.f32 %v500
  %vm507 = vmor %vm505, %vm506
  %v508 = vsel %vm507, %v500, %v504
  %v509 = vand.u32 2147483647, %v499
  %vm510 = vcmp.eq.f32.partialorder %v509, 8.507059e+37
  %v511 = vand.u32 %v499, 2147483648
  %v512 = vor.u32 1.1754944e-38, %v511
  %v513 = vsel %vm510, %v512, %v508
  %v514 = vmul.f32 1.0, %v513
  %v516 = vperm.slane %v388, 0
  %517 = vrot.lane.b32.xlu0 %v516, 32
  %v518 = vpop.permute.xlu0 %517
  %v520 = vadd.f32 %v440, %v518
  %522 = vrot.lane.b32.xlu0 %v520, 96
  %v523 = vpop.permute.xlu0 %522
  %v525 = vmul.f32 %v514, %v523
  %527 = vrot.lane.b32.xlu0 %v525, 32
  %v528 = vpop.permute.xlu0 %527
  %v530 = vadd.f32 %v395, %v528
  %v531 = vtanh.pop %v530
  %533 = vrot.lane.b32.xlu0 %v531, 96
  %v534 = vpop.permute.xlu0 %533
  %v536 = vsub.f32 %v391, %v534
  %538 = vrot.lane.b32.xlu0 %v536, 16
  %v539 = vpop.permute.xlu0 %538
  %v541 = vmul.f32 %v514, %v539
  %543 = vrot.lane.b32.xlu0 %v541, 16
  %v544 = vpop.permute.xlu0 %543
  %v546 = vadd.f32 %v531, %v544
  %v547 = vpack.c.bf16 %v494, %v494
  %549 = vrot.lane.b32.xlu0 %v547, 96
  %v550 = vpop.permute.xlu0 %549
  %vm552 = vcmask 125952
  %553 = vst.msk [vmem:[%s6] sm:$0xf] %vm552, %v550
  %v554 = vpack.c.bf16 %v546, %v546
  %556 = vrot.lane.b32.xlu0 %v554, 96
  %v557 = vpop.permute.xlu0 %556
  %s559 = scalar_lea.vmem %s58, 60
  %560 = vst.msk [vmem:[%s559] sm:$0xf] %vm552, %v557
  %s561 = scalar_lea.vmem [#allocation2], 8
  %v562 = vld [vmem:[%s561] sm:$0xff]
  %s563 = sadd.s32 112, 128
  %s564 = scalar_lea.vmem [#allocation2], %s563
  %v565 = vld [vmem:[%s564] sm:$0xff]
  %v566 = vunpack.c.l.b16 %v547
  %v567 = vpack.c.b16 %v566, %v566
  %568 = vrot.lane.b32.xlu0 %v567, 96
  %v569 = vpop.permute.xlu0 %568
  %v571 = vsel %vm403, %v569, 0
  %573 = vmatpush.bf16.msra.mxu0 0
  %574 = vmatpush.bf16.msra.mxu0 0
  %575 = vmatpush.bf16.msra.mxu0 0
  %576 = vmatpush.bf16.msra.mxu0 0
  %577 = vmatpush.bf16.msra.mxu0 0
  %578 = vmatpush.bf16.msra.mxu0 0
  %579 = vmatpush.bf16.msra.mxu0 0
  %580 = vmatpush.bf16.msra.mxu0 %v401
  %581 = vmatmul.bf16.gmra.mxu0 %v571
  %v582 = vpop.f32.mrf.mxu0
  %v583 = vadd.f32 0.0, %v582
  %v584 = vpop.f32.mrf.mxu0
  %585 = vdwg.mxu0
  %v586 = vunpack.c.l.b16 %v554
  %v587 = vpack.c.b16 %v586, %v586
  %588 = vrot.lane.b32.xlu0 %v587, 96
  %v589 = vpop.permute.xlu0 %588
  %v591 = vsel %vm403, %v589, 0
  %593 = vmatpush.bf16.msra.mxu0 0
  %594 = vmatpush.bf16.msra.mxu0 0
  %595 = vmatpush.bf16.msra.mxu0 0
  %596 = vmatpush.bf16.msra.mxu0 0
  %597 = vmatpush.bf16.msra.mxu0 0
  %598 = vmatpush.bf16.msra.mxu0 0
  %599 = vmatpush.bf16.msra.mxu0 0
  %600 = vmatpush.bf16.msra.mxu0 %v425
  %601 = vmatmul.bf16.gmra.mxu0 %v591
  %v602 = vpop.f32.mrf.mxu0
  %v603 = vadd.f32 0.0, %v602
  %v604 = vpop.f32.mrf.mxu0
  %605 = vdwg.mxu0
  %v606 = vadd.f32 %v562, %v583
  %v607 = vxor.u32 %v606, 2147483648
  %v608 = vmul.f32 %v607, 1.442695
  %v609 = vpow.pop %v608
  %v610 = vadd.f32 %v609, 1.0
  %v611 = vrcp.pop %v610
  %v612 = vmul.f32 %v610, %v611
  %v613 = vsub.f32 1.0, %v612
  %v614 = vmul.f32 %v611, %v613
  %v615 = vadd.f32 %v611, %v614
  %vm616 = vweird.f32 %v610
  %vm617 = vweird.f32 %v611
  %vm618 = vmor %vm616, %vm617
  %v619 = vsel %vm618, %v611, %v615
  %v620 = vand.u32 2147483647, %v610
  %vm621 = vcmp.eq.f32.partialorder %v620, 8.507059e+37
  %v622 = vand.u32 %v610, 2147483648
  %v623 = vor.u32 1.1754944e-38, %v622
  %v624 = vsel %vm621, %v623, %v619
  %v625 = vmul.f32 1.0, %v624
  %v626 = vadd.f32 %v583, %v466
  %628 = vrot.lane.b32.xlu0 %v626, 96
  %v629 = vpop.permute.xlu0 %628
  %v631 = vmul.f32 %v625, %v629
  %633 = vrot.lane.b32.xlu0 %v631, 32
  %v634 = vpop.permute.xlu0 %633
  %v636 = vadd.f32 %v562, %v634
  %v637 = vtanh.pop %v636
  %v638 = vsub.f32 %v494, %v637
  %640 = vrot.lane.b32.xlu0 %v638, 112
  %v641 = vpop.permute.xlu0 %640
  %v643 = vmul.f32 %v625, %v641
  %645 = vrot.lane.b32.xlu0 %v643, 16
  %v646 = vpop.permute.xlu0 %645
  %v648 = vadd.f32 %v637, %v646
  %v649 = vadd.f32 %v565, %v603
  %v650 = vxor.u32 %v649, 2147483648
  %v651 = vmul.f32 %v650, 1.442695
  %v652 = vpow.pop %v651
  %v653 = vadd.f32 %v652, 1.0
  %v654 = vrcp.pop %v653
  %v655 = vmul.f32 %v653, %v654
  %v656 = vsub.f32 1.0, %v655
  %v657 = vmul.f32 %v654, %v656
  %v658 = vadd.f32 %v654, %v657
  %vm659 = vweird.f32 %v653
  %vm660 = vweird.f32 %v654
  %vm661 = vmor %vm659, %vm660
  %v662 = vsel %vm661, %v654, %v658
  %v663 = vand.u32 2147483647, %v653
  %vm664 = vcmp.eq.f32.partialorder %v663, 8.507059e+37
  %v665 = vand.u32 %v653, 2147483648
  %v666 = vor.u32 1.1754944e-38, %v665
  %v667 = vsel %vm664, %v666, %v662
  %v668 = vmul.f32 1.0, %v667
  %v669 = vadd.f32 %v603, %v518
  %671 = vrot.lane.b32.xlu0 %v669, 96
  %v672 = vpop.permute.xlu0 %671
  %v674 = vmul.f32 %v668, %v672
  %676 = vrot.lane.b32.xlu0 %v674, 32
  %v677 = vpop.permute.xlu0 %676
  %v679 = vadd.f32 %v565, %v677
  %v680 = vtanh.pop %v679
  %v681 = vsub.f32 %v546, %v680
  %683 = vrot.lane.b32.xlu0 %v681, 112
  %v684 = vpop.permute.xlu0 %683
  %v686 = vmul.f32 %v668, %v684
  %688 = vrot.lane.b32.xlu0 %v686, 16
  %v689 = vpop.permute.xlu0 %688
  %v691 = vadd.f32 %v680, %v689
  %v692 = vpack.c.bf16 %v648, %v648
  %694 = vrot.lane.b32.xlu0 %v692, 96
  %v695 = vpop.permute.xlu0 %694
  %s697 = scalar_lea.vmem %s6, 4
  %698 = vst.msk [vmem:[%s697] sm:$0xf] %vm552, %v695
  %v699 = vpack.c.bf16 %v691, %v691
  %701 = vrot.lane.b32.xlu0 %v699, 96
  %v702 = vpop.permute.xlu0 %701
  %s704 = scalar_lea.vmem %s58, 56
  %705 = vst.msk [vmem:[%s704] sm:$0xf] %vm552, %v702
  %s706 = scalar_lea.vmem [#allocation2], 16
  %v707 = vld [vmem:[%s706] sm:$0xff]
  %s708 = sadd.s32 104, 128
  %s709 = scalar_lea.vmem [#allocation2], %s708
  %v710 = vld [vmem:[%s709] sm:$0xff]
  %v711 = vunpack.c.l.b16 %v692
  %v712 = vpack.c.b16 %v711, %v711
  %713 = vrot.lane.b32.xlu0 %v712, 96
  %v714 = vpop.permute.xlu0 %713
  %v716 = vsel %vm403, %v714, 0
  %718 = vmatpush.bf16.msra.mxu0 0
  %719 = vmatpush.bf16.msra.mxu0 0
  %720 = vmatpush.bf16.msra.mxu0 0
  %721 = vmatpush.bf16.msra.mxu0 0
  %722 = vmatpush.bf16.msra.mxu0 0
  %723 = vmatpush.bf16.msra.mxu0 0
  %724 = vmatpush.bf16.msra.mxu0 0
  %725 = vmatpush.bf16.msra.mxu0 %v401
  %726 = vmatmul.bf16.gmra.mxu0 %v716
  %v727 = vpop.f32.mrf.mxu0
  %v728 = vadd.f32 0.0, %v727
  %v729 = vpop.f32.mrf.mxu0
  %730 = vdwg.mxu0
  %v731 = vunpack.c.l.b16 %v699
  %v732 = vpack.c.b16 %v731, %v731
  %733 = vrot.lane.b32.xlu0 %v732, 96
  %v734 = vpop.permute.xlu0 %733
  %v736 = vsel %vm403, %v734, 0
  %738 = vmatpush.bf16.msra.mxu0 0
  %739 = vmatpush.bf16.msra.mxu0 0
  %740 = vmatpush.bf16.msra.mxu0 0
  %741 = vmatpush.bf16.msra.mxu0 0
  %742 = vmatpush.bf16.msra.mxu0 0
  %743 = vmatpush.bf16.msra.mxu0 0
  %744 = vmatpush.bf16.msra.mxu0 0
  %745 = vmatpush.bf16.msra.mxu0 %v425
  %746 = vmatmul.bf16.gmra.mxu0 %v736
  %v747 = vpop.f32.mrf.mxu0
  %v748 = vadd.f32 0.0, %v747
  %v749 = vpop.f32.mrf.mxu0
  %750 = vdwg.mxu0
  %v751 = vadd.f32 %v707, %v728
  %v752 = vxor.u32 %v751, 2147483648
  %v753 = vmul.f32 %v752, 1.442695
  %v754 = vpow.pop %v753
  %v755 = vadd.f32 %v754, 1.0
  %v756 = vrcp.pop %v755
  %v757 = vmul.f32 %v755, %v756
  %v758 = vsub.f32 1.0, %v757
  %v759 = vmul.f32 %v756, %v758
  %v760 = vadd.f32 %v756, %v759
  %vm761 = vweird.f32 %v755
  %vm762 = vweird.f32 %v756
  %vm763 = vmor %vm761, %vm762
  %v764 = vsel %vm763, %v756, %v760
  %v765 = vand.u32 2147483647, %v755
  %vm766 = vcmp.eq.f32.partialorder %v765, 8.507059e+37
  %v767 = vand.u32 %v755, 2147483648
  %v768 = vor.u32 1.1754944e-38, %v767
  %v769 = vsel %vm766, %v768, %v764
  %v770 = vmul.f32 1.0, %v769
  %v771 = vadd.f32 %v728, %v466
  %773 = vrot.lane.b32.xlu0 %v771, 96
  %v774 = vpop.permute.xlu0 %773
  %v776 = vmul.f32 %v770, %v774
  %778 = vrot.lane.b32.xlu0 %v776, 32
  %v779 = vpop.permute.xlu0 %778
  %v781 = vadd.f32 %v707, %v779
  %v782 = vtanh.pop %v781
  %v783 = vsub.f32 %v648, %v782
  %785 = vrot.lane.b32.xlu0 %v783, 112
  %v786 = vpop.permute.xlu0 %785
  %v788 = vmul.f32 %v770, %v786
  %790 = vrot.lane.b32.xlu0 %v788, 16
  %v791 = vpop.permute.xlu0 %790
  %v793 = vadd.f32 %v782, %v791
  %v794 = vadd.f32 %v710, %v748
  %v795 = vxor.u32 %v794, 2147483648
  %v796 = vmul.f32 %v795, 1.442695
  %v797 = vpow.pop %v796
  %v798 = vadd.f32 %v797, 1.0
  %v799 = vrcp.pop %v798
  %v800 = vmul.f32 %v798, %v799
  %v801 = vsub.f32 1.0, %v800
  %v802 = vmul.f32 %v799, %v801
  %v803 = vadd.f32 %v799, %v802
  %vm804 = vweird.f32 %v798
  %vm805 = vweird.f32 %v799
  %vm806 = vmor %vm804, %vm805
  %v807 = vsel %vm806, %v799, %v803
  %v808 = vand.u32 2147483647, %v798
  %vm809 = vcmp.eq.f32.partialorder %v808, 8.507059e+37
  %v810 = vand.u32 %v798, 2147483648
  %v811 = vor.u32 1.1754944e-38, %v810
  %v812 = vsel %vm809, %v811, %v807
  %v813 = vmul.f32 1.0, %v812
  %v814 = vadd.f32 %v748, %v518
  %816 = vrot.lane.b32.xlu0 %v814, 96
  %v817 = vpop.permute.xlu0 %816
  %v819 = vmul.f32 %v813, %v817
  %821 = vrot.lane.b32.xlu0 %v819, 32
  %v822 = vpop.permute.xlu0 %821
  %v824 = vadd.f32 %v710, %v822
  %v825 = vtanh.pop %v824
  %v826 = vsub.f32 %v691, %v825
  %828 = vrot.lane.b32.xlu0 %v826, 112
  %v829 = vpop.permute.xlu0 %828
  %v831 = vmul.f32 %v813, %v829
  %833 = vrot.lane.b32.xlu0 %v831, 16
  %v834 = vpop.permute.xlu0 %833
  %v836 = vadd.f32 %v825, %v834
  %v837 = vpack.c.bf16 %v793, %v793
  %839 = vrot.lane.b32.xlu0 %v837, 96
  %v840 = vpop.permute.xlu0 %839
  %s842 = scalar_lea.vmem %s6, 8
  %843 = vst.msk [vmem:[%s842] sm:$0xf] %vm552, %v840
  %v844 = vpack.c.bf16 %v836, %v836
  %846 = vrot.lane.b32.xlu0 %v844, 96
  %v847 = vpop.permute.xlu0 %846
  %s849 = scalar_lea.vmem %s58, 52
  %850 = vst.msk [vmem:[%s849] sm:$0xf] %vm552, %v847
  %s851 = scalar_lea.vmem [#allocation2], 24
  %v852 = vld [vmem:[%s851] sm:$0xff]
  %s853 = sadd.s32 96, 128
  %s854 = scalar_lea.vmem [#allocation2], %s853
  %v855 = vld [vmem:[%s854] sm:$0xff]
  %v856 = vunpack.c.l.b16 %v837
  %v857 = vpack.c.b16 %v856, %v856
  %858 = vrot.lane.b32.xlu0 %v857, 96
  %v859 = vpop.permute.xlu0 %858
  %v861 = vsel %vm403, %v859, 0
  %863 = vmatpush.bf16.msra.mxu0 0
  %864 = vmatpush.bf16.msra.mxu0 0
  %865 = vmatpush.bf16.msra.mxu0 0
  %866 = vmatpush.bf16.msra.mxu0 0
  %867 = vmatpush.bf16.msra.mxu0 0
  %868 = vmatpush.bf16.msra.mxu0 0
  %869 = vmatpush.bf16.msra.mxu0 0
  %870 = vmatpush.bf16.msra.mxu0 %v401
  %871 = vmatmul.bf16.gmra.mxu0 %v861
  %v872 = vpop.f32.mrf.mxu0
  %v873 = vadd.f32 0.0, %v872
  %v874 = vpop.f32.mrf.mxu0
  %875 = vdwg.mxu0
  %v876 = vunpack.c.l.b16 %v844
  %v877 = vpack.c.b16 %v876, %v876
  %878 = vrot.lane.b32.xlu0 %v877, 96
  %v879 = vpop.permute.xlu0 %878
  %v881 = vsel %vm403, %v879, 0
  %883 = vmatpush.bf16.msra.mxu0 0
  %884 = vmatpush.bf16.msra.mxu0 0
  %885 = vmatpush.bf16.msra.mxu0 0
  %886 = vmatpush.bf16.msra.mxu0 0
  %887 = vmatpush.bf16.msra.mxu0 0
  %888 = vmatpush.bf16.msra.mxu0 0
  %889 = vmatpush.bf16.msra.mxu0 0
  %890 = vmatpush.bf16.msra.mxu0 %v425
  %891 = vmatmul.bf16.gmra.mxu0 %v881
  %v892 = vpop.f32.mrf.mxu0
  %v893 = vadd.f32 0.0, %v892
  %v894 = vpop.f32.mrf.mxu0
  %895 = vdwg.mxu0
  %v896 = vadd.f32 %v852, %v873
  %v897 = vxor.u32 %v896, 2147483648
  %v898 = vmul.f32 %v897, 1.442695
  %v899 = vpow.pop %v898
  %v900 = vadd.f32 %v899, 1.0
  %v901 = vrcp.pop %v900
  %v902 = vmul.f32 %v900, %v901
  %v903 = vsub.f32 1.0, %v902
  %v904 = vmul.f32 %v901, %v903
  %v905 = vadd.f32 %v901, %v904
  %vm906 = vweird.f32 %v900
  %vm907 = vweird.f32 %v901
  %vm908 = vmor %vm906, %vm907
  %v909 = vsel %vm908, %v901, %v905
  %v910 = vand.u32 2147483647, %v900
  %vm911 = vcmp.eq.f32.partialorder %v910, 8.507059e+37
  %v912 = vand.u32 %v900, 2147483648
  %v913 = vor.u32 1.1754944e-38, %v912
  %v914 = vsel %vm911, %v913, %v909
  %v915 = vmul.f32 1.0, %v914
  %v916 = vadd.f32 %v873, %v466
  %918 = vrot.lane.b32.xlu0 %v916, 96
  %v919 = vpop.permute.xlu0 %918
  %v921 = vmul.f32 %v915, %v919
  %923 = vrot.lane.b32.xlu0 %v921, 32
  %v924 = vpop.permute.xlu0 %923
  %v926 = vadd.f32 %v852, %v924
  %v927 = vtanh.pop %v926
  %v928 = vsub.f32 %v793, %v927
  %930 = vrot.lane.b32.xlu0 %v928, 112
  %v931 = vpop.permute.xlu0 %930
  %v933 = vmul.f32 %v915, %v931
  %935 = vrot.lane.b32.xlu0 %v933, 16
  %v936 = vpop.permute.xlu0 %935
  %v938 = vadd.f32 %v927, %v936
  %v939 = vadd.f32 %v855, %v893
  %v940 = vxor.u32 %v939, 2147483648
  %v941 = vmul.f32 %v940, 1.442695
  %v942 = vpow.pop %v941
  %v943 = vadd.f32 %v942, 1.0
  %v944 = vrcp.pop %v943
  %v945 = vmul.f32 %v943, %v944
  %v946 = vsub.f32 1.0, %v945
  %v947 = vmul.f32 %v944, %v946
  %v948 = vadd.f32 %v944, %v947
  %vm949 = vweird.f32 %v943
  %vm950 = vweird.f32 %v944
  %vm951 = vmor %vm949, %vm950
  %v952 = vsel %vm951, %v944, %v948
  %v953 = vand.u32 2147483647, %v943
  %vm954 = vcmp.eq.f32.partialorder %v953, 8.507059e+37
  %v955 = vand.u32 %v943, 2147483648
  %v956 = vor.u32 1.1754944e-38, %v955
  %v957 = vsel %vm954, %v956, %v952
  %v958 = vmul.f32 1.0, %v957
  %v959 = vadd.f32 %v893, %v518
  %961 = vrot.lane.b32.xlu0 %v959, 96
  %v962 = vpop.permute.xlu0 %961
  %v964 = vmul.f32 %v958, %v962
  %966 = vrot.lane.b32.xlu0 %v964, 32
  %v967 = vpop.permute.xlu0 %966
  %v969 = vadd.f32 %v855, %v967
  %v970 = vtanh.pop %v969
  %v971 = vsub.f32 %v836, %v970
  %973 = vrot.lane.b32.xlu0 %v971, 112
  %v974 = vpop.permute.xlu0 %973
  %v976 = vmul.f32 %v958, %v974
  %978 = vrot.lane.b32.xlu0 %v976, 16
  %v979 = vpop.permute.xlu0 %978
  %v981 = vadd.f32 %v970, %v979
  %v982 = vpack.c.bf16 %v938, %v938
  %984 = vrot.lane.b32.xlu0 %v982, 96
  %v985 = vpop.permute.xlu0 %984
  %s987 = scalar_lea.vmem %s6, 12
  %988 = vst.msk [vmem:[%s987] sm:$0xf] %vm552, %v985
  %v989 = vpack.c.bf16 %v981, %v981
  %991 = vrot.lane.b32.xlu0 %v989, 96
  %v992 = vpop.permute.xlu0 %991
  %s994 = scalar_lea.vmem %s58, 48
  %995 = vst.msk [vmem:[%s994] sm:$0xf] %vm552, %v992
  %s996 = scalar_lea.vmem [#allocation2], 32
  %v997 = vld [vmem:[%s996] sm:$0xff]
  %s998 = sadd.s32 88, 128
  %s999 = scalar_lea.vmem [#allocation2], %s998
  %v1000 = vld [vmem:[%s999] sm:$0xff]
  %v1001 = vunpack.c.l.b16 %v982
  %v1002 = vpack.c.b16 %v1001, %v1001
  %1003 = vrot.lane.b32.xlu0 %v1002, 96
  %v1004 = vpop.permute.xlu0 %1003
  %v1006 = vsel %vm403, %v1004, 0
  %1008 = vmatpush.bf16.msra.mxu0 0
  %1009 = vmatpush.bf16.msra.mxu0 0
  %1010 = vmatpush.bf16.msra.mxu0 0
  %1011 = vmatpush.bf16.msra.mxu0 0
  %1012 = vmatpush.bf16.msra.mxu0 0
  %1013 = vmatpush.bf16.msra.mxu0 0
  %1014 = vmatpush.bf16.msra.mxu0 0
  %1015 = vmatpush.bf16.msra.mxu0 %v401
  %1016 = vmatmul.bf16.gmra.mxu0 %v1006
  %v1017 = vpop.f32.mrf.mxu0
  %v1018 = vadd.f32 0.0, %v1017
  %v1019 = vpop.f32.mrf.mxu0
  %1020 = vdwg.mxu0
  %v1021 = vunpack.c.l.b16 %v989
  %v1022 = vpack.c.b16 %v1021, %v1021
  %1023 = vrot.lane.b32.xlu0 %v1022, 96
  %v1024 = vpop.permute.xlu0 %1023
  %v1026 = vsel %vm403, %v1024, 0
  %1028 = vmatpush.bf16.msra.mxu0 0
  %1029 = vmatpush.bf16.msra.mxu0 0
  %1030 = vmatpush.bf16.msra.mxu0 0
  %1031 = vmatpush.bf16.msra.mxu0 0
  %1032 = vmatpush.bf16.msra.mxu0 0
  %1033 = vmatpush.bf16.msra.mxu0 0
  %1034 = vmatpush.bf16.msra.mxu0 0
  %1035 = vmatpush.bf16.msra.mxu0 %v425
  %1036 = vmatmul.bf16.gmra.mxu0 %v1026
  %v1037 = vpop.f32.mrf.mxu0
  %v1038 = vadd.f32 0.0, %v1037
  %v1039 = vpop.f32.mrf.mxu0
  %1040 = vdwg.mxu0
  %v1041 = vadd.f32 %v997, %v1018
  %v1042 = vxor.u32 %v1041, 2147483648
  %v1043 = vmul.f32 %v1042, 1.442695
  %v1044 = vpow.pop %v1043
  %v1045 = vadd.f32 %v1044, 1.0
  %v1046 = vrcp.pop %v1045
  %v1047 = vmul.f32 %v1045, %v1046
  %v1048 = vsub.f32 1.0, %v1047
  %v1049 = vmul.f32 %v1046, %v1048
  %v1050 = vadd.f32 %v1046, %v1049
  %vm1051 = vweird.f32 %v1045
  %vm1052 = vweird.f32 %v1046
  %vm1053 = vmor %vm1051, %vm1052
  %v1054 = vsel %vm1053, %v1046, %v1050
  %v1055 = vand.u32 2147483647, %v1045
  %vm1056 = vcmp.eq.f32.partialorder %v1055, 8.507059e+37
  %v1057 = vand.u32 %v1045, 2147483648
  %v1058 = vor.u32 1.1754944e-38, %v1057
  %v1059 = vsel %vm1056, %v1058, %v1054
  %v1060 = vmul.f32 1.0, %v1059
  %v1061 = vadd.f32 %v1018, %v466
  %1063 = vrot.lane.b32.xlu0 %v1061, 96
  %v1064 = vpop.permute.xlu0 %1063
  %v1066 = vmul.f32 %v1060, %v1064
  %1068 = vrot.lane.b32.xlu0 %v1066, 32
  %v1069 = vpop.permute.xlu0 %1068
  %v1071 = vadd.f32 %v997, %v1069
  %v1072 = vtanh.pop %v1071
  %v1073 = vsub.f32 %v938, %v1072
  %1075 = vrot.lane.b32.xlu0 %v1073, 112
  %v1076 = vpop.permute.xlu0 %1075
  %v1078 = vmul.f32 %v1060, %v1076
  %1080 = vrot.lane.b32.xlu0 %v1078, 16
  %v1081 = vpop.permute.xlu0 %1080
  %v1083 = vadd.f32 %v1072, %v1081
  %v1084 = vadd.f32 %v1000, %v1038
  %v1085 = vxor.u32 %v1084, 2147483648
  %v1086 = vmul.f32 %v1085, 1.442695
  %v1087 = vpow.pop %v1086
  %v1088 = vadd.f32 %v1087, 1.0
  %v1089 = vrcp.pop %v1088
  %v1090 = vmul.f32 %v1088, %v1089
  %v1091 = vsub.f32 1.0, %v1090
  %v1092 = vmul.f32 %v1089, %v1091
  %v1093 = vadd.f32 %v1089, %v1092
  %vm1094 = vweird.f32 %v1088
  %vm1095 = vweird.f32 %v1089
  %vm1096 = vmor %vm1094, %vm1095
  %v1097 = vsel %vm1096, %v1089, %v1093
  %v1098 = vand.u32 2147483647, %v1088
  %vm1099 = vcmp.eq.f32.partialorder %v1098, 8.507059e+37
  %v1100 = vand.u32 %v1088, 2147483648
  %v1101 = vor.u32 1.1754944e-38, %v1100
  %v1102 = vsel %vm1099, %v1101, %v1097
  %v1103 = vmul.f32 1.0, %v1102
  %v1104 = vadd.f32 %v1038, %v518
  %1106 = vrot.lane.b32.xlu0 %v1104, 96
  %v1107 = vpop.permute.xlu0 %1106
  %v1109 = vmul.f32 %v1103, %v1107
  %1111 = vrot.lane.b32.xlu0 %v1109, 32
  %v1112 = vpop.permute.xlu0 %1111
  %v1114 = vadd.f32 %v1000, %v1112
  %v1115 = vtanh.pop %v1114
  %v1116 = vsub.f32 %v981, %v1115
  %1118 = vrot.lane.b32.xlu0 %v1116, 112
  %v1119 = vpop.permute.xlu0 %1118
  %v1121 = vmul.f32 %v1103, %v1119
  %1123 = vrot.lane.b32.xlu0 %v1121, 16
  %v1124 = vpop.permute.xlu0 %1123
  %v1126 = vadd.f32 %v1115, %v1124
  %v1127 = vpack.c.bf16 %v1083, %v1083
  %1129 = vrot.lane.b32.xlu0 %v1127, 96
  %v1130 = vpop.permute.xlu0 %1129
  %s1132 = scalar_lea.vmem %s6, 16
  %1133 = vst.msk [vmem:[%s1132] sm:$0xf] %vm552, %v1130
  %v1134 = vpack.c.bf16 %v1126, %v1126
  %1136 = vrot.lane.b32.xlu0 %v1134, 96
  %v1137 = vpop.permute.xlu0 %1136
  %s1139 = scalar_lea.vmem %s58, 44
  %1140 = vst.msk [vmem:[%s1139] sm:$0xf] %vm552, %v1137
  %s1141 = scalar_lea.vmem [#allocation2], 40
  %v1142 = vld [vmem:[%s1141] sm:$0xff]
  %s1143 = sadd.s32 80, 128
  %s1144 = scalar_lea.vmem [#allocation2], %s1143
  %v1145 = vld [vmem:[%s1144] sm:$0xff]
  %v1146 = vunpack.c.l.b16 %v1127
  %v1147 = vpack.c.b16 %v1146, %v1146
  %1148 = vrot.lane.b32.xlu0 %v1147, 96
  %v1149 = vpop.permute.xlu0 %1148
  %v1151 = vsel %vm403, %v1149, 0
  %1153 = vmatpush.bf16.msra.mxu0 0
  %1154 = vmatpush.bf16.msra.mxu0 0
  %1155 = vmatpush.bf16.msra.mxu0 0
  %1156 = vmatpush.bf16.msra.mxu0 0
  %1157 = vmatpush.bf16.msra.mxu0 0
  %1158 = vmatpush.bf16.msra.mxu0 0
  %1159 = vmatpush.bf16.msra.mxu0 0
  %1160 = vmatpush.bf16.msra.mxu0 %v401
  %1161 = vmatmul.bf16.gmra.mxu0 %v1151
  %v1162 = vpop.f32.mrf.mxu0
  %v1163 = vadd.f32 0.0, %v1162
  %v1164 = vpop.f32.mrf.mxu0
  %1165 = vdwg.mxu0
  %v1166 = vunpack.c.l.b16 %v1134
  %v1167 = vpack.c.b16 %v1166, %v1166
  %1168 = vrot.lane.b32.xlu0 %v1167, 96
  %v1169 = vpop.permute.xlu0 %1168
  %v1171 = vsel %vm403, %v1169, 0
  %1173 = vmatpush.bf16.msra.mxu0 0
  %1174 = vmatpush.bf16.msra.mxu0 0
  %1175 = vmatpush.bf16.msra.mxu0 0
  %1176 = vmatpush.bf16.msra.mxu0 0
  %1177 = vmatpush.bf16.msra.mxu0 0
  %1178 = vmatpush.bf16.msra.mxu0 0
  %1179 = vmatpush.bf16.msra.mxu0 0
  %1180 = vmatpush.bf16.msra.mxu0 %v425
  %1181 = vmatmul.bf16.gmra.mxu0 %v1171
  %v1182 = vpop.f32.mrf.mxu0
  %v1183 = vadd.f32 0.0, %v1182
  %v1184 = vpop.f32.mrf.mxu0
  %1185 = vdwg.mxu0
  %v1186 = vadd.f32 %v1142, %v1163
  %v1187 = vxor.u32 %v1186, 2147483648
  %v1188 = vmul.f32 %v1187, 1.442695
  %v1189 = vpow.pop %v1188
  %v1190 = vadd.f32 %v1189, 1.0
  %v1191 = vrcp.pop %v1190
  %v1192 = vmul.f32 %v1190, %v1191
  %v1193 = vsub.f32 1.0, %v1192
  %v1194 = vmul.f32 %v1191, %v1193
  %v1195 = vadd.f32 %v1191, %v1194
  %vm1196 = vweird.f32 %v1190
  %vm1197 = vweird.f32 %v1191
  %vm1198 = vmor %vm1196, %vm1197
  %v1199 = vsel %vm1198, %v1191, %v1195
  %v1200 = vand.u32 2147483647, %v1190
  %vm1201 = vcmp.eq.f32.partialorder %v1200, 8.507059e+37
  %v1202 = vand.u32 %v1190, 2147483648
  %v1203 = vor.u32 1.1754944e-38, %v1202
  %v1204 = vsel %vm1201, %v1203, %v1199
  %v1205 = vmul.f32 1.0, %v1204
  %v1206 = vadd.f32 %v1163, %v466
  %1208 = vrot.lane.b32.xlu0 %v1206, 96
  %v1209 = vpop.permute.xlu0 %1208
  %v1211 = vmul.f32 %v1205, %v1209
  %1213 = vrot.lane.b32.xlu0 %v1211, 32
  %v1214 = vpop.permute.xlu0 %1213
  %v1216 = vadd.f32 %v1142, %v1214
  %v1217 = vtanh.pop %v1216
  %v1218 = vsub.f32 %v1083, %v1217
  %1220 = vrot.lane.b32.xlu0 %v1218, 112
  %v1221 = vpop.permute.xlu0 %1220
  %v1223 = vmul.f32 %v1205, %v1221
  %1225 = vrot.lane.b32.xlu0 %v1223, 16
  %v1226 = vpop.permute.xlu0 %1225
  %v1228 = vadd.f32 %v1217, %v1226
  %v1229 = vadd.f32 %v1145, %v1183
  %v1230 = vxor.u32 %v1229, 2147483648
  %v1231 = vmul.f32 %v1230, 1.442695
  %v1232 = vpow.pop %v1231
  %v1233 = vadd.f32 %v1232, 1.0
  %v1234 = vrcp.pop %v1233
  %v1235 = vmul.f32 %v1233, %v1234
  %v1236 = vsub.f32 1.0, %v1235
  %v1237 = vmul.f32 %v1234, %v1236
  %v1238 = vadd.f32 %v1234, %v1237
  %vm1239 = vweird.f32 %v1233
  %vm1240 = vweird.f32 %v1234
  %vm1241 = vmor %vm1239, %vm1240
  %v1242 = vsel %vm1241, %v1234, %v1238
  %v1243 = vand.u32 2147483647, %v1233
  %vm1244 = vcmp.eq.f32.partialorder %v1243, 8.507059e+37
  %v1245 = vand.u32 %v1233, 2147483648
  %v1246 = vor.u32 1.1754944e-38, %v1245
  %v1247 = vsel %vm1244, %v1246, %v1242
  %v1248 = vmul.f32 1.0, %v1247
  %v1249 = vadd.f32 %v1183, %v518
  %1251 = vrot.lane.b32.xlu0 %v1249, 96
  %v1252 = vpop.permute.xlu0 %1251
  %v1254 = vmul.f32 %v1248, %v1252
  %1256 = vrot.lane.b32.xlu0 %v1254, 32
  %v1257 = vpop.permute.xlu0 %1256
  %v1259 = vadd.f32 %v1145, %v1257
  %v1260 = vtanh.pop %v1259
  %v1261 = vsub.f32 %v1126, %v1260
  %1263 = vrot.lane.b32.xlu0 %v1261, 112
  %v1264 = vpop.permute.xlu0 %1263
  %v1266 = vmul.f32 %v1248, %v1264
  %1268 = vrot.lane.b32.xlu0 %v1266, 16
  %v1269 = vpop.permute.xlu0 %1268
  %v1271 = vadd.f32 %v1260, %v1269
  %v1272 = vpack.c.bf16 %v1228, %v1228
  %1274 = vrot.lane.b32.xlu0 %v1272, 96
  %v1275 = vpop.permute.xlu0 %1274
  %s1277 = scalar_lea.vmem %s6, 20
  %1278 = vst.msk [vmem:[%s1277] sm:$0xf] %vm552, %v1275
  %v1279 = vpack.c.bf16 %v1271, %v1271
  %1281 = vrot.lane.b32.xlu0 %v1279, 96
  %v1282 = vpop.permute.xlu0 %1281
  %s1284 = scalar_lea.vmem %s58, 40
  %1285 = vst.msk [vmem:[%s1284] sm:$0xf] %vm552, %v1282
  %s1286 = scalar_lea.vmem [#allocation2], 48
  %v1287 = vld [vmem:[%s1286] sm:$0xff]
  %s1288 = sadd.s32 72, 128
  %s1289 = scalar_lea.vmem [#allocation2], %s1288
  %v1290 = vld [vmem:[%s1289] sm:$0xff]
  %v1291 = vunpack.c.l.b16 %v1272
  %v1292 = vpack.c.b16 %v1291, %v1291
  %1293 = vrot.lane.b32.xlu0 %v1292, 96
  %v1294 = vpop.permute.xlu0 %1293
  %v1296 = vsel %vm403, %v1294, 0
  %1298 = vmatpush.bf16.msra.mxu0 0
  %1299 = vmatpush.bf16.msra.mxu0 0
  %1300 = vmatpush.bf16.msra.mxu0 0
  %1301 = vmatpush.bf16.msra.mxu0 0
  %1302 = vmatpush.bf16.msra.mxu0 0
  %1303 = vmatpush.bf16.msra.mxu0 0
  %1304 = vmatpush.bf16.msra.mxu0 0
  %1305 = vmatpush.bf16.msra.mxu0 %v401
  %1306 = vmatmul.bf16.gmra.mxu0 %v1296
  %v1307 = vpop.f32.mrf.mxu0
  %v1308 = vadd.f32 0.0, %v1307
  %v1309 = vpop.f32.mrf.mxu0
  %1310 = vdwg.mxu0
  %v1311 = vunpack.c.l.b16 %v1279
  %v1312 = vpack.c.b16 %v1311, %v1311
  %1313 = vrot.lane.b32.xlu0 %v1312, 96
  %v1314 = vpop.permute.xlu0 %1313
  %v1316 = vsel %vm403, %v1314, 0
  %1318 = vmatpush.bf16.msra.mxu0 0
  %1319 = vmatpush.bf16.msra.mxu0 0
  %1320 = vmatpush.bf16.msra.mxu0 0
  %1321 = vmatpush.bf16.msra.mxu0 0
  %1322 = vmatpush.bf16.msra.mxu0 0
  %1323 = vmatpush.bf16.msra.mxu0 0
  %1324 = vmatpush.bf16.msra.mxu0 0
  %1325 = vmatpush.bf16.msra.mxu0 %v425
  %1326 = vmatmul.bf16.gmra.mxu0 %v1316
  %v1327 = vpop.f32.mrf.mxu0
  %v1328 = vadd.f32 0.0, %v1327
  %v1329 = vpop.f32.mrf.mxu0
  %1330 = vdwg.mxu0
  %v1331 = vadd.f32 %v1287, %v1308
  %v1332 = vxor.u32 %v1331, 2147483648
  %v1333 = vmul.f32 %v1332, 1.442695
  %v1334 = vpow.pop %v1333
  %v1335 = vadd.f32 %v1334, 1.0
  %v1336 = vrcp.pop %v1335
  %v1337 = vmul.f32 %v1335, %v1336
  %v1338 = vsub.f32 1.0, %v1337
  %v1339 = vmul.f32 %v1336, %v1338
  %v1340 = vadd.f32 %v1336, %v1339
  %vm1341 = vweird.f32 %v1335
  %vm1342 = vweird.f32 %v1336
  %vm1343 = vmor %vm1341, %vm1342
  %v1344 = vsel %vm1343, %v1336, %v1340
  %v1345 = vand.u32 2147483647, %v1335
  %vm1346 = vcmp.eq.f32.partialorder %v1345, 8.507059e+37
  %v1347 = vand.u32 %v1335, 2147483648
  %v1348 = vor.u32 1.1754944e-38, %v1347
  %v1349 = vsel %vm1346, %v1348, %v1344
  %v1350 = vmul.f32 1.0, %v1349
  %v1351 = vadd.f32 %v1308, %v466
  %1353 = vrot.lane.b32.xlu0 %v1351, 96
  %v1354 = vpop.permute.xlu0 %1353
  %v1356 = vmul.f32 %v1350, %v1354
  %1358 = vrot.lane.b32.xlu0 %v1356, 32
  %v1359 = vpop.permute.xlu0 %1358
  %v1361 = vadd.f32 %v1287, %v1359
  %v1362 = vtanh.pop %v1361
  %v1363 = vsub.f32 %v1228, %v1362
  %1365 = vrot.lane.b32.xlu0 %v1363, 112
  %v1366 = vpop.permute.xlu0 %1365
  %v1368 = vmul.f32 %v1350, %v1366
  %1370 = vrot.lane.b32.xlu0 %v1368, 16
  %v1371 = vpop.permute.xlu0 %1370
  %v1373 = vadd.f32 %v1362, %v1371
  %v1374 = vadd.f32 %v1290, %v1328
  %v1375 = vxor.u32 %v1374, 2147483648
  %v1376 = vmul.f32 %v1375, 1.442695
  %v1377 = vpow.pop %v1376
  %v1378 = vadd.f32 %v1377, 1.0
  %v1379 = vrcp.pop %v1378
  %v1380 = vmul.f32 %v1378, %v1379
  %v1381 = vsub.f32 1.0, %v1380
  %v1382 = vmul.f32 %v1379, %v1381
  %v1383 = vadd.f32 %v1379, %v1382
  %vm1384 = vweird.f32 %v1378
  %vm1385 = vweird.f32 %v1379
  %vm1386 = vmor %vm1384, %vm1385
  %v1387 = vsel %vm1386, %v1379, %v1383
  %v1388 = vand.u32 2147483647, %v1378
  %vm1389 = vcmp.eq.f32.partialorder %v1388, 8.507059e+37
  %v1390 = vand.u32 %v1378, 2147483648
  %v1391 = vor.u32 1.1754944e-38, %v1390
  %v1392 = vsel %vm1389, %v1391, %v1387
  %v1393 = vmul.f32 1.0, %v1392
  %v1394 = vadd.f32 %v1328, %v518
  %1396 = vrot.lane.b32.xlu0 %v1394, 96
  %v1397 = vpop.permute.xlu0 %1396
  %v1399 = vmul.f32 %v1393, %v1397
  %1401 = vrot.lane.b32.xlu0 %v1399, 32
  %v1402 = vpop.permute.xlu0 %1401
  %v1404 = vadd.f32 %v1290, %v1402
  %v1405 = vtanh.pop %v1404
  %v1406 = vsub.f32 %v1271, %v1405
  %1408 = vrot.lane.b32.xlu0 %v1406, 112
  %v1409 = vpop.permute.xlu0 %1408
  %v1411 = vmul.f32 %v1393, %v1409
  %1413 = vrot.lane.b32.xlu0 %v1411, 16
  %v1414 = vpop.permute.xlu0 %1413
  %v1416 = vadd.f32 %v1405, %v1414
  %v1417 = vpack.c.bf16 %v1373, %v1373
  %1419 = vrot.lane.b32.xlu0 %v1417, 96
  %v1420 = vpop.permute.xlu0 %1419
  %s1422 = scalar_lea.vmem %s6, 24
  %1423 = vst.msk [vmem:[%s1422] sm:$0xf] %vm552, %v1420
  %v1424 = vpack.c.bf16 %v1416, %v1416
  %1426 = vrot.lane.b32.xlu0 %v1424, 96
  %v1427 = vpop.permute.xlu0 %1426
  %s1429 = scalar_lea.vmem %s58, 36
  %1430 = vst.msk [vmem:[%s1429] sm:$0xf] %vm552, %v1427
  %s1431 = scalar_lea.vmem [#allocation2], 56
  %v1432 = vld [vmem:[%s1431] sm:$0xff]
  %s1433 = sadd.s32 64, 128
  %s1434 = scalar_lea.vmem [#allocation2], %s1433
  %v1435 = vld [vmem:[%s1434] sm:$0xff]
  %v1436 = vunpack.c.l.b16 %v1417
  %v1437 = vpack.c.b16 %v1436, %v1436
  %1438 = vrot.lane.b32.xlu0 %v1437, 96
  %v1439 = vpop.permute.xlu0 %1438
  %v1441 = vsel %vm403, %v1439, 0
  %1443 = vmatpush.bf16.msra.mxu0 0
  %1444 = vmatpush.bf16.msra.mxu0 0
  %1445 = vmatpush.bf16.msra.mxu0 0
  %1446 = vmatpush.bf16.msra.mxu0 0
  %1447 = vmatpush.bf16.msra.mxu0 0
  %1448 = vmatpush.bf16.msra.mxu0 0
  %1449 = vmatpush.bf16.msra.mxu0 0
  %1450 = vmatpush.bf16.msra.mxu0 %v401
  %1451 = vmatmul.bf16.gmra.mxu0 %v1441
  %v1452 = vpop.f32.mrf.mxu0
  %v1453 = vadd.f32 0.0, %v1452
  %v1454 = vpop.f32.mrf.mxu0
  %1455 = vdwg.mxu0
  %v1456 = vunpack.c.l.b16 %v1424
  %v1457 = vpack.c.b16 %v1456, %v1456
  %1458 = vrot.lane.b32.xlu0 %v1457, 96
  %v1459 = vpop.permute.xlu0 %1458
  %v1461 = vsel %vm403, %v1459, 0
  %1463 = vmatpush.bf16.msra.mxu0 0
  %1464 = vmatpush.bf16.msra.mxu0 0
  %1465 = vmatpush.bf16.msra.mxu0 0
  %1466 = vmatpush.bf16.msra.mxu0 0
  %1467 = vmatpush.bf16.msra.mxu0 0
  %1468 = vmatpush.bf16.msra.mxu0 0
  %1469 = vmatpush.bf16.msra.mxu0 0
  %1470 = vmatpush.bf16.msra.mxu0 %v425
  %1471 = vmatmul.bf16.gmra.mxu0 %v1461
  %v1472 = vpop.f32.mrf.mxu0
  %v1473 = vadd.f32 0.0, %v1472
  %v1474 = vpop.f32.mrf.mxu0
  %1475 = vdwg.mxu0
  %v1476 = vadd.f32 %v1432, %v1453
  %v1477 = vxor.u32 %v1476, 2147483648
  %v1478 = vmul.f32 %v1477, 1.442695
  %v1479 = vpow.pop %v1478
  %v1480 = vadd.f32 %v1479, 1.0
  %v1481 = vrcp.pop %v1480
  %v1482 = vmul.f32 %v1480, %v1481
  %v1483 = vsub.f32 1.0, %v1482
  %v1484 = vmul.f32 %v1481, %v1483
  %v1485 = vadd.f32 %v1481, %v1484
  %vm1486 = vweird.f32 %v1480
  %vm1487 = vweird.f32 %v1481
  %vm1488 = vmor %vm1486, %vm1487
  %v1489 = vsel %vm1488, %v1481, %v1485
  %v1490 = vand.u32 2147483647, %v1480
  %vm1491 = vcmp.eq.f32.partialorder %v1490, 8.507059e+37
  %v1492 = vand.u32 %v1480, 2147483648
  %v1493 = vor.u32 1.1754944e-38, %v1492
  %v1494 = vsel %vm1491, %v1493, %v1489
  %v1495 = vmul.f32 1.0, %v1494
  %v1496 = vadd.f32 %v1453, %v466
  %1498 = vrot.lane.b32.xlu0 %v1496, 96
  %v1499 = vpop.permute.xlu0 %1498
  %v1501 = vmul.f32 %v1495, %v1499
  %1503 = vrot.lane.b32.xlu0 %v1501, 32
  %v1504 = vpop.permute.xlu0 %1503
  %v1506 = vadd.f32 %v1432, %v1504
  %v1507 = vtanh.pop %v1506
  %v1508 = vsub.f32 %v1373, %v1507
  %1510 = vrot.lane.b32.xlu0 %v1508, 112
  %v1511 = vpop.permute.xlu0 %1510
  %v1513 = vmul.f32 %v1495, %v1511
  %1515 = vrot.lane.b32.xlu0 %v1513, 16
  %v1516 = vpop.permute.xlu0 %1515
  %v1518 = vadd.f32 %v1507, %v1516
  %v1519 = vadd.f32 %v1435, %v1473
  %v1520 = vxor.u32 %v1519, 2147483648
  %v1521 = vmul.f32 %v1520, 1.442695
  %v1522 = vpow.pop %v1521
  %v1523 = vadd.f32 %v1522, 1.0
  %v1524 = vrcp.pop %v1523
  %v1525 = vmul.f32 %v1523, %v1524
  %v1526 = vsub.f32 1.0, %v1525
  %v1527 = vmul.f32 %v1524, %v1526
  %v1528 = vadd.f32 %v1524, %v1527
  %vm1529 = vweird.f32 %v1523
  %vm1530 = vweird.f32 %v1524
  %vm1531 = vmor %vm1529, %vm1530
  %v1532 = vsel %vm1531, %v1524, %v1528
  %v1533 = vand.u32 2147483647, %v1523
  %vm1534 = vcmp.eq.f32.partialorder %v1533, 8.507059e+37
  %v1535 = vand.u32 %v1523, 2147483648
  %v1536 = vor.u32 1.1754944e-38, %v1535
  %v1537 = vsel %vm1534, %v1536, %v1532
  %v1538 = vmul.f32 1.0, %v1537
  %v1539 = vadd.f32 %v1473, %v518
  %1541 = vrot.lane.b32.xlu0 %v1539, 96
  %v1542 = vpop.permute.xlu0 %1541
  %v1544 = vmul.f32 %v1538, %v1542
  %1546 = vrot.lane.b32.xlu0 %v1544, 32
  %v1547 = vpop.permute.xlu0 %1546
  %v1549 = vadd.f32 %v1435, %v1547
  %v1550 = vtanh.pop %v1549
  %v1551 = vsub.f32 %v1416, %v1550
  %1553 = vrot.lane.b32.xlu0 %v1551, 112
  %v1554 = vpop.permute.xlu0 %1553
  %v1556 = vmul.f32 %v1538, %v1554
  %1558 = vrot.lane.b32.xlu0 %v1556, 16
  %v1559 = vpop.permute.xlu0 %1558
  %v1561 = vadd.f32 %v1550, %v1559
  %v1562 = vpack.c.bf16 %v1518, %v1518
  %1564 = vrot.lane.b32.xlu0 %v1562, 96
  %v1565 = vpop.permute.xlu0 %1564
  %s1567 = scalar_lea.vmem %s6, 28
  %1568 = vst.msk [vmem:[%s1567] sm:$0xf] %vm552, %v1565
  %v1569 = vpack.c.bf16 %v1561, %v1561
  %1571 = vrot.lane.b32.xlu0 %v1569, 96
  %v1572 = vpop.permute.xlu0 %1571
  %s1574 = scalar_lea.vmem %s58, 32
  %1575 = vst.msk [vmem:[%s1574] sm:$0xf] %vm552, %v1572
  %s1576 = scalar_lea.vmem [#allocation2], 64
  %v1577 = vld [vmem:[%s1576] sm:$0xff]
  %s1578 = sadd.s32 56, 128
  %s1579 = scalar_lea.vmem [#allocation2], %s1578
  %v1580 = vld [vmem:[%s1579] sm:$0xff]
  %v1581 = vunpack.c.l.b16 %v1562
  %v1582 = vpack.c.b16 %v1581, %v1581
  %1583 = vrot.lane.b32.xlu0 %v1582, 96
  %v1584 = vpop.permute.xlu0 %1583
  %v1586 = vsel %vm403, %v1584, 0
  %1588 = vmatpush.bf16.msra.mxu0 0
  %1589 = vmatpush.bf16.msra.mxu0 0
  %1590 = vmatpush.bf16.msra.mxu0 0
  %1591 = vmatpush.bf16.msra.mxu0 0
  %1592 = vmatpush.bf16.msra.mxu0 0
  %1593 = vmatpush.bf16.msra.mxu0 0
  %1594 = vmatpush.bf16.msra.mxu0 0
  %1595 = vmatpush.bf16.msra.mxu0 %v401
  %1596 = vmatmul.bf16.gmra.mxu0 %v1586
  %v1597 = vpop.f32.mrf.mxu0
  %v1598 = vadd.f32 0.0, %v1597
  %v1599 = vpop.f32.mrf.mxu0
  %1600 = vdwg.mxu0
  %v1601 = vunpack.c.l.b16 %v1569
  %v1602 = vpack.c.b16 %v1601, %v1601
  %1603 = vrot.lane.b32.xlu0 %v1602, 96
  %v1604 = vpop.permute.xlu0 %1603
  %v1606 = vsel %vm403, %v1604, 0
  %1608 = vmatpush.bf16.msra.mxu0 0
  %1609 = vmatpush.bf16.msra.mxu0 0
  %1610 = vmatpush.bf16.msra.mxu0 0
  %1611 = vmatpush.bf16.msra.mxu0 0
  %1612 = vmatpush.bf16.msra.mxu0 0
  %1613 = vmatpush.bf16.msra.mxu0 0
  %1614 = vmatpush.bf16.msra.mxu0 0
  %1615 = vmatpush.bf16.msra.mxu0 %v425
  %1616 = vmatmul.bf16.gmra.mxu0 %v1606
  %v1617 = vpop.f32.mrf.mxu0
  %v1618 = vadd.f32 0.0, %v1617
  %v1619 = vpop.f32.mrf.mxu0
  %1620 = vdwg.mxu0
  %v1621 = vadd.f32 %v1577, %v1598
  %v1622 = vxor.u32 %v1621, 2147483648
  %v1623 = vmul.f32 %v1622, 1.442695
  %v1624 = vpow.pop %v1623
  %v1625 = vadd.f32 %v1624, 1.0
  %v1626 = vrcp.pop %v1625
  %v1627 = vmul.f32 %v1625, %v1626
  %v1628 = vsub.f32 1.0, %v1627
  %v1629 = vmul.f32 %v1626, %v1628
  %v1630 = vadd.f32 %v1626, %v1629
  %vm1631 = vweird.f32 %v1625
  %vm1632 = vweird.f32 %v1626
  %vm1633 = vmor %vm1631, %vm1632
  %v1634 = vsel %vm1633, %v1626, %v1630
  %v1635 = vand.u32 2147483647, %v1625
  %vm1636 = vcmp.eq.f32.partialorder %v1635, 8.507059e+37
  %v1637 = vand.u32 %v1625, 2147483648
  %v1638 = vor.u32 1.1754944e-38, %v1637
  %v1639 = vsel %vm1636, %v1638, %v1634
  %v1640 = vmul.f32 1.0, %v1639
  %v1641 = vadd.f32 %v1598, %v466
  %1643 = vrot.lane.b32.xlu0 %v1641, 96
  %v1644 = vpop.permute.xlu0 %1643
  %v1646 = vmul.f32 %v1640, %v1644
  %1648 = vrot.lane.b32.xlu0 %v1646, 32
  %v1649 = vpop.permute.xlu0 %1648
  %v1651 = vadd.f32 %v1577, %v1649
  %v1652 = vtanh.pop %v1651
  %v1653 = vsub.f32 %v1518, %v1652
  %1655 = vrot.lane.b32.xlu0 %v1653, 112
  %v1656 = vpop.permute.xlu0 %1655
  %v1658 = vmul.f32 %v1640, %v1656
  %1660 = vrot.lane.b32.xlu0 %v1658, 16
  %v1661 = vpop.permute.xlu0 %1660
  %v1663 = vadd.f32 %v1652, %v1661
  %v1664 = vadd.f32 %v1580, %v1618
  %v1665 = vxor.u32 %v1664, 2147483648
  %v1666 = vmul.f32 %v1665, 1.442695
  %v1667 = vpow.pop %v1666
  %v1668 = vadd.f32 %v1667, 1.0
  %v1669 = vrcp.pop %v1668
  %v1670 = vmul.f32 %v1668, %v1669
  %v1671 = vsub.f32 1.0, %v1670
  %v1672 = vmul.f32 %v1669, %v1671
  %v1673 = vadd.f32 %v1669, %v1672
  %vm1674 = vweird.f32 %v1668
  %vm1675 = vweird.f32 %v1669
  %vm1676 = vmor %vm1674, %vm1675
  %v1677 = vsel %vm1676, %v1669, %v1673
  %v1678 = vand.u32 2147483647, %v1668
  %vm1679 = vcmp.eq.f32.partialorder %v1678, 8.507059e+37
  %v1680 = vand.u32 %v1668, 2147483648
  %v1681 = vor.u32 1.1754944e-38, %v1680
  %v1682 = vsel %vm1679, %v1681, %v1677
  %v1683 = vmul.f32 1.0, %v1682
  %v1684 = vadd.f32 %v1618, %v518
  %1686 = vrot.lane.b32.xlu0 %v1684, 96
  %v1687 = vpop.permute.xlu0 %1686
  %v1689 = vmul.f32 %v1683, %v1687
  %1691 = vrot.lane.b32.xlu0 %v1689, 32
  %v1692 = vpop.permute.xlu0 %1691
  %v1694 = vadd.f32 %v1580, %v1692
  %v1695 = vtanh.pop %v1694
  %v1696 = vsub.f32 %v1561, %v1695
  %1698 = vrot.lane.b32.xlu0 %v1696, 112
  %v1699 = vpop.permute.xlu0 %1698
  %v1701 = vmul.f32 %v1683, %v1699
  %1703 = vrot.lane.b32.xlu0 %v1701, 16
  %v1704 = vpop.permute.xlu0 %1703
  %v1706 = vadd.f32 %v1695, %v1704
  %v1707 = vpack.c.bf16 %v1663, %v1663
  %1709 = vrot.lane.b32.xlu0 %v1707, 96
  %v1710 = vpop.permute.xlu0 %1709
  %s1712 = scalar_lea.vmem %s6, 32
  %1713 = vst.msk [vmem:[%s1712] sm:$0xf] %vm552, %v1710
  %v1714 = vpack.c.bf16 %v1706, %v1706
  %1716 = vrot.lane.b32.xlu0 %v1714, 96
  %v1717 = vpop.permute.xlu0 %1716
  %s1719 = scalar_lea.vmem %s58, 28
  %1720 = vst.msk [vmem:[%s1719] sm:$0xf] %vm552, %v1717
  %s1721 = scalar_lea.vmem [#allocation2], 72
  %v1722 = vld [vmem:[%s1721] sm:$0xff]
  %s1723 = sadd.s32 48, 128
  %s1724 = scalar_lea.vmem [#allocation2], %s1723
  %v1725 = vld [vmem:[%s1724] sm:$0xff]
  %v1726 = vunpack.c.l.b16 %v1707
  %v1727 = vpack.c.b16 %v1726, %v1726
  %1728 = vrot.lane.b32.xlu0 %v1727, 96
  %v1729 = vpop.permute.xlu0 %1728
  %v1731 = vsel %vm403, %v1729, 0
  %1733 = vmatpush.bf16.msra.mxu0 0
  %1734 = vmatpush.bf16.msra.mxu0 0
  %1735 = vmatpush.bf16.msra.mxu0 0
  %1736 = vmatpush.bf16.msra.mxu0 0
  %1737 = vmatpush.bf16.msra.mxu0 0
  %1738 = vmatpush.bf16.msra.mxu0 0
  %1739 = vmatpush.bf16.msra.mxu0 0
  %1740 = vmatpush.bf16.msra.mxu0 %v401
  %1741 = vmatmul.bf16.gmra.mxu0 %v1731
  %v1742 = vpop.f32.mrf.mxu0
  %v1743 = vadd.f32 0.0, %v1742
  %v1744 = vpop.f32.mrf.mxu0
  %1745 = vdwg.mxu0
  %v1746 = vunpack.c.l.b16 %v1714
  %v1747 = vpack.c.b16 %v1746, %v1746
  %1748 = vrot.lane.b32.xlu0 %v1747, 96
  %v1749 = vpop.permute.xlu0 %1748
  %v1751 = vsel %vm403, %v1749, 0
  %1753 = vmatpush.bf16.msra.mxu0 0
  %1754 = vmatpush.bf16.msra.mxu0 0
  %1755 = vmatpush.bf16.msra.mxu0 0
  %1756 = vmatpush.bf16.msra.mxu0 0
  %1757 = vmatpush.bf16.msra.mxu0 0
  %1758 = vmatpush.bf16.msra.mxu0 0
  %1759 = vmatpush.bf16.msra.mxu0 0
  %1760 = vmatpush.bf16.msra.mxu0 %v425
  %1761 = vmatmul.bf16.gmra.mxu0 %v1751
  %v1762 = vpop.f32.mrf.mxu0
  %v1763 = vadd.f32 0.0, %v1762
  %v1764 = vpop.f32.mrf.mxu0
  %1765 = vdwg.mxu0
  %v1766 = vadd.f32 %v1722, %v1743
  %v1767 = vxor.u32 %v1766, 2147483648
  %v1768 = vmul.f32 %v1767, 1.442695
  %v1769 = vpow.pop %v1768
  %v1770 = vadd.f32 %v1769, 1.0
  %v1771 = vrcp.pop %v1770
  %v1772 = vmul.f32 %v1770, %v1771
  %v1773 = vsub.f32 1.0, %v1772
  %v1774 = vmul.f32 %v1771, %v1773
  %v1775 = vadd.f32 %v1771, %v1774
  %vm1776 = vweird.f32 %v1770
  %vm1777 = vweird.f32 %v1771
  %vm1778 = vmor %vm1776, %vm1777
  %v1779 = vsel %vm1778, %v1771, %v1775
  %v1780 = vand.u32 2147483647, %v1770
  %vm1781 = vcmp.eq.f32.partialorder %v1780, 8.507059e+37
  %v1782 = vand.u32 %v1770, 2147483648
  %v1783 = vor.u32 1.1754944e-38, %v1782
  %v1784 = vsel %vm1781, %v1783, %v1779
  %v1785 = vmul.f32 1.0, %v1784
  %v1786 = vadd.f32 %v1743, %v466
  %1788 = vrot.lane.b32.xlu0 %v1786, 96
  %v1789 = vpop.permute.xlu0 %1788
  %v1791 = vmul.f32 %v1785, %v1789
  %1793 = vrot.lane.b32.xlu0 %v1791, 32
  %v1794 = vpop.permute.xlu0 %1793
  %v1796 = vadd.f32 %v1722, %v1794
  %v1797 = vtanh.pop %v1796
  %v1798 = vsub.f32 %v1663, %v1797
  %1800 = vrot.lane.b32.xlu0 %v1798, 112
  %v1801 = vpop.permute.xlu0 %1800
  %v1803 = vmul.f32 %v1785, %v1801
  %1805 = vrot.lane.b32.xlu0 %v1803, 16
  %v1806 = vpop.permute.xlu0 %1805
  %v1808 = vadd.f32 %v1797, %v1806
  %v1809 = vadd.f32 %v1725, %v1763
  %v1810 = vxor.u32 %v1809, 2147483648
  %v1811 = vmul.f32 %v1810, 1.442695
  %v1812 = vpow.pop %v1811
  %v1813 = vadd.f32 %v1812, 1.0
  %v1814 = vrcp.pop %v1813
  %v1815 = vmul.f32 %v1813, %v1814
  %v1816 = vsub.f32 1.0, %v1815
  %v1817 = vmul.f32 %v1814, %v1816
  %v1818 = vadd.f32 %v1814, %v1817
  %vm1819 = vweird.f32 %v1813
  %vm1820 = vweird.f32 %v1814
  %vm1821 = vmor %vm1819, %vm1820
  %v1822 = vsel %vm1821, %v1814, %v1818
  %v1823 = vand.u32 2147483647, %v1813
  %vm1824 = vcmp.eq.f32.partialorder %v1823, 8.507059e+37
  %v1825 = vand.u32 %v1813, 2147483648
  %v1826 = vor.u32 1.1754944e-38, %v1825
  %v1827 = vsel %vm1824, %v1826, %v1822
  %v1828 = vmul.f32 1.0, %v1827
  %v1829 = vadd.f32 %v1763, %v518
  %1831 = vrot.lane.b32.xlu0 %v1829, 96
  %v1832 = vpop.permute.xlu0 %1831
  %v1834 = vmul.f32 %v1828, %v1832
  %1836 = vrot.lane.b32.xlu0 %v1834, 32
  %v1837 = vpop.permute.xlu0 %1836
  %v1839 = vadd.f32 %v1725, %v1837
  %v1840 = vtanh.pop %v1839
  %v1841 = vsub.f32 %v1706, %v1840
  %1843 = vrot.lane.b32.xlu0 %v1841, 112
  %v1844 = vpop.permute.xlu0 %1843
  %v1846 = vmul.f32 %v1828, %v1844
  %1848 = vrot.lane.b32.xlu0 %v1846, 16
  %v1849 = vpop.permute.xlu0 %1848
  %v1851 = vadd.f32 %v1840, %v1849
  %v1852 = vpack.c.bf16 %v1808, %v1808
  %1854 = vrot.lane.b32.xlu0 %v1852, 96
  %v1855 = vpop.permute.xlu0 %1854
  %s1857 = scalar_lea.vmem %s6, 36
  %1858 = vst.msk [vmem:[%s1857] sm:$0xf] %vm552, %v1855
  %v1859 = vpack.c.bf16 %v1851, %v1851
  %1861 = vrot.lane.b32.xlu0 %v1859, 96
  %v1862 = vpop.permute.xlu0 %1861
  %s1864 = scalar_lea.vmem %s58, 24
  %1865 = vst.msk [vmem:[%s1864] sm:$0xf] %vm552, %v1862
  %s1866 = scalar_lea.vmem [#allocation2], 80
  %v1867 = vld [vmem:[%s1866] sm:$0xff]
  %s1868 = sadd.s32 40, 128
  %s1869 = scalar_lea.vmem [#allocation2], %s1868
  %v1870 = vld [vmem:[%s1869] sm:$0xff]
  %v1871 = vunpack.c.l.b16 %v1852
  %v1872 = vpack.c.b16 %v1871, %v1871
  %1873 = vrot.lane.b32.xlu0 %v1872, 96
  %v1874 = vpop.permute.xlu0 %1873
  %v1876 = vsel %vm403, %v1874, 0
  %1878 = vmatpush.bf16.msra.mxu0 0
  %1879 = vmatpush.bf16.msra.mxu0 0
  %1880 = vmatpush.bf16.msra.mxu0 0
  %1881 = vmatpush.bf16.msra.mxu0 0
  %1882 = vmatpush.bf16.msra.mxu0 0
  %1883 = vmatpush.bf16.msra.mxu0 0
  %1884 = vmatpush.bf16.msra.mxu0 0
  %1885 = vmatpush.bf16.msra.mxu0 %v401
  %1886 = vmatmul.bf16.gmra.mxu0 %v1876
  %v1887 = vpop.f32.mrf.mxu0
  %v1888 = vadd.f32 0.0, %v1887
  %v1889 = vpop.f32.mrf.mxu0
  %1890 = vdwg.mxu0
  %v1891 = vunpack.c.l.b16 %v1859
  %v1892 = vpack.c.b16 %v1891, %v1891
  %1893 = vrot.lane.b32.xlu0 %v1892, 96
  %v1894 = vpop.permute.xlu0 %1893
  %v1896 = vsel %vm403, %v1894, 0
  %1898 = vmatpush.bf16.msra.mxu0 0
  %1899 = vmatpush.bf16.msra.mxu0 0
  %1900 = vmatpush.bf16.msra.mxu0 0
  %1901 = vmatpush.bf16.msra.mxu0 0
  %1902 = vmatpush.bf16.msra.mxu0 0
  %1903 = vmatpush.bf16.msra.mxu0 0
  %1904 = vmatpush.bf16.msra.mxu0 0
  %1905 = vmatpush.bf16.msra.mxu0 %v425
  %1906 = vmatmul.bf16.gmra.mxu0 %v1896
  %v1907 = vpop.f32.mrf.mxu0
  %v1908 = vadd.f32 0.0, %v1907
  %v1909 = vpop.f32.mrf.mxu0
  %1910 = vdwg.mxu0
  %v1911 = vadd.f32 %v1867, %v1888
  %v1912 = vxor.u32 %v1911, 2147483648
  %v1913 = vmul.f32 %v1912, 1.442695
  %v1914 = vpow.pop %v1913
  %v1915 = vadd.f32 %v1914, 1.0
  %v1916 = vrcp.pop %v1915
  %v1917 = vmul.f32 %v1915, %v1916
  %v1918 = vsub.f32 1.0, %v1917
  %v1919 = vmul.f32 %v1916, %v1918
  %v1920 = vadd.f32 %v1916, %v1919
  %vm1921 = vweird.f32 %v1915
  %vm1922 = vweird.f32 %v1916
  %vm1923 = vmor %vm1921, %vm1922
  %v1924 = vsel %vm1923, %v1916, %v1920
  %v1925 = vand.u32 2147483647, %v1915
  %vm1926 = vcmp.eq.f32.partialorder %v1925, 8.507059e+37
  %v1927 = vand.u32 %v1915, 2147483648
  %v1928 = vor.u32 1.1754944e-38, %v1927
  %v1929 = vsel %vm1926, %v1928, %v1924
  %v1930 = vmul.f32 1.0, %v1929
  %v1931 = vadd.f32 %v1888, %v466
  %1933 = vrot.lane.b32.xlu0 %v1931, 96
  %v1934 = vpop.permute.xlu0 %1933
  %v1936 = vmul.f32 %v1930, %v1934
  %1938 = vrot.lane.b32.xlu0 %v1936, 32
  %v1939 = vpop.permute.xlu0 %1938
  %v1941 = vadd.f32 %v1867, %v1939
  %v1942 = vtanh.pop %v1941
  %v1943 = vsub.f32 %v1808, %v1942
  %1945 = vrot.lane.b32.xlu0 %v1943, 112
  %v1946 = vpop.permute.xlu0 %1945
  %v1948 = vmul.f32 %v1930, %v1946
  %1950 = vrot.lane.b32.xlu0 %v1948, 16
  %v1951 = vpop.permute.xlu0 %1950
  %v1953 = vadd.f32 %v1942, %v1951
  %v1954 = vadd.f32 %v1870, %v1908
  %v1955 = vxor.u32 %v1954, 2147483648
  %v1956 = vmul.f32 %v1955, 1.442695
  %v1957 = vpow.pop %v1956
  %v1958 = vadd.f32 %v1957, 1.0
  %v1959 = vrcp.pop %v1958
  %v1960 = vmul.f32 %v1958, %v1959
  %v1961 = vsub.f32 1.0, %v1960
  %v1962 = vmul.f32 %v1959, %v1961
  %v1963 = vadd.f32 %v1959, %v1962
  %vm1964 = vweird.f32 %v1958
  %vm1965 = vweird.f32 %v1959
  %vm1966 = vmor %vm1964, %vm1965
  %v1967 = vsel %vm1966, %v1959, %v1963
  %v1968 = vand.u32 2147483647, %v1958
  %vm1969 = vcmp.eq.f32.partialorder %v1968, 8.507059e+37
  %v1970 = vand.u32 %v1958, 2147483648
  %v1971 = vor.u32 1.1754944e-38, %v1970
  %v1972 = vsel %vm1969, %v1971, %v1967
  %v1973 = vmul.f32 1.0, %v1972
  %v1974 = vadd.f32 %v1908, %v518
  %1976 = vrot.lane.b32.xlu0 %v1974, 96
  %v1977 = vpop.permute.xlu0 %1976
  %v1979 = vmul.f32 %v1973, %v1977
  %1981 = vrot.lane.b32.xlu0 %v1979, 32
  %v1982 = vpop.permute.xlu0 %1981
  %v1984 = vadd.f32 %v1870, %v1982
  %v1985 = vtanh.pop %v1984
  %v1986 = vsub.f32 %v1851, %v1985
  %1988 = vrot.lane.b32.xlu0 %v1986, 112
  %v1989 = vpop.permute.xlu0 %1988
  %v1991 = vmul.f32 %v1973, %v1989
  %1993 = vrot.lane.b32.xlu0 %v1991, 16
  %v1994 = vpop.permute.xlu0 %1993
  %v1996 = vadd.f32 %v1985, %v1994
  %v1997 = vpack.c.bf16 %v1953, %v1953
  %1999 = vrot.lane.b32.xlu0 %v1997, 96
  %v2000 = vpop.permute.xlu0 %1999
  %s2002 = scalar_lea.vmem %s6, 40
  %2003 = vst.msk [vmem:[%s2002] sm:$0xf] %vm552, %v2000
  %v2004 = vpack.c.bf16 %v1996, %v1996
  %2006 = vrot.lane.b32.xlu0 %v2004, 96
  %v2007 = vpop.permute.xlu0 %2006
  %s2009 = scalar_lea.vmem %s58, 20
  %2010 = vst.msk [vmem:[%s2009] sm:$0xf] %vm552, %v2007
  %s2011 = scalar_lea.vmem [#allocation2], 88
  %v2012 = vld [vmem:[%s2011] sm:$0xff]
  %s2013 = sadd.s32 32, 128
  %s2014 = scalar_lea.vmem [#allocation2], %s2013
  %v2015 = vld [vmem:[%s2014] sm:$0xff]
  %v2016 = vunpack.c.l.b16 %v1997
  %v2017 = vpack.c.b16 %v2016, %v2016
  %2018 = vrot.lane.b32.xlu0 %v2017, 96
  %v2019 = vpop.permute.xlu0 %2018
  %v2021 = vsel %vm403, %v2019, 0
  %2023 = vmatpush.bf16.msra.mxu0 0
  %2024 = vmatpush.bf16.msra.mxu0 0
  %2025 = vmatpush.bf16.msra.mxu0 0
  %2026 = vmatpush.bf16.msra.mxu0 0
  %2027 = vmatpush.bf16.msra.mxu0 0
  %2028 = vmatpush.bf16.msra.mxu0 0
  %2029 = vmatpush.bf16.msra.mxu0 0
  %2030 = vmatpush.bf16.msra.mxu0 %v401
  %2031 = vmatmul.bf16.gmra.mxu0 %v2021
  %v2032 = vpop.f32.mrf.mxu0
  %v2033 = vadd.f32 0.0, %v2032
  %v2034 = vpop.f32.mrf.mxu0
  %2035 = vdwg.mxu0
  %v2036 = vunpack.c.l.b16 %v2004
  %v2037 = vpack.c.b16 %v2036, %v2036
  %2038 = vrot.lane.b32.xlu0 %v2037, 96
  %v2039 = vpop.permute.xlu0 %2038
  %v2041 = vsel %vm403, %v2039, 0
  %2043 = vmatpush.bf16.msra.mxu0 0
  %2044 = vmatpush.bf16.msra.mxu0 0
  %2045 = vmatpush.bf16.msra.mxu0 0
  %2046 = vmatpush.bf16.msra.mxu0 0
  %2047 = vmatpush.bf16.msra.mxu0 0
  %2048 = vmatpush.bf16.msra.mxu0 0
  %2049 = vmatpush.bf16.msra.mxu0 0
  %2050 = vmatpush.bf16.msra.mxu0 %v425
  %2051 = vmatmul.bf16.gmra.mxu0 %v2041
  %v2052 = vpop.f32.mrf.mxu0
  %v2053 = vadd.f32 0.0, %v2052
  %v2054 = vpop.f32.mrf.mxu0
  %2055 = vdwg.mxu0
  %v2056 = vadd.f32 %v2012, %v2033
  %v2057 = vxor.u32 %v2056, 2147483648
  %v2058 = vmul.f32 %v2057, 1.442695
  %v2059 = vpow.pop %v2058
  %v2060 = vadd.f32 %v2059, 1.0
  %v2061 = vrcp.pop %v2060
  %v2062 = vmul.f32 %v2060, %v2061
  %v2063 = vsub.f32 1.0, %v2062
  %v2064 = vmul.f32 %v2061, %v2063
  %v2065 = vadd.f32 %v2061, %v2064
  %vm2066 = vweird.f32 %v2060
  %vm2067 = vweird.f32 %v2061
  %vm2068 = vmor %vm2066, %vm2067
  %v2069 = vsel %vm2068, %v2061, %v2065
  %v2070 = vand.u32 2147483647, %v2060
  %vm2071 = vcmp.eq.f32.partialorder %v2070, 8.507059e+37
  %v2072 = vand.u32 %v2060, 2147483648
  %v2073 = vor.u32 1.1754944e-38, %v2072
  %v2074 = vsel %vm2071, %v2073, %v2069
  %v2075 = vmul.f32 1.0, %v2074
  %v2076 = vadd.f32 %v2033, %v466
  %2078 = vrot.lane.b32.xlu0 %v2076, 96
  %v2079 = vpop.permute.xlu0 %2078
  %v2081 = vmul.f32 %v2075, %v2079
  %2083 = vrot.lane.b32.xlu0 %v2081, 32
  %v2084 = vpop.permute.xlu0 %2083
  %v2086 = vadd.f32 %v2012, %v2084
  %v2087 = vtanh.pop %v2086
  %v2088 = vsub.f32 %v1953, %v2087
  %2090 = vrot.lane.b32.xlu0 %v2088, 112
  %v2091 = vpop.permute.xlu0 %2090
  %v2093 = vmul.f32 %v2075, %v2091
  %2095 = vrot.lane.b32.xlu0 %v2093, 16
  %v2096 = vpop.permute.xlu0 %2095
  %v2098 = vadd.f32 %v2087, %v2096
  %v2099 = vadd.f32 %v2015, %v2053
  %v2100 = vxor.u32 %v2099, 2147483648
  %v2101 = vmul.f32 %v2100, 1.442695
  %v2102 = vpow.pop %v2101
  %v2103 = vadd.f32 %v2102, 1.0
  %v2104 = vrcp.pop %v2103
  %v2105 = vmul.f32 %v2103, %v2104
  %v2106 = vsub.f32 1.0, %v2105
  %v2107 = vmul.f32 %v2104, %v2106
  %v2108 = vadd.f32 %v2104, %v2107
  %vm2109 = vweird.f32 %v2103
  %vm2110 = vweird.f32 %v2104
  %vm2111 = vmor %vm2109, %vm2110
  %v2112 = vsel %vm2111, %v2104, %v2108
  %v2113 = vand.u32 2147483647, %v2103
  %vm2114 = vcmp.eq.f32.partialorder %v2113, 8.507059e+37
  %v2115 = vand.u32 %v2103, 2147483648
  %v2116 = vor.u32 1.1754944e-38, %v2115
  %v2117 = vsel %vm2114, %v2116, %v2112
  %v2118 = vmul.f32 1.0, %v2117
  %v2119 = vadd.f32 %v2053, %v518
  %2121 = vrot.lane.b32.xlu0 %v2119, 96
  %v2122 = vpop.permute.xlu0 %2121
  %v2124 = vmul.f32 %v2118, %v2122
  %2126 = vrot.lane.b32.xlu0 %v2124, 32
  %v2127 = vpop.permute.xlu0 %2126
  %v2129 = vadd.f32 %v2015, %v2127
  %v2130 = vtanh.pop %v2129
  %v2131 = vsub.f32 %v1996, %v2130
  %2133 = vrot.lane.b32.xlu0 %v2131, 112
  %v2134 = vpop.permute.xlu0 %2133
  %v2136 = vmul.f32 %v2118, %v2134
  %2138 = vrot.lane.b32.xlu0 %v2136, 16
  %v2139 = vpop.permute.xlu0 %2138
  %v2141 = vadd.f32 %v2130, %v2139
  %v2142 = vpack.c.bf16 %v2098, %v2098
  %2144 = vrot.lane.b32.xlu0 %v2142, 96
  %v2145 = vpop.permute.xlu0 %2144
  %s2147 = scalar_lea.vmem %s6, 44
  %2148 = vst.msk [vmem:[%s2147] sm:$0xf] %vm552, %v2145
  %v2149 = vpack.c.bf16 %v2141, %v2141
  %2151 = vrot.lane.b32.xlu0 %v2149, 96
  %v2152 = vpop.permute.xlu0 %2151
  %s2154 = scalar_lea.vmem %s58, 16
  %2155 = vst.msk [vmem:[%s2154] sm:$0xf] %vm552, %v2152
  %s2156 = scalar_lea.vmem [#allocation2], 96
  %v2157 = vld [vmem:[%s2156] sm:$0xff]
  %s2158 = sadd.s32 24, 128
  %s2159 = scalar_lea.vmem [#allocation2], %s2158
  %v2160 = vld [vmem:[%s2159] sm:$0xff]
  %v2161 = vunpack.c.l.b16 %v2142
  %v2162 = vpack.c.b16 %v2161, %v2161
  %2163 = vrot.lane.b32.xlu0 %v2162, 96
  %v2164 = vpop.permute.xlu0 %2163
  %v2166 = vsel %vm403, %v2164, 0
  %2168 = vmatpush.bf16.msra.mxu0 0
  %2169 = vmatpush.bf16.msra.mxu0 0
  %2170 = vmatpush.bf16.msra.mxu0 0
  %2171 = vmatpush.bf16.msra.mxu0 0
  %2172 = vmatpush.bf16.msra.mxu0 0
  %2173 = vmatpush.bf16.msra.mxu0 0
  %2174 = vmatpush.bf16.msra.mxu0 0
  %2175 = vmatpush.bf16.msra.mxu0 %v401
  %2176 = vmatmul.bf16.gmra.mxu0 %v2166
  %v2177 = vpop.f32.mrf.mxu0
  %v2178 = vadd.f32 0.0, %v2177
  %v2179 = vpop.f32.mrf.mxu0
  %2180 = vdwg.mxu0
  %v2181 = vunpack.c.l.b16 %v2149
  %v2182 = vpack.c.b16 %v2181, %v2181
  %2183 = vrot.lane.b32.xlu0 %v2182, 96
  %v2184 = vpop.permute.xlu0 %2183
  %v2186 = vsel %vm403, %v2184, 0
  %2188 = vmatpush.bf16.msra.mxu0 0
  %2189 = vmatpush.bf16.msra.mxu0 0
  %2190 = vmatpush.bf16.msra.mxu0 0
  %2191 = vmatpush.bf16.msra.mxu0 0
  %2192 = vmatpush.bf16.msra.mxu0 0
  %2193 = vmatpush.bf16.msra.mxu0 0
  %2194 = vmatpush.bf16.msra.mxu0 0
  %2195 = vmatpush.bf16.msra.mxu0 %v425
  %2196 = vmatmul.bf16.gmra.mxu0 %v2186
  %v2197 = vpop.f32.mrf.mxu0
  %v2198 = vadd.f32 0.0, %v2197
  %v2199 = vpop.f32.mrf.mxu0
  %2200 = vdwg.mxu0
  %v2201 = vadd.f32 %v2157, %v2178
  %v2202 = vxor.u32 %v2201, 2147483648
  %v2203 = vmul.f32 %v2202, 1.442695
  %v2204 = vpow.pop %v2203
  %v2205 = vadd.f32 %v2204, 1.0
  %v2206 = vrcp.pop %v2205
  %v2207 = vmul.f32 %v2205, %v2206
  %v2208 = vsub.f32 1.0, %v2207
  %v2209 = vmul.f32 %v2206, %v2208
  %v2210 = vadd.f32 %v2206, %v2209
  %vm2211 = vweird.f32 %v2205
  %vm2212 = vweird.f32 %v2206
  %vm2213 = vmor %vm2211, %vm2212
  %v2214 = vsel %vm2213, %v2206, %v2210
  %v2215 = vand.u32 2147483647, %v2205
  %vm2216 = vcmp.eq.f32.partialorder %v2215, 8.507059e+37
  %v2217 = vand.u32 %v2205, 2147483648
  %v2218 = vor.u32 1.1754944e-38, %v2217
  %v2219 = vsel %vm2216, %v2218, %v2214
  %v2220 = vmul.f32 1.0, %v2219
  %v2221 = vadd.f32 %v2178, %v466
  %2223 = vrot.lane.b32.xlu0 %v2221, 96
  %v2224 = vpop.permute.xlu0 %2223
  %v2226 = vmul.f32 %v2220, %v2224
  %2228 = vrot.lane.b32.xlu0 %v2226, 32
  %v2229 = vpop.permute.xlu0 %2228
  %v2231 = vadd.f32 %v2157, %v2229
  %v2232 = vtanh.pop %v2231
  %v2233 = vsub.f32 %v2098, %v2232
  %2235 = vrot.lane.b32.xlu0 %v2233, 112
  %v2236 = vpop.permute.xlu0 %2235
  %v2238 = vmul.f32 %v2220, %v2236
  %2240 = vrot.lane.b32.xlu0 %v2238, 16
  %v2241 = vpop.permute.xlu0 %2240
  %v2243 = vadd.f32 %v2232, %v2241
  %v2244 = vadd.f32 %v2160, %v2198
  %v2245 = vxor.u32 %v2244, 2147483648
  %v2246 = vmul.f32 %v2245, 1.442695
  %v2247 = vpow.pop %v2246
  %v2248 = vadd.f32 %v2247, 1.0
  %v2249 = vrcp.pop %v2248
  %v2250 = vmul.f32 %v2248, %v2249
  %v2251 = vsub.f32 1.0, %v2250
  %v2252 = vmul.f32 %v2249, %v2251
  %v2253 = vadd.f32 %v2249, %v2252
  %vm2254 = vweird.f32 %v2248
  %vm2255 = vweird.f32 %v2249
  %vm2256 = vmor %vm2254, %vm2255
  %v2257 = vsel %vm2256, %v2249, %v2253
  %v2258 = vand.u32 2147483647, %v2248
  %vm2259 = vcmp.eq.f32.partialorder %v2258, 8.507059e+37
  %v2260 = vand.u32 %v2248, 2147483648
  %v2261 = vor.u32 1.1754944e-38, %v2260
  %v2262 = vsel %vm2259, %v2261, %v2257
  %v2263 = vmul.f32 1.0, %v2262
  %v2264 = vadd.f32 %v2198, %v518
  %2266 = vrot.lane.b32.xlu0 %v2264, 96
  %v2267 = vpop.permute.xlu0 %2266
  %v2269 = vmul.f32 %v2263, %v2267
  %2271 = vrot.lane.b32.xlu0 %v2269, 32
  %v2272 = vpop.permute.xlu0 %2271
  %v2274 = vadd.f32 %v2160, %v2272
  %v2275 = vtanh.pop %v2274
  %v2276 = vsub.f32 %v2141, %v2275
  %2278 = vrot.lane.b32.xlu0 %v2276, 112
  %v2279 = vpop.permute.xlu0 %2278
  %v2281 = vmul.f32 %v2263, %v2279
  %2283 = vrot.lane.b32.xlu0 %v2281, 16
  %v2284 = vpop.permute.xlu0 %2283
  %v2286 = vadd.f32 %v2275, %v2284
  %v2287 = vpack.c.bf16 %v2243, %v2243
  %2289 = vrot.lane.b32.xlu0 %v2287, 96
  %v2290 = vpop.permute.xlu0 %2289
  %s2292 = scalar_lea.vmem %s6, 48
  %2293 = vst.msk [vmem:[%s2292] sm:$0xf] %vm552, %v2290
  %v2294 = vpack.c.bf16 %v2286, %v2286
  %2296 = vrot.lane.b32.xlu0 %v2294, 96
  %v2297 = vpop.permute.xlu0 %2296
  %s2299 = scalar_lea.vmem %s58, 12
  %2300 = vst.msk [vmem:[%s2299] sm:$0xf] %vm552, %v2297
  %s2301 = scalar_lea.vmem [#allocation2], 104
  %v2302 = vld [vmem:[%s2301] sm:$0xff]
  %s2303 = sadd.s32 16, 128
  %s2304 = scalar_lea.vmem [#allocation2], %s2303
  %v2305 = vld [vmem:[%s2304] sm:$0xff]
  %v2306 = vunpack.c.l.b16 %v2287
  %v2307 = vpack.c.b16 %v2306, %v2306
  %2308 = vrot.lane.b32.xlu0 %v2307, 96
  %v2309 = vpop.permute.xlu0 %2308
  %v2311 = vsel %vm403, %v2309, 0
  %2313 = vmatpush.bf16.msra.mxu0 0
  %2314 = vmatpush.bf16.msra.mxu0 0
  %2315 = vmatpush.bf16.msra.mxu0 0
  %2316 = vmatpush.bf16.msra.mxu0 0
  %2317 = vmatpush.bf16.msra.mxu0 0
  %2318 = vmatpush.bf16.msra.mxu0 0
  %2319 = vmatpush.bf16.msra.mxu0 0
  %2320 = vmatpush.bf16.msra.mxu0 %v401
  %2321 = vmatmul.bf16.gmra.mxu0 %v2311
  %v2322 = vpop.f32.mrf.mxu0
  %v2323 = vadd.f32 0.0, %v2322
  %v2324 = vpop.f32.mrf.mxu0
  %2325 = vdwg.mxu0
  %v2326 = vunpack.c.l.b16 %v2294
  %v2327 = vpack.c.b16 %v2326, %v2326
  %2328 = vrot.lane.b32.xlu0 %v2327, 96
  %v2329 = vpop.permute.xlu0 %2328
  %v2331 = vsel %vm403, %v2329, 0
  %2333 = vmatpush.bf16.msra.mxu0 0
  %2334 = vmatpush.bf16.msra.mxu0 0
  %2335 = vmatpush.bf16.msra.mxu0 0
  %2336 = vmatpush.bf16.msra.mxu0 0
  %2337 = vmatpush.bf16.msra.mxu0 0
  %2338 = vmatpush.bf16.msra.mxu0 0
  %2339 = vmatpush.bf16.msra.mxu0 0
  %2340 = vmatpush.bf16.msra.mxu0 %v425
  %2341 = vmatmul.bf16.gmra.mxu0 %v2331
  %v2342 = vpop.f32.mrf.mxu0
  %v2343 = vadd.f32 0.0, %v2342
  %v2344 = vpop.f32.mrf.mxu0
  %2345 = vdwg.mxu0
  %v2346 = vadd.f32 %v2302, %v2323
  %v2347 = vxor.u32 %v2346, 2147483648
  %v2348 = vmul.f32 %v2347, 1.442695
  %v2349 = vpow.pop %v2348
  %v2350 = vadd.f32 %v2349, 1.0
  %v2351 = vrcp.pop %v2350
  %v2352 = vmul.f32 %v2350, %v2351
  %v2353 = vsub.f32 1.0, %v2352
  %v2354 = vmul.f32 %v2351, %v2353
  %v2355 = vadd.f32 %v2351, %v2354
  %vm2356 = vweird.f32 %v2350
  %vm2357 = vweird.f32 %v2351
  %vm2358 = vmor %vm2356, %vm2357
  %v2359 = vsel %vm2358, %v2351, %v2355
  %v2360 = vand.u32 2147483647, %v2350
  %vm2361 = vcmp.eq.f32.partialorder %v2360, 8.507059e+37
  %v2362 = vand.u32 %v2350, 2147483648
  %v2363 = vor.u32 1.1754944e-38, %v2362
  %v2364 = vsel %vm2361, %v2363, %v2359
  %v2365 = vmul.f32 1.0, %v2364
  %v2366 = vadd.f32 %v2323, %v466
  %2368 = vrot.lane.b32.xlu0 %v2366, 96
  %v2369 = vpop.permute.xlu0 %2368
  %v2371 = vmul.f32 %v2365, %v2369
  %2373 = vrot.lane.b32.xlu0 %v2371, 32
  %v2374 = vpop.permute.xlu0 %2373
  %v2376 = vadd.f32 %v2302, %v2374
  %v2377 = vtanh.pop %v2376
  %v2378 = vsub.f32 %v2243, %v2377
  %2380 = vrot.lane.b32.xlu0 %v2378, 112
  %v2381 = vpop.permute.xlu0 %2380
  %v2383 = vmul.f32 %v2365, %v2381
  %2385 = vrot.lane.b32.xlu0 %v2383, 16
  %v2386 = vpop.permute.xlu0 %2385
  %v2388 = vadd.f32 %v2377, %v2386
  %v2389 = vadd.f32 %v2305, %v2343
  %v2390 = vxor.u32 %v2389, 2147483648
  %v2391 = vmul.f32 %v2390, 1.442695
  %v2392 = vpow.pop %v2391
  %v2393 = vadd.f32 %v2392, 1.0
  %v2394 = vrcp.pop %v2393
  %v2395 = vmul.f32 %v2393, %v2394
  %v2396 = vsub.f32 1.0, %v2395
  %v2397 = vmul.f32 %v2394, %v2396
  %v2398 = vadd.f32 %v2394, %v2397
  %vm2399 = vweird.f32 %v2393
  %vm2400 = vweird.f32 %v2394
  %vm2401 = vmor %vm2399, %vm2400
  %v2402 = vsel %vm2401, %v2394, %v2398
  %v2403 = vand.u32 2147483647, %v2393
  %vm2404 = vcmp.eq.f32.partialorder %v2403, 8.507059e+37
  %v2405 = vand.u32 %v2393, 2147483648
  %v2406 = vor.u32 1.1754944e-38, %v2405
  %v2407 = vsel %vm2404, %v2406, %v2402
  %v2408 = vmul.f32 1.0, %v2407
  %v2409 = vadd.f32 %v2343, %v518
  %2411 = vrot.lane.b32.xlu0 %v2409, 96
  %v2412 = vpop.permute.xlu0 %2411
  %v2414 = vmul.f32 %v2408, %v2412
  %2416 = vrot.lane.b32.xlu0 %v2414, 32
  %v2417 = vpop.permute.xlu0 %2416
  %v2419 = vadd.f32 %v2305, %v2417
  %v2420 = vtanh.pop %v2419
  %v2421 = vsub.f32 %v2286, %v2420
  %2423 = vrot.lane.b32.xlu0 %v2421, 112
  %v2424 = vpop.permute.xlu0 %2423
  %v2426 = vmul.f32 %v2408, %v2424
  %2428 = vrot.lane.b32.xlu0 %v2426, 16
  %v2429 = vpop.permute.xlu0 %2428
  %v2431 = vadd.f32 %v2420, %v2429
  %v2432 = vpack.c.bf16 %v2388, %v2388
  %2434 = vrot.lane.b32.xlu0 %v2432, 96
  %v2435 = vpop.permute.xlu0 %2434
  %s2437 = scalar_lea.vmem %s6, 52
  %2438 = vst.msk [vmem:[%s2437] sm:$0xf] %vm552, %v2435
  %v2439 = vpack.c.bf16 %v2431, %v2431
  %2441 = vrot.lane.b32.xlu0 %v2439, 96
  %v2442 = vpop.permute.xlu0 %2441
  %s2444 = scalar_lea.vmem %s58, 8
  %2445 = vst.msk [vmem:[%s2444] sm:$0xf] %vm552, %v2442
  %s2446 = scalar_lea.vmem [#allocation2], 112
  %v2447 = vld [vmem:[%s2446] sm:$0xff]
  %s2448 = sadd.s32 8, 128
  %s2449 = scalar_lea.vmem [#allocation2], %s2448
  %v2450 = vld [vmem:[%s2449] sm:$0xff]
  %v2451 = vunpack.c.l.b16 %v2432
  %v2452 = vpack.c.b16 %v2451, %v2451
  %2453 = vrot.lane.b32.xlu0 %v2452, 96
  %v2454 = vpop.permute.xlu0 %2453
  %v2456 = vsel %vm403, %v2454, 0
  %2458 = vmatpush.bf16.msra.mxu0 0
  %2459 = vmatpush.bf16.msra.mxu0 0
  %2460 = vmatpush.bf16.msra.mxu0 0
  %2461 = vmatpush.bf16.msra.mxu0 0
  %2462 = vmatpush.bf16.msra.mxu0 0
  %2463 = vmatpush.bf16.msra.mxu0 0
  %2464 = vmatpush.bf16.msra.mxu0 0
  %2465 = vmatpush.bf16.msra.mxu0 %v401
  %2466 = vmatmul.bf16.gmra.mxu0 %v2456
  %v2467 = vpop.f32.mrf.mxu0
  %v2468 = vadd.f32 0.0, %v2467
  %v2469 = vpop.f32.mrf.mxu0
  %2470 = vdwg.mxu0
  %v2471 = vunpack.c.l.b16 %v2439
  %v2472 = vpack.c.b16 %v2471, %v2471
  %2473 = vrot.lane.b32.xlu0 %v2472, 96
  %v2474 = vpop.permute.xlu0 %2473
  %v2476 = vsel %vm403, %v2474, 0
  %2478 = vmatpush.bf16.msra.mxu0 0
  %2479 = vmatpush.bf16.msra.mxu0 0
  %2480 = vmatpush.bf16.msra.mxu0 0
  %2481 = vmatpush.bf16.msra.mxu0 0
  %2482 = vmatpush.bf16.msra.mxu0 0
  %2483 = vmatpush.bf16.msra.mxu0 0
  %2484 = vmatpush.bf16.msra.mxu0 0
  %2485 = vmatpush.bf16.msra.mxu0 %v425
  %2486 = vmatmul.bf16.gmra.mxu0 %v2476
  %v2487 = vpop.f32.mrf.mxu0
  %v2488 = vadd.f32 0.0, %v2487
  %v2489 = vpop.f32.mrf.mxu0
  %2490 = vdwg.mxu0
  %v2491 = vadd.f32 %v2447, %v2468
  %v2492 = vxor.u32 %v2491, 2147483648
  %v2493 = vmul.f32 %v2492, 1.442695
  %v2494 = vpow.pop %v2493
  %v2495 = vadd.f32 %v2494, 1.0
  %v2496 = vrcp.pop %v2495
  %v2497 = vmul.f32 %v2495, %v2496
  %v2498 = vsub.f32 1.0, %v2497
  %v2499 = vmul.f32 %v2496, %v2498
  %v2500 = vadd.f32 %v2496, %v2499
  %vm2501 = vweird.f32 %v2495
  %vm2502 = vweird.f32 %v2496
  %vm2503 = vmor %vm2501, %vm2502
  %v2504 = vsel %vm2503, %v2496, %v2500
  %v2505 = vand.u32 2147483647, %v2495
  %vm2506 = vcmp.eq.f32.partialorder %v2505, 8.507059e+37
  %v2507 = vand.u32 %v2495, 2147483648
  %v2508 = vor.u32 1.1754944e-38, %v2507
  %v2509 = vsel %vm2506, %v2508, %v2504
  %v2510 = vmul.f32 1.0, %v2509
  %v2511 = vadd.f32 %v2468, %v466
  %2513 = vrot.lane.b32.xlu0 %v2511, 96
  %v2514 = vpop.permute.xlu0 %2513
  %v2516 = vmul.f32 %v2510, %v2514
  %2518 = vrot.lane.b32.xlu0 %v2516, 32
  %v2519 = vpop.permute.xlu0 %2518
  %v2521 = vadd.f32 %v2447, %v2519
  %v2522 = vtanh.pop %v2521
  %v2523 = vsub.f32 %v2388, %v2522
  %2525 = vrot.lane.b32.xlu0 %v2523, 112
  %v2526 = vpop.permute.xlu0 %2525
  %v2528 = vmul.f32 %v2510, %v2526
  %2530 = vrot.lane.b32.xlu0 %v2528, 16
  %v2531 = vpop.permute.xlu0 %2530
  %v2533 = vadd.f32 %v2522, %v2531
  %v2534 = vadd.f32 %v2450, %v2488
  %v2535 = vxor.u32 %v2534, 2147483648
  %v2536 = vmul.f32 %v2535, 1.442695
  %v2537 = vpow.pop %v2536
  %v2538 = vadd.f32 %v2537, 1.0
  %v2539 = vrcp.pop %v2538
  %v2540 = vmul.f32 %v2538, %v2539
  %v2541 = vsub.f32 1.0, %v2540
  %v2542 = vmul.f32 %v2539, %v2541
  %v2543 = vadd.f32 %v2539, %v2542
  %vm2544 = vweird.f32 %v2538
  %vm2545 = vweird.f32 %v2539
  %vm2546 = vmor %vm2544, %vm2545
  %v2547 = vsel %vm2546, %v2539, %v2543
  %v2548 = vand.u32 2147483647, %v2538
  %vm2549 = vcmp.eq.f32.partialorder %v2548, 8.507059e+37
  %v2550 = vand.u32 %v2538, 2147483648
  %v2551 = vor.u32 1.1754944e-38, %v2550
  %v2552 = vsel %vm2549, %v2551, %v2547
  %v2553 = vmul.f32 1.0, %v2552
  %v2554 = vadd.f32 %v2488, %v518
  %2556 = vrot.lane.b32.xlu0 %v2554, 96
  %v2557 = vpop.permute.xlu0 %2556
  %v2559 = vmul.f32 %v2553, %v2557
  %2561 = vrot.lane.b32.xlu0 %v2559, 32
  %v2562 = vpop.permute.xlu0 %2561
  %v2564 = vadd.f32 %v2450, %v2562
  %v2565 = vtanh.pop %v2564
  %v2566 = vsub.f32 %v2431, %v2565
  %2568 = vrot.lane.b32.xlu0 %v2566, 112
  %v2569 = vpop.permute.xlu0 %2568
  %v2571 = vmul.f32 %v2553, %v2569
  %2573 = vrot.lane.b32.xlu0 %v2571, 16
  %v2574 = vpop.permute.xlu0 %2573
  %v2576 = vadd.f32 %v2565, %v2574
  %v2577 = vpack.c.bf16 %v2533, %v2533
  %2579 = vrot.lane.b32.xlu0 %v2577, 96
  %v2580 = vpop.permute.xlu0 %2579
  %s2582 = scalar_lea.vmem %s6, 56
  %2583 = vst.msk [vmem:[%s2582] sm:$0xf] %vm552, %v2580
  %v2584 = vpack.c.bf16 %v2576, %v2576
  %2586 = vrot.lane.b32.xlu0 %v2584, 96
  %v2587 = vpop.permute.xlu0 %2586
  %s2589 = scalar_lea.vmem %s58, 4
  %2590 = vst.msk [vmem:[%s2589] sm:$0xf] %vm552, %v2587
  %s2591 = scalar_lea.vmem [#allocation2], 120
  %v2592 = vld [vmem:[%s2591] sm:$0xff]
  %s2593 = sadd.s32 0, 128
  %s2594 = scalar_lea.vmem [#allocation2], %s2593
  %v2595 = vld [vmem:[%s2594] sm:$0xff]
  %v2596 = vunpack.c.l.b16 %v2577
  %v2597 = vpack.c.b16 %v2596, %v2596
  %2598 = vrot.lane.b32.xlu0 %v2597, 96
  %v2599 = vpop.permute.xlu0 %2598
  %v2601 = vsel %vm403, %v2599, 0
  %2603 = vmatpush.bf16.msra.mxu0 0
  %2604 = vmatpush.bf16.msra.mxu0 0
  %2605 = vmatpush.bf16.msra.mxu0 0
  %2606 = vmatpush.bf16.msra.mxu0 0
  %2607 = vmatpush.bf16.msra.mxu0 0
  %2608 = vmatpush.bf16.msra.mxu0 0
  %2609 = vmatpush.bf16.msra.mxu0 0
  %2610 = vmatpush.bf16.msra.mxu0 %v401
  %2611 = vmatmul.bf16.gmra.mxu0 %v2601
  %v2612 = vpop.f32.mrf.mxu0
  %v2613 = vadd.f32 0.0, %v2612
  %v2614 = vpop.f32.mrf.mxu0
  %2615 = vdwg.mxu0
  %v2616 = vunpack.c.l.b16 %v2584
  %v2617 = vpack.c.b16 %v2616, %v2616
  %2618 = vrot.lane.b32.xlu0 %v2617, 96
  %v2619 = vpop.permute.xlu0 %2618
  %v2621 = vsel %vm403, %v2619, 0
  %2623 = vmatpush.bf16.msra.mxu0 0
  %2624 = vmatpush.bf16.msra.mxu0 0
  %2625 = vmatpush.bf16.msra.mxu0 0
  %2626 = vmatpush.bf16.msra.mxu0 0
  %2627 = vmatpush.bf16.msra.mxu0 0
  %2628 = vmatpush.bf16.msra.mxu0 0
  %2629 = vmatpush.bf16.msra.mxu0 0
  %2630 = vmatpush.bf16.msra.mxu0 %v425
  %2631 = vmatmul.bf16.gmra.mxu0 %v2621
  %v2632 = vpop.f32.mrf.mxu0
  %v2633 = vadd.f32 0.0, %v2632
  %v2634 = vpop.f32.mrf.mxu0
  %2635 = vdwg.mxu0
  %v2636 = vadd.f32 %v2592, %v2613
  %v2637 = vxor.u32 %v2636, 2147483648
  %v2638 = vmul.f32 %v2637, 1.442695
  %v2639 = vpow.pop %v2638
  %v2640 = vadd.f32 %v2639, 1.0
  %v2641 = vrcp.pop %v2640
  %v2642 = vmul.f32 %v2640, %v2641
  %v2643 = vsub.f32 1.0, %v2642
  %v2644 = vmul.f32 %v2641, %v2643
  %v2645 = vadd.f32 %v2641, %v2644
  %vm2646 = vweird.f32 %v2640
  %vm2647 = vweird.f32 %v2641
  %vm2648 = vmor %vm2646, %vm2647
  %v2649 = vsel %vm2648, %v2641, %v2645
  %v2650 = vand.u32 2147483647, %v2640
  %vm2651 = vcmp.eq.f32.partialorder %v2650, 8.507059e+37
  %v2652 = vand.u32 %v2640, 2147483648
  %v2653 = vor.u32 1.1754944e-38, %v2652
  %v2654 = vsel %vm2651, %v2653, %v2649
  %v2655 = vmul.f32 1.0, %v2654
  %v2656 = vadd.f32 %v2613, %v466
  %2658 = vrot.lane.b32.xlu0 %v2656, 96
  %v2659 = vpop.permute.xlu0 %2658
  %v2661 = vmul.f32 %v2655, %v2659
  %2663 = vrot.lane.b32.xlu0 %v2661, 32
  %v2664 = vpop.permute.xlu0 %2663
  %v2666 = vadd.f32 %v2592, %v2664
  %v2667 = vtanh.pop %v2666
  %v2668 = vsub.f32 %v2533, %v2667
  %2670 = vrot.lane.b32.xlu0 %v2668, 112
  %v2671 = vpop.permute.xlu0 %2670
  %v2673 = vmul.f32 %v2655, %v2671
  %2675 = vrot.lane.b32.xlu0 %v2673, 16
  %v2676 = vpop.permute.xlu0 %2675
  %v2678 = vadd.f32 %v2667, %v2676
  %v2679 = vadd.f32 %v2595, %v2633
  %v2680 = vxor.u32 %v2679, 2147483648
  %v2681 = vmul.f32 %v2680, 1.442695
  %v2682 = vpow.pop %v2681
  %v2683 = vadd.f32 %v2682, 1.0
  %v2684 = vrcp.pop %v2683
  %v2685 = vmul.f32 %v2683, %v2684
  %v2686 = vsub.f32 1.0, %v2685
  %v2687 = vmul.f32 %v2684, %v2686
  %v2688 = vadd.f32 %v2684, %v2687
  %vm2689 = vweird.f32 %v2683
  %vm2690 = vweird.f32 %v2684
  %vm2691 = vmor %vm2689, %vm2690
  %v2692 = vsel %vm2691, %v2684, %v2688
  %v2693 = vand.u32 2147483647, %v2683
  %vm2694 = vcmp.eq.f32.partialorder %v2693, 8.507059e+37
  %v2695 = vand.u32 %v2683, 2147483648
  %v2696 = vor.u32 1.1754944e-38, %v2695
  %v2697 = vsel %vm2694, %v2696, %v2692
  %v2698 = vmul.f32 1.0, %v2697
  %v2699 = vadd.f32 %v2633, %v518
  %2701 = vrot.lane.b32.xlu0 %v2699, 96
  %v2702 = vpop.permute.xlu0 %2701
  %v2704 = vmul.f32 %v2698, %v2702
  %2706 = vrot.lane.b32.xlu0 %v2704, 32
  %v2707 = vpop.permute.xlu0 %2706
  %v2709 = vadd.f32 %v2595, %v2707
  %v2710 = vtanh.pop %v2709
  %v2711 = vsub.f32 %v2576, %v2710
  %2713 = vrot.lane.b32.xlu0 %v2711, 112
  %v2714 = vpop.permute.xlu0 %2713
  %v2716 = vmul.f32 %v2698, %v2714
  %2718 = vrot.lane.b32.xlu0 %v2716, 16
  %v2719 = vpop.permute.xlu0 %2718
  %v2721 = vadd.f32 %v2710, %v2719
  %v2722 = vpack.c.bf16 %v2678, %v2678
  %2724 = vrot.lane.b32.xlu0 %v2722, 96
  %v2725 = vpop.permute.xlu0 %2724
  %s2727 = scalar_lea.vmem %s6, 60
  %2728 = vst.msk [vmem:[%s2727] sm:$0xf] %vm552, %v2725
  %v2729 = vpack.c.bf16 %v2721, %v2721
  %2731 = vrot.lane.b32.xlu0 %v2729, 96
  %v2732 = vpop.permute.xlu0 %2731
  %2734 = vst.msk [vmem:[%s58] sm:$0xf] %vm552, %v2732
  %2736 = vrot.lane.b32.xlu0 %v2678, 96
  %v2737 = vpop.permute.xlu0 %2736
  %2739 = vst.msk [vmem:[#allocation3] sm:$0xff] %vm403, %v2737
  %2741 = vrot.lane.b32.xlu0 %v2721, 96
  %v2742 = vpop.permute.xlu0 %2741
  %2744 = vst.msk [vmem:[%s390] sm:$0xff] %vm403, %v2742
  %s2745 = ssub.s32 0, 0
  %s2746 = smul.u32 16, %s2745
  %p2747 = scmp.lt.s32.totalorder %s2746, 15
  %s2748 = scalar_select %p2747, %s2746, 15
  %s2749 = smul.addr %s2748, 4
  %s2750 = scalar_lea.vmem %s7, %s2749
  // Predicated region
  $region30: #{sub_sampling_encoder_forward.3} parent=0 // pred_check
    _
  $region31: #{sub_sampling_encoder_forward.3} parent=0 // pred_check_branch
    %2752 = sbr.rel (0) target = $region33
  $region32: #{sub_sampling_encoder_forward.3} parent=0 // pred_region
    _
  $region33: #{sub_sampling_encoder_forward.3} parent=0 // pred_fallthru
    _
  // Predicated region
  $region34: #{sub_sampling_encoder_forward.3} parent=0 // pred_check
    _
  $region35: #{sub_sampling_encoder_forward.3} parent=0 // pred_check_branch
    %2754 = sbr.rel (0) target = $region37
  $region36: #{sub_sampling_encoder_forward.3} parent=0 // pred_region
    %s2755 = ssub.s32 0, 0
    %s2756 = smul.u32 16, %s2755
  $region37: #{sub_sampling_encoder_forward.3} parent=0 // pred_fallthru
    _
  // Predicated region
  $region38: #{sub_sampling_encoder_forward.3} parent=0 // pred_check
    _
  $region39: #{sub_sampling_encoder_forward.3} parent=0 // pred_check_branch
    %2758 = sbr.rel (0) target = $region41
  $region40: #{sub_sampling_encoder_forward.3} parent=0 // pred_region
    _
  $region41: #{sub_sampling_encoder_forward.3} parent=0 // pred_fallthru
    _
  // Predicated region
  $region42: #{sub_sampling_encoder_forward.3} parent=0 // pred_check
    _
  $region43: #{sub_sampling_encoder_forward.3} parent=0 // pred_check_branch
    %2760 = sbr.rel (0) target = $region45
  $region44: #{sub_sampling_encoder_forward.3} parent=0 // pred_region
    %s2761 = ssub.s32 0, 0
    %s2762 = smul.u32 16, %s2761
    %p2763 = scmp.lt.s32.totalorder %s2762, 15
    %s2764 = scalar_select %p2763, %s2762, 15
    %s2765 = smul.addr %s2764, 4
    %s2766 = scalar_lea.vmem %s7, %s2765
  $region45: #{sub_sampling_encoder_forward.3} parent=0 // pred_fallthru
    _

</llo_original>
